<compile_context>
chip_gen: v7x
topology: tpu7x:2x2x1
jax: 0.10.0
libtpu: 0.0.40
codegen_flags: <defaults>
</compile_context>

<pallas_src>
import functools

import jax
import jax.numpy as jnp
import numpy as np
from jax.experimental import pallas as pl
from jax.experimental.pallas import tpu as pltpu


def _round_up(x, m):
    return (x + m - 1) // m * m


def _exact_div_magic(divisor, max_val):
    """Smallest (m, s) with (f * m) >> s == f // divisor for all 0 <= f <= max_val,
    with f * m staying inside int32.  Avoids vector integer division on the VPU."""
    f = np.arange(max_val + 1, dtype=np.int64)
    want = f // divisor
    for s in range(8, 31):
        m = -((-(1 << s)) // divisor)          # ceil(2**s / divisor)
        if max_val * m >= 2 ** 31:
            break
        if np.all(((f * m) >> s) == want):
            return int(m), int(s)
    # TODO(synk): fall back to a host-precomputed lane-dense (1, npad_pad) mask
    # input for spatial sizes where no int32 magic divider exists.
    raise ValueError(f"no exact int32 magic divider for divisor={divisor}")


def _dslayer_kernel(x_ref, w1_ref, b1_ref, w2_ref, b2_ref, w3_ref, b3_ref,
                    out_ref, y_scr, *, margin, wp, h, w, m_band, n_bands,
                    images, magic_m, magic_s):
    """Fused conv3x3+ReLU -> conv3x3+ReLU -> conv1x1 for `images` images.

    x_ref  : (G, Cin, buf_len) bf16  flattened padded image on lanes, zero margins
    w1_ref : (9, C1, Cin)      bf16  conv1 taps, tap order (ky, kx)
    w2_ref : (9, C1, C1)       bf16  conv2 taps
    b1/b2  : (C1, 1) f32, w3: (1, C1) bf16, b3: (1, 1) f32
    out_ref: (G, 1, npad_pad)  f32   lane-dense prediction over the padded grid
    y_scr  : (C1, buf_len)     bf16  conv1 activation staging (never zero-filled)
    """
    deltas = tuple((ky - 1) * wp + (kx - 1) for ky in range(3) for kx in range(3))

    def interior(b0):
        # 1.0 at interior pixels of the zero-padded (Hp, Wp) grid, else 0.0.
        f = b0 + jax.lax.broadcasted_iota(jnp.int32, (1, m_band), 1)
        r = (f * magic_m) >> magic_s           # == f // wp (exactness host-verified)
        c = f - r * wp
        ok = (r >= 1) & (r <= h) & (c >= 1) & (c <= w)
        return ok.astype(jnp.float32)

    def conv3x3_relu(load_slab, w_ref, b_ref, b0):
        # 9 accumulating (C1, K)@(K, m_band) MXU matmuls (bf16 in, f32 acc);
        # no tap concatenate, so the only live temp is the f32 accumulator.
        acc = None
        for t, d in enumerate(deltas):
            part = jax.lax.dot_general(
                w_ref[t], load_slab(margin + d + b0),
                dimension_numbers=(((1,), (0,)), ((), ())),
                preferred_element_type=jnp.float32)
            acc = part if acc is None else acc + part
        return jnp.maximum(acc + b_ref[...], 0.0)

    for g in range(images):                    # images per grid step
        # ---- conv1 + ReLU -> masked bf16 staging (lane-aligned stores) ----
        for i in range(n_bands):               # static band unroll (M tiling)
            b0 = i * m_band
            y1 = conv3x3_relu(
                lambda s, g=g: x_ref[g, :, pl.ds(s, m_band)], w1_ref, b1_ref, b0)
            # Zero padded-border / tail positions so they act as conv2's zero
            # padding.  Interior outputs never read y_scr outside
            # [margin, margin + npad), so no scratch zero-init is needed.
            y1 = y1 * interior(b0)
            y_scr[:, pl.ds(margin + b0, m_band)] = y1.astype(y_scr.dtype)

        # ---- conv2 + ReLU -> 1x1 prediction, lane-dense (1, m_band) rows ----
        for i in range(n_bands):
            b0 = i * m_band
            y2 = conv3x3_relu(
                lambda s: y_scr[:, pl.ds(s, m_band)], w2_ref, b2_ref, b0)
            pred = jax.lax.dot_general(
                w3_ref[...], y2.astype(jnp.bfloat16),
                dimension_numbers=(((1,), (0,)), ((), ())),
                preferred_element_type=jnp.float32)            # (1, m_band)
            out_ref[g, :, pl.ds(b0, m_band)] = pred + b3_ref[...]


def dslayer_forward(x_nchw, params, *, images_per_step=None):
    """params = (w1, b1, w2, b2, w3, b3) in PyTorch Conv2d layouts."""
    w1, b1, w2, b2, w3, b3 = params
    B, Cin, H, W = x_nchw.shape
    C1 = w1.shape[0]                          # 64 hidden channels
    Hp, Wp = H + 2, W + 2
    npad = Hp * Wp
    m_band = 128 if npad <= 2048 else 256     # spatial band (MXU N dimension)
    npad_pad = _round_up(npad, m_band)        # lane-dense, 128-aligned output width
    n_bands = npad_pad // m_band
    margin = _round_up(Wp + 1, 128)           # lane margin so tap shifts stay in bounds
    buf_len = _round_up(margin + npad_pad + Wp + 1, 128)

    if images_per_step is None:
        # Amortize per-grid-step overhead for larger batches; keep >= 2 grid
        # steps so both TensorCores stay busy on v7x.
        images_per_step = 1
        for g in (8, 4, 2):
            if B % g == 0 and B // g >= 2:
                images_per_step = g
                break
    G = images_per_step
    assert B % G == 0

    magic_m, magic_s = _exact_div_magic(Wp, npad - 1)

    # NCHW -> zero-pad spatially -> flatten row-major onto the lane axis with
    # `margin` leading zero lanes; bf16 (the kernel feeds bf16 to the MXU).
    x_pad = jnp.pad(x_nchw.astype(jnp.float32), ((0, 0), (0, 0), (1, 1), (1, 1)))
    x_flat = x_pad.reshape(B, Cin, npad)
    x_buf = jnp.pad(x_flat, ((0, 0), (0, 0), (margin, buf_len - margin - npad)))
    x_buf = x_buf.astype(jnp.bfloat16)

    # 3x3 conv weight (Cout, Cin, 3, 3) -> (9, Cout, Cin) bf16, taps ordered
    # (ky, kx) to match the kernel's delta enumeration.
    def taps(wt):
        co, ci = wt.shape[0], wt.shape[1]
        return jnp.transpose(wt, (2, 3, 0, 1)).reshape(9, co, ci).astype(jnp.bfloat16)

    w1t, w2t = taps(w1), taps(w2)
    b1c = b1.reshape(C1, 1).astype(jnp.float32)
    b2c = b2.reshape(C1, 1).astype(jnp.float32)
    w3r = w3.reshape(1, C1).astype(jnp.bfloat16)   # (1, 64, 1, 1) -> (1, 64)
    b3r = b3.reshape(1, 1).astype(jnp.float32)

    kernel = functools.partial(
        _dslayer_kernel, margin=margin, wp=Wp, h=H, w=W, m_band=m_band,
        n_bands=n_bands, images=G, magic_m=magic_m, magic_s=magic_s)

    flops = 2 * B * npad_pad * (9 * Cin * C1 + 9 * C1 * C1 + C1)
    bytes_accessed = (x_buf.size * 2 + (w1t.size + w2t.size + w3r.size) * 2
                      + (b1c.size + b2c.size + b3r.size) * 4 + B * npad_pad * 4)

    # VMEM budget derived from actual buffer sizes (double-buffered in/out,
    # single staging scratch) + compute slack; clamped for v7x's 64 MiB.
    vmem_bytes = (2 * (G * Cin * buf_len * 2                 # x block (bf16)
                       + (w1t.size + w2t.size + w3r.size) * 2
                       + (2 * C1 + 1) * 128 * 4              # lane-padded biases
                       + G * npad_pad * 4)                   # out block
                  + C1 * buf_len * 2                          # y_scr (bf16)
                  + (8 << 20))
    vmem_bytes = int(max(16 << 20, min(64 << 20, vmem_bytes)))

    out = pl.pallas_call(
        kernel,
        grid=(B // G,),
        in_specs=[
            pl.BlockSpec((G, Cin, buf_len), lambda b: (b, 0, 0)),   # x (G images)
            pl.BlockSpec((9, C1, Cin), lambda b: (0, 0, 0)),        # w1 taps
            pl.BlockSpec((C1, 1), lambda b: (0, 0)),                # b1
            pl.BlockSpec((9, C1, C1), lambda b: (0, 0, 0)),         # w2 taps
            pl.BlockSpec((C1, 1), lambda b: (0, 0)),                # b2
            pl.BlockSpec((1, C1), lambda b: (0, 0)),                # w3
            pl.BlockSpec((1, 1), lambda b: (0, 0)),                 # b3
        ],
        out_specs=pl.BlockSpec((G, 1, npad_pad), lambda b: (b, 0, 0)),
        out_shape=jax.ShapeDtypeStruct((B, 1, npad_pad), jnp.float32),
        scratch_shapes=[pltpu.VMEM((C1, buf_len), jnp.bfloat16)],
        compiler_params=pltpu.CompilerParams(
            dimension_semantics=("parallel",),
            vmem_limit_bytes=vmem_bytes),
        cost_estimate=pl.CostEstimate(
            flops=int(flops), transcendentals=0,
            bytes_accessed=int(bytes_accessed)),
    )(x_buf, w1t, b1c, w2t, b2c, w3r, b3r)

    # (B, 1, npad_pad) -> (B, Hp, Wp) -> crop interior -> (B, 1, H, W)
    pred = out[:, 0, :npad].reshape(B, Hp, Wp)[:, 1:H + 1, 1:W + 1]
    return pred[:, None, :, :]


if __name__ == "__main__":
    key = jax.random.PRNGKey(0)
    B, Cin, H, W = 2, 64, 16, 16
    C1 = 64
    ks = jax.random.split(key, 4)
    x = jax.random.normal(ks[0], (B, Cin, H, W), jnp.float32)

    def conv_init(k, cout, cin, ksz):
        kw, kb = jax.random.split(k)
        bound = 1.0 / float(cin * ksz * ksz) ** 0.5
        w = jax.random.uniform(kw, (cout, cin, ksz, ksz), jnp.float32, -bound, bound)
        b = jax.random.uniform(kb, (cout,), jnp.float32, -bound, bound)
        return w, b

    w1, b1 = conv_init(ks[1], C1, Cin, 3)
    w2, b2 = conv_init(ks[2], C1, C1, 3)
    w3, b3 = conv_init(ks[3], 1, C1, 1)
    params = (w1, b1, w2, b2, w3, b3)

    out = dslayer_forward(x, params)
    out = jax.block_until_ready(out)
    assert out.shape == (B, 1, H, W)

    # Pure-JAX f32 reference of the DSLayer forward for a sanity check.
    def conv(x_, w_, b_, pad):
        y = jax.lax.conv_general_dilated(
            x_, w_, window_strides=(1, 1),
            padding=((pad, pad), (pad, pad)),
            dimension_numbers=('NCHW', 'OIHW', 'NCHW'))
        return y + b_.reshape(1, -1, 1, 1)

    ref = conv(jnp.maximum(conv(jnp.maximum(conv(x, w1, b1, 1), 0.0),
                                w2, b2, 1), 0.0), w3, b3, 0)
    err = float(jnp.max(jnp.abs(out - ref)))
    # bf16 operands / f32 accumulation -> intentional precision trade-off.
    assert err < 1e-1, f"max abs error too large: {err}"
    print("KERNEL_OK")
</pallas_src>

<mosaic_0001>
module attributes {stable_mosaic.version = 11 : i64} {
  func.func @_dslayer_kernel(%arg0: i32, %arg1: memref<1x64x640xbf16, #tpu.memory_space<vmem>>, %arg2: memref<9x64x64xbf16, #tpu.memory_space<vmem>>, %arg3: memref<64x1xf32, #tpu.memory_space<vmem>>, %arg4: memref<9x64x64xbf16, #tpu.memory_space<vmem>>, %arg5: memref<64x1xf32, #tpu.memory_space<vmem>>, %arg6: memref<1x64xbf16, #tpu.memory_space<vmem>>, %arg7: memref<1x1xf32, #tpu.memory_space<vmem>>, %arg8: memref<1x1x384xf32, #tpu.memory_space<vmem>>, %arg9: memref<64x640xbf16, #tpu.memory_space<vmem>>) attributes {dimension_semantics = [#tpu.dimension_semantics<parallel>], iteration_bounds = array<i64: 2>, scalar_prefetch = 0 : i64, scratch_operands = 1 : i64, tpu.core_type = #tpu.core_type<tc>, window_params = [{transform_indices = @transform_0, window_bounds = array<i64: 1, 64, 640>}, {pipeline_mode = #tpu.pipeline_mode<synchronous>, transform_indices = @transform_1, window_bounds = array<i64: 9, 64, 64>}, {pipeline_mode = #tpu.pipeline_mode<synchronous>, transform_indices = @transform_2, window_bounds = array<i64: 64, 1>}, {pipeline_mode = #tpu.pipeline_mode<synchronous>, transform_indices = @transform_3, window_bounds = array<i64: 9, 64, 64>}, {pipeline_mode = #tpu.pipeline_mode<synchronous>, transform_indices = @transform_4, window_bounds = array<i64: 64, 1>}, {pipeline_mode = #tpu.pipeline_mode<synchronous>, transform_indices = @transform_5, window_bounds = array<i64: 1, 64>}, {pipeline_mode = #tpu.pipeline_mode<synchronous>, transform_indices = @transform_6, window_bounds = array<i64: 1, 1>}, {transform_indices = @transform_7, window_bounds = array<i64: 1, 1, 384>}]} {
    %c0 = arith.constant 0 : index
    %c0_0 = arith.constant 0 : index
    %c0_1 = arith.constant 0 : index
    %0 = vector.load %arg2[%c0, %c0_0, %c0_1] : memref<9x64x64xbf16, #tpu.memory_space<vmem>>, vector<1x64x64xbf16>
    %1 = vector.shape_cast %0 : vector<1x64x64xbf16> to vector<64x64xbf16>
    %c0_2 = arith.constant 0 : index
    %c0_3 = arith.constant 0 : index
    %c109 = arith.constant 109 : index
    %2 = vector.load %arg1[%c0_2, %c0_3, %c109] : memref<1x64x640xbf16, #tpu.memory_space<vmem>>, vector<1x64x128xbf16>
    %3 = vector.shape_cast %2 : vector<1x64x128xbf16> to vector<64x128xbf16>
    %cst = arith.constant dense<0.000000e+00> : vector<64x128xf32>
    %4 = tpu.matmul %1, %3, %cst {dimension_numbers = #tpu.dot_dimension_numbers<[1], [0], [0], [1], [0, 0, 1, 1], [], []>} : vector<64x64xbf16>, vector<64x128xbf16>, vector<64x128xf32> -> vector<64x128xf32>
    %c1 = arith.constant 1 : index
    %c0_4 = arith.constant 0 : index
    %c0_5 = arith.constant 0 : index
    %5 = vector.load %arg2[%c1, %c0_4, %c0_5] : memref<9x64x64xbf16, #tpu.memory_space<vmem>>, vector<1x64x64xbf16>
    %6 = vector.shape_cast %5 : vector<1x64x64xbf16> to vector<64x64xbf16>
    %c0_6 = arith.constant 0 : index
    %c0_7 = arith.constant 0 : index
    %c110 = arith.constant 110 : index
    %7 = vector.load %arg1[%c0_6, %c0_7, %c110] : memref<1x64x640xbf16, #tpu.memory_space<vmem>>, vector<1x64x128xbf16>
    %8 = vector.shape_cast %7 : vector<1x64x128xbf16> to vector<64x128xbf16>
    %cst_8 = arith.constant dense<0.000000e+00> : vector<64x128xf32>
    %9 = tpu.matmul %6, %8, %cst_8 {dimension_numbers = #tpu.dot_dimension_numbers<[1], [0], [0], [1], [0, 0, 1, 1], [], []>} : vector<64x64xbf16>, vector<64x128xbf16>, vector<64x128xf32> -> vector<64x128xf32>
    %10 = arith.addf %4, %9 : vector<64x128xf32>
    %c2 = arith.constant 2 : index
    %c0_9 = arith.constant 0 : index
    %c0_10 = arith.constant 0 : index
    %11 = vector.load %arg2[%c2, %c0_9, %c0_10] : memref<9x64x64xbf16, #tpu.memory_space<vmem>>, vector<1x64x64xbf16>
    %12 = vector.shape_cast %11 : vector<1x64x64xbf16> to vector<64x64xbf16>
    %c0_11 = arith.constant 0 : index
    %c0_12 = arith.constant 0 : index
    %c111 = arith.constant 111 : index
    %13 = vector.load %arg1[%c0_11, %c0_12, %c111] : memref<1x64x640xbf16, #tpu.memory_space<vmem>>, vector<1x64x128xbf16>
    %14 = vector.shape_cast %13 : vector<1x64x128xbf16> to vector<64x128xbf16>
    %cst_13 = arith.constant dense<0.000000e+00> : vector<64x128xf32>
    %15 = tpu.matmul %12, %14, %cst_13 {dimension_numbers = #tpu.dot_dimension_numbers<[1], [0], [0], [1], [0, 0, 1, 1], [], []>} : vector<64x64xbf16>, vector<64x128xbf16>, vector<64x128xf32> -> vector<64x128xf32>
    %16 = arith.addf %10, %15 : vector<64x128xf32>
    %c3 = arith.constant 3 : index
    %c0_14 = arith.constant 0 : index
    %c0_15 = arith.constant 0 : index
    %17 = vector.load %arg2[%c3, %c0_14, %c0_15] : memref<9x64x64xbf16, #tpu.memory_space<vmem>>, vector<1x64x64xbf16>
    %18 = vector.shape_cast %17 : vector<1x64x64xbf16> to vector<64x64xbf16>
    %c0_16 = arith.constant 0 : index
    %c0_17 = arith.constant 0 : index
    %c127 = arith.constant 127 : index
    %19 = vector.load %arg1[%c0_16, %c0_17, %c127] : memref<1x64x640xbf16, #tpu.memory_space<vmem>>, vector<1x64x128xbf16>
    %20 = vector.shape_cast %19 : vector<1x64x128xbf16> to vector<64x128xbf16>
    %cst_18 = arith.constant dense<0.000000e+00> : vector<64x128xf32>
    %21 = tpu.matmul %18, %20, %cst_18 {dimension_numbers = #tpu.dot_dimension_numbers<[1], [0], [0], [1], [0, 0, 1, 1], [], []>} : vector<64x64xbf16>, vector<64x128xbf16>, vector<64x128xf32> -> vector<64x128xf32>
    %22 = arith.addf %16, %21 : vector<64x128xf32>
    %c4 = arith.constant 4 : index
    %c0_19 = arith.constant 0 : index
    %c0_20 = arith.constant 0 : index
    %23 = vector.load %arg2[%c4, %c0_19, %c0_20] : memref<9x64x64xbf16, #tpu.memory_space<vmem>>, vector<1x64x64xbf16>
    %24 = vector.shape_cast %23 : vector<1x64x64xbf16> to vector<64x64xbf16>
    %c0_21 = arith.constant 0 : index
    %c0_22 = arith.constant 0 : index
    %c128 = arith.constant 128 : index
    %25 = vector.load %arg1[%c0_21, %c0_22, %c128] : memref<1x64x640xbf16, #tpu.memory_space<vmem>>, vector<1x64x128xbf16>
    %26 = vector.shape_cast %25 : vector<1x64x128xbf16> to vector<64x128xbf16>
    %cst_23 = arith.constant dense<0.000000e+00> : vector<64x128xf32>
    %27 = tpu.matmul %24, %26, %cst_23 {dimension_numbers = #tpu.dot_dimension_numbers<[1], [0], [0], [1], [0, 0, 1, 1], [], []>} : vector<64x64xbf16>, vector<64x128xbf16>, vector<64x128xf32> -> vector<64x128xf32>
    %28 = arith.addf %22, %27 : vector<64x128xf32>
    %c5 = arith.constant 5 : index
    %c0_24 = arith.constant 0 : index
    %c0_25 = arith.constant 0 : index
    %29 = vector.load %arg2[%c5, %c0_24, %c0_25] : memref<9x64x64xbf16, #tpu.memory_space<vmem>>, vector<1x64x64xbf16>
    %30 = vector.shape_cast %29 : vector<1x64x64xbf16> to vector<64x64xbf16>
    %c0_26 = arith.constant 0 : index
    %c0_27 = arith.constant 0 : index
    %c129 = arith.constant 129 : index
    %31 = vector.load %arg1[%c0_26, %c0_27, %c129] : memref<1x64x640xbf16, #tpu.memory_space<vmem>>, vector<1x64x128xbf16>
    %32 = vector.shape_cast %31 : vector<1x64x128xbf16> to vector<64x128xbf16>
    %cst_28 = arith.constant dense<0.000000e+00> : vector<64x128xf32>
    %33 = tpu.matmul %30, %32, %cst_28 {dimension_numbers = #tpu.dot_dimension_numbers<[1], [0], [0], [1], [0, 0, 1, 1], [], []>} : vector<64x64xbf16>, vector<64x128xbf16>, vector<64x128xf32> -> vector<64x128xf32>
    %34 = arith.addf %28, %33 : vector<64x128xf32>
    %c6 = arith.constant 6 : index
    %c0_29 = arith.constant 0 : index
    %c0_30 = arith.constant 0 : index
    %35 = vector.load %arg2[%c6, %c0_29, %c0_30] : memref<9x64x64xbf16, #tpu.memory_space<vmem>>, vector<1x64x64xbf16>
    %36 = vector.shape_cast %35 : vector<1x64x64xbf16> to vector<64x64xbf16>
    %c0_31 = arith.constant 0 : index
    %c0_32 = arith.constant 0 : index
    %c145 = arith.constant 145 : index
    %37 = vector.load %arg1[%c0_31, %c0_32, %c145] : memref<1x64x640xbf16, #tpu.memory_space<vmem>>, vector<1x64x128xbf16>
    %38 = vector.shape_cast %37 : vector<1x64x128xbf16> to vector<64x128xbf16>
    %cst_33 = arith.constant dense<0.000000e+00> : vector<64x128xf32>
    %39 = tpu.matmul %36, %38, %cst_33 {dimension_numbers = #tpu.dot_dimension_numbers<[1], [0], [0], [1], [0, 0, 1, 1], [], []>} : vector<64x64xbf16>, vector<64x128xbf16>, vector<64x128xf32> -> vector<64x128xf32>
    %40 = arith.addf %34, %39 : vector<64x128xf32>
    %c7 = arith.constant 7 : index
    %c0_34 = arith.constant 0 : index
    %c0_35 = arith.constant 0 : index
    %41 = vector.load %arg2[%c7, %c0_34, %c0_35] : memref<9x64x64xbf16, #tpu.memory_space<vmem>>, vector<1x64x64xbf16>
    %42 = vector.shape_cast %41 : vector<1x64x64xbf16> to vector<64x64xbf16>
    %c0_36 = arith.constant 0 : index
    %c0_37 = arith.constant 0 : index
    %c146 = arith.constant 146 : index
    %43 = vector.load %arg1[%c0_36, %c0_37, %c146] : memref<1x64x640xbf16, #tpu.memory_space<vmem>>, vector<1x64x128xbf16>
    %44 = vector.shape_cast %43 : vector<1x64x128xbf16> to vector<64x128xbf16>
    %cst_38 = arith.constant dense<0.000000e+00> : vector<64x128xf32>
    %45 = tpu.matmul %42, %44, %cst_38 {dimension_numbers = #tpu.dot_dimension_numbers<[1], [0], [0], [1], [0, 0, 1, 1], [], []>} : vector<64x64xbf16>, vector<64x128xbf16>, vector<64x128xf32> -> vector<64x128xf32>
    %46 = arith.addf %40, %45 : vector<64x128xf32>
    %c8 = arith.constant 8 : index
    %c0_39 = arith.constant 0 : index
    %c0_40 = arith.constant 0 : index
    %47 = vector.load %arg2[%c8, %c0_39, %c0_40] : memref<9x64x64xbf16, #tpu.memory_space<vmem>>, vector<1x64x64xbf16>
    %48 = vector.shape_cast %47 : vector<1x64x64xbf16> to vector<64x64xbf16>
    %c0_41 = arith.constant 0 : index
    %c0_42 = arith.constant 0 : index
    %c147 = arith.constant 147 : index
    %49 = vector.load %arg1[%c0_41, %c0_42, %c147] : memref<1x64x640xbf16, #tpu.memory_space<vmem>>, vector<1x64x128xbf16>
    %50 = vector.shape_cast %49 : vector<1x64x128xbf16> to vector<64x128xbf16>
    %cst_43 = arith.constant dense<0.000000e+00> : vector<64x128xf32>
    %51 = tpu.matmul %48, %50, %cst_43 {dimension_numbers = #tpu.dot_dimension_numbers<[1], [0], [0], [1], [0, 0, 1, 1], [], []>} : vector<64x64xbf16>, vector<64x128xbf16>, vector<64x128xf32> -> vector<64x128xf32>
    %52 = arith.addf %46, %51 : vector<64x128xf32>
    %c0_44 = arith.constant 0 : index
    %c0_45 = arith.constant 0 : index
    %53 = vector.load %arg3[%c0_44, %c0_45] : memref<64x1xf32, #tpu.memory_space<vmem>>, vector<64x1xf32>
    %54 = vector.broadcast %53 : vector<64x1xf32> to vector<64x128xf32>
    %55 = arith.addf %52, %54 : vector<64x128xf32>
    %cst_46 = arith.constant 0.000000e+00 : f32
    %56 = vector.broadcast %cst_46 : f32 to vector<64x128xf32>
    %57 = arith.maximumf %55, %56 : vector<64x128xf32>
    %58 = tpu.iota {dimensions = array<i32: 1>} : vector<1x128xi32>
    %c0_i32 = arith.constant 0 : i32
    %59 = vector.broadcast %c0_i32 : i32 to vector<1x128xi32>
    %60 = arith.addi %59, %58 : vector<1x128xi32>
    %c57_i32 = arith.constant 57 : i32
    %61 = vector.broadcast %c57_i32 : i32 to vector<1x128xi32>
    %62 = arith.muli %60, %61 : vector<1x128xi32>
    %c10_i32 = arith.constant 10 : i32
    %63 = vector.broadcast %c10_i32 : i32 to vector<1x128xi32>
    %64 = arith.shrsi %62, %63 : vector<1x128xi32>
    %c18_i32 = arith.constant 18 : i32
    %65 = vector.broadcast %c18_i32 : i32 to vector<1x128xi32>
    %66 = arith.muli %64, %65 : vector<1x128xi32>
    %67 = arith.subi %60, %66 : vector<1x128xi32>
    %c1_i32 = arith.constant 1 : i32
    %68 = vector.broadcast %c1_i32 : i32 to vector<1x128xi32>
    %69 = arith.cmpi sge, %64, %68 : vector<1x128xi32>
    %c16_i32 = arith.constant 16 : i32
    %70 = vector.broadcast %c16_i32 : i32 to vector<1x128xi32>
    %71 = arith.cmpi sle, %64, %70 : vector<1x128xi32>
    %72 = arith.andi %69, %71 : vector<1x128xi1>
    %c1_i32_47 = arith.constant 1 : i32
    %73 = vector.broadcast %c1_i32_47 : i32 to vector<1x128xi32>
    %74 = arith.cmpi sge, %67, %73 : vector<1x128xi32>
    %75 = arith.andi %72, %74 : vector<1x128xi1>
    %c16_i32_48 = arith.constant 16 : i32
    %76 = vector.broadcast %c16_i32_48 : i32 to vector<1x128xi32>
    %77 = arith.cmpi sle, %67, %76 : vector<1x128xi32>
    %78 = arith.andi %75, %77 : vector<1x128xi1>
    %79 = arith.extui %78 : vector<1x128xi1> to vector<1x128xi32>
    %80 = arith.sitofp %79 : vector<1x128xi32> to vector<1x128xf32>
    %81 = vector.broadcast %80 : vector<1x128xf32> to vector<64x128xf32>
    %82 = arith.mulf %57, %81 : vector<64x128xf32>
    %83 = arith.truncf %82 : vector<64x128xf32> to vector<64x128xbf16>
    %c0_49 = arith.constant 0 : index
    %c128_50 = arith.constant 128 : index
    %84 = vector.load %arg9[%c0_49, %c128_50] : memref<64x640xbf16, #tpu.memory_space<vmem>>, vector<64x128xbf16>
    tpu.vector_store %arg9[%c0_49, %c128_50], %83 {strides = array<i32>} : memref<64x640xbf16, #tpu.memory_space<vmem>>, vector<64x128xbf16>,
    %c0_51 = arith.constant 0 : index
    %c0_52 = arith.constant 0 : index
    %c0_53 = arith.constant 0 : index
    %85 = vector.load %arg2[%c0_51, %c0_52, %c0_53] : memref<9x64x64xbf16, #tpu.memory_space<vmem>>, vector<1x64x64xbf16>
    %86 = vector.shape_cast %85 : vector<1x64x64xbf16> to vector<64x64xbf16>
    %c0_54 = arith.constant 0 : index
    %c0_55 = arith.constant 0 : index
    %c237 = arith.constant 237 : index
    %87 = vector.load %arg1[%c0_54, %c0_55, %c237] : memref<1x64x640xbf16, #tpu.memory_space<vmem>>, vector<1x64x128xbf16>
    %88 = vector.shape_cast %87 : vector<1x64x128xbf16> to vector<64x128xbf16>
    %cst_56 = arith.constant dense<0.000000e+00> : vector<64x128xf32>
    %89 = tpu.matmul %86, %88, %cst_56 {dimension_numbers = #tpu.dot_dimension_numbers<[1], [0], [0], [1], [0, 0, 1, 1], [], []>} : vector<64x64xbf16>, vector<64x128xbf16>, vector<64x128xf32> -> vector<64x128xf32>
    %c1_57 = arith.constant 1 : index
    %c0_58 = arith.constant 0 : index
    %c0_59 = arith.constant 0 : index
    %90 = vector.load %arg2[%c1_57, %c0_58, %c0_59] : memref<9x64x64xbf16, #tpu.memory_space<vmem>>, vector<1x64x64xbf16>
    %91 = vector.shape_cast %90 : vector<1x64x64xbf16> to vector<64x64xbf16>
    %c0_60 = arith.constant 0 : index
    %c0_61 = arith.constant 0 : index
    %c238 = arith.constant 238 : index
    %92 = vector.load %arg1[%c0_60, %c0_61, %c238] : memref<1x64x640xbf16, #tpu.memory_space<vmem>>, vector<1x64x128xbf16>
    %93 = vector.shape_cast %92 : vector<1x64x128xbf16> to vector<64x128xbf16>
    %cst_62 = arith.constant dense<0.000000e+00> : vector<64x128xf32>
    %94 = tpu.matmul %91, %93, %cst_62 {dimension_numbers = #tpu.dot_dimension_numbers<[1], [0], [0], [1], [0, 0, 1, 1], [], []>} : vector<64x64xbf16>, vector<64x128xbf16>, vector<64x128xf32> -> vector<64x128xf32>
    %95 = arith.addf %89, %94 : vector<64x128xf32>
    %c2_63 = arith.constant 2 : index
    %c0_64 = arith.constant 0 : index
    %c0_65 = arith.constant 0 : index
    %96 = vector.load %arg2[%c2_63, %c0_64, %c0_65] : memref<9x64x64xbf16, #tpu.memory_space<vmem>>, vector<1x64x64xbf16>
    %97 = vector.shape_cast %96 : vector<1x64x64xbf16> to vector<64x64xbf16>
    %c0_66 = arith.constant 0 : index
    %c0_67 = arith.constant 0 : index
    %c239 = arith.constant 239 : index
    %98 = vector.load %arg1[%c0_66, %c0_67, %c239] : memref<1x64x640xbf16, #tpu.memory_space<vmem>>, vector<1x64x128xbf16>
    %99 = vector.shape_cast %98 : vector<1x64x128xbf16> to vector<64x128xbf16>
    %cst_68 = arith.constant dense<0.000000e+00> : vector<64x128xf32>
    %100 = tpu.matmul %97, %99, %cst_68 {dimension_numbers = #tpu.dot_dimension_numbers<[1], [0], [0], [1], [0, 0, 1, 1], [], []>} : vector<64x64xbf16>, vector<64x128xbf16>, vector<64x128xf32> -> vector<64x128xf32>
    %101 = arith.addf %95, %100 : vector<64x128xf32>
    %c3_69 = arith.constant 3 : index
    %c0_70 = arith.constant 0 : index
    %c0_71 = arith.constant 0 : index
    %102 = vector.load %arg2[%c3_69, %c0_70, %c0_71] : memref<9x64x64xbf16, #tpu.memory_space<vmem>>, vector<1x64x64xbf16>
    %103 = vector.shape_cast %102 : vector<1x64x64xbf16> to vector<64x64xbf16>
    %c0_72 = arith.constant 0 : index
    %c0_73 = arith.constant 0 : index
    %c255 = arith.constant 255 : index
    %104 = vector.load %arg1[%c0_72, %c0_73, %c255] : memref<1x64x640xbf16, #tpu.memory_space<vmem>>, vector<1x64x128xbf16>
    %105 = vector.shape_cast %104 : vector<1x64x128xbf16> to vector<64x128xbf16>
    %cst_74 = arith.constant dense<0.000000e+00> : vector<64x128xf32>
    %106 = tpu.matmul %103, %105, %cst_74 {dimension_numbers = #tpu.dot_dimension_numbers<[1], [0], [0], [1], [0, 0, 1, 1], [], []>} : vector<64x64xbf16>, vector<64x128xbf16>, vector<64x128xf32> -> vector<64x128xf32>
    %107 = arith.addf %101, %106 : vector<64x128xf32>
    %c4_75 = arith.constant 4 : index
    %c0_76 = arith.constant 0 : index
    %c0_77 = arith.constant 0 : index
    %108 = vector.load %arg2[%c4_75, %c0_76, %c0_77] : memref<9x64x64xbf16, #tpu.memory_space<vmem>>, vector<1x64x64xbf16>
    %109 = vector.shape_cast %108 : vector<1x64x64xbf16> to vector<64x64xbf16>
    %c0_78 = arith.constant 0 : index
    %c0_79 = arith.constant 0 : index
    %c256 = arith.constant 256 : index
    %110 = vector.load %arg1[%c0_78, %c0_79, %c256] : memref<1x64x640xbf16, #tpu.memory_space<vmem>>, vector<1x64x128xbf16>
    %111 = vector.shape_cast %110 : vector<1x64x128xbf16> to vector<64x128xbf16>
    %cst_80 = arith.constant dense<0.000000e+00> : vector<64x128xf32>
    %112 = tpu.matmul %109, %111, %cst_80 {dimension_numbers = #tpu.dot_dimension_numbers<[1], [0], [0], [1], [0, 0, 1, 1], [], []>} : vector<64x64xbf16>, vector<64x128xbf16>, vector<64x128xf32> -> vector<64x128xf32>
    %113 = arith.addf %107, %112 : vector<64x128xf32>
    %c5_81 = arith.constant 5 : index
    %c0_82 = arith.constant 0 : index
    %c0_83 = arith.constant 0 : index
    %114 = vector.load %arg2[%c5_81, %c0_82, %c0_83] : memref<9x64x64xbf16, #tpu.memory_space<vmem>>, vector<1x64x64xbf16>
    %115 = vector.shape_cast %114 : vector<1x64x64xbf16> to vector<64x64xbf16>
    %c0_84 = arith.constant 0 : index
    %c0_85 = arith.constant 0 : index
    %c257 = arith.constant 257 : index
    %116 = vector.load %arg1[%c0_84, %c0_85, %c257] : memref<1x64x640xbf16, #tpu.memory_space<vmem>>, vector<1x64x128xbf16>
    %117 = vector.shape_cast %116 : vector<1x64x128xbf16> to vector<64x128xbf16>
    %cst_86 = arith.constant dense<0.000000e+00> : vector<64x128xf32>
    %118 = tpu.matmul %115, %117, %cst_86 {dimension_numbers = #tpu.dot_dimension_numbers<[1], [0], [0], [1], [0, 0, 1, 1], [], []>} : vector<64x64xbf16>, vector<64x128xbf16>, vector<64x128xf32> -> vector<64x128xf32>
    %119 = arith.addf %113, %118 : vector<64x128xf32>
    %c6_87 = arith.constant 6 : index
    %c0_88 = arith.constant 0 : index
    %c0_89 = arith.constant 0 : index
    %120 = vector.load %arg2[%c6_87, %c0_88, %c0_89] : memref<9x64x64xbf16, #tpu.memory_space<vmem>>, vector<1x64x64xbf16>
    %121 = vector.shape_cast %120 : vector<1x64x64xbf16> to vector<64x64xbf16>
    %c0_90 = arith.constant 0 : index
    %c0_91 = arith.constant 0 : index
    %c273 = arith.constant 273 : index
    %122 = vector.load %arg1[%c0_90, %c0_91, %c273] : memref<1x64x640xbf16, #tpu.memory_space<vmem>>, vector<1x64x128xbf16>
    %123 = vector.shape_cast %122 : vector<1x64x128xbf16> to vector<64x128xbf16>
    %cst_92 = arith.constant dense<0.000000e+00> : vector<64x128xf32>
    %124 = tpu.matmul %121, %123, %cst_92 {dimension_numbers = #tpu.dot_dimension_numbers<[1], [0], [0], [1], [0, 0, 1, 1], [], []>} : vector<64x64xbf16>, vector<64x128xbf16>, vector<64x128xf32> -> vector<64x128xf32>
    %125 = arith.addf %119, %124 : vector<64x128xf32>
    %c7_93 = arith.constant 7 : index
    %c0_94 = arith.constant 0 : index
    %c0_95 = arith.constant 0 : index
    %126 = vector.load %arg2[%c7_93, %c0_94, %c0_95] : memref<9x64x64xbf16, #tpu.memory_space<vmem>>, vector<1x64x64xbf16>
    %127 = vector.shape_cast %126 : vector<1x64x64xbf16> to vector<64x64xbf16>
    %c0_96 = arith.constant 0 : index
    %c0_97 = arith.constant 0 : index
    %c274 = arith.constant 274 : index
    %128 = vector.load %arg1[%c0_96, %c0_97, %c274] : memref<1x64x640xbf16, #tpu.memory_space<vmem>>, vector<1x64x128xbf16>
    %129 = vector.shape_cast %128 : vector<1x64x128xbf16> to vector<64x128xbf16>
    %cst_98 = arith.constant dense<0.000000e+00> : vector<64x128xf32>
    %130 = tpu.matmul %127, %129, %cst_98 {dimension_numbers = #tpu.dot_dimension_numbers<[1], [0], [0], [1], [0, 0, 1, 1], [], []>} : vector<64x64xbf16>, vector<64x128xbf16>, vector<64x128xf32> -> vector<64x128xf32>
    %131 = arith.addf %125, %130 : vector<64x128xf32>
    %c8_99 = arith.constant 8 : index
    %c0_100 = arith.constant 0 : index
    %c0_101 = arith.constant 0 : index
    %132 = vector.load %arg2[%c8_99, %c0_100, %c0_101] : memref<9x64x64xbf16, #tpu.memory_space<vmem>>, vector<1x64x64xbf16>
    %133 = vector.shape_cast %132 : vector<1x64x64xbf16> to vector<64x64xbf16>
    %c0_102 = arith.constant 0 : index
    %c0_103 = arith.constant 0 : index
    %c275 = arith.constant 275 : index
    %134 = vector.load %arg1[%c0_102, %c0_103, %c275] : memref<1x64x640xbf16, #tpu.memory_space<vmem>>, vector<1x64x128xbf16>
    %135 = vector.shape_cast %134 : vector<1x64x128xbf16> to vector<64x128xbf16>
    %cst_104 = arith.constant dense<0.000000e+00> : vector<64x128xf32>
    %136 = tpu.matmul %133, %135, %cst_104 {dimension_numbers = #tpu.dot_dimension_numbers<[1], [0], [0], [1], [0, 0, 1, 1], [], []>} : vector<64x64xbf16>, vector<64x128xbf16>, vector<64x128xf32> -> vector<64x128xf32>
    %137 = arith.addf %131, %136 : vector<64x128xf32>
    %c0_105 = arith.constant 0 : index
    %c0_106 = arith.constant 0 : index
    %138 = vector.load %arg3[%c0_105, %c0_106] : memref<64x1xf32, #tpu.memory_space<vmem>>, vector<64x1xf32>
    %139 = vector.broadcast %138 : vector<64x1xf32> to vector<64x128xf32>
    %140 = arith.addf %137, %139 : vector<64x128xf32>
    %cst_107 = arith.constant 0.000000e+00 : f32
    %141 = vector.broadcast %cst_107 : f32 to vector<64x128xf32>
    %142 = arith.maximumf %140, %141 : vector<64x128xf32>
    %143 = tpu.iota {dimensions = array<i32: 1>} : vector<1x128xi32>
    %c128_i32 = arith.constant 128 : i32
    %144 = vector.broadcast %c128_i32 : i32 to vector<1x128xi32>
    %145 = arith.addi %144, %143 : vector<1x128xi32>
    %c57_i32_108 = arith.constant 57 : i32
    %146 = vector.broadcast %c57_i32_108 : i32 to vector<1x128xi32>
    %147 = arith.muli %145, %146 : vector<1x128xi32>
    %c10_i32_109 = arith.constant 10 : i32
    %148 = vector.broadcast %c10_i32_109 : i32 to vector<1x128xi32>
    %149 = arith.shrsi %147, %148 : vector<1x128xi32>
    %c18_i32_110 = arith.constant 18 : i32
    %150 = vector.broadcast %c18_i32_110 : i32 to vector<1x128xi32>
    %151 = arith.muli %149, %150 : vector<1x128xi32>
    %152 = arith.subi %145, %151 : vector<1x128xi32>
    %c1_i32_111 = arith.constant 1 : i32
    %153 = vector.broadcast %c1_i32_111 : i32 to vector<1x128xi32>
    %154 = arith.cmpi sge, %149, %153 : vector<1x128xi32>
    %c16_i32_112 = arith.constant 16 : i32
    %155 = vector.broadcast %c16_i32_112 : i32 to vector<1x128xi32>
    %156 = arith.cmpi sle, %149, %155 : vector<1x128xi32>
    %157 = arith.andi %154, %156 : vector<1x128xi1>
    %c1_i32_113 = arith.constant 1 : i32
    %158 = vector.broadcast %c1_i32_113 : i32 to vector<1x128xi32>
    %159 = arith.cmpi sge, %152, %158 : vector<1x128xi32>
    %160 = arith.andi %157, %159 : vector<1x128xi1>
    %c16_i32_114 = arith.constant 16 : i32
    %161 = vector.broadcast %c16_i32_114 : i32 to vector<1x128xi32>
    %162 = arith.cmpi sle, %152, %161 : vector<1x128xi32>
    %163 = arith.andi %160, %162 : vector<1x128xi1>
    %164 = arith.extui %163 : vector<1x128xi1> to vector<1x128xi32>
    %165 = arith.sitofp %164 : vector<1x128xi32> to vector<1x128xf32>
    %166 = vector.broadcast %165 : vector<1x128xf32> to vector<64x128xf32>
    %167 = arith.mulf %142, %166 : vector<64x128xf32>
    %168 = arith.truncf %167 : vector<64x128xf32> to vector<64x128xbf16>
    %c0_115 = arith.constant 0 : index
    %c256_116 = arith.constant 256 : index
    %169 = vector.load %arg9[%c0_115, %c256_116] : memref<64x640xbf16, #tpu.memory_space<vmem>>, vector<64x128xbf16>
    tpu.vector_store %arg9[%c0_115, %c256_116], %168 {strides = array<i32>} : memref<64x640xbf16, #tpu.memory_space<vmem>>, vector<64x128xbf16>,
    %c0_117 = arith.constant 0 : index
    %c0_118 = arith.constant 0 : index
    %c0_119 = arith.constant 0 : index
    %170 = vector.load %arg2[%c0_117, %c0_118, %c0_119] : memref<9x64x64xbf16, #tpu.memory_space<vmem>>, vector<1x64x64xbf16>
    %171 = vector.shape_cast %170 : vector<1x64x64xbf16> to vector<64x64xbf16>
    %c0_120 = arith.constant 0 : index
    %c0_121 = arith.constant 0 : index
    %c365 = arith.constant 365 : index
    %172 = vector.load %arg1[%c0_120, %c0_121, %c365] : memref<1x64x640xbf16, #tpu.memory_space<vmem>>, vector<1x64x128xbf16>
    %173 = vector.shape_cast %172 : vector<1x64x128xbf16> to vector<64x128xbf16>
    %cst_122 = arith.constant dense<0.000000e+00> : vector<64x128xf32>
    %174 = tpu.matmul %171, %173, %cst_122 {dimension_numbers = #tpu.dot_dimension_numbers<[1], [0], [0], [1], [0, 0, 1, 1], [], []>} : vector<64x64xbf16>, vector<64x128xbf16>, vector<64x128xf32> -> vector<64x128xf32>
    %c1_123 = arith.constant 1 : index
    %c0_124 = arith.constant 0 : index
    %c0_125 = arith.constant 0 : index
    %175 = vector.load %arg2[%c1_123, %c0_124, %c0_125] : memref<9x64x64xbf16, #tpu.memory_space<vmem>>, vector<1x64x64xbf16>
    %176 = vector.shape_cast %175 : vector<1x64x64xbf16> to vector<64x64xbf16>
    %c0_126 = arith.constant 0 : index
    %c0_127 = arith.constant 0 : index
    %c366 = arith.constant 366 : index
    %177 = vector.load %arg1[%c0_126, %c0_127, %c366] : memref<1x64x640xbf16, #tpu.memory_space<vmem>>, vector<1x64x128xbf16>
    %178 = vector.shape_cast %177 : vector<1x64x128xbf16> to vector<64x128xbf16>
    %cst_128 = arith.constant dense<0.000000e+00> : vector<64x128xf32>
    %179 = tpu.matmul %176, %178, %cst_128 {dimension_numbers = #tpu.dot_dimension_numbers<[1], [0], [0], [1], [0, 0, 1, 1], [], []>} : vector<64x64xbf16>, vector<64x128xbf16>, vector<64x128xf32> -> vector<64x128xf32>
    %180 = arith.addf %174, %179 : vector<64x128xf32>
    %c2_129 = arith.constant 2 : index
    %c0_130 = arith.constant 0 : index
    %c0_131 = arith.constant 0 : index
    %181 = vector.load %arg2[%c2_129, %c0_130, %c0_131] : memref<9x64x64xbf16, #tpu.memory_space<vmem>>, vector<1x64x64xbf16>
    %182 = vector.shape_cast %181 : vector<1x64x64xbf16> to vector<64x64xbf16>
    %c0_132 = arith.constant 0 : index
    %c0_133 = arith.constant 0 : index
    %c367 = arith.constant 367 : index
    %183 = vector.load %arg1[%c0_132, %c0_133, %c367] : memref<1x64x640xbf16, #tpu.memory_space<vmem>>, vector<1x64x128xbf16>
    %184 = vector.shape_cast %183 : vector<1x64x128xbf16> to vector<64x128xbf16>
    %cst_134 = arith.constant dense<0.000000e+00> : vector<64x128xf32>
    %185 = tpu.matmul %182, %184, %cst_134 {dimension_numbers = #tpu.dot_dimension_numbers<[1], [0], [0], [1], [0, 0, 1, 1], [], []>} : vector<64x64xbf16>, vector<64x128xbf16>, vector<64x128xf32> -> vector<64x128xf32>
    %186 = arith.addf %180, %185 : vector<64x128xf32>
    %c3_135 = arith.constant 3 : index
    %c0_136 = arith.constant 0 : index
    %c0_137 = arith.constant 0 : index
    %187 = vector.load %arg2[%c3_135, %c0_136, %c0_137] : memref<9x64x64xbf16, #tpu.memory_space<vmem>>, vector<1x64x64xbf16>
    %188 = vector.shape_cast %187 : vector<1x64x64xbf16> to vector<64x64xbf16>
    %c0_138 = arith.constant 0 : index
    %c0_139 = arith.constant 0 : index
    %c383 = arith.constant 383 : index
    %189 = vector.load %arg1[%c0_138, %c0_139, %c383] : memref<1x64x640xbf16, #tpu.memory_space<vmem>>, vector<1x64x128xbf16>
    %190 = vector.shape_cast %189 : vector<1x64x128xbf16> to vector<64x128xbf16>
    %cst_140 = arith.constant dense<0.000000e+00> : vector<64x128xf32>
    %191 = tpu.matmul %188, %190, %cst_140 {dimension_numbers = #tpu.dot_dimension_numbers<[1], [0], [0], [1], [0, 0, 1, 1], [], []>} : vector<64x64xbf16>, vector<64x128xbf16>, vector<64x128xf32> -> vector<64x128xf32>
    %192 = arith.addf %186, %191 : vector<64x128xf32>
    %c4_141 = arith.constant 4 : index
    %c0_142 = arith.constant 0 : index
    %c0_143 = arith.constant 0 : index
    %193 = vector.load %arg2[%c4_141, %c0_142, %c0_143] : memref<9x64x64xbf16, #tpu.memory_space<vmem>>, vector<1x64x64xbf16>
    %194 = vector.shape_cast %193 : vector<1x64x64xbf16> to vector<64x64xbf16>
    %c0_144 = arith.constant 0 : index
    %c0_145 = arith.constant 0 : index
    %c384 = arith.constant 384 : index
    %195 = vector.load %arg1[%c0_144, %c0_145, %c384] : memref<1x64x640xbf16, #tpu.memory_space<vmem>>, vector<1x64x128xbf16>
    %196 = vector.shape_cast %195 : vector<1x64x128xbf16> to vector<64x128xbf16>
    %cst_146 = arith.constant dense<0.000000e+00> : vector<64x128xf32>
    %197 = tpu.matmul %194, %196, %cst_146 {dimension_numbers = #tpu.dot_dimension_numbers<[1], [0], [0], [1], [0, 0, 1, 1], [], []>} : vector<64x64xbf16>, vector<64x128xbf16>, vector<64x128xf32> -> vector<64x128xf32>
    %198 = arith.addf %192, %197 : vector<64x128xf32>
    %c5_147 = arith.constant 5 : index
    %c0_148 = arith.constant 0 : index
    %c0_149 = arith.constant 0 : index
    %199 = vector.load %arg2[%c5_147, %c0_148, %c0_149] : memref<9x64x64xbf16, #tpu.memory_space<vmem>>, vector<1x64x64xbf16>
    %200 = vector.shape_cast %199 : vector<1x64x64xbf16> to vector<64x64xbf16>
    %c0_150 = arith.constant 0 : index
    %c0_151 = arith.constant 0 : index
    %c385 = arith.constant 385 : index
    %201 = vector.load %arg1[%c0_150, %c0_151, %c385] : memref<1x64x640xbf16, #tpu.memory_space<vmem>>, vector<1x64x128xbf16>
    %202 = vector.shape_cast %201 : vector<1x64x128xbf16> to vector<64x128xbf16>
    %cst_152 = arith.constant dense<0.000000e+00> : vector<64x128xf32>
    %203 = tpu.matmul %200, %202, %cst_152 {dimension_numbers = #tpu.dot_dimension_numbers<[1], [0], [0], [1], [0, 0, 1, 1], [], []>} : vector<64x64xbf16>, vector<64x128xbf16>, vector<64x128xf32> -> vector<64x128xf32>
    %204 = arith.addf %198, %203 : vector<64x128xf32>
    %c6_153 = arith.constant 6 : index
    %c0_154 = arith.constant 0 : index
    %c0_155 = arith.constant 0 : index
    %205 = vector.load %arg2[%c6_153, %c0_154, %c0_155] : memref<9x64x64xbf16, #tpu.memory_space<vmem>>, vector<1x64x64xbf16>
    %206 = vector.shape_cast %205 : vector<1x64x64xbf16> to vector<64x64xbf16>
    %c0_156 = arith.constant 0 : index
    %c0_157 = arith.constant 0 : index
    %c401 = arith.constant 401 : index
    %207 = vector.load %arg1[%c0_156, %c0_157, %c401] : memref<1x64x640xbf16, #tpu.memory_space<vmem>>, vector<1x64x128xbf16>
    %208 = vector.shape_cast %207 : vector<1x64x128xbf16> to vector<64x128xbf16>
    %cst_158 = arith.constant dense<0.000000e+00> : vector<64x128xf32>
    %209 = tpu.matmul %206, %208, %cst_158 {dimension_numbers = #tpu.dot_dimension_numbers<[1], [0], [0], [1], [0, 0, 1, 1], [], []>} : vector<64x64xbf16>, vector<64x128xbf16>, vector<64x128xf32> -> vector<64x128xf32>
    %210 = arith.addf %204, %209 : vector<64x128xf32>
    %c7_159 = arith.constant 7 : index
    %c0_160 = arith.constant 0 : index
    %c0_161 = arith.constant 0 : index
    %211 = vector.load %arg2[%c7_159, %c0_160, %c0_161] : memref<9x64x64xbf16, #tpu.memory_space<vmem>>, vector<1x64x64xbf16>
    %212 = vector.shape_cast %211 : vector<1x64x64xbf16> to vector<64x64xbf16>
    %c0_162 = arith.constant 0 : index
    %c0_163 = arith.constant 0 : index
    %c402 = arith.constant 402 : index
    %213 = vector.load %arg1[%c0_162, %c0_163, %c402] : memref<1x64x640xbf16, #tpu.memory_space<vmem>>, vector<1x64x128xbf16>
    %214 = vector.shape_cast %213 : vector<1x64x128xbf16> to vector<64x128xbf16>
    %cst_164 = arith.constant dense<0.000000e+00> : vector<64x128xf32>
    %215 = tpu.matmul %212, %214, %cst_164 {dimension_numbers = #tpu.dot_dimension_numbers<[1], [0], [0], [1], [0, 0, 1, 1], [], []>} : vector<64x64xbf16>, vector<64x128xbf16>, vector<64x128xf32> -> vector<64x128xf32>
    %216 = arith.addf %210, %215 : vector<64x128xf32>
    %c8_165 = arith.constant 8 : index
    %c0_166 = arith.constant 0 : index
    %c0_167 = arith.constant 0 : index
    %217 = vector.load %arg2[%c8_165, %c0_166, %c0_167] : memref<9x64x64xbf16, #tpu.memory_space<vmem>>, vector<1x64x64xbf16>
    %218 = vector.shape_cast %217 : vector<1x64x64xbf16> to vector<64x64xbf16>
    %c0_168 = arith.constant 0 : index
    %c0_169 = arith.constant 0 : index
    %c403 = arith.constant 403 : index
    %219 = vector.load %arg1[%c0_168, %c0_169, %c403] : memref<1x64x640xbf16, #tpu.memory_space<vmem>>, vector<1x64x128xbf16>
    %220 = vector.shape_cast %219 : vector<1x64x128xbf16> to vector<64x128xbf16>
    %cst_170 = arith.constant dense<0.000000e+00> : vector<64x128xf32>
    %221 = tpu.matmul %218, %220, %cst_170 {dimension_numbers = #tpu.dot_dimension_numbers<[1], [0], [0], [1], [0, 0, 1, 1], [], []>} : vector<64x64xbf16>, vector<64x128xbf16>, vector<64x128xf32> -> vector<64x128xf32>
    %222 = arith.addf %216, %221 : vector<64x128xf32>
    %c0_171 = arith.constant 0 : index
    %c0_172 = arith.constant 0 : index
    %223 = vector.load %arg3[%c0_171, %c0_172] : memref<64x1xf32, #tpu.memory_space<vmem>>, vector<64x1xf32>
    %224 = vector.broadcast %223 : vector<64x1xf32> to vector<64x128xf32>
    %225 = arith.addf %222, %224 : vector<64x128xf32>
    %cst_173 = arith.constant 0.000000e+00 : f32
    %226 = vector.broadcast %cst_173 : f32 to vector<64x128xf32>
    %227 = arith.maximumf %225, %226 : vector<64x128xf32>
    %228 = tpu.iota {dimensions = array<i32: 1>} : vector<1x128xi32>
    %c256_i32 = arith.constant 256 : i32
    %229 = vector.broadcast %c256_i32 : i32 to vector<1x128xi32>
    %230 = arith.addi %229, %228 : vector<1x128xi32>
    %c57_i32_174 = arith.constant 57 : i32
    %231 = vector.broadcast %c57_i32_174 : i32 to vector<1x128xi32>
    %232 = arith.muli %230, %231 : vector<1x128xi32>
    %c10_i32_175 = arith.constant 10 : i32
    %233 = vector.broadcast %c10_i32_175 : i32 to vector<1x128xi32>
    %234 = arith.shrsi %232, %233 : vector<1x128xi32>
    %c18_i32_176 = arith.constant 18 : i32
    %235 = vector.broadcast %c18_i32_176 : i32 to vector<1x128xi32>
    %236 = arith.muli %234, %235 : vector<1x128xi32>
    %237 = arith.subi %230, %236 : vector<1x128xi32>
    %c1_i32_177 = arith.constant 1 : i32
    %238 = vector.broadcast %c1_i32_177 : i32 to vector<1x128xi32>
    %239 = arith.cmpi sge, %234, %238 : vector<1x128xi32>
    %c16_i32_178 = arith.constant 16 : i32
    %240 = vector.broadcast %c16_i32_178 : i32 to vector<1x128xi32>
    %241 = arith.cmpi sle, %234, %240 : vector<1x128xi32>
    %242 = arith.andi %239, %241 : vector<1x128xi1>
    %c1_i32_179 = arith.constant 1 : i32
    %243 = vector.broadcast %c1_i32_179 : i32 to vector<1x128xi32>
    %244 = arith.cmpi sge, %237, %243 : vector<1x128xi32>
    %245 = arith.andi %242, %244 : vector<1x128xi1>
    %c16_i32_180 = arith.constant 16 : i32
    %246 = vector.broadcast %c16_i32_180 : i32 to vector<1x128xi32>
    %247 = arith.cmpi sle, %237, %246 : vector<1x128xi32>
    %248 = arith.andi %245, %247 : vector<1x128xi1>
    %249 = arith.extui %248 : vector<1x128xi1> to vector<1x128xi32>
    %250 = arith.sitofp %249 : vector<1x128xi32> to vector<1x128xf32>
    %251 = vector.broadcast %250 : vector<1x128xf32> to vector<64x128xf32>
    %252 = arith.mulf %227, %251 : vector<64x128xf32>
    %253 = arith.truncf %252 : vector<64x128xf32> to vector<64x128xbf16>
    %c0_181 = arith.constant 0 : index
    %c384_182 = arith.constant 384 : index
    %254 = vector.load %arg9[%c0_181, %c384_182] : memref<64x640xbf16, #tpu.memory_space<vmem>>, vector<64x128xbf16>
    tpu.vector_store %arg9[%c0_181, %c384_182], %253 {strides = array<i32>} : memref<64x640xbf16, #tpu.memory_space<vmem>>, vector<64x128xbf16>,
    %c0_183 = arith.constant 0 : index
    %c0_184 = arith.constant 0 : index
    %c0_185 = arith.constant 0 : index
    %255 = vector.load %arg4[%c0_183, %c0_184, %c0_185] : memref<9x64x64xbf16, #tpu.memory_space<vmem>>, vector<1x64x64xbf16>
    %256 = vector.shape_cast %255 : vector<1x64x64xbf16> to vector<64x64xbf16>
    %c0_186 = arith.constant 0 : index
    %c109_187 = arith.constant 109 : index
    %257 = vector.load %arg9[%c0_186, %c109_187] : memref<64x640xbf16, #tpu.memory_space<vmem>>, vector<64x128xbf16>
    %cst_188 = arith.constant dense<0.000000e+00> : vector<64x128xf32>
    %258 = tpu.matmul %256, %257, %cst_188 {dimension_numbers = #tpu.dot_dimension_numbers<[1], [0], [0], [1], [0, 0, 1, 1], [], []>} : vector<64x64xbf16>, vector<64x128xbf16>, vector<64x128xf32> -> vector<64x128xf32>
    %c1_189 = arith.constant 1 : index
    %c0_190 = arith.constant 0 : index
    %c0_191 = arith.constant 0 : index
    %259 = vector.load %arg4[%c1_189, %c0_190, %c0_191] : memref<9x64x64xbf16, #tpu.memory_space<vmem>>, vector<1x64x64xbf16>
    %260 = vector.shape_cast %259 : vector<1x64x64xbf16> to vector<64x64xbf16>
    %c0_192 = arith.constant 0 : index
    %c110_193 = arith.constant 110 : index
    %261 = vector.load %arg9[%c0_192, %c110_193] : memref<64x640xbf16, #tpu.memory_space<vmem>>, vector<64x128xbf16>
    %cst_194 = arith.constant dense<0.000000e+00> : vector<64x128xf32>
    %262 = tpu.matmul %260, %261, %cst_194 {dimension_numbers = #tpu.dot_dimension_numbers<[1], [0], [0], [1], [0, 0, 1, 1], [], []>} : vector<64x64xbf16>, vector<64x128xbf16>, vector<64x128xf32> -> vector<64x128xf32>
    %263 = arith.addf %258, %262 : vector<64x128xf32>
    %c2_195 = arith.constant 2 : index
    %c0_196 = arith.constant 0 : index
    %c0_197 = arith.constant 0 : index
    %264 = vector.load %arg4[%c2_195, %c0_196, %c0_197] : memref<9x64x64xbf16, #tpu.memory_space<vmem>>, vector<1x64x64xbf16>
    %265 = vector.shape_cast %264 : vector<1x64x64xbf16> to vector<64x64xbf16>
    %c0_198 = arith.constant 0 : index
    %c111_199 = arith.constant 111 : index
    %266 = vector.load %arg9[%c0_198, %c111_199] : memref<64x640xbf16, #tpu.memory_space<vmem>>, vector<64x128xbf16>
    %cst_200 = arith.constant dense<0.000000e+00> : vector<64x128xf32>
    %267 = tpu.matmul %265, %266, %cst_200 {dimension_numbers = #tpu.dot_dimension_numbers<[1], [0], [0], [1], [0, 0, 1, 1], [], []>} : vector<64x64xbf16>, vector<64x128xbf16>, vector<64x128xf32> -> vector<64x128xf32>
    %268 = arith.addf %263, %267 : vector<64x128xf32>
    %c3_201 = arith.constant 3 : index
    %c0_202 = arith.constant 0 : index
    %c0_203 = arith.constant 0 : index
    %269 = vector.load %arg4[%c3_201, %c0_202, %c0_203] : memref<9x64x64xbf16, #tpu.memory_space<vmem>>, vector<1x64x64xbf16>
    %270 = vector.shape_cast %269 : vector<1x64x64xbf16> to vector<64x64xbf16>
    %c0_204 = arith.constant 0 : index
    %c127_205 = arith.constant 127 : index
    %271 = vector.load %arg9[%c0_204, %c127_205] : memref<64x640xbf16, #tpu.memory_space<vmem>>, vector<64x128xbf16>
    %cst_206 = arith.constant dense<0.000000e+00> : vector<64x128xf32>
    %272 = tpu.matmul %270, %271, %cst_206 {dimension_numbers = #tpu.dot_dimension_numbers<[1], [0], [0], [1], [0, 0, 1, 1], [], []>} : vector<64x64xbf16>, vector<64x128xbf16>, vector<64x128xf32> -> vector<64x128xf32>
    %273 = arith.addf %268, %272 : vector<64x128xf32>
    %c4_207 = arith.constant 4 : index
    %c0_208 = arith.constant 0 : index
    %c0_209 = arith.constant 0 : index
    %274 = vector.load %arg4[%c4_207, %c0_208, %c0_209] : memref<9x64x64xbf16, #tpu.memory_space<vmem>>, vector<1x64x64xbf16>
    %275 = vector.shape_cast %274 : vector<1x64x64xbf16> to vector<64x64xbf16>
    %c0_210 = arith.constant 0 : index
    %c128_211 = arith.constant 128 : index
    %276 = vector.load %arg9[%c0_210, %c128_211] : memref<64x640xbf16, #tpu.memory_space<vmem>>, vector<64x128xbf16>
    %cst_212 = arith.constant dense<0.000000e+00> : vector<64x128xf32>
    %277 = tpu.matmul %275, %276, %cst_212 {dimension_numbers = #tpu.dot_dimension_numbers<[1], [0], [0], [1], [0, 0, 1, 1], [], []>} : vector<64x64xbf16>, vector<64x128xbf16>, vector<64x128xf32> -> vector<64x128xf32>
    %278 = arith.addf %273, %277 : vector<64x128xf32>
    %c5_213 = arith.constant 5 : index
    %c0_214 = arith.constant 0 : index
    %c0_215 = arith.constant 0 : index
    %279 = vector.load %arg4[%c5_213, %c0_214, %c0_215] : memref<9x64x64xbf16, #tpu.memory_space<vmem>>, vector<1x64x64xbf16>
    %280 = vector.shape_cast %279 : vector<1x64x64xbf16> to vector<64x64xbf16>
    %c0_216 = arith.constant 0 : index
    %c129_217 = arith.constant 129 : index
    %281 = vector.load %arg9[%c0_216, %c129_217] : memref<64x640xbf16, #tpu.memory_space<vmem>>, vector<64x128xbf16>
    %cst_218 = arith.constant dense<0.000000e+00> : vector<64x128xf32>
    %282 = tpu.matmul %280, %281, %cst_218 {dimension_numbers = #tpu.dot_dimension_numbers<[1], [0], [0], [1], [0, 0, 1, 1], [], []>} : vector<64x64xbf16>, vector<64x128xbf16>, vector<64x128xf32> -> vector<64x128xf32>
    %283 = arith.addf %278, %282 : vector<64x128xf32>
    %c6_219 = arith.constant 6 : index
    %c0_220 = arith.constant 0 : index
    %c0_221 = arith.constant 0 : index
    %284 = vector.load %arg4[%c6_219, %c0_220, %c0_221] : memref<9x64x64xbf16, #tpu.memory_space<vmem>>, vector<1x64x64xbf16>
    %285 = vector.shape_cast %284 : vector<1x64x64xbf16> to vector<64x64xbf16>
    %c0_222 = arith.constant 0 : index
    %c145_223 = arith.constant 145 : index
    %286 = vector.load %arg9[%c0_222, %c145_223] : memref<64x640xbf16, #tpu.memory_space<vmem>>, vector<64x128xbf16>
    %cst_224 = arith.constant dense<0.000000e+00> : vector<64x128xf32>
    %287 = tpu.matmul %285, %286, %cst_224 {dimension_numbers = #tpu.dot_dimension_numbers<[1], [0], [0], [1], [0, 0, 1, 1], [], []>} : vector<64x64xbf16>, vector<64x128xbf16>, vector<64x128xf32> -> vector<64x128xf32>
    %288 = arith.addf %283, %287 : vector<64x128xf32>
    %c7_225 = arith.constant 7 : index
    %c0_226 = arith.constant 0 : index
    %c0_227 = arith.constant 0 : index
    %289 = vector.load %arg4[%c7_225, %c0_226, %c0_227] : memref<9x64x64xbf16, #tpu.memory_space<vmem>>, vector<1x64x64xbf16>
    %290 = vector.shape_cast %289 : vector<1x64x64xbf16> to vector<64x64xbf16>
    %c0_228 = arith.constant 0 : index
    %c146_229 = arith.constant 146 : index
    %291 = vector.load %arg9[%c0_228, %c146_229] : memref<64x640xbf16, #tpu.memory_space<vmem>>, vector<64x128xbf16>
    %cst_230 = arith.constant dense<0.000000e+00> : vector<64x128xf32>
    %292 = tpu.matmul %290, %291, %cst_230 {dimension_numbers = #tpu.dot_dimension_numbers<[1], [0], [0], [1], [0, 0, 1, 1], [], []>} : vector<64x64xbf16>, vector<64x128xbf16>, vector<64x128xf32> -> vector<64x128xf32>
    %293 = arith.addf %288, %292 : vector<64x128xf32>
    %c8_231 = arith.constant 8 : index
    %c0_232 = arith.constant 0 : index
    %c0_233 = arith.constant 0 : index
    %294 = vector.load %arg4[%c8_231, %c0_232, %c0_233] : memref<9x64x64xbf16, #tpu.memory_space<vmem>>, vector<1x64x64xbf16>
    %295 = vector.shape_cast %294 : vector<1x64x64xbf16> to vector<64x64xbf16>
    %c0_234 = arith.constant 0 : index
    %c147_235 = arith.constant 147 : index
    %296 = vector.load %arg9[%c0_234, %c147_235] : memref<64x640xbf16, #tpu.memory_space<vmem>>, vector<64x128xbf16>
    %cst_236 = arith.constant dense<0.000000e+00> : vector<64x128xf32>
    %297 = tpu.matmul %295, %296, %cst_236 {dimension_numbers = #tpu.dot_dimension_numbers<[1], [0], [0], [1], [0, 0, 1, 1], [], []>} : vector<64x64xbf16>, vector<64x128xbf16>, vector<64x128xf32> -> vector<64x128xf32>
    %298 = arith.addf %293, %297 : vector<64x128xf32>
    %c0_237 = arith.constant 0 : index
    %c0_238 = arith.constant 0 : index
    %299 = vector.load %arg5[%c0_237, %c0_238] : memref<64x1xf32, #tpu.memory_space<vmem>>, vector<64x1xf32>
    %300 = vector.broadcast %299 : vector<64x1xf32> to vector<64x128xf32>
    %301 = arith.addf %298, %300 : vector<64x128xf32>
    %cst_239 = arith.constant 0.000000e+00 : f32
    %302 = vector.broadcast %cst_239 : f32 to vector<64x128xf32>
    %303 = arith.maximumf %301, %302 : vector<64x128xf32>
    %c0_240 = arith.constant 0 : index
    %c0_241 = arith.constant 0 : index
    %304 = vector.load %arg6[%c0_240, %c0_241] : memref<1x64xbf16, #tpu.memory_space<vmem>>, vector<1x64xbf16>
    %305 = arith.truncf %303 : vector<64x128xf32> to vector<64x128xbf16>
    %cst_242 = arith.constant dense<0.000000e+00> : vector<1x128xf32>
    %306 = tpu.matmul %304, %305, %cst_242 {dimension_numbers = #tpu.dot_dimension_numbers<[1], [0], [0], [1], [0, 0, 1, 1], [], []>} : vector<1x64xbf16>, vector<64x128xbf16>, vector<1x128xf32> -> vector<1x128xf32>
    %c0_243 = arith.constant 0 : index
    %c0_244 = arith.constant 0 : index
    %307 = vector.load %arg7[%c0_243, %c0_244] : memref<1x1xf32, #tpu.memory_space<vmem>>, vector<1x1xf32>
    %308 = vector.broadcast %307 : vector<1x1xf32> to vector<1x128xf32>
    %309 = arith.addf %306, %308 : vector<1x128xf32>
    %c0_245 = arith.constant 0 : index
    %c0_246 = arith.constant 0 : index
    %c0_247 = arith.constant 0 : index
    %310 = vector.load %arg8[%c0_245, %c0_246, %c0_247] : memref<1x1x384xf32, #tpu.memory_space<vmem>>, vector<1x1x128xf32>
    %311 = vector.shape_cast %310 : vector<1x1x128xf32> to vector<1x128xf32>
    %312 = vector.shape_cast %309 : vector<1x128xf32> to vector<1x1x128xf32>
    tpu.vector_store %arg8[%c0_245, %c0_246, %c0_247], %312 {strides = array<i32>} : memref<1x1x384xf32, #tpu.memory_space<vmem>>, vector<1x1x128xf32>,
    %c0_248 = arith.constant 0 : index
    %c0_249 = arith.constant 0 : index
    %c0_250 = arith.constant 0 : index
    %313 = vector.load %arg4[%c0_248, %c0_249, %c0_250] : memref<9x64x64xbf16, #tpu.memory_space<vmem>>, vector<1x64x64xbf16>
    %314 = vector.shape_cast %313 : vector<1x64x64xbf16> to vector<64x64xbf16>
    %c0_251 = arith.constant 0 : index
    %c237_252 = arith.constant 237 : index
    %315 = vector.load %arg9[%c0_251, %c237_252] : memref<64x640xbf16, #tpu.memory_space<vmem>>, vector<64x128xbf16>
    %cst_253 = arith.constant dense<0.000000e+00> : vector<64x128xf32>
    %316 = tpu.matmul %314, %315, %cst_253 {dimension_numbers = #tpu.dot_dimension_numbers<[1], [0], [0], [1], [0, 0, 1, 1], [], []>} : vector<64x64xbf16>, vector<64x128xbf16>, vector<64x128xf32> -> vector<64x128xf32>
    %c1_254 = arith.constant 1 : index
    %c0_255 = arith.constant 0 : index
    %c0_256 = arith.constant 0 : index
    %317 = vector.load %arg4[%c1_254, %c0_255, %c0_256] : memref<9x64x64xbf16, #tpu.memory_space<vmem>>, vector<1x64x64xbf16>
    %318 = vector.shape_cast %317 : vector<1x64x64xbf16> to vector<64x64xbf16>
    %c0_257 = arith.constant 0 : index
    %c238_258 = arith.constant 238 : index
    %319 = vector.load %arg9[%c0_257, %c238_258] : memref<64x640xbf16, #tpu.memory_space<vmem>>, vector<64x128xbf16>
    %cst_259 = arith.constant dense<0.000000e+00> : vector<64x128xf32>
    %320 = tpu.matmul %318, %319, %cst_259 {dimension_numbers = #tpu.dot_dimension_numbers<[1], [0], [0], [1], [0, 0, 1, 1], [], []>} : vector<64x64xbf16>, vector<64x128xbf16>, vector<64x128xf32> -> vector<64x128xf32>
    %321 = arith.addf %316, %320 : vector<64x128xf32>
    %c2_260 = arith.constant 2 : index
    %c0_261 = arith.constant 0 : index
    %c0_262 = arith.constant 0 : index
    %322 = vector.load %arg4[%c2_260, %c0_261, %c0_262] : memref<9x64x64xbf16, #tpu.memory_space<vmem>>, vector<1x64x64xbf16>
    %323 = vector.shape_cast %322 : vector<1x64x64xbf16> to vector<64x64xbf16>
    %c0_263 = arith.constant 0 : index
    %c239_264 = arith.constant 239 : index
    %324 = vector.load %arg9[%c0_263, %c239_264] : memref<64x640xbf16, #tpu.memory_space<vmem>>, vector<64x128xbf16>
    %cst_265 = arith.constant dense<0.000000e+00> : vector<64x128xf32>
    %325 = tpu.matmul %323, %324, %cst_265 {dimension_numbers = #tpu.dot_dimension_numbers<[1], [0], [0], [1], [0, 0, 1, 1], [], []>} : vector<64x64xbf16>, vector<64x128xbf16>, vector<64x128xf32> -> vector<64x128xf32>
    %326 = arith.addf %321, %325 : vector<64x128xf32>
    %c3_266 = arith.constant 3 : index
    %c0_267 = arith.constant 0 : index
    %c0_268 = arith.constant 0 : index
    %327 = vector.load %arg4[%c3_266, %c0_267, %c0_268] : memref<9x64x64xbf16, #tpu.memory_space<vmem>>, vector<1x64x64xbf16>
    %328 = vector.shape_cast %327 : vector<1x64x64xbf16> to vector<64x64xbf16>
    %c0_269 = arith.constant 0 : index
    %c255_270 = arith.constant 255 : index
    %329 = vector.load %arg9[%c0_269, %c255_270] : memref<64x640xbf16, #tpu.memory_space<vmem>>, vector<64x128xbf16>
    %cst_271 = arith.constant dense<0.000000e+00> : vector<64x128xf32>
    %330 = tpu.matmul %328, %329, %cst_271 {dimension_numbers = #tpu.dot_dimension_numbers<[1], [0], [0], [1], [0, 0, 1, 1], [], []>} : vector<64x64xbf16>, vector<64x128xbf16>, vector<64x128xf32> -> vector<64x128xf32>
    %331 = arith.addf %326, %330 : vector<64x128xf32>
    %c4_272 = arith.constant 4 : index
    %c0_273 = arith.constant 0 : index
    %c0_274 = arith.constant 0 : index
    %332 = vector.load %arg4[%c4_272, %c0_273, %c0_274] : memref<9x64x64xbf16, #tpu.memory_space<vmem>>, vector<1x64x64xbf16>
    %333 = vector.shape_cast %332 : vector<1x64x64xbf16> to vector<64x64xbf16>
    %c0_275 = arith.constant 0 : index
    %c256_276 = arith.constant 256 : index
    %334 = vector.load %arg9[%c0_275, %c256_276] : memref<64x640xbf16, #tpu.memory_space<vmem>>, vector<64x128xbf16>
    %cst_277 = arith.constant dense<0.000000e+00> : vector<64x128xf32>
    %335 = tpu.matmul %333, %334, %cst_277 {dimension_numbers = #tpu.dot_dimension_numbers<[1], [0], [0], [1], [0, 0, 1, 1], [], []>} : vector<64x64xbf16>, vector<64x128xbf16>, vector<64x128xf32> -> vector<64x128xf32>
    %336 = arith.addf %331, %335 : vector<64x128xf32>
    %c5_278 = arith.constant 5 : index
    %c0_279 = arith.constant 0 : index
    %c0_280 = arith.constant 0 : index
    %337 = vector.load %arg4[%c5_278, %c0_279, %c0_280] : memref<9x64x64xbf16, #tpu.memory_space<vmem>>, vector<1x64x64xbf16>
    %338 = vector.shape_cast %337 : vector<1x64x64xbf16> to vector<64x64xbf16>
    %c0_281 = arith.constant 0 : index
    %c257_282 = arith.constant 257 : index
    %339 = vector.load %arg9[%c0_281, %c257_282] : memref<64x640xbf16, #tpu.memory_space<vmem>>, vector<64x128xbf16>
    %cst_283 = arith.constant dense<0.000000e+00> : vector<64x128xf32>
    %340 = tpu.matmul %338, %339, %cst_283 {dimension_numbers = #tpu.dot_dimension_numbers<[1], [0], [0], [1], [0, 0, 1, 1], [], []>} : vector<64x64xbf16>, vector<64x128xbf16>, vector<64x128xf32> -> vector<64x128xf32>
    %341 = arith.addf %336, %340 : vector<64x128xf32>
    %c6_284 = arith.constant 6 : index
    %c0_285 = arith.constant 0 : index
    %c0_286 = arith.constant 0 : index
    %342 = vector.load %arg4[%c6_284, %c0_285, %c0_286] : memref<9x64x64xbf16, #tpu.memory_space<vmem>>, vector<1x64x64xbf16>
    %343 = vector.shape_cast %342 : vector<1x64x64xbf16> to vector<64x64xbf16>
    %c0_287 = arith.constant 0 : index
    %c273_288 = arith.constant 273 : index
    %344 = vector.load %arg9[%c0_287, %c273_288] : memref<64x640xbf16, #tpu.memory_space<vmem>>, vector<64x128xbf16>
    %cst_289 = arith.constant dense<0.000000e+00> : vector<64x128xf32>
    %345 = tpu.matmul %343, %344, %cst_289 {dimension_numbers = #tpu.dot_dimension_numbers<[1], [0], [0], [1], [0, 0, 1, 1], [], []>} : vector<64x64xbf16>, vector<64x128xbf16>, vector<64x128xf32> -> vector<64x128xf32>
    %346 = arith.addf %341, %345 : vector<64x128xf32>
    %c7_290 = arith.constant 7 : index
    %c0_291 = arith.constant 0 : index
    %c0_292 = arith.constant 0 : index
    %347 = vector.load %arg4[%c7_290, %c0_291, %c0_292] : memref<9x64x64xbf16, #tpu.memory_space<vmem>>, vector<1x64x64xbf16>
    %348 = vector.shape_cast %347 : vector<1x64x64xbf16> to vector<64x64xbf16>
    %c0_293 = arith.constant 0 : index
    %c274_294 = arith.constant 274 : index
    %349 = vector.load %arg9[%c0_293, %c274_294] : memref<64x640xbf16, #tpu.memory_space<vmem>>, vector<64x128xbf16>
    %cst_295 = arith.constant dense<0.000000e+00> : vector<64x128xf32>
    %350 = tpu.matmul %348, %349, %cst_295 {dimension_numbers = #tpu.dot_dimension_numbers<[1], [0], [0], [1], [0, 0, 1, 1], [], []>} : vector<64x64xbf16>, vector<64x128xbf16>, vector<64x128xf32> -> vector<64x128xf32>
    %351 = arith.addf %346, %350 : vector<64x128xf32>
    %c8_296 = arith.constant 8 : index
    %c0_297 = arith.constant 0 : index
    %c0_298 = arith.constant 0 : index
    %352 = vector.load %arg4[%c8_296, %c0_297, %c0_298] : memref<9x64x64xbf16, #tpu.memory_space<vmem>>, vector<1x64x64xbf16>
    %353 = vector.shape_cast %352 : vector<1x64x64xbf16> to vector<64x64xbf16>
    %c0_299 = arith.constant 0 : index
    %c275_300 = arith.constant 275 : index
    %354 = vector.load %arg9[%c0_299, %c275_300] : memref<64x640xbf16, #tpu.memory_space<vmem>>, vector<64x128xbf16>
    %cst_301 = arith.constant dense<0.000000e+00> : vector<64x128xf32>
    %355 = tpu.matmul %353, %354, %cst_301 {dimension_numbers = #tpu.dot_dimension_numbers<[1], [0], [0], [1], [0, 0, 1, 1], [], []>} : vector<64x64xbf16>, vector<64x128xbf16>, vector<64x128xf32> -> vector<64x128xf32>
    %356 = arith.addf %351, %355 : vector<64x128xf32>
    %c0_302 = arith.constant 0 : index
    %c0_303 = arith.constant 0 : index
    %357 = vector.load %arg5[%c0_302, %c0_303] : memref<64x1xf32, #tpu.memory_space<vmem>>, vector<64x1xf32>
    %358 = vector.broadcast %357 : vector<64x1xf32> to vector<64x128xf32>
    %359 = arith.addf %356, %358 : vector<64x128xf32>
    %cst_304 = arith.constant 0.000000e+00 : f32
    %360 = vector.broadcast %cst_304 : f32 to vector<64x128xf32>
    %361 = arith.maximumf %359, %360 : vector<64x128xf32>
    %c0_305 = arith.constant 0 : index
    %c0_306 = arith.constant 0 : index
    %362 = vector.load %arg6[%c0_305, %c0_306] : memref<1x64xbf16, #tpu.memory_space<vmem>>, vector<1x64xbf16>
    %363 = arith.truncf %361 : vector<64x128xf32> to vector<64x128xbf16>
    %cst_307 = arith.constant dense<0.000000e+00> : vector<1x128xf32>
    %364 = tpu.matmul %362, %363, %cst_307 {dimension_numbers = #tpu.dot_dimension_numbers<[1], [0], [0], [1], [0, 0, 1, 1], [], []>} : vector<1x64xbf16>, vector<64x128xbf16>, vector<1x128xf32> -> vector<1x128xf32>
    %c0_308 = arith.constant 0 : index
    %c0_309 = arith.constant 0 : index
    %365 = vector.load %arg7[%c0_308, %c0_309] : memref<1x1xf32, #tpu.memory_space<vmem>>, vector<1x1xf32>
    %366 = vector.broadcast %365 : vector<1x1xf32> to vector<1x128xf32>
    %367 = arith.addf %364, %366 : vector<1x128xf32>
    %c0_310 = arith.constant 0 : index
    %c0_311 = arith.constant 0 : index
    %c128_312 = arith.constant 128 : index
    %368 = vector.load %arg8[%c0_310, %c0_311, %c128_312] : memref<1x1x384xf32, #tpu.memory_space<vmem>>, vector<1x1x128xf32>
    %369 = vector.shape_cast %368 : vector<1x1x128xf32> to vector<1x128xf32>
    %370 = vector.shape_cast %367 : vector<1x128xf32> to vector<1x1x128xf32>
    tpu.vector_store %arg8[%c0_310, %c0_311, %c128_312], %370 {strides = array<i32>} : memref<1x1x384xf32, #tpu.memory_space<vmem>>, vector<1x1x128xf32>,
    %c0_313 = arith.constant 0 : index
    %c0_314 = arith.constant 0 : index
    %c0_315 = arith.constant 0 : index
    %371 = vector.load %arg4[%c0_313, %c0_314, %c0_315] : memref<9x64x64xbf16, #tpu.memory_space<vmem>>, vector<1x64x64xbf16>
    %372 = vector.shape_cast %371 : vector<1x64x64xbf16> to vector<64x64xbf16>
    %c0_316 = arith.constant 0 : index
    %c365_317 = arith.constant 365 : index
    %373 = vector.load %arg9[%c0_316, %c365_317] : memref<64x640xbf16, #tpu.memory_space<vmem>>, vector<64x128xbf16>
    %cst_318 = arith.constant dense<0.000000e+00> : vector<64x128xf32>
    %374 = tpu.matmul %372, %373, %cst_318 {dimension_numbers = #tpu.dot_dimension_numbers<[1], [0], [0], [1], [0, 0, 1, 1], [], []>} : vector<64x64xbf16>, vector<64x128xbf16>, vector<64x128xf32> -> vector<64x128xf32>
    %c1_319 = arith.constant 1 : index
    %c0_320 = arith.constant 0 : index
    %c0_321 = arith.constant 0 : index
    %375 = vector.load %arg4[%c1_319, %c0_320, %c0_321] : memref<9x64x64xbf16, #tpu.memory_space<vmem>>, vector<1x64x64xbf16>
    %376 = vector.shape_cast %375 : vector<1x64x64xbf16> to vector<64x64xbf16>
    %c0_322 = arith.constant 0 : index
    %c366_323 = arith.constant 366 : index
    %377 = vector.load %arg9[%c0_322, %c366_323] : memref<64x640xbf16, #tpu.memory_space<vmem>>, vector<64x128xbf16>
    %cst_324 = arith.constant dense<0.000000e+00> : vector<64x128xf32>
    %378 = tpu.matmul %376, %377, %cst_324 {dimension_numbers = #tpu.dot_dimension_numbers<[1], [0], [0], [1], [0, 0, 1, 1], [], []>} : vector<64x64xbf16>, vector<64x128xbf16>, vector<64x128xf32> -> vector<64x128xf32>
    %379 = arith.addf %374, %378 : vector<64x128xf32>
    %c2_325 = arith.constant 2 : index
    %c0_326 = arith.constant 0 : index
    %c0_327 = arith.constant 0 : index
    %380 = vector.load %arg4[%c2_325, %c0_326, %c0_327] : memref<9x64x64xbf16, #tpu.memory_space<vmem>>, vector<1x64x64xbf16>
    %381 = vector.shape_cast %380 : vector<1x64x64xbf16> to vector<64x64xbf16>
    %c0_328 = arith.constant 0 : index
    %c367_329 = arith.constant 367 : index
    %382 = vector.load %arg9[%c0_328, %c367_329] : memref<64x640xbf16, #tpu.memory_space<vmem>>, vector<64x128xbf16>
    %cst_330 = arith.constant dense<0.000000e+00> : vector<64x128xf32>
    %383 = tpu.matmul %381, %382, %cst_330 {dimension_numbers = #tpu.dot_dimension_numbers<[1], [0], [0], [1], [0, 0, 1, 1], [], []>} : vector<64x64xbf16>, vector<64x128xbf16>, vector<64x128xf32> -> vector<64x128xf32>
    %384 = arith.addf %379, %383 : vector<64x128xf32>
    %c3_331 = arith.constant 3 : index
    %c0_332 = arith.constant 0 : index
    %c0_333 = arith.constant 0 : index
    %385 = vector.load %arg4[%c3_331, %c0_332, %c0_333] : memref<9x64x64xbf16, #tpu.memory_space<vmem>>, vector<1x64x64xbf16>
    %386 = vector.shape_cast %385 : vector<1x64x64xbf16> to vector<64x64xbf16>
    %c0_334 = arith.constant 0 : index
    %c383_335 = arith.constant 383 : index
    %387 = vector.load %arg9[%c0_334, %c383_335] : memref<64x640xbf16, #tpu.memory_space<vmem>>, vector<64x128xbf16>
    %cst_336 = arith.constant dense<0.000000e+00> : vector<64x128xf32>
    %388 = tpu.matmul %386, %387, %cst_336 {dimension_numbers = #tpu.dot_dimension_numbers<[1], [0], [0], [1], [0, 0, 1, 1], [], []>} : vector<64x64xbf16>, vector<64x128xbf16>, vector<64x128xf32> -> vector<64x128xf32>
    %389 = arith.addf %384, %388 : vector<64x128xf32>
    %c4_337 = arith.constant 4 : index
    %c0_338 = arith.constant 0 : index
    %c0_339 = arith.constant 0 : index
    %390 = vector.load %arg4[%c4_337, %c0_338, %c0_339] : memref<9x64x64xbf16, #tpu.memory_space<vmem>>, vector<1x64x64xbf16>
    %391 = vector.shape_cast %390 : vector<1x64x64xbf16> to vector<64x64xbf16>
    %c0_340 = arith.constant 0 : index
    %c384_341 = arith.constant 384 : index
    %392 = vector.load %arg9[%c0_340, %c384_341] : memref<64x640xbf16, #tpu.memory_space<vmem>>, vector<64x128xbf16>
    %cst_342 = arith.constant dense<0.000000e+00> : vector<64x128xf32>
    %393 = tpu.matmul %391, %392, %cst_342 {dimension_numbers = #tpu.dot_dimension_numbers<[1], [0], [0], [1], [0, 0, 1, 1], [], []>} : vector<64x64xbf16>, vector<64x128xbf16>, vector<64x128xf32> -> vector<64x128xf32>
    %394 = arith.addf %389, %393 : vector<64x128xf32>
    %c5_343 = arith.constant 5 : index
    %c0_344 = arith.constant 0 : index
    %c0_345 = arith.constant 0 : index
    %395 = vector.load %arg4[%c5_343, %c0_344, %c0_345] : memref<9x64x64xbf16, #tpu.memory_space<vmem>>, vector<1x64x64xbf16>
    %396 = vector.shape_cast %395 : vector<1x64x64xbf16> to vector<64x64xbf16>
    %c0_346 = arith.constant 0 : index
    %c385_347 = arith.constant 385 : index
    %397 = vector.load %arg9[%c0_346, %c385_347] : memref<64x640xbf16, #tpu.memory_space<vmem>>, vector<64x128xbf16>
    %cst_348 = arith.constant dense<0.000000e+00> : vector<64x128xf32>
    %398 = tpu.matmul %396, %397, %cst_348 {dimension_numbers = #tpu.dot_dimension_numbers<[1], [0], [0], [1], [0, 0, 1, 1], [], []>} : vector<64x64xbf16>, vector<64x128xbf16>, vector<64x128xf32> -> vector<64x128xf32>
    %399 = arith.addf %394, %398 : vector<64x128xf32>
    %c6_349 = arith.constant 6 : index
    %c0_350 = arith.constant 0 : index
    %c0_351 = arith.constant 0 : index
    %400 = vector.load %arg4[%c6_349, %c0_350, %c0_351] : memref<9x64x64xbf16, #tpu.memory_space<vmem>>, vector<1x64x64xbf16>
    %401 = vector.shape_cast %400 : vector<1x64x64xbf16> to vector<64x64xbf16>
    %c0_352 = arith.constant 0 : index
    %c401_353 = arith.constant 401 : index
    %402 = vector.load %arg9[%c0_352, %c401_353] : memref<64x640xbf16, #tpu.memory_space<vmem>>, vector<64x128xbf16>
    %cst_354 = arith.constant dense<0.000000e+00> : vector<64x128xf32>
    %403 = tpu.matmul %401, %402, %cst_354 {dimension_numbers = #tpu.dot_dimension_numbers<[1], [0], [0], [1], [0, 0, 1, 1], [], []>} : vector<64x64xbf16>, vector<64x128xbf16>, vector<64x128xf32> -> vector<64x128xf32>
    %404 = arith.addf %399, %403 : vector<64x128xf32>
    %c7_355 = arith.constant 7 : index
    %c0_356 = arith.constant 0 : index
    %c0_357 = arith.constant 0 : index
    %405 = vector.load %arg4[%c7_355, %c0_356, %c0_357] : memref<9x64x64xbf16, #tpu.memory_space<vmem>>, vector<1x64x64xbf16>
    %406 = vector.shape_cast %405 : vector<1x64x64xbf16> to vector<64x64xbf16>
    %c0_358 = arith.constant 0 : index
    %c402_359 = arith.constant 402 : index
    %407 = vector.load %arg9[%c0_358, %c402_359] : memref<64x640xbf16, #tpu.memory_space<vmem>>, vector<64x128xbf16>
    %cst_360 = arith.constant dense<0.000000e+00> : vector<64x128xf32>
    %408 = tpu.matmul %406, %407, %cst_360 {dimension_numbers = #tpu.dot_dimension_numbers<[1], [0], [0], [1], [0, 0, 1, 1], [], []>} : vector<64x64xbf16>, vector<64x128xbf16>, vector<64x128xf32> -> vector<64x128xf32>
    %409 = arith.addf %404, %408 : vector<64x128xf32>
    %c8_361 = arith.constant 8 : index
    %c0_362 = arith.constant 0 : index
    %c0_363 = arith.constant 0 : index
    %410 = vector.load %arg4[%c8_361, %c0_362, %c0_363] : memref<9x64x64xbf16, #tpu.memory_space<vmem>>, vector<1x64x64xbf16>
    %411 = vector.shape_cast %410 : vector<1x64x64xbf16> to vector<64x64xbf16>
    %c0_364 = arith.constant 0 : index
    %c403_365 = arith.constant 403 : index
    %412 = vector.load %arg9[%c0_364, %c403_365] : memref<64x640xbf16, #tpu.memory_space<vmem>>, vector<64x128xbf16>
    %cst_366 = arith.constant dense<0.000000e+00> : vector<64x128xf32>
    %413 = tpu.matmul %411, %412, %cst_366 {dimension_numbers = #tpu.dot_dimension_numbers<[1], [0], [0], [1], [0, 0, 1, 1], [], []>} : vector<64x64xbf16>, vector<64x128xbf16>, vector<64x128xf32> -> vector<64x128xf32>
    %414 = arith.addf %409, %413 : vector<64x128xf32>
    %c0_367 = arith.constant 0 : index
    %c0_368 = arith.constant 0 : index
    %415 = vector.load %arg5[%c0_367, %c0_368] : memref<64x1xf32, #tpu.memory_space<vmem>>, vector<64x1xf32>
    %416 = vector.broadcast %415 : vector<64x1xf32> to vector<64x128xf32>
    %417 = arith.addf %414, %416 : vector<64x128xf32>
    %cst_369 = arith.constant 0.000000e+00 : f32
    %418 = vector.broadcast %cst_369 : f32 to vector<64x128xf32>
    %419 = arith.maximumf %417, %418 : vector<64x128xf32>
    %c0_370 = arith.constant 0 : index
    %c0_371 = arith.constant 0 : index
    %420 = vector.load %arg6[%c0_370, %c0_371] : memref<1x64xbf16, #tpu.memory_space<vmem>>, vector<1x64xbf16>
    %421 = arith.truncf %419 : vector<64x128xf32> to vector<64x128xbf16>
    %cst_372 = arith.constant dense<0.000000e+00> : vector<1x128xf32>
    %422 = tpu.matmul %420, %421, %cst_372 {dimension_numbers = #tpu.dot_dimension_numbers<[1], [0], [0], [1], [0, 0, 1, 1], [], []>} : vector<1x64xbf16>, vector<64x128xbf16>, vector<1x128xf32> -> vector<1x128xf32>
    %c0_373 = arith.constant 0 : index
    %c0_374 = arith.constant 0 : index
    %423 = vector.load %arg7[%c0_373, %c0_374] : memref<1x1xf32, #tpu.memory_space<vmem>>, vector<1x1xf32>
    %424 = vector.broadcast %423 : vector<1x1xf32> to vector<1x128xf32>
    %425 = arith.addf %422, %424 : vector<1x128xf32>
    %c0_375 = arith.constant 0 : index
    %c0_376 = arith.constant 0 : index
    %c256_377 = arith.constant 256 : index
    %426 = vector.load %arg8[%c0_375, %c0_376, %c256_377] : memref<1x1x384xf32, #tpu.memory_space<vmem>>, vector<1x1x128xf32>
    %427 = vector.shape_cast %426 : vector<1x1x128xf32> to vector<1x128xf32>
    %428 = vector.shape_cast %425 : vector<1x128xf32> to vector<1x1x128xf32>
    tpu.vector_store %arg8[%c0_375, %c0_376, %c256_377], %428 {strides = array<i32>} : memref<1x1x384xf32, #tpu.memory_space<vmem>>, vector<1x1x128xf32>,
    return
  }
  func.func @transform_0(%arg0: i32) -> (i32, i32, i32) {
    %c0_i32 = arith.constant 0 : i32
    %c0_i32_0 = arith.constant 0 : i32
    %c0_i32_1 = arith.constant 0 : i32
    return %arg0, %c0_i32, %c0_i32_0 : i32, i32, i32
  }
  func.func @transform_1(%arg0: i32) -> (i32, i32, i32) {
    %c0_i32 = arith.constant 0 : i32
    %c0_i32_0 = arith.constant 0 : i32
    %c0_i32_1 = arith.constant 0 : i32
    %c0_i32_2 = arith.constant 0 : i32
    return %c0_i32, %c0_i32_0, %c0_i32_1 : i32, i32, i32
  }
  func.func @transform_2(%arg0: i32) -> (i32, i32) {
    %c0_i32 = arith.constant 0 : i32
    %c0_i32_0 = arith.constant 0 : i32
    %c0_i32_1 = arith.constant 0 : i32
    return %c0_i32, %c0_i32_0 : i32, i32
  }
  func.func @transform_3(%arg0: i32) -> (i32, i32, i32) {
    %c0_i32 = arith.constant 0 : i32
    %c0_i32_0 = arith.constant 0 : i32
    %c0_i32_1 = arith.constant 0 : i32
    %c0_i32_2 = arith.constant 0 : i32
    return %c0_i32, %c0_i32_0, %c0_i32_1 : i32, i32, i32
  }
  func.func @transform_4(%arg0: i32) -> (i32, i32) {
    %c0_i32 = arith.constant 0 : i32
    %c0_i32_0 = arith.constant 0 : i32
    %c0_i32_1 = arith.constant 0 : i32
    return %c0_i32, %c0_i32_0 : i32, i32
  }
  func.func @transform_5(%arg0: i32) -> (i32, i32) {
    %c0_i32 = arith.constant 0 : i32
    %c0_i32_0 = arith.constant 0 : i32
    %c0_i32_1 = arith.constant 0 : i32
    return %c0_i32, %c0_i32_0 : i32, i32
  }
  func.func @transform_6(%arg0: i32) -> (i32, i32) {
    %c0_i32 = arith.constant 0 : i32
    %c0_i32_0 = arith.constant 0 : i32
    %c0_i32_1 = arith.constant 0 : i32
    return %c0_i32, %c0_i32_0 : i32, i32
  }
  func.func @transform_7(%arg0: i32) -> (i32, i32, i32) {
    %c0_i32 = arith.constant 0 : i32
    %c0_i32_0 = arith.constant 0 : i32
    %c0_i32_1 = arith.constant 0 : i32
    return %arg0, %c0_i32, %c0_i32_0 : i32, i32, i32
  }
}

</mosaic_0001>

<llo_original>
// kernel: tpu_custom_call.1
$region0: #{tpu_custom_call.1}
  #allocation0 [shape = 'u32[]', space=smem, size = 0x4, offset = 0x4, fixed_abs, tag = 'smem constant byte address 0x4 - core index']
  #allocation1 [shape = 'u32[144,128]{1,0:T(1,128)}', space=vmem, size = 0x12000, scoped, tag = 'internal scratch']
  #allocation2 [shape = 'bf16[64,640]{1,0:T(16,128)(2,1)}', space=vmem, size = 0x14000, scoped, tag = 'scratch operand']
  #allocation3 [shape = 'f32[1,1]{1,0:T(1,128)S(1)}', space=vmem, size = 0x200, scoped, tag = 'scoped memory for tpu_custom_call.1']
  %s0 = inlined_call_operand.hbm [shape: bf16[2,64,640], index: 0, kind: input, shape index: {}]
  %s1 = inlined_call_operand.hbm [shape: bf16[9,64,64], index: 1, kind: input, shape index: {}]
  %s2 = inlined_call_operand.vmem [shape: f32[64,1], index: 2, kind: input, shape index: {}]
  %s3 = inlined_call_operand.hbm [shape: bf16[9,64,64], index: 3, kind: input, shape index: {}]
  %s4 = inlined_call_operand.vmem [shape: f32[64,1], index: 4, kind: input, shape index: {}]
  %s5 = inlined_call_operand.vmem [shape: bf16[1,64], index: 5, kind: input, shape index: {}]
  %s6 = inlined_call_operand.<no memory space> [shape: f32[1,1], index: 6, kind: input, shape index: {}]
  %s7 = inlined_call_operand.hbm [shape: f32[2,1,384], index: 7, kind: output, shape index: {}]
  %s8 = sld [smem:[#allocation0]]
  $region73: #{tpu_custom_call.1} parent=0
    _
  %s10 = ssub.s32 1, %s8
  %s11 = scalar_select 0, %s10, %s8
  %v12 = vstv %s6
  %13 = vst [vmem:[#allocation3] sm:$0x1] %v12
  $region1: #{tpu_custom_call.1} parent=0
    #allocation4 [shape = 'u8[163840]{0}', space=vmem, size = 0x28000, scoped, tag = 'input window, operand 0']
    #allocation5 [shape = 's32[2]{0}', space=sflag, size = 0x8, scoped, tag = 'scoped memory for tpu_custom_call.1']
    #allocation6 [shape = 's32[2]{0}', space=sflag, size = 0x8, scoped, tag = 'scoped memory for tpu_custom_call.1']
    #allocation7 [shape = 'u8[147456]{0}', space=vmem, size = 0x24000, scoped, tag = 'input window, operand 1, single buffered']
    #allocation8 [shape = 's32[1]{0}', space=sflag, size = 0x4, scoped, tag = 'scoped memory for tpu_custom_call.1']
    #allocation9 [shape = 'u8[147456]{0}', space=vmem, size = 0x24000, scoped, tag = 'input window, operand 3, single buffered']
    #allocation10 [shape = 'u8[3072]{0}', space=vmem, size = 0xc00, scoped, tag = 'output window, operand 0']
    %14 = vsyncpa [#allocation5], 0
    %s15 = scalar_lea.sflag [#allocation5], 1
    %16 = vsyncpa %s15, 0
    %17 = vsyncpa [#allocation8], 0
    %18 = vsyncpa [#allocation6], 0
    %s19 = scalar_lea.sflag [#allocation6], 1
    %20 = vsyncpa %s19, 0
    loop: start=0, step=1, limit=4
    $region2: #{tpu_custom_call.1} parent=1 // loop_pre_header
      _
    $region3: #{tpu_custom_call.1} parent=1 // loop_header
      %s22 = sphi 0, %s26
      %p23 = scmp.ge.s32.totalorder %s22, 4
      %s32 = sphi 0, %s34
      %s35 = sphi 0, %s32
      %s36 = sphi 0, %s35
      %s52 = sphi 0, %s36
      %s56 = sphi 0, %s56
      %s58 = sphi 0, %s56
      %s59 = sphi 0, %s58
      %s73 = sphi 0, %s59
      %s77 = sphi 0, %s77
      %s79 = sphi 0, %s77
      %s80 = sphi 0, %s79
      %s94 = sphi 0, %s80
      %s98 = sphi 0, %s98
      %s100 = sphi 0, %s98
      %s101 = sphi 0, %s100
      %s115 = sphi 0, %s101
      %s119 = sphi 0, %s119
      %s121 = sphi 0, %s119
      %s122 = sphi 0, %s121
      %s136 = sphi 0, %s122
      %s140 = sphi 0, %s140
      %s142 = sphi 0, %s140
      %s143 = sphi 0, %s142
      %s157 = sphi 0, %s143
      %s161 = sphi 0, %s161
      %s163 = sphi 0, %s161
      %s164 = sphi 0, %s163
      %s178 = sphi 0, %s164
      %s184 = sphi 0, %s186
      %s187 = sphi 0, %s184
      %s188 = sphi 0, %s187
      %s204 = sphi 0, %s188
    $region4: #{tpu_custom_call.1} parent=1 // loop_header_branch
      %25 = sbr.rel (%p23) target = $region8
    $region5: #{tpu_custom_call.1} parent=1 // loop_body
      %s27 = ssub.s32 %s22, 1
      %s28 = ssub.s32 %s22, 2
      %s29 = sadd.s32 %s22, 1
      %s30 = ssub.s32 %s22, %s29
      %p31 = scmp.eq.s32.totalorder %s30, 0
      %s33 = sadd.s32 %s32, 1
      %s34 = scalar_select %p31, %s32, %s33
      %p37 = pneg %p31
      %p38 = scmp.eq.s32.totalorder %s22, 1
      %p39 = por %p37, %p38
      %p40 = scmp.ne.s32.totalorder %s32, %s35
      %p41 = scmp.eq.s32.totalorder %s22, 0
      %p42 = por %p40, %p41
      %p43 = scmp.ne.s32.totalorder %s32, %s35
      %p44 = scmp.eq.s32.totalorder %s27, 1
      %p45 = por %p43, %p44
      %p46 = scmp.ne.s32.totalorder %s35, %s36
      %p47 = scmp.eq.s32.totalorder %s27, 0
      %p48 = por %p46, %p47
      %p49 = scmp.ne.s32.totalorder %s35, %s36
      %p50 = scmp.eq.s32.totalorder %s28, 1
      %p51 = por %p49, %p50
      %p53 = scmp.ne.s32.totalorder %s36, %s52
      %p54 = scmp.eq.s32.totalorder %s28, 0
      %p55 = por %p53, %p54
      %s57 = sadd.s32 %s56, 1
      %p60 = scmp.eq.s32.totalorder %s22, 1
      %p61 = scmp.ne.s32.totalorder %s56, %s58
      %p62 = scmp.eq.s32.totalorder %s22, 0
      %p63 = por %p61, %p62
      %p64 = scmp.ne.s32.totalorder %s56, %s58
      %p65 = scmp.eq.s32.totalorder %s27, 1
      %p66 = por %p64, %p65
      %p67 = scmp.ne.s32.totalorder %s58, %s59
      %p68 = scmp.eq.s32.totalorder %s27, 0
      %p69 = por %p67, %p68
      %p70 = scmp.ne.s32.totalorder %s58, %s59
      %p71 = scmp.eq.s32.totalorder %s28, 1
      %p72 = por %p70, %p71
      %p74 = scmp.ne.s32.totalorder %s59, %s73
      %p75 = scmp.eq.s32.totalorder %s28, 0
      %p76 = por %p74, %p75
      %s78 = sadd.s32 %s77, 1
      %p81 = scmp.eq.s32.totalorder %s22, 1
      %p82 = scmp.ne.s32.totalorder %s77, %s79
      %p83 = scmp.eq.s32.totalorder %s22, 0
      %p84 = por %p82, %p83
      %p85 = scmp.ne.s32.totalorder %s77, %s79
      %p86 = scmp.eq.s32.totalorder %s27, 1
      %p87 = por %p85, %p86
      %p88 = scmp.ne.s32.totalorder %s79, %s80
      %p89 = scmp.eq.s32.totalorder %s27, 0
      %p90 = por %p88, %p89
      %p91 = scmp.ne.s32.totalorder %s79, %s80
      %p92 = scmp.eq.s32.totalorder %s28, 1
      %p93 = por %p91, %p92
      %p95 = scmp.ne.s32.totalorder %s80, %s94
      %p96 = scmp.eq.s32.totalorder %s28, 0
      %p97 = por %p95, %p96
      %s99 = sadd.s32 %s98, 1
      %p102 = scmp.eq.s32.totalorder %s22, 1
      %p103 = scmp.ne.s32.totalorder %s98, %s100
      %p104 = scmp.eq.s32.totalorder %s22, 0
      %p105 = por %p103, %p104
      %p106 = scmp.ne.s32.totalorder %s98, %s100
      %p107 = scmp.eq.s32.totalorder %s27, 1
      %p108 = por %p106, %p107
      %p109 = scmp.ne.s32.totalorder %s100, %s101
      %p110 = scmp.eq.s32.totalorder %s27, 0
      %p111 = por %p109, %p110
      %p112 = scmp.ne.s32.totalorder %s100, %s101
      %p113 = scmp.eq.s32.totalorder %s28, 1
      %p114 = por %p112, %p113
      %p116 = scmp.ne.s32.totalorder %s101, %s115
      %p117 = scmp.eq.s32.totalorder %s28, 0
      %p118 = por %p116, %p117
      %s120 = sadd.s32 %s119, 1
      %p123 = scmp.eq.s32.totalorder %s22, 1
      %p124 = scmp.ne.s32.totalorder %s119, %s121
      %p125 = scmp.eq.s32.totalorder %s22, 0
      %p126 = por %p124, %p125
      %p127 = scmp.ne.s32.totalorder %s119, %s121
      %p128 = scmp.eq.s32.totalorder %s27, 1
      %p129 = por %p127, %p128
      %p130 = scmp.ne.s32.totalorder %s121, %s122
      %p131 = scmp.eq.s32.totalorder %s27, 0
      %p132 = por %p130, %p131
      %p133 = scmp.ne.s32.totalorder %s121, %s122
      %p134 = scmp.eq.s32.totalorder %s28, 1
      %p135 = por %p133, %p134
      %p137 = scmp.ne.s32.totalorder %s122, %s136
      %p138 = scmp.eq.s32.totalorder %s28, 0
      %p139 = por %p137, %p138
      %s141 = sadd.s32 %s140, 1
      %p144 = scmp.eq.s32.totalorder %s22, 1
      %p145 = scmp.ne.s32.totalorder %s140, %s142
      %p146 = scmp.eq.s32.totalorder %s22, 0
      %p147 = por %p145, %p146
      %p148 = scmp.ne.s32.totalorder %s140, %s142
      %p149 = scmp.eq.s32.totalorder %s27, 1
      %p150 = por %p148, %p149
      %p151 = scmp.ne.s32.totalorder %s142, %s143
      %p152 = scmp.eq.s32.totalorder %s27, 0
      %p153 = por %p151, %p152
      %p154 = scmp.ne.s32.totalorder %s142, %s143
      %p155 = scmp.eq.s32.totalorder %s28, 1
      %p156 = por %p154, %p155
      %p158 = scmp.ne.s32.totalorder %s143, %s157
      %p159 = scmp.eq.s32.totalorder %s28, 0
      %p160 = por %p158, %p159
      %s162 = sadd.s32 %s161, 1
      %p165 = scmp.eq.s32.totalorder %s22, 1
      %p166 = scmp.ne.s32.totalorder %s161, %s163
      %p167 = scmp.eq.s32.totalorder %s22, 0
      %p168 = por %p166, %p167
      %p169 = scmp.ne.s32.totalorder %s161, %s163
      %p170 = scmp.eq.s32.totalorder %s27, 1
      %p171 = por %p169, %p170
      %p172 = scmp.ne.s32.totalorder %s163, %s164
      %p173 = scmp.eq.s32.totalorder %s27, 0
      %p174 = por %p172, %p173
      %p175 = scmp.ne.s32.totalorder %s163, %s164
      %p176 = scmp.eq.s32.totalorder %s28, 1
      %p177 = por %p175, %p176
      %p179 = scmp.ne.s32.totalorder %s164, %s178
      %p180 = scmp.eq.s32.totalorder %s28, 0
      %p181 = por %p179, %p180
      %s182 = ssub.s32 %s22, %s29
      %p183 = scmp.eq.s32.totalorder %s182, 0
      %s185 = sadd.s32 %s184, 1
      %s186 = scalar_select %p183, %s184, %s185
      %p189 = pneg %p183
      %p190 = scmp.eq.s32.totalorder %s22, 1
      %p191 = por %p189, %p190
      %p192 = scmp.ne.s32.totalorder %s184, %s187
      %p193 = scmp.eq.s32.totalorder %s22, 0
      %p194 = por %p192, %p193
      %p195 = scmp.ne.s32.totalorder %s184, %s187
      %p196 = scmp.eq.s32.totalorder %s27, 1
      %p197 = por %p195, %p196
      %p198 = scmp.ne.s32.totalorder %s187, %s188
      %p199 = scmp.eq.s32.totalorder %s27, 0
      %p200 = por %p198, %p199
      %p201 = scmp.ne.s32.totalorder %s187, %s188
      %p202 = scmp.eq.s32.totalorder %s28, 1
      %p203 = por %p201, %p202
      %p205 = scmp.ne.s32.totalorder %s188, %s204
      %p206 = scmp.eq.s32.totalorder %s28, 0
      %p207 = por %p205, %p206
      %p208 = scmp.le.s32.totalorder 1, %s22
      %p209 = scmp.lt.s32.totalorder %s22, 3
      %p210 = pnand %p208, %p209
      %p211 = pneg %p210
      // Predicated region
      $region9: #{tpu_custom_call.1} parent=5 // pred_check
        _
      $region10: #{tpu_custom_call.1} parent=5 // pred_check_branch
        %213 = sbr.rel (%p210) target = $region12
      $region11: #{tpu_custom_call.1} parent=5 // pred_region
        %s214 = ssub.s32 %s22, 1
        // Predicated region
        $region13: #{tpu_custom_call.1} parent=11 // pred_check
          %p215 = pneg %p69
        $region14: #{tpu_custom_call.1} parent=11 // pred_check_branch
          %217 = sbr.rel (%p215) target = $region16
        $region15: #{tpu_custom_call.1} parent=11 // pred_region
          %s219 = ssub.s32 4608, 4608
          %220 = vsyncadd [#allocation8], %s219
          %s221 = sshll.u32 [#allocation7], 4
          %s222 = int_to_ptr.vmem [resolvable:$true] %s221
          %227 = dma.hbm_to_vmem [thread:$0]  %s1, 4608, %s222, [#allocation8], 64, 64, 4
        $region16: #{tpu_custom_call.1} parent=11 // pred_fallthru
          _
        // Predicated region
        $region17: #{tpu_custom_call.1} parent=11 // pred_check
          %p228 = pneg %p90
        $region18: #{tpu_custom_call.1} parent=11 // pred_check_branch
          %230 = sbr.rel (%p228) target = $region20
        $region19: #{tpu_custom_call.1} parent=11 // pred_region
          _
        $region20: #{tpu_custom_call.1} parent=11 // pred_fallthru
          _
        // Predicated region
        $region21: #{tpu_custom_call.1} parent=11 // pred_check
          %p231 = pneg %p111
        $region22: #{tpu_custom_call.1} parent=11 // pred_check_branch
          %233 = sbr.rel (%p231) target = $region24
        $region23: #{tpu_custom_call.1} parent=11 // pred_region
          %s235 = ssub.s32 4608, 4608
          %236 = vsyncadd [#allocation8], %s235
          %s237 = sshll.u32 [#allocation9], 4
          %s238 = int_to_ptr.vmem [resolvable:$true] %s237
          %243 = dma.hbm_to_vmem [thread:$0]  %s3, 4608, %s238, [#allocation8], 64, 64, 4
        $region24: #{tpu_custom_call.1} parent=11 // pred_fallthru
          _
        // Predicated region
        $region25: #{tpu_custom_call.1} parent=11 // pred_check
          %p244 = pneg %p132
        $region26: #{tpu_custom_call.1} parent=11 // pred_check_branch
          %246 = sbr.rel (%p244) target = $region28
        $region27: #{tpu_custom_call.1} parent=11 // pred_region
          _
        $region28: #{tpu_custom_call.1} parent=11 // pred_fallthru
          _
        // Predicated region
        $region29: #{tpu_custom_call.1} parent=11 // pred_check
          %p247 = pneg %p153
        $region30: #{tpu_custom_call.1} parent=11 // pred_check_branch
          %249 = sbr.rel (%p247) target = $region32
        $region31: #{tpu_custom_call.1} parent=11 // pred_region
          _
        $region32: #{tpu_custom_call.1} parent=11 // pred_fallthru
          _
        // Predicated region
        $region33: #{tpu_custom_call.1} parent=11 // pred_check
          %p250 = pneg %p174
        $region34: #{tpu_custom_call.1} parent=11 // pred_check_branch
          %252 = sbr.rel (%p250) target = $region36
        $region35: #{tpu_custom_call.1} parent=11 // pred_region
          _
        $region36: #{tpu_custom_call.1} parent=11 // pred_fallthru
          _
      $region12: #{tpu_custom_call.1} parent=5 // pred_fallthru
        _
      %p253 = scmp.lt.s32.totalorder %s22, 2
      // Predicated region
      $region37: #{tpu_custom_call.1} parent=5 // pred_check
        %p254 = pneg %p253
      $region38: #{tpu_custom_call.1} parent=5 // pred_check_branch
        %256 = sbr.rel (%p254) target = $region40
      $region39: #{tpu_custom_call.1} parent=5 // pred_region
        // Predicated region
        $region41: #{tpu_custom_call.1} parent=39 // pred_check
          %p257 = pneg %p42
        $region42: #{tpu_custom_call.1} parent=39 // pred_check_branch
          %259 = sbr.rel (%p257) target = $region44
        $region43: #{tpu_custom_call.1} parent=39 // pred_region
          %s260 = sand.u32 %s32, 1
          %s261 = scalar_lea.sflag [#allocation5], %s260
          %s262 = sand.u32 %s32, 1
          %s263 = smul.addr %s262, 160
          %s264 = scalar_lea.vmem [#allocation4], %s263
          %s266 = ssub.s32 2560, 2560
          %267 = vsyncadd %s261, %s266
          %s268 = smul.addr %s22, 40
          %s269 = smul.addr %s268, 64
          %s270 = scalar_lea.hbm %s0, %s269
          %s271 = sshll.u32 %s264, 4
          %s272 = int_to_ptr.vmem [resolvable:$true] %s271
          %277 = dma.hbm_to_vmem [thread:$0]  %s270, 2560, %s272, %s261, 320, 320, 20
        $region44: #{tpu_custom_call.1} parent=39 // pred_fallthru
          _
      $region40: #{tpu_custom_call.1} parent=5 // pred_fallthru
        _
      %p278 = scmp.le.s32.totalorder 1, %s22
      %p279 = scmp.lt.s32.totalorder %s22, 3
      %p280 = pnand %p278, %p279
      %p281 = pneg %p280
      // Predicated region
      $region45: #{tpu_custom_call.1} parent=5 // pred_check
        _
      $region46: #{tpu_custom_call.1} parent=5 // pred_check_branch
        %283 = sbr.rel (%p280) target = $region48
      $region47: #{tpu_custom_call.1} parent=5 // pred_region
        %s284 = ssub.s32 %s22, 1
        %s285 = sand.u32 %s35, 1
        %s286 = scalar_lea.sflag [#allocation5], %s285
        %s287 = sand.u32 %s35, 1
        %s288 = smul.addr %s287, 160
        %s289 = scalar_lea.vmem [#allocation4], %s288
        // Predicated region
        $region49: #{tpu_custom_call.1} parent=47 // pred_check
          %p290 = pneg %p48
        $region50: #{tpu_custom_call.1} parent=47 // pred_check_branch
          %292 = sbr.rel (%p290) target = $region52
        $region51: #{tpu_custom_call.1} parent=47 // pred_region
          %293 = dma.done %s286, 2560
        $region52: #{tpu_custom_call.1} parent=47 // pred_fallthru
          _
        // Predicated region
        $region53: #{tpu_custom_call.1} parent=47 // pred_check
          %p294 = pneg %p69
        $region54: #{tpu_custom_call.1} parent=47 // pred_check_branch
          %296 = sbr.rel (%p294) target = $region56
        $region55: #{tpu_custom_call.1} parent=47 // pred_region
          %297 = dma.done [#allocation8], 4608
        $region56: #{tpu_custom_call.1} parent=47 // pred_fallthru
          _
        // Predicated region
        $region57: #{tpu_custom_call.1} parent=47 // pred_check
          %p298 = pneg %p111
        $region58: #{tpu_custom_call.1} parent=47 // pred_check_branch
          %300 = sbr.rel (%p298) target = $region60
        $region59: #{tpu_custom_call.1} parent=47 // pred_region
          %301 = dma.done [#allocation8], 4608
        $region60: #{tpu_custom_call.1} parent=47 // pred_fallthru
          _
        %s302 = sand.u32 %s35, 1
        %s303 = scalar_lea.sflag [#allocation5], %s302
        %s304 = sand.u32 %s35, 1
        %s305 = smul.addr %s304, 160
        %s306 = scalar_lea.vmem [#allocation4], %s305
        %p307 = pneg %p48
        %p308 = pneg %p45
        %p309 = pneg %p69
        %p310 = pneg %p66
        %p311 = pneg %p90
        %p312 = pneg %p87
        %p313 = pneg %p111
        %p314 = pneg %p108
        %p315 = pneg %p132
        %p316 = pneg %p129
        %p317 = pneg %p153
        %p318 = pneg %p150
        %p319 = pneg %p174
        %p320 = pneg %p171
        %p321 = pneg %p200
        %p322 = pneg %p197
        %s323 = sand.u32 %s187, 1
        %s324 = scalar_lea.sflag [#allocation6], %s323
        %s325 = sand.u32 %s187, 1
        %s326 = smul.addr %s325, 3
        %s327 = scalar_lea.vmem [#allocation10], %s326
        %v329 = vld [vmem:[#allocation7] sm:$0xf]
        %v330 = vld [vmem:[#allocation7 + $0x4] sm:$0xf]
        %v331 = vld [vmem:[#allocation7 + $0x8] sm:$0xf]
        %v332 = vld [vmem:[#allocation7 + $0xc] sm:$0xf]
        %v333 = vld [vmem:[#allocation7 + $0x10] sm:$0xf]
        %v334 = vld [vmem:[#allocation7 + $0x14] sm:$0xf]
        %v335 = vld [vmem:[#allocation7 + $0x18] sm:$0xf]
        %v336 = vld [vmem:[#allocation7 + $0x1c] sm:$0xf]
        %v337 = vld [vmem:[%s289] sm:$0xff]
        %v338 = vld [vmem:[%s289 + $0x14] sm:$0xff]
        %v339 = vld [vmem:[%s289 + $0x28] sm:$0xff]
        %v340 = vld [vmem:[%s289 + $0x3c] sm:$0xff]
        %v341 = vld [vmem:[%s289 + $0x50] sm:$0xff]
        %v342 = vld [vmem:[%s289 + $0x64] sm:$0xff]
        %v343 = vld [vmem:[%s289 + $0x78] sm:$0xff]
        %v344 = vld [vmem:[%s289 + $0x8c] sm:$0xff]
        %s345 = scalar_lea.vmem [#allocation7], 32
        %v346 = vld [vmem:[%s345] sm:$0xf]
        %v347 = vld [vmem:[%s345 + $0x4] sm:$0xf]
        %v348 = vld [vmem:[%s345 + $0x8] sm:$0xf]
        %v349 = vld [vmem:[%s345 + $0xc] sm:$0xf]
        %v350 = vld [vmem:[%s345 + $0x10] sm:$0xf]
        %v351 = vld [vmem:[%s345 + $0x14] sm:$0xf]
        %v352 = vld [vmem:[%s345 + $0x18] sm:$0xf]
        %v353 = vld [vmem:[%s345 + $0x1c] sm:$0xf]
        %v362 = vunpack.c.l.b16 %v346
        %v363 = vunpack.c.l.b16 %v347
        %v364 = vunpack.c.l.b16 %v348
        %v365 = vunpack.c.l.b16 %v349
        %v366 = vunpack.c.l.b16 %v350
        %v367 = vunpack.c.l.b16 %v351
        %v368 = vunpack.c.l.b16 %v352
        %v369 = vunpack.c.l.b16 %v353
        %v370 = vpack.c.b16 %v363, %v362
        %v371 = vpack.c.b16 %v365, %v364
        %v372 = vpack.c.b16 %v367, %v366
        %v373 = vpack.c.b16 %v369, %v368
        %v382 = vunpack.c.l.b16 %v337
        %v383 = vunpack.c.h.b16 %v337
        %v384 = vunpack.c.l.b16 %v338
        %v385 = vunpack.c.h.b16 %v338
        %v386 = vunpack.c.l.b16 %v339
        %v387 = vunpack.c.h.b16 %v339
        %v388 = vunpack.c.l.b16 %v340
        %v389 = vunpack.c.h.b16 %v340
        %v390 = vunpack.c.l.b16 %v341
        %v391 = vunpack.c.h.b16 %v341
        %v392 = vunpack.c.l.b16 %v342
        %v393 = vunpack.c.h.b16 %v342
        %v394 = vunpack.c.l.b16 %v343
        %v395 = vunpack.c.h.b16 %v343
        %v396 = vunpack.c.l.b16 %v344
        %v397 = vunpack.c.h.b16 %v344
        %v398 = vpack.c.b16 %v384, %v382
        %v399 = vpack.c.b16 %v385, %v383
        %v400 = vpack.c.b16 %v388, %v386
        %v401 = vpack.c.b16 %v389, %v387
        %v402 = vpack.c.b16 %v392, %v390
        %v403 = vpack.c.b16 %v393, %v391
        %v404 = vpack.c.b16 %v396, %v394
        %v405 = vpack.c.b16 %v397, %v395
        %406 = vrot.lane.b32.xlu0 %v398, 18
        %v407 = vpop.permute.xlu0 %406
        %408 = vrot.lane.b32.xlu0 %v399, 18
        %v409 = vpop.permute.xlu0 %408
        %410 = vrot.lane.b32.xlu0 %v400, 18
        %v411 = vpop.permute.xlu0 %410
        %412 = vrot.lane.b32.xlu0 %v401, 18
        %v413 = vpop.permute.xlu0 %412
        %414 = vrot.lane.b32.xlu0 %v402, 18
        %v415 = vpop.permute.xlu0 %414
        %416 = vrot.lane.b32.xlu0 %v403, 18
        %v417 = vpop.permute.xlu0 %416
        %418 = vrot.lane.b32.xlu0 %v404, 18
        %v419 = vpop.permute.xlu0 %418
        %420 = vrot.lane.b32.xlu0 %v405, 18
        %v421 = vpop.permute.xlu0 %420
        %vm422 = vcmask 146432
        %v423 = vsel %vm422, %v407, %v409
        %v424 = vsel %vm422, %v411, %v413
        %v425 = vsel %vm422, %v415, %v417
        %v426 = vsel %vm422, %v419, %v421
        %vm431 = vcmask 523264
        %v433 = vsel %vm431, %v370, 0
        %v436 = vsel %vm431, %v371, 0
        %v439 = vsel %vm431, %v372, 0
        %v442 = vsel %vm431, %v373, 0
        %444 = vmatprep.subr.bf16.mxu0 0
        %445 = vmatpush1.bf16.msra.mxu0 %v423
        %446 = vmatprep.subr.bf16.mxu0 0
        %447 = vmatpush1.bf16.msra.mxu0 %v424
        %448 = vmatprep.subr.bf16.mxu0 0
        %449 = vmatpush1.bf16.msra.mxu0 %v425
        %450 = vmatprep.subr.bf16.mxu0 0
        %451 = vmatpush1.bf16.msra.mxu0 %v426
        %452 = vmatprep.subr.bf16.mxu0 0
        %453 = vmatpush1.bf16.msra.mxu0 0
        %454 = vmatprep.subr.bf16.mxu0 0
        %455 = vmatpush1.bf16.msra.mxu0 0
        %456 = vmatprep.subr.bf16.mxu0 0
        %457 = vmatpush1.bf16.msra.mxu0 0
        %458 = vmatprep.subr.bf16.mxu0 0
        %459 = vmatpush1.bf16.msra.mxu0 0
        %460 = vmatprep.subr.bf16.mxu0 0
        %461 = vmatpush1.bf16.msra.mxu0 0
        %462 = vmatprep.subr.bf16.mxu0 0
        %463 = vmatpush1.bf16.msra.mxu0 0
        %464 = vmatprep.subr.bf16.mxu0 0
        %465 = vmatpush1.bf16.msra.mxu0 0
        %466 = vmatprep.subr.bf16.mxu0 0
        %467 = vmatpush1.bf16.msra.mxu0 0
        %468 = vmatprep.subr.bf16.mxu0 0
        %469 = vmatpush1.bf16.msra.mxu0 0
        %470 = vmatprep.subr.bf16.mxu0 0
        %471 = vmatpush1.bf16.msra.mxu0 0
        %472 = vmatprep.subr.bf16.mxu0 0
        %473 = vmatpush1.bf16.msra.mxu0 0
        %474 = vmatprep.subr.bf16.mxu0 0
        %475 = vmatpush1.bf16.msra.mxu0 0
        %476 = vmatprep.mubr.bf16.mxu0 0
        %477 = vmatmul.mubr.bf16.gmra.mrb[0].mxu0 %v433
        %v478 = vpop.f32.mrb[0].mxu0
        %v479 = vadd.f32 0.0, %v478
        %v480 = vpop.f32.mrb[0].mxu0
        %v481 = vpop.f32.mrb[0].mxu0
        %v482 = vadd.f32 0.0, %v481
        %v483 = vpop.f32.mrb[0].mxu0
        %484 = vmatprep.mubr.bf16.mxu0 0
        %485 = vmatmul.mubr.bf16.gmra.mrb[0].mxu0 %v436
        %v486 = vpop.f32.mrb[0].mxu0
        %v487 = vadd.f32 0.0, %v486
        %v488 = vpop.f32.mrb[0].mxu0
        %v489 = vpop.f32.mrb[0].mxu0
        %v490 = vadd.f32 0.0, %v489
        %v491 = vpop.f32.mrb[0].mxu0
        %492 = vmatprep.mubr.bf16.mxu0 0
        %493 = vmatmul.mubr.bf16.gmra.mrb[0].mxu0 %v439
        %v494 = vpop.f32.mrb[0].mxu0
        %v495 = vadd.f32 0.0, %v494
        %v496 = vpop.f32.mrb[0].mxu0
        %v497 = vpop.f32.mrb[0].mxu0
        %v498 = vadd.f32 0.0, %v497
        %v499 = vpop.f32.mrb[0].mxu0
        %500 = vmatprep.mubr.bf16.mxu0 0
        %501 = vmatmul.mubr.bf16.gmra.mrb[0].mxu0 %v442
        %v502 = vpop.f32.mrb[0].mxu0
        %v503 = vadd.f32 0.0, %v502
        %v504 = vpop.f32.mrb[0].mxu0
        %v505 = vpop.f32.mrb[0].mxu0
        %v506 = vadd.f32 0.0, %v505
        %v507 = vpop.f32.mrb[0].mxu0
        %508 = vdwg.mxu0
        %v517 = vunpack.c.l.b16 %v329
        %v518 = vunpack.c.l.b16 %v330
        %v519 = vunpack.c.l.b16 %v331
        %v520 = vunpack.c.l.b16 %v332
        %v521 = vunpack.c.l.b16 %v333
        %v522 = vunpack.c.l.b16 %v334
        %v523 = vunpack.c.l.b16 %v335
        %v524 = vunpack.c.l.b16 %v336
        %v525 = vpack.c.b16 %v518, %v517
        %v526 = vpack.c.b16 %v520, %v519
        %v527 = vpack.c.b16 %v522, %v521
        %v528 = vpack.c.b16 %v524, %v523
        %529 = vrot.lane.b32.xlu0 %v398, 19
        %v530 = vpop.permute.xlu0 %529
        %531 = vrot.lane.b32.xlu0 %v399, 19
        %v532 = vpop.permute.xlu0 %531
        %533 = vrot.lane.b32.xlu0 %v400, 19
        %v534 = vpop.permute.xlu0 %533
        %535 = vrot.lane.b32.xlu0 %v401, 19
        %v536 = vpop.permute.xlu0 %535
        %537 = vrot.lane.b32.xlu0 %v402, 19
        %v538 = vpop.permute.xlu0 %537
        %539 = vrot.lane.b32.xlu0 %v403, 19
        %v540 = vpop.permute.xlu0 %539
        %541 = vrot.lane.b32.xlu0 %v404, 19
        %v542 = vpop.permute.xlu0 %541
        %543 = vrot.lane.b32.xlu0 %v405, 19
        %v544 = vpop.permute.xlu0 %543
        %vm545 = vcmask 154624
        %v546 = vsel %vm545, %v530, %v532
        %v547 = vsel %vm545, %v534, %v536
        %v548 = vsel %vm545, %v538, %v540
        %v549 = vsel %vm545, %v542, %v544
        %v555 = vsel %vm431, %v525, 0
        %v558 = vsel %vm431, %v526, 0
        %v561 = vsel %vm431, %v527, 0
        %v564 = vsel %vm431, %v528, 0
        %566 = vmatprep.subr.bf16.mxu0 0
        %567 = vmatpush1.bf16.msra.mxu0 %v546
        %568 = vmatprep.subr.bf16.mxu0 0
        %569 = vmatpush1.bf16.msra.mxu0 %v547
        %570 = vmatprep.subr.bf16.mxu0 0
        %571 = vmatpush1.bf16.msra.mxu0 %v548
        %572 = vmatprep.subr.bf16.mxu0 0
        %573 = vmatpush1.bf16.msra.mxu0 %v549
        %574 = vmatprep.subr.bf16.mxu0 0
        %575 = vmatpush1.bf16.msra.mxu0 0
        %576 = vmatprep.subr.bf16.mxu0 0
        %577 = vmatpush1.bf16.msra.mxu0 0
        %578 = vmatprep.subr.bf16.mxu0 0
        %579 = vmatpush1.bf16.msra.mxu0 0
        %580 = vmatprep.subr.bf16.mxu0 0
        %581 = vmatpush1.bf16.msra.mxu0 0
        %582 = vmatprep.subr.bf16.mxu0 0
        %583 = vmatpush1.bf16.msra.mxu0 0
        %584 = vmatprep.subr.bf16.mxu0 0
        %585 = vmatpush1.bf16.msra.mxu0 0
        %586 = vmatprep.subr.bf16.mxu0 0
        %587 = vmatpush1.bf16.msra.mxu0 0
        %588 = vmatprep.subr.bf16.mxu0 0
        %589 = vmatpush1.bf16.msra.mxu0 0
        %590 = vmatprep.subr.bf16.mxu0 0
        %591 = vmatpush1.bf16.msra.mxu0 0
        %592 = vmatprep.subr.bf16.mxu0 0
        %593 = vmatpush1.bf16.msra.mxu0 0
        %594 = vmatprep.subr.bf16.mxu0 0
        %595 = vmatpush1.bf16.msra.mxu0 0
        %596 = vmatprep.subr.bf16.mxu0 0
        %597 = vmatpush1.bf16.msra.mxu0 0
        %598 = vmatprep.mubr.bf16.mxu0 0
        %599 = vmatmul.mubr.bf16.gmra.mrb[0].mxu0 %v555
        %v600 = vpop.f32.mrb[0].mxu0
        %v601 = vadd.f32 %v479, %v600
        %v602 = vpop.f32.mrb[0].mxu0
        %v603 = vpop.f32.mrb[0].mxu0
        %v604 = vadd.f32 %v482, %v603
        %v605 = vpop.f32.mrb[0].mxu0
        %606 = vmatprep.mubr.bf16.mxu0 0
        %607 = vmatmul.mubr.bf16.gmra.mrb[0].mxu0 %v558
        %v608 = vpop.f32.mrb[0].mxu0
        %v609 = vadd.f32 %v487, %v608
        %v610 = vpop.f32.mrb[0].mxu0
        %v611 = vpop.f32.mrb[0].mxu0
        %v612 = vadd.f32 %v490, %v611
        %v613 = vpop.f32.mrb[0].mxu0
        %614 = vmatprep.mubr.bf16.mxu0 0
        %615 = vmatmul.mubr.bf16.gmra.mrb[0].mxu0 %v561
        %v616 = vpop.f32.mrb[0].mxu0
        %v617 = vadd.f32 %v495, %v616
        %v618 = vpop.f32.mrb[0].mxu0
        %v619 = vpop.f32.mrb[0].mxu0
        %v620 = vadd.f32 %v498, %v619
        %v621 = vpop.f32.mrb[0].mxu0
        %622 = vmatprep.mubr.bf16.mxu0 0
        %623 = vmatmul.mubr.bf16.gmra.mrb[0].mxu0 %v564
        %v624 = vpop.f32.mrb[0].mxu0
        %v625 = vadd.f32 %v503, %v624
        %v626 = vpop.f32.mrb[0].mxu0
        %v627 = vpop.f32.mrb[0].mxu0
        %v628 = vadd.f32 %v506, %v627
        %v629 = vpop.f32.mrb[0].mxu0
        %630 = vdwg.mxu0
        %s631 = scalar_lea.vmem [#allocation7], 64
        %v632 = vld [vmem:[%s631] sm:$0xf]
        %v633 = vld [vmem:[%s631 + $0x4] sm:$0xf]
        %v634 = vld [vmem:[%s631 + $0x8] sm:$0xf]
        %v635 = vld [vmem:[%s631 + $0xc] sm:$0xf]
        %v636 = vld [vmem:[%s631 + $0x10] sm:$0xf]
        %v637 = vld [vmem:[%s631 + $0x14] sm:$0xf]
        %v638 = vld [vmem:[%s631 + $0x18] sm:$0xf]
        %v639 = vld [vmem:[%s631 + $0x1c] sm:$0xf]
        %v648 = vunpack.c.l.b16 %v632
        %v649 = vunpack.c.l.b16 %v633
        %v650 = vunpack.c.l.b16 %v634
        %v651 = vunpack.c.l.b16 %v635
        %v652 = vunpack.c.l.b16 %v636
        %v653 = vunpack.c.l.b16 %v637
        %v654 = vunpack.c.l.b16 %v638
        %v655 = vunpack.c.l.b16 %v639
        %v656 = vpack.c.b16 %v649, %v648
        %v657 = vpack.c.b16 %v651, %v650
        %v658 = vpack.c.b16 %v653, %v652
        %v659 = vpack.c.b16 %v655, %v654
        %660 = vrot.lane.b32.xlu0 %v398, 17
        %v661 = vpop.permute.xlu0 %660
        %662 = vrot.lane.b32.xlu0 %v399, 17
        %v663 = vpop.permute.xlu0 %662
        %664 = vrot.lane.b32.xlu0 %v400, 17
        %v665 = vpop.permute.xlu0 %664
        %666 = vrot.lane.b32.xlu0 %v401, 17
        %v667 = vpop.permute.xlu0 %666
        %668 = vrot.lane.b32.xlu0 %v402, 17
        %v669 = vpop.permute.xlu0 %668
        %670 = vrot.lane.b32.xlu0 %v403, 17
        %v671 = vpop.permute.xlu0 %670
        %672 = vrot.lane.b32.xlu0 %v404, 17
        %v673 = vpop.permute.xlu0 %672
        %674 = vrot.lane.b32.xlu0 %v405, 17
        %v675 = vpop.permute.xlu0 %674
        %vm676 = vcmask 138240
        %v677 = vsel %vm676, %v661, %v663
        %v678 = vsel %vm676, %v665, %v667
        %v679 = vsel %vm676, %v669, %v671
        %v680 = vsel %vm676, %v673, %v675
        %v686 = vsel %vm431, %v656, 0
        %v689 = vsel %vm431, %v657, 0
        %v692 = vsel %vm431, %v658, 0
        %v695 = vsel %vm431, %v659, 0
        %697 = vmatprep.subr.bf16.mxu0 0
        %698 = vmatpush1.bf16.msra.mxu0 %v677
        %699 = vmatprep.subr.bf16.mxu0 0
        %700 = vmatpush1.bf16.msra.mxu0 %v678
        %701 = vmatprep.subr.bf16.mxu0 0
        %702 = vmatpush1.bf16.msra.mxu0 %v679
        %703 = vmatprep.subr.bf16.mxu0 0
        %704 = vmatpush1.bf16.msra.mxu0 %v680
        %705 = vmatprep.subr.bf16.mxu0 0
        %706 = vmatpush1.bf16.msra.mxu0 0
        %707 = vmatprep.subr.bf16.mxu0 0
        %708 = vmatpush1.bf16.msra.mxu0 0
        %709 = vmatprep.subr.bf16.mxu0 0
        %710 = vmatpush1.bf16.msra.mxu0 0
        %711 = vmatprep.subr.bf16.mxu0 0
        %712 = vmatpush1.bf16.msra.mxu0 0
        %713 = vmatprep.subr.bf16.mxu0 0
        %714 = vmatpush1.bf16.msra.mxu0 0
        %715 = vmatprep.subr.bf16.mxu0 0
        %716 = vmatpush1.bf16.msra.mxu0 0
        %717 = vmatprep.subr.bf16.mxu0 0
        %718 = vmatpush1.bf16.msra.mxu0 0
        %719 = vmatprep.subr.bf16.mxu0 0
        %720 = vmatpush1.bf16.msra.mxu0 0
        %721 = vmatprep.subr.bf16.mxu0 0
        %722 = vmatpush1.bf16.msra.mxu0 0
        %723 = vmatprep.subr.bf16.mxu0 0
        %724 = vmatpush1.bf16.msra.mxu0 0
        %725 = vmatprep.subr.bf16.mxu0 0
        %726 = vmatpush1.bf16.msra.mxu0 0
        %727 = vmatprep.subr.bf16.mxu0 0
        %728 = vmatpush1.bf16.msra.mxu0 0
        %729 = vmatprep.mubr.bf16.mxu0 0
        %730 = vmatmul.mubr.bf16.gmra.mrb[0].mxu0 %v686
        %v731 = vpop.f32.mrb[0].mxu0
        %v732 = vadd.f32 0.0, %v731
        %v733 = vpop.f32.mrb[0].mxu0
        %v734 = vpop.f32.mrb[0].mxu0
        %v735 = vadd.f32 0.0, %v734
        %v736 = vpop.f32.mrb[0].mxu0
        %737 = vmatprep.mubr.bf16.mxu0 0
        %738 = vmatmul.mubr.bf16.gmra.mrb[0].mxu0 %v689
        %v739 = vpop.f32.mrb[0].mxu0
        %v740 = vadd.f32 0.0, %v739
        %v741 = vpop.f32.mrb[0].mxu0
        %v742 = vpop.f32.mrb[0].mxu0
        %v743 = vadd.f32 0.0, %v742
        %v744 = vpop.f32.mrb[0].mxu0
        %745 = vmatprep.mubr.bf16.mxu0 0
        %746 = vmatmul.mubr.bf16.gmra.mrb[0].mxu0 %v692
        %v747 = vpop.f32.mrb[0].mxu0
        %v748 = vadd.f32 0.0, %v747
        %v749 = vpop.f32.mrb[0].mxu0
        %v750 = vpop.f32.mrb[0].mxu0
        %v751 = vadd.f32 0.0, %v750
        %v752 = vpop.f32.mrb[0].mxu0
        %753 = vmatprep.mubr.bf16.mxu0 0
        %754 = vmatmul.mubr.bf16.gmra.mrb[0].mxu0 %v695
        %v755 = vpop.f32.mrb[0].mxu0
        %v756 = vadd.f32 0.0, %v755
        %v757 = vpop.f32.mrb[0].mxu0
        %v758 = vpop.f32.mrb[0].mxu0
        %v759 = vadd.f32 0.0, %v758
        %v760 = vpop.f32.mrb[0].mxu0
        %761 = vdwg.mxu0
        %v762 = vadd.f32 %v601, %v732
        %v763 = vadd.f32 %v604, %v735
        %v764 = vadd.f32 %v609, %v740
        %v765 = vadd.f32 %v612, %v743
        %v766 = vadd.f32 %v617, %v748
        %v767 = vadd.f32 %v620, %v751
        %v768 = vadd.f32 %v625, %v756
        %v769 = vadd.f32 %v628, %v759
        %s770 = scalar_lea.vmem [#allocation7], 96
        %v771 = vld [vmem:[%s770] sm:$0xf]
        %v772 = vld [vmem:[%s770 + $0x4] sm:$0xf]
        %v773 = vld [vmem:[%s770 + $0x8] sm:$0xf]
        %v774 = vld [vmem:[%s770 + $0xc] sm:$0xf]
        %v775 = vld [vmem:[%s770 + $0x10] sm:$0xf]
        %v776 = vld [vmem:[%s770 + $0x14] sm:$0xf]
        %v777 = vld [vmem:[%s770 + $0x18] sm:$0xf]
        %v778 = vld [vmem:[%s770 + $0x1c] sm:$0xf]
        %v787 = vunpack.c.l.b16 %v771
        %v788 = vunpack.c.l.b16 %v772
        %v789 = vunpack.c.l.b16 %v773
        %v790 = vunpack.c.l.b16 %v774
        %v791 = vunpack.c.l.b16 %v775
        %v792 = vunpack.c.l.b16 %v776
        %v793 = vunpack.c.l.b16 %v777
        %v794 = vunpack.c.l.b16 %v778
        %v795 = vpack.c.b16 %v788, %v787
        %v796 = vpack.c.b16 %v790, %v789
        %v797 = vpack.c.b16 %v792, %v791
        %v798 = vpack.c.b16 %v794, %v793
        %799 = vrot.lane.b32.xlu0 %v398, 1
        %v800 = vpop.permute.xlu0 %799
        %801 = vrot.lane.b32.xlu0 %v399, 1
        %v802 = vpop.permute.xlu0 %801
        %803 = vrot.lane.b32.xlu0 %v400, 1
        %v804 = vpop.permute.xlu0 %803
        %805 = vrot.lane.b32.xlu0 %v401, 1
        %v806 = vpop.permute.xlu0 %805
        %807 = vrot.lane.b32.xlu0 %v402, 1
        %v808 = vpop.permute.xlu0 %807
        %809 = vrot.lane.b32.xlu0 %v403, 1
        %v810 = vpop.permute.xlu0 %809
        %811 = vrot.lane.b32.xlu0 %v404, 1
        %v812 = vpop.permute.xlu0 %811
        %813 = vrot.lane.b32.xlu0 %v405, 1
        %v814 = vpop.permute.xlu0 %813
        %vm815 = vcmask 7168
        %v816 = vsel %vm815, %v800, %v802
        %v817 = vsel %vm815, %v804, %v806
        %v818 = vsel %vm815, %v808, %v810
        %v819 = vsel %vm815, %v812, %v814
        %v825 = vsel %vm431, %v795, 0
        %v828 = vsel %vm431, %v796, 0
        %v831 = vsel %vm431, %v797, 0
        %v834 = vsel %vm431, %v798, 0
        %836 = vmatprep.subr.bf16.mxu0 0
        %837 = vmatpush1.bf16.msra.mxu0 %v816
        %838 = vmatprep.subr.bf16.mxu0 0
        %839 = vmatpush1.bf16.msra.mxu0 %v817
        %840 = vmatprep.subr.bf16.mxu0 0
        %841 = vmatpush1.bf16.msra.mxu0 %v818
        %842 = vmatprep.subr.bf16.mxu0 0
        %843 = vmatpush1.bf16.msra.mxu0 %v819
        %844 = vmatprep.subr.bf16.mxu0 0
        %845 = vmatpush1.bf16.msra.mxu0 0
        %846 = vmatprep.subr.bf16.mxu0 0
        %847 = vmatpush1.bf16.msra.mxu0 0
        %848 = vmatprep.subr.bf16.mxu0 0
        %849 = vmatpush1.bf16.msra.mxu0 0
        %850 = vmatprep.subr.bf16.mxu0 0
        %851 = vmatpush1.bf16.msra.mxu0 0
        %852 = vmatprep.subr.bf16.mxu0 0
        %853 = vmatpush1.bf16.msra.mxu0 0
        %854 = vmatprep.subr.bf16.mxu0 0
        %855 = vmatpush1.bf16.msra.mxu0 0
        %856 = vmatprep.subr.bf16.mxu0 0
        %857 = vmatpush1.bf16.msra.mxu0 0
        %858 = vmatprep.subr.bf16.mxu0 0
        %859 = vmatpush1.bf16.msra.mxu0 0
        %860 = vmatprep.subr.bf16.mxu0 0
        %861 = vmatpush1.bf16.msra.mxu0 0
        %862 = vmatprep.subr.bf16.mxu0 0
        %863 = vmatpush1.bf16.msra.mxu0 0
        %864 = vmatprep.subr.bf16.mxu0 0
        %865 = vmatpush1.bf16.msra.mxu0 0
        %866 = vmatprep.subr.bf16.mxu0 0
        %867 = vmatpush1.bf16.msra.mxu0 0
        %868 = vmatprep.mubr.bf16.mxu0 0
        %869 = vmatmul.mubr.bf16.gmra.mrb[0].mxu0 %v825
        %v870 = vpop.f32.mrb[0].mxu0
        %v871 = vadd.f32 0.0, %v870
        %v872 = vpop.f32.mrb[0].mxu0
        %v873 = vpop.f32.mrb[0].mxu0
        %v874 = vadd.f32 0.0, %v873
        %v875 = vpop.f32.mrb[0].mxu0
        %876 = vmatprep.mubr.bf16.mxu0 0
        %877 = vmatmul.mubr.bf16.gmra.mrb[0].mxu0 %v828
        %v878 = vpop.f32.mrb[0].mxu0
        %v879 = vadd.f32 0.0, %v878
        %v880 = vpop.f32.mrb[0].mxu0
        %v881 = vpop.f32.mrb[0].mxu0
        %v882 = vadd.f32 0.0, %v881
        %v883 = vpop.f32.mrb[0].mxu0
        %884 = vmatprep.mubr.bf16.mxu0 0
        %885 = vmatmul.mubr.bf16.gmra.mrb[0].mxu0 %v831
        %v886 = vpop.f32.mrb[0].mxu0
        %v887 = vadd.f32 0.0, %v886
        %v888 = vpop.f32.mrb[0].mxu0
        %v889 = vpop.f32.mrb[0].mxu0
        %v890 = vadd.f32 0.0, %v889
        %v891 = vpop.f32.mrb[0].mxu0
        %892 = vmatprep.mubr.bf16.mxu0 0
        %893 = vmatmul.mubr.bf16.gmra.mrb[0].mxu0 %v834
        %v894 = vpop.f32.mrb[0].mxu0
        %v895 = vadd.f32 0.0, %v894
        %v896 = vpop.f32.mrb[0].mxu0
        %v897 = vpop.f32.mrb[0].mxu0
        %v898 = vadd.f32 0.0, %v897
        %v899 = vpop.f32.mrb[0].mxu0
        %900 = vdwg.mxu0
        %v901 = vadd.f32 %v762, %v871
        %v902 = vadd.f32 %v763, %v874
        %v903 = vadd.f32 %v764, %v879
        %v904 = vadd.f32 %v765, %v882
        %v905 = vadd.f32 %v766, %v887
        %v906 = vadd.f32 %v767, %v890
        %v907 = vadd.f32 %v768, %v895
        %v908 = vadd.f32 %v769, %v898
        %s909 = scalar_lea.vmem [#allocation7], 128
        %v910 = vld [vmem:[%s909] sm:$0xf]
        %v911 = vld [vmem:[%s909 + $0x4] sm:$0xf]
        %v912 = vld [vmem:[%s909 + $0x8] sm:$0xf]
        %v913 = vld [vmem:[%s909 + $0xc] sm:$0xf]
        %v914 = vld [vmem:[%s909 + $0x10] sm:$0xf]
        %v915 = vld [vmem:[%s909 + $0x14] sm:$0xf]
        %v916 = vld [vmem:[%s909 + $0x18] sm:$0xf]
        %v917 = vld [vmem:[%s909 + $0x1c] sm:$0xf]
        %v918 = vld [vmem:[%s289 + $0x4] sm:$0xf]
        %v919 = vld [vmem:[%s289 + $0x18] sm:$0xf]
        %v920 = vld [vmem:[%s289 + $0x2c] sm:$0xf]
        %v921 = vld [vmem:[%s289 + $0x40] sm:$0xf]
        %v922 = vld [vmem:[%s289 + $0x54] sm:$0xf]
        %v923 = vld [vmem:[%s289 + $0x68] sm:$0xf]
        %v924 = vld [vmem:[%s289 + $0x7c] sm:$0xf]
        %v925 = vld [vmem:[%s289 + $0x90] sm:$0xf]
        %v934 = vunpack.c.l.b16 %v910
        %v935 = vunpack.c.l.b16 %v911
        %v936 = vunpack.c.l.b16 %v912
        %v937 = vunpack.c.l.b16 %v913
        %v938 = vunpack.c.l.b16 %v914
        %v939 = vunpack.c.l.b16 %v915
        %v940 = vunpack.c.l.b16 %v916
        %v941 = vunpack.c.l.b16 %v917
        %v942 = vpack.c.b16 %v935, %v934
        %v943 = vpack.c.b16 %v937, %v936
        %v944 = vpack.c.b16 %v939, %v938
        %v945 = vpack.c.b16 %v941, %v940
        %v954 = vunpack.c.l.b16 %v918
        %v955 = vunpack.c.l.b16 %v919
        %v956 = vunpack.c.l.b16 %v920
        %v957 = vunpack.c.l.b16 %v921
        %v958 = vunpack.c.l.b16 %v922
        %v959 = vunpack.c.l.b16 %v923
        %v960 = vunpack.c.l.b16 %v924
        %v961 = vunpack.c.l.b16 %v925
        %v962 = vpack.c.b16 %v955, %v954
        %v963 = vpack.c.b16 %v957, %v956
        %v964 = vpack.c.b16 %v959, %v958
        %v965 = vpack.c.b16 %v961, %v960
        %v971 = vsel %vm431, %v942, 0
        %v974 = vsel %vm431, %v943, 0
        %v977 = vsel %vm431, %v944, 0
        %v980 = vsel %vm431, %v945, 0
        %982 = vmatprep.subr.bf16.mxu0 0
        %983 = vmatpush1.bf16.msra.mxu0 %v962
        %984 = vmatprep.subr.bf16.mxu0 0
        %985 = vmatpush1.bf16.msra.mxu0 %v963
        %986 = vmatprep.subr.bf16.mxu0 0
        %987 = vmatpush1.bf16.msra.mxu0 %v964
        %988 = vmatprep.subr.bf16.mxu0 0
        %989 = vmatpush1.bf16.msra.mxu0 %v965
        %990 = vmatprep.subr.bf16.mxu0 0
        %991 = vmatpush1.bf16.msra.mxu0 0
        %992 = vmatprep.subr.bf16.mxu0 0
        %993 = vmatpush1.bf16.msra.mxu0 0
        %994 = vmatprep.subr.bf16.mxu0 0
        %995 = vmatpush1.bf16.msra.mxu0 0
        %996 = vmatprep.subr.bf16.mxu0 0
        %997 = vmatpush1.bf16.msra.mxu0 0
        %998 = vmatprep.subr.bf16.mxu0 0
        %999 = vmatpush1.bf16.msra.mxu0 0
        %1000 = vmatprep.subr.bf16.mxu0 0
        %1001 = vmatpush1.bf16.msra.mxu0 0
        %1002 = vmatprep.subr.bf16.mxu0 0
        %1003 = vmatpush1.bf16.msra.mxu0 0
        %1004 = vmatprep.subr.bf16.mxu0 0
        %1005 = vmatpush1.bf16.msra.mxu0 0
        %1006 = vmatprep.subr.bf16.mxu0 0
        %1007 = vmatpush1.bf16.msra.mxu0 0
        %1008 = vmatprep.subr.bf16.mxu0 0
        %1009 = vmatpush1.bf16.msra.mxu0 0
        %1010 = vmatprep.subr.bf16.mxu0 0
        %1011 = vmatpush1.bf16.msra.mxu0 0
        %1012 = vmatprep.subr.bf16.mxu0 0
        %1013 = vmatpush1.bf16.msra.mxu0 0
        %1014 = vmatprep.mubr.bf16.mxu0 0
        %1015 = vmatmul.mubr.bf16.gmra.mrb[0].mxu0 %v971
        %v1016 = vpop.f32.mrb[0].mxu0
        %v1017 = vadd.f32 0.0, %v1016
        %v1018 = vpop.f32.mrb[0].mxu0
        %v1019 = vpop.f32.mrb[0].mxu0
        %v1020 = vadd.f32 0.0, %v1019
        %v1021 = vpop.f32.mrb[0].mxu0
        %1022 = vmatprep.mubr.bf16.mxu0 0
        %1023 = vmatmul.mubr.bf16.gmra.mrb[0].mxu0 %v974
        %v1024 = vpop.f32.mrb[0].mxu0
        %v1025 = vadd.f32 0.0, %v1024
        %v1026 = vpop.f32.mrb[0].mxu0
        %v1027 = vpop.f32.mrb[0].mxu0
        %v1028 = vadd.f32 0.0, %v1027
        %v1029 = vpop.f32.mrb[0].mxu0
        %1030 = vmatprep.mubr.bf16.mxu0 0
        %1031 = vmatmul.mubr.bf16.gmra.mrb[0].mxu0 %v977
        %v1032 = vpop.f32.mrb[0].mxu0
        %v1033 = vadd.f32 0.0, %v1032
        %v1034 = vpop.f32.mrb[0].mxu0
        %v1035 = vpop.f32.mrb[0].mxu0
        %v1036 = vadd.f32 0.0, %v1035
        %v1037 = vpop.f32.mrb[0].mxu0
        %1038 = vmatprep.mubr.bf16.mxu0 0
        %1039 = vmatmul.mubr.bf16.gmra.mrb[0].mxu0 %v980
        %v1040 = vpop.f32.mrb[0].mxu0
        %v1041 = vadd.f32 0.0, %v1040
        %v1042 = vpop.f32.mrb[0].mxu0
        %v1043 = vpop.f32.mrb[0].mxu0
        %v1044 = vadd.f32 0.0, %v1043
        %v1045 = vpop.f32.mrb[0].mxu0
        %1046 = vdwg.mxu0
        %v1047 = vadd.f32 %v901, %v1017
        %v1048 = vadd.f32 %v902, %v1020
        %v1049 = vadd.f32 %v903, %v1025
        %v1050 = vadd.f32 %v904, %v1028
        %v1051 = vadd.f32 %v905, %v1033
        %v1052 = vadd.f32 %v906, %v1036
        %v1053 = vadd.f32 %v907, %v1041
        %v1054 = vadd.f32 %v908, %v1044
        %s1055 = scalar_lea.vmem [#allocation7], 160
        %v1056 = vld [vmem:[%s1055] sm:$0xf]
        %v1057 = vld [vmem:[%s1055 + $0x4] sm:$0xf]
        %v1058 = vld [vmem:[%s1055 + $0x8] sm:$0xf]
        %v1059 = vld [vmem:[%s1055 + $0xc] sm:$0xf]
        %v1060 = vld [vmem:[%s1055 + $0x10] sm:$0xf]
        %v1061 = vld [vmem:[%s1055 + $0x14] sm:$0xf]
        %v1062 = vld [vmem:[%s1055 + $0x18] sm:$0xf]
        %v1063 = vld [vmem:[%s1055 + $0x1c] sm:$0xf]
        %v1064 = vld [vmem:[%s289 + $0x4] sm:$0xff]
        %v1065 = vld [vmem:[%s289 + $0x18] sm:$0xff]
        %v1066 = vld [vmem:[%s289 + $0x2c] sm:$0xff]
        %v1067 = vld [vmem:[%s289 + $0x40] sm:$0xff]
        %v1068 = vld [vmem:[%s289 + $0x54] sm:$0xff]
        %v1069 = vld [vmem:[%s289 + $0x68] sm:$0xff]
        %v1070 = vld [vmem:[%s289 + $0x7c] sm:$0xff]
        %v1071 = vld [vmem:[%s289 + $0x90] sm:$0xff]
        %v1080 = vunpack.c.l.b16 %v1056
        %v1081 = vunpack.c.l.b16 %v1057
        %v1082 = vunpack.c.l.b16 %v1058
        %v1083 = vunpack.c.l.b16 %v1059
        %v1084 = vunpack.c.l.b16 %v1060
        %v1085 = vunpack.c.l.b16 %v1061
        %v1086 = vunpack.c.l.b16 %v1062
        %v1087 = vunpack.c.l.b16 %v1063
        %v1088 = vpack.c.b16 %v1081, %v1080
        %v1089 = vpack.c.b16 %v1083, %v1082
        %v1090 = vpack.c.b16 %v1085, %v1084
        %v1091 = vpack.c.b16 %v1087, %v1086
        %v1100 = vunpack.c.l.b16 %v1064
        %v1101 = vunpack.c.h.b16 %v1064
        %v1102 = vunpack.c.l.b16 %v1065
        %v1103 = vunpack.c.h.b16 %v1065
        %v1104 = vunpack.c.l.b16 %v1066
        %v1105 = vunpack.c.h.b16 %v1066
        %v1106 = vunpack.c.l.b16 %v1067
        %v1107 = vunpack.c.h.b16 %v1067
        %v1108 = vunpack.c.l.b16 %v1068
        %v1109 = vunpack.c.h.b16 %v1068
        %v1110 = vunpack.c.l.b16 %v1069
        %v1111 = vunpack.c.h.b16 %v1069
        %v1112 = vunpack.c.l.b16 %v1070
        %v1113 = vunpack.c.h.b16 %v1070
        %v1114 = vunpack.c.l.b16 %v1071
        %v1115 = vunpack.c.h.b16 %v1071
        %v1116 = vpack.c.b16 %v1102, %v1100
        %v1117 = vpack.c.b16 %v1103, %v1101
        %v1118 = vpack.c.b16 %v1106, %v1104
        %v1119 = vpack.c.b16 %v1107, %v1105
        %v1120 = vpack.c.b16 %v1110, %v1108
        %v1121 = vpack.c.b16 %v1111, %v1109
        %v1122 = vpack.c.b16 %v1114, %v1112
        %v1123 = vpack.c.b16 %v1115, %v1113
        %1124 = vrot.lane.b32.xlu0 %v1116, 127
        %v1125 = vpop.permute.xlu0 %1124
        %1126 = vrot.lane.b32.xlu0 %v1117, 127
        %v1127 = vpop.permute.xlu0 %1126
        %1128 = vrot.lane.b32.xlu0 %v1118, 127
        %v1129 = vpop.permute.xlu0 %1128
        %1130 = vrot.lane.b32.xlu0 %v1119, 127
        %v1131 = vpop.permute.xlu0 %1130
        %1132 = vrot.lane.b32.xlu0 %v1120, 127
        %v1133 = vpop.permute.xlu0 %1132
        %1134 = vrot.lane.b32.xlu0 %v1121, 127
        %v1135 = vpop.permute.xlu0 %1134
        %1136 = vrot.lane.b32.xlu0 %v1122, 127
        %v1137 = vpop.permute.xlu0 %1136
        %1138 = vrot.lane.b32.xlu0 %v1123, 127
        %v1139 = vpop.permute.xlu0 %1138
        %vm1140 = vcmask 1039360
        %v1141 = vsel %vm1140, %v1125, %v1127
        %v1142 = vsel %vm1140, %v1129, %v1131
        %v1143 = vsel %vm1140, %v1133, %v1135
        %v1144 = vsel %vm1140, %v1137, %v1139
        %v1150 = vsel %vm431, %v1088, 0
        %v1153 = vsel %vm431, %v1089, 0
        %v1156 = vsel %vm431, %v1090, 0
        %v1159 = vsel %vm431, %v1091, 0
        %1161 = vmatprep.subr.bf16.mxu0 0
        %1162 = vmatpush1.bf16.msra.mxu0 %v1141
        %1163 = vmatprep.subr.bf16.mxu0 0
        %1164 = vmatpush1.bf16.msra.mxu0 %v1142
        %1165 = vmatprep.subr.bf16.mxu0 0
        %1166 = vmatpush1.bf16.msra.mxu0 %v1143
        %1167 = vmatprep.subr.bf16.mxu0 0
        %1168 = vmatpush1.bf16.msra.mxu0 %v1144
        %1169 = vmatprep.subr.bf16.mxu0 0
        %1170 = vmatpush1.bf16.msra.mxu0 0
        %1171 = vmatprep.subr.bf16.mxu0 0
        %1172 = vmatpush1.bf16.msra.mxu0 0
        %1173 = vmatprep.subr.bf16.mxu0 0
        %1174 = vmatpush1.bf16.msra.mxu0 0
        %1175 = vmatprep.subr.bf16.mxu0 0
        %1176 = vmatpush1.bf16.msra.mxu0 0
        %1177 = vmatprep.subr.bf16.mxu0 0
        %1178 = vmatpush1.bf16.msra.mxu0 0
        %1179 = vmatprep.subr.bf16.mxu0 0
        %1180 = vmatpush1.bf16.msra.mxu0 0
        %1181 = vmatprep.subr.bf16.mxu0 0
        %1182 = vmatpush1.bf16.msra.mxu0 0
        %1183 = vmatprep.subr.bf16.mxu0 0
        %1184 = vmatpush1.bf16.msra.mxu0 0
        %1185 = vmatprep.subr.bf16.mxu0 0
        %1186 = vmatpush1.bf16.msra.mxu0 0
        %1187 = vmatprep.subr.bf16.mxu0 0
        %1188 = vmatpush1.bf16.msra.mxu0 0
        %1189 = vmatprep.subr.bf16.mxu0 0
        %1190 = vmatpush1.bf16.msra.mxu0 0
        %1191 = vmatprep.subr.bf16.mxu0 0
        %1192 = vmatpush1.bf16.msra.mxu0 0
        %1193 = vmatprep.mubr.bf16.mxu0 0
        %1194 = vmatmul.mubr.bf16.gmra.mrb[0].mxu0 %v1150
        %v1195 = vpop.f32.mrb[0].mxu0
        %v1196 = vadd.f32 0.0, %v1195
        %v1197 = vpop.f32.mrb[0].mxu0
        %v1198 = vpop.f32.mrb[0].mxu0
        %v1199 = vadd.f32 0.0, %v1198
        %v1200 = vpop.f32.mrb[0].mxu0
        %1201 = vmatprep.mubr.bf16.mxu0 0
        %1202 = vmatmul.mubr.bf16.gmra.mrb[0].mxu0 %v1153
        %v1203 = vpop.f32.mrb[0].mxu0
        %v1204 = vadd.f32 0.0, %v1203
        %v1205 = vpop.f32.mrb[0].mxu0
        %v1206 = vpop.f32.mrb[0].mxu0
        %v1207 = vadd.f32 0.0, %v1206
        %v1208 = vpop.f32.mrb[0].mxu0
        %1209 = vmatprep.mubr.bf16.mxu0 0
        %1210 = vmatmul.mubr.bf16.gmra.mrb[0].mxu0 %v1156
        %v1211 = vpop.f32.mrb[0].mxu0
        %v1212 = vadd.f32 0.0, %v1211
        %v1213 = vpop.f32.mrb[0].mxu0
        %v1214 = vpop.f32.mrb[0].mxu0
        %v1215 = vadd.f32 0.0, %v1214
        %v1216 = vpop.f32.mrb[0].mxu0
        %1217 = vmatprep.mubr.bf16.mxu0 0
        %1218 = vmatmul.mubr.bf16.gmra.mrb[0].mxu0 %v1159
        %v1219 = vpop.f32.mrb[0].mxu0
        %v1220 = vadd.f32 0.0, %v1219
        %v1221 = vpop.f32.mrb[0].mxu0
        %v1222 = vpop.f32.mrb[0].mxu0
        %v1223 = vadd.f32 0.0, %v1222
        %v1224 = vpop.f32.mrb[0].mxu0
        %1225 = vdwg.mxu0
        %v1226 = vadd.f32 %v1047, %v1196
        %v1227 = vadd.f32 %v1048, %v1199
        %v1228 = vadd.f32 %v1049, %v1204
        %v1229 = vadd.f32 %v1050, %v1207
        %v1230 = vadd.f32 %v1051, %v1212
        %v1231 = vadd.f32 %v1052, %v1215
        %v1232 = vadd.f32 %v1053, %v1220
        %v1233 = vadd.f32 %v1054, %v1223
        %s1234 = scalar_lea.vmem [#allocation7], 192
        %v1235 = vld [vmem:[%s1234] sm:$0xf]
        %v1236 = vld [vmem:[%s1234 + $0x4] sm:$0xf]
        %v1237 = vld [vmem:[%s1234 + $0x8] sm:$0xf]
        %v1238 = vld [vmem:[%s1234 + $0xc] sm:$0xf]
        %v1239 = vld [vmem:[%s1234 + $0x10] sm:$0xf]
        %v1240 = vld [vmem:[%s1234 + $0x14] sm:$0xf]
        %v1241 = vld [vmem:[%s1234 + $0x18] sm:$0xf]
        %v1242 = vld [vmem:[%s1234 + $0x1c] sm:$0xf]
        %v1251 = vunpack.c.l.b16 %v1235
        %v1252 = vunpack.c.l.b16 %v1236
        %v1253 = vunpack.c.l.b16 %v1237
        %v1254 = vunpack.c.l.b16 %v1238
        %v1255 = vunpack.c.l.b16 %v1239
        %v1256 = vunpack.c.l.b16 %v1240
        %v1257 = vunpack.c.l.b16 %v1241
        %v1258 = vunpack.c.l.b16 %v1242
        %v1259 = vpack.c.b16 %v1252, %v1251
        %v1260 = vpack.c.b16 %v1254, %v1253
        %v1261 = vpack.c.b16 %v1256, %v1255
        %v1262 = vpack.c.b16 %v1258, %v1257
        %1263 = vrot.lane.b32.xlu0 %v1116, 111
        %v1264 = vpop.permute.xlu0 %1263
        %1265 = vrot.lane.b32.xlu0 %v1117, 111
        %v1266 = vpop.permute.xlu0 %1265
        %1267 = vrot.lane.b32.xlu0 %v1118, 111
        %v1268 = vpop.permute.xlu0 %1267
        %1269 = vrot.lane.b32.xlu0 %v1119, 111
        %v1270 = vpop.permute.xlu0 %1269
        %1271 = vrot.lane.b32.xlu0 %v1120, 111
        %v1272 = vpop.permute.xlu0 %1271
        %1273 = vrot.lane.b32.xlu0 %v1121, 111
        %v1274 = vpop.permute.xlu0 %1273
        %1275 = vrot.lane.b32.xlu0 %v1122, 111
        %v1276 = vpop.permute.xlu0 %1275
        %1277 = vrot.lane.b32.xlu0 %v1123, 111
        %v1278 = vpop.permute.xlu0 %1277
        %vm1279 = vcmask 908288
        %v1280 = vsel %vm1279, %v1264, %v1266
        %v1281 = vsel %vm1279, %v1268, %v1270
        %v1282 = vsel %vm1279, %v1272, %v1274
        %v1283 = vsel %vm1279, %v1276, %v1278
        %v1289 = vsel %vm431, %v1259, 0
        %v1292 = vsel %vm431, %v1260, 0
        %v1295 = vsel %vm431, %v1261, 0
        %v1298 = vsel %vm431, %v1262, 0
        %1300 = vmatprep.subr.bf16.mxu0 0
        %1301 = vmatpush1.bf16.msra.mxu0 %v1280
        %1302 = vmatprep.subr.bf16.mxu0 0
        %1303 = vmatpush1.bf16.msra.mxu0 %v1281
        %1304 = vmatprep.subr.bf16.mxu0 0
        %1305 = vmatpush1.bf16.msra.mxu0 %v1282
        %1306 = vmatprep.subr.bf16.mxu0 0
        %1307 = vmatpush1.bf16.msra.mxu0 %v1283
        %1308 = vmatprep.subr.bf16.mxu0 0
        %1309 = vmatpush1.bf16.msra.mxu0 0
        %1310 = vmatprep.subr.bf16.mxu0 0
        %1311 = vmatpush1.bf16.msra.mxu0 0
        %1312 = vmatprep.subr.bf16.mxu0 0
        %1313 = vmatpush1.bf16.msra.mxu0 0
        %1314 = vmatprep.subr.bf16.mxu0 0
        %1315 = vmatpush1.bf16.msra.mxu0 0
        %1316 = vmatprep.subr.bf16.mxu0 0
        %1317 = vmatpush1.bf16.msra.mxu0 0
        %1318 = vmatprep.subr.bf16.mxu0 0
        %1319 = vmatpush1.bf16.msra.mxu0 0
        %1320 = vmatprep.subr.bf16.mxu0 0
        %1321 = vmatpush1.bf16.msra.mxu0 0
        %1322 = vmatprep.subr.bf16.mxu0 0
        %1323 = vmatpush1.bf16.msra.mxu0 0
        %1324 = vmatprep.subr.bf16.mxu0 0
        %1325 = vmatpush1.bf16.msra.mxu0 0
        %1326 = vmatprep.subr.bf16.mxu0 0
        %1327 = vmatpush1.bf16.msra.mxu0 0
        %1328 = vmatprep.subr.bf16.mxu0 0
        %1329 = vmatpush1.bf16.msra.mxu0 0
        %1330 = vmatprep.subr.bf16.mxu0 0
        %1331 = vmatpush1.bf16.msra.mxu0 0
        %1332 = vmatprep.mubr.bf16.mxu0 0
        %1333 = vmatmul.mubr.bf16.gmra.mrb[0].mxu0 %v1289
        %v1334 = vpop.f32.mrb[0].mxu0
        %v1335 = vadd.f32 0.0, %v1334
        %v1336 = vpop.f32.mrb[0].mxu0
        %v1337 = vpop.f32.mrb[0].mxu0
        %v1338 = vadd.f32 0.0, %v1337
        %v1339 = vpop.f32.mrb[0].mxu0
        %1340 = vmatprep.mubr.bf16.mxu0 0
        %1341 = vmatmul.mubr.bf16.gmra.mrb[0].mxu0 %v1292
        %v1342 = vpop.f32.mrb[0].mxu0
        %v1343 = vadd.f32 0.0, %v1342
        %v1344 = vpop.f32.mrb[0].mxu0
        %v1345 = vpop.f32.mrb[0].mxu0
        %v1346 = vadd.f32 0.0, %v1345
        %v1347 = vpop.f32.mrb[0].mxu0
        %1348 = vmatprep.mubr.bf16.mxu0 0
        %1349 = vmatmul.mubr.bf16.gmra.mrb[0].mxu0 %v1295
        %v1350 = vpop.f32.mrb[0].mxu0
        %v1351 = vadd.f32 0.0, %v1350
        %v1352 = vpop.f32.mrb[0].mxu0
        %v1353 = vpop.f32.mrb[0].mxu0
        %v1354 = vadd.f32 0.0, %v1353
        %v1355 = vpop.f32.mrb[0].mxu0
        %1356 = vmatprep.mubr.bf16.mxu0 0
        %1357 = vmatmul.mubr.bf16.gmra.mrb[0].mxu0 %v1298
        %v1358 = vpop.f32.mrb[0].mxu0
        %v1359 = vadd.f32 0.0, %v1358
        %v1360 = vpop.f32.mrb[0].mxu0
        %v1361 = vpop.f32.mrb[0].mxu0
        %v1362 = vadd.f32 0.0, %v1361
        %v1363 = vpop.f32.mrb[0].mxu0
        %1364 = vdwg.mxu0
        %v1365 = vadd.f32 %v1226, %v1335
        %v1366 = vadd.f32 %v1227, %v1338
        %v1367 = vadd.f32 %v1228, %v1343
        %v1368 = vadd.f32 %v1229, %v1346
        %v1369 = vadd.f32 %v1230, %v1351
        %v1370 = vadd.f32 %v1231, %v1354
        %v1371 = vadd.f32 %v1232, %v1359
        %v1372 = vadd.f32 %v1233, %v1362
        %s1373 = scalar_lea.vmem [#allocation7], 224
        %v1374 = vld [vmem:[%s1373] sm:$0xf]
        %v1375 = vld [vmem:[%s1373 + $0x4] sm:$0xf]
        %v1376 = vld [vmem:[%s1373 + $0x8] sm:$0xf]
        %v1377 = vld [vmem:[%s1373 + $0xc] sm:$0xf]
        %v1378 = vld [vmem:[%s1373 + $0x10] sm:$0xf]
        %v1379 = vld [vmem:[%s1373 + $0x14] sm:$0xf]
        %v1380 = vld [vmem:[%s1373 + $0x18] sm:$0xf]
        %v1381 = vld [vmem:[%s1373 + $0x1c] sm:$0xf]
        %v1390 = vunpack.c.l.b16 %v1374
        %v1391 = vunpack.c.l.b16 %v1375
        %v1392 = vunpack.c.l.b16 %v1376
        %v1393 = vunpack.c.l.b16 %v1377
        %v1394 = vunpack.c.l.b16 %v1378
        %v1395 = vunpack.c.l.b16 %v1379
        %v1396 = vunpack.c.l.b16 %v1380
        %v1397 = vunpack.c.l.b16 %v1381
        %v1398 = vpack.c.b16 %v1391, %v1390
        %v1399 = vpack.c.b16 %v1393, %v1392
        %v1400 = vpack.c.b16 %v1395, %v1394
        %v1401 = vpack.c.b16 %v1397, %v1396
        %1402 = vrot.lane.b32.xlu0 %v1116, 110
        %v1403 = vpop.permute.xlu0 %1402
        %1404 = vrot.lane.b32.xlu0 %v1117, 110
        %v1405 = vpop.permute.xlu0 %1404
        %1406 = vrot.lane.b32.xlu0 %v1118, 110
        %v1407 = vpop.permute.xlu0 %1406
        %1408 = vrot.lane.b32.xlu0 %v1119, 110
        %v1409 = vpop.permute.xlu0 %1408
        %1410 = vrot.lane.b32.xlu0 %v1120, 110
        %v1411 = vpop.permute.xlu0 %1410
        %1412 = vrot.lane.b32.xlu0 %v1121, 110
        %v1413 = vpop.permute.xlu0 %1412
        %1414 = vrot.lane.b32.xlu0 %v1122, 110
        %v1415 = vpop.permute.xlu0 %1414
        %1416 = vrot.lane.b32.xlu0 %v1123, 110
        %v1417 = vpop.permute.xlu0 %1416
        %vm1418 = vcmask 900096
        %v1419 = vsel %vm1418, %v1403, %v1405
        %v1420 = vsel %vm1418, %v1407, %v1409
        %v1421 = vsel %vm1418, %v1411, %v1413
        %v1422 = vsel %vm1418, %v1415, %v1417
        %v1428 = vsel %vm431, %v1398, 0
        %v1431 = vsel %vm431, %v1399, 0
        %v1434 = vsel %vm431, %v1400, 0
        %v1437 = vsel %vm431, %v1401, 0
        %1439 = vmatprep.subr.bf16.mxu0 0
        %1440 = vmatpush1.bf16.msra.mxu0 %v1419
        %1441 = vmatprep.subr.bf16.mxu0 0
        %1442 = vmatpush1.bf16.msra.mxu0 %v1420
        %1443 = vmatprep.subr.bf16.mxu0 0
        %1444 = vmatpush1.bf16.msra.mxu0 %v1421
        %1445 = vmatprep.subr.bf16.mxu0 0
        %1446 = vmatpush1.bf16.msra.mxu0 %v1422
        %1447 = vmatprep.subr.bf16.mxu0 0
        %1448 = vmatpush1.bf16.msra.mxu0 0
        %1449 = vmatprep.subr.bf16.mxu0 0
        %1450 = vmatpush1.bf16.msra.mxu0 0
        %1451 = vmatprep.subr.bf16.mxu0 0
        %1452 = vmatpush1.bf16.msra.mxu0 0
        %1453 = vmatprep.subr.bf16.mxu0 0
        %1454 = vmatpush1.bf16.msra.mxu0 0
        %1455 = vmatprep.subr.bf16.mxu0 0
        %1456 = vmatpush1.bf16.msra.mxu0 0
        %1457 = vmatprep.subr.bf16.mxu0 0
        %1458 = vmatpush1.bf16.msra.mxu0 0
        %1459 = vmatprep.subr.bf16.mxu0 0
        %1460 = vmatpush1.bf16.msra.mxu0 0
        %1461 = vmatprep.subr.bf16.mxu0 0
        %1462 = vmatpush1.bf16.msra.mxu0 0
        %1463 = vmatprep.subr.bf16.mxu0 0
        %1464 = vmatpush1.bf16.msra.mxu0 0
        %1465 = vmatprep.subr.bf16.mxu0 0
        %1466 = vmatpush1.bf16.msra.mxu0 0
        %1467 = vmatprep.subr.bf16.mxu0 0
        %1468 = vmatpush1.bf16.msra.mxu0 0
        %1469 = vmatprep.subr.bf16.mxu0 0
        %1470 = vmatpush1.bf16.msra.mxu0 0
        %1471 = vmatprep.mubr.bf16.mxu0 0
        %1472 = vmatmul.mubr.bf16.gmra.mrb[0].mxu0 %v1428
        %v1473 = vpop.f32.mrb[0].mxu0
        %v1474 = vadd.f32 0.0, %v1473
        %v1475 = vpop.f32.mrb[0].mxu0
        %v1476 = vpop.f32.mrb[0].mxu0
        %v1477 = vadd.f32 0.0, %v1476
        %v1478 = vpop.f32.mrb[0].mxu0
        %1479 = vmatprep.mubr.bf16.mxu0 0
        %1480 = vmatmul.mubr.bf16.gmra.mrb[0].mxu0 %v1431
        %v1481 = vpop.f32.mrb[0].mxu0
        %v1482 = vadd.f32 0.0, %v1481
        %v1483 = vpop.f32.mrb[0].mxu0
        %v1484 = vpop.f32.mrb[0].mxu0
        %v1485 = vadd.f32 0.0, %v1484
        %v1486 = vpop.f32.mrb[0].mxu0
        %1487 = vmatprep.mubr.bf16.mxu0 0
        %1488 = vmatmul.mubr.bf16.gmra.mrb[0].mxu0 %v1434
        %v1489 = vpop.f32.mrb[0].mxu0
        %v1490 = vadd.f32 0.0, %v1489
        %v1491 = vpop.f32.mrb[0].mxu0
        %v1492 = vpop.f32.mrb[0].mxu0
        %v1493 = vadd.f32 0.0, %v1492
        %v1494 = vpop.f32.mrb[0].mxu0
        %1495 = vmatprep.mubr.bf16.mxu0 0
        %1496 = vmatmul.mubr.bf16.gmra.mrb[0].mxu0 %v1437
        %v1497 = vpop.f32.mrb[0].mxu0
        %v1498 = vadd.f32 0.0, %v1497
        %v1499 = vpop.f32.mrb[0].mxu0
        %v1500 = vpop.f32.mrb[0].mxu0
        %v1501 = vadd.f32 0.0, %v1500
        %v1502 = vpop.f32.mrb[0].mxu0
        %1503 = vdwg.mxu0
        %v1504 = vadd.f32 %v1365, %v1474
        %v1505 = vadd.f32 %v1366, %v1477
        %v1506 = vadd.f32 %v1367, %v1482
        %v1507 = vadd.f32 %v1368, %v1485
        %v1508 = vadd.f32 %v1369, %v1490
        %v1509 = vadd.f32 %v1370, %v1493
        %v1510 = vadd.f32 %v1371, %v1498
        %v1511 = vadd.f32 %v1372, %v1501
        %s1512 = scalar_lea.vmem [#allocation7], 256
        %v1513 = vld [vmem:[%s1512] sm:$0xf]
        %v1514 = vld [vmem:[%s1512 + $0x4] sm:$0xf]
        %v1515 = vld [vmem:[%s1512 + $0x8] sm:$0xf]
        %v1516 = vld [vmem:[%s1512 + $0xc] sm:$0xf]
        %v1517 = vld [vmem:[%s1512 + $0x10] sm:$0xf]
        %v1518 = vld [vmem:[%s1512 + $0x14] sm:$0xf]
        %v1519 = vld [vmem:[%s1512 + $0x18] sm:$0xf]
        %v1520 = vld [vmem:[%s1512 + $0x1c] sm:$0xf]
        %v1529 = vunpack.c.l.b16 %v1513
        %v1530 = vunpack.c.l.b16 %v1514
        %v1531 = vunpack.c.l.b16 %v1515
        %v1532 = vunpack.c.l.b16 %v1516
        %v1533 = vunpack.c.l.b16 %v1517
        %v1534 = vunpack.c.l.b16 %v1518
        %v1535 = vunpack.c.l.b16 %v1519
        %v1536 = vunpack.c.l.b16 %v1520
        %v1537 = vpack.c.b16 %v1530, %v1529
        %v1538 = vpack.c.b16 %v1532, %v1531
        %v1539 = vpack.c.b16 %v1534, %v1533
        %v1540 = vpack.c.b16 %v1536, %v1535
        %1541 = vrot.lane.b32.xlu0 %v1116, 109
        %v1542 = vpop.permute.xlu0 %1541
        %1543 = vrot.lane.b32.xlu0 %v1117, 109
        %v1544 = vpop.permute.xlu0 %1543
        %1545 = vrot.lane.b32.xlu0 %v1118, 109
        %v1546 = vpop.permute.xlu0 %1545
        %1547 = vrot.lane.b32.xlu0 %v1119, 109
        %v1548 = vpop.permute.xlu0 %1547
        %1549 = vrot.lane.b32.xlu0 %v1120, 109
        %v1550 = vpop.permute.xlu0 %1549
        %1551 = vrot.lane.b32.xlu0 %v1121, 109
        %v1552 = vpop.permute.xlu0 %1551
        %1553 = vrot.lane.b32.xlu0 %v1122, 109
        %v1554 = vpop.permute.xlu0 %1553
        %1555 = vrot.lane.b32.xlu0 %v1123, 109
        %v1556 = vpop.permute.xlu0 %1555
        %vm1557 = vcmask 891904
        %v1558 = vsel %vm1557, %v1542, %v1544
        %v1559 = vsel %vm1557, %v1546, %v1548
        %v1560 = vsel %vm1557, %v1550, %v1552
        %v1561 = vsel %vm1557, %v1554, %v1556
        %v1567 = vsel %vm431, %v1537, 0
        %v1570 = vsel %vm431, %v1538, 0
        %v1573 = vsel %vm431, %v1539, 0
        %v1576 = vsel %vm431, %v1540, 0
        %1578 = vmatprep.subr.bf16.mxu0 0
        %1579 = vmatpush1.bf16.msra.mxu0 %v1558
        %1580 = vmatprep.subr.bf16.mxu0 0
        %1581 = vmatpush1.bf16.msra.mxu0 %v1559
        %1582 = vmatprep.subr.bf16.mxu0 0
        %1583 = vmatpush1.bf16.msra.mxu0 %v1560
        %1584 = vmatprep.subr.bf16.mxu0 0
        %1585 = vmatpush1.bf16.msra.mxu0 %v1561
        %1586 = vmatprep.subr.bf16.mxu0 0
        %1587 = vmatpush1.bf16.msra.mxu0 0
        %1588 = vmatprep.subr.bf16.mxu0 0
        %1589 = vmatpush1.bf16.msra.mxu0 0
        %1590 = vmatprep.subr.bf16.mxu0 0
        %1591 = vmatpush1.bf16.msra.mxu0 0
        %1592 = vmatprep.subr.bf16.mxu0 0
        %1593 = vmatpush1.bf16.msra.mxu0 0
        %1594 = vmatprep.subr.bf16.mxu0 0
        %1595 = vmatpush1.bf16.msra.mxu0 0
        %1596 = vmatprep.subr.bf16.mxu0 0
        %1597 = vmatpush1.bf16.msra.mxu0 0
        %1598 = vmatprep.subr.bf16.mxu0 0
        %1599 = vmatpush1.bf16.msra.mxu0 0
        %1600 = vmatprep.subr.bf16.mxu0 0
        %1601 = vmatpush1.bf16.msra.mxu0 0
        %1602 = vmatprep.subr.bf16.mxu0 0
        %1603 = vmatpush1.bf16.msra.mxu0 0
        %1604 = vmatprep.subr.bf16.mxu0 0
        %1605 = vmatpush1.bf16.msra.mxu0 0
        %1606 = vmatprep.subr.bf16.mxu0 0
        %1607 = vmatpush1.bf16.msra.mxu0 0
        %1608 = vmatprep.subr.bf16.mxu0 0
        %1609 = vmatpush1.bf16.msra.mxu0 0
        %1610 = vmatprep.mubr.bf16.mxu0 0
        %1611 = vmatmul.mubr.bf16.gmra.mrb[0].mxu0 %v1567
        %v1612 = vpop.f32.mrb[0].mxu0
        %v1613 = vadd.f32 0.0, %v1612
        %v1614 = vpop.f32.mrb[0].mxu0
        %v1615 = vpop.f32.mrb[0].mxu0
        %v1616 = vadd.f32 0.0, %v1615
        %v1617 = vpop.f32.mrb[0].mxu0
        %1618 = vmatprep.mubr.bf16.mxu0 0
        %1619 = vmatmul.mubr.bf16.gmra.mrb[0].mxu0 %v1570
        %v1620 = vpop.f32.mrb[0].mxu0
        %v1621 = vadd.f32 0.0, %v1620
        %v1622 = vpop.f32.mrb[0].mxu0
        %v1623 = vpop.f32.mrb[0].mxu0
        %v1624 = vadd.f32 0.0, %v1623
        %v1625 = vpop.f32.mrb[0].mxu0
        %1626 = vmatprep.mubr.bf16.mxu0 0
        %1627 = vmatmul.mubr.bf16.gmra.mrb[0].mxu0 %v1573
        %v1628 = vpop.f32.mrb[0].mxu0
        %v1629 = vadd.f32 0.0, %v1628
        %v1630 = vpop.f32.mrb[0].mxu0
        %v1631 = vpop.f32.mrb[0].mxu0
        %v1632 = vadd.f32 0.0, %v1631
        %v1633 = vpop.f32.mrb[0].mxu0
        %1634 = vmatprep.mubr.bf16.mxu0 0
        %1635 = vmatmul.mubr.bf16.gmra.mrb[0].mxu0 %v1576
        %v1636 = vpop.f32.mrb[0].mxu0
        %v1637 = vadd.f32 0.0, %v1636
        %v1638 = vpop.f32.mrb[0].mxu0
        %v1639 = vpop.f32.mrb[0].mxu0
        %v1640 = vadd.f32 0.0, %v1639
        %v1641 = vpop.f32.mrb[0].mxu0
        %1642 = vdwg.mxu0
        %v1643 = vadd.f32 %v1504, %v1613
        %v1644 = vadd.f32 %v1505, %v1616
        %v1645 = vadd.f32 %v1506, %v1621
        %v1646 = vadd.f32 %v1507, %v1624
        %v1647 = vadd.f32 %v1508, %v1629
        %v1648 = vadd.f32 %v1509, %v1632
        %v1649 = vadd.f32 %v1510, %v1637
        %v1650 = vadd.f32 %v1511, %v1640
        %v1651 = vld [vmem:[%s2] sm:$0xff]
        %v1652 = vld [vmem:[%s2 + $0x8] sm:$0xff]
        %v1653 = vld [vmem:[%s2 + $0x10] sm:$0xff]
        %v1654 = vld [vmem:[%s2 + $0x18] sm:$0xff]
        %v1655 = vld [vmem:[%s2 + $0x20] sm:$0xff]
        %v1656 = vld [vmem:[%s2 + $0x28] sm:$0xff]
        %v1657 = vld [vmem:[%s2 + $0x30] sm:$0xff]
        %v1658 = vld [vmem:[%s2 + $0x38] sm:$0xff]
        %1660 = vset.pattern.permute.xlu0 0
        %1661 = vperm.xlu0 %1660, %v1651
        %v1662 = vpop.permute.xlu0 %1661
        %1665 = vset.pattern.permute.xlu0 0
        %1666 = vperm.xlu0 %1665, %v1652
        %v1667 = vpop.permute.xlu0 %1666
        %1670 = vset.pattern.permute.xlu0 0
        %1671 = vperm.xlu0 %1670, %v1653
        %v1672 = vpop.permute.xlu0 %1671
        %1675 = vset.pattern.permute.xlu0 0
        %1676 = vperm.xlu0 %1675, %v1654
        %v1677 = vpop.permute.xlu0 %1676
        %1680 = vset.pattern.permute.xlu0 0
        %1681 = vperm.xlu0 %1680, %v1655
        %v1682 = vpop.permute.xlu0 %1681
        %1685 = vset.pattern.permute.xlu0 0
        %1686 = vperm.xlu0 %1685, %v1656
        %v1687 = vpop.permute.xlu0 %1686
        %1690 = vset.pattern.permute.xlu0 0
        %1691 = vperm.xlu0 %1690, %v1657
        %v1692 = vpop.permute.xlu0 %1691
        %1695 = vset.pattern.permute.xlu0 0
        %1696 = vperm.xlu0 %1695, %v1658
        %v1697 = vpop.permute.xlu0 %1696
        %v1699 = vadd.f32 %v1643, %v1662
        %v1700 = vadd.f32 %v1644, %v1667
        %v1701 = vadd.f32 %v1645, %v1672
        %v1702 = vadd.f32 %v1646, %v1677
        %v1703 = vadd.f32 %v1647, %v1682
        %v1704 = vadd.f32 %v1648, %v1687
        %v1705 = vadd.f32 %v1649, %v1692
        %v1706 = vadd.f32 %v1650, %v1697
        %v1707 = vmax.f32 %v1699, 0.0
        %v1708 = vmax.f32 %v1700, 0.0
        %v1709 = vmax.f32 %v1701, 0.0
        %v1710 = vmax.f32 %v1702, 0.0
        %v1711 = vmax.f32 %v1703, 0.0
        %v1712 = vmax.f32 %v1704, 0.0
        %v1713 = vmax.f32 %v1705, 0.0
        %v1714 = vmax.f32 %v1706, 0.0
        %v1715 = vlaneseq
        %v1716 = vand.u32 %v1715, 127
        %v1717 = vmul.u32 %v1716, 57
        %v1718 = vshra.s32 %v1717, 10
        %v1719 = vmul.u32 %v1718, 18
        %v1720 = vsub.s32 %v1716, %v1719
        %vm1721 = vcmp.ge.s32.totalorder %v1718, 1
        %vm1722 = vcmp.le.s32.totalorder %v1718, 16
        %vm1723 = vmand %vm1721, %vm1722
        %vm1724 = vcmp.ge.s32.totalorder %v1720, 1
        %vm1725 = vmand %vm1723, %vm1724
        %vm1726 = vcmp.le.s32.totalorder %v1720, 16
        %vm1727 = vmand %vm1725, %vm1726
        %v1728 = vsel %vm1727, 1, 0
        %v1729 = vcvt.s32.f32 %v1728
        %v1730 = vmul.f32 %v1707, %v1729
        %v1731 = vmul.f32 %v1708, %v1729
        %v1732 = vmul.f32 %v1709, %v1729
        %v1733 = vmul.f32 %v1710, %v1729
        %v1734 = vmul.f32 %v1711, %v1729
        %v1735 = vmul.f32 %v1712, %v1729
        %v1736 = vmul.f32 %v1713, %v1729
        %v1737 = vmul.f32 %v1714, %v1729
        %v1738 = vpack.c.bf16 %v1731, %v1730
        %v1739 = vpack.c.bf16 %v1733, %v1732
        %v1740 = vpack.c.bf16 %v1735, %v1734
        %v1741 = vpack.c.bf16 %v1737, %v1736
        %1742 = vst [vmem:[#allocation2 + $0x8] sm:$0xff] %v1738
        %1743 = vst [vmem:[#allocation2 + $0x30] sm:$0xff] %v1739
        %1744 = vst [vmem:[#allocation2 + $0x58] sm:$0xff] %v1740
        %1745 = vst [vmem:[#allocation2 + $0x80] sm:$0xff] %v1741
        %v1746 = vld [vmem:[#allocation7] sm:$0xf]
        %v1747 = vld [vmem:[#allocation7 + $0x4] sm:$0xf]
        %v1748 = vld [vmem:[#allocation7 + $0x8] sm:$0xf]
        %v1749 = vld [vmem:[#allocation7 + $0xc] sm:$0xf]
        %v1750 = vld [vmem:[#allocation7 + $0x10] sm:$0xf]
        %v1751 = vld [vmem:[#allocation7 + $0x14] sm:$0xf]
        %v1752 = vld [vmem:[#allocation7 + $0x18] sm:$0xf]
        %v1753 = vld [vmem:[#allocation7 + $0x1c] sm:$0xf]
        %v1754 = vld [vmem:[%s289 + $0x4] sm:$0xff]
        %v1755 = vld [vmem:[%s289 + $0x18] sm:$0xff]
        %v1756 = vld [vmem:[%s289 + $0x2c] sm:$0xff]
        %v1757 = vld [vmem:[%s289 + $0x40] sm:$0xff]
        %v1758 = vld [vmem:[%s289 + $0x54] sm:$0xff]
        %v1759 = vld [vmem:[%s289 + $0x68] sm:$0xff]
        %v1760 = vld [vmem:[%s289 + $0x7c] sm:$0xff]
        %v1761 = vld [vmem:[%s289 + $0x90] sm:$0xff]
        %v1762 = vld [vmem:[%s345] sm:$0xf]
        %v1763 = vld [vmem:[%s345 + $0x4] sm:$0xf]
        %v1764 = vld [vmem:[%s345 + $0x8] sm:$0xf]
        %v1765 = vld [vmem:[%s345 + $0xc] sm:$0xf]
        %v1766 = vld [vmem:[%s345 + $0x10] sm:$0xf]
        %v1767 = vld [vmem:[%s345 + $0x14] sm:$0xf]
        %v1768 = vld [vmem:[%s345 + $0x18] sm:$0xf]
        %v1769 = vld [vmem:[%s345 + $0x1c] sm:$0xf]
        %v1778 = vunpack.c.l.b16 %v1762
        %v1779 = vunpack.c.l.b16 %v1763
        %v1780 = vunpack.c.l.b16 %v1764
        %v1781 = vunpack.c.l.b16 %v1765
        %v1782 = vunpack.c.l.b16 %v1766
        %v1783 = vunpack.c.l.b16 %v1767
        %v1784 = vunpack.c.l.b16 %v1768
        %v1785 = vunpack.c.l.b16 %v1769
        %v1786 = vpack.c.b16 %v1779, %v1778
        %v1787 = vpack.c.b16 %v1781, %v1780
        %v1788 = vpack.c.b16 %v1783, %v1782
        %v1789 = vpack.c.b16 %v1785, %v1784
        %v1798 = vunpack.c.l.b16 %v1754
        %v1799 = vunpack.c.h.b16 %v1754
        %v1800 = vunpack.c.l.b16 %v1755
        %v1801 = vunpack.c.h.b16 %v1755
        %v1802 = vunpack.c.l.b16 %v1756
        %v1803 = vunpack.c.h.b16 %v1756
        %v1804 = vunpack.c.l.b16 %v1757
        %v1805 = vunpack.c.h.b16 %v1757
        %v1806 = vunpack.c.l.b16 %v1758
        %v1807 = vunpack.c.h.b16 %v1758
        %v1808 = vunpack.c.l.b16 %v1759
        %v1809 = vunpack.c.h.b16 %v1759
        %v1810 = vunpack.c.l.b16 %v1760
        %v1811 = vunpack.c.h.b16 %v1760
        %v1812 = vunpack.c.l.b16 %v1761
        %v1813 = vunpack.c.h.b16 %v1761
        %v1814 = vpack.c.b16 %v1800, %v1798
        %v1815 = vpack.c.b16 %v1801, %v1799
        %v1816 = vpack.c.b16 %v1804, %v1802
        %v1817 = vpack.c.b16 %v1805, %v1803
        %v1818 = vpack.c.b16 %v1808, %v1806
        %v1819 = vpack.c.b16 %v1809, %v1807
        %v1820 = vpack.c.b16 %v1812, %v1810
        %v1821 = vpack.c.b16 %v1813, %v1811
        %1822 = vrot.lane.b32.xlu0 %v1814, 18
        %v1823 = vpop.permute.xlu0 %1822
        %1824 = vrot.lane.b32.xlu0 %v1815, 18
        %v1825 = vpop.permute.xlu0 %1824
        %1826 = vrot.lane.b32.xlu0 %v1816, 18
        %v1827 = vpop.permute.xlu0 %1826
        %1828 = vrot.lane.b32.xlu0 %v1817, 18
        %v1829 = vpop.permute.xlu0 %1828
        %1830 = vrot.lane.b32.xlu0 %v1818, 18
        %v1831 = vpop.permute.xlu0 %1830
        %1832 = vrot.lane.b32.xlu0 %v1819, 18
        %v1833 = vpop.permute.xlu0 %1832
        %1834 = vrot.lane.b32.xlu0 %v1820, 18
        %v1835 = vpop.permute.xlu0 %1834
        %1836 = vrot.lane.b32.xlu0 %v1821, 18
        %v1837 = vpop.permute.xlu0 %1836
        %v1838 = vsel %vm422, %v1823, %v1825
        %v1839 = vsel %vm422, %v1827, %v1829
        %v1840 = vsel %vm422, %v1831, %v1833
        %v1841 = vsel %vm422, %v1835, %v1837
        %v1847 = vsel %vm431, %v1786, 0
        %v1850 = vsel %vm431, %v1787, 0
        %v1853 = vsel %vm431, %v1788, 0
        %v1856 = vsel %vm431, %v1789, 0
        %1858 = vmatprep.subr.bf16.mxu0 0
        %1859 = vmatpush1.bf16.msra.mxu0 %v1838
        %1860 = vmatprep.subr.bf16.mxu0 0
        %1861 = vmatpush1.bf16.msra.mxu0 %v1839
        %1862 = vmatprep.subr.bf16.mxu0 0
        %1863 = vmatpush1.bf16.msra.mxu0 %v1840
        %1864 = vmatprep.subr.bf16.mxu0 0
        %1865 = vmatpush1.bf16.msra.mxu0 %v1841
        %1866 = vmatprep.subr.bf16.mxu0 0
        %1867 = vmatpush1.bf16.msra.mxu0 0
        %1868 = vmatprep.subr.bf16.mxu0 0
        %1869 = vmatpush1.bf16.msra.mxu0 0
        %1870 = vmatprep.subr.bf16.mxu0 0
        %1871 = vmatpush1.bf16.msra.mxu0 0
        %1872 = vmatprep.subr.bf16.mxu0 0
        %1873 = vmatpush1.bf16.msra.mxu0 0
        %1874 = vmatprep.subr.bf16.mxu0 0
        %1875 = vmatpush1.bf16.msra.mxu0 0
        %1876 = vmatprep.subr.bf16.mxu0 0
        %1877 = vmatpush1.bf16.msra.mxu0 0
        %1878 = vmatprep.subr.bf16.mxu0 0
        %1879 = vmatpush1.bf16.msra.mxu0 0
        %1880 = vmatprep.subr.bf16.mxu0 0
        %1881 = vmatpush1.bf16.msra.mxu0 0
        %1882 = vmatprep.subr.bf16.mxu0 0
        %1883 = vmatpush1.bf16.msra.mxu0 0
        %1884 = vmatprep.subr.bf16.mxu0 0
        %1885 = vmatpush1.bf16.msra.mxu0 0
        %1886 = vmatprep.subr.bf16.mxu0 0
        %1887 = vmatpush1.bf16.msra.mxu0 0
        %1888 = vmatprep.subr.bf16.mxu0 0
        %1889 = vmatpush1.bf16.msra.mxu0 0
        %1890 = vmatprep.mubr.bf16.mxu0 0
        %1891 = vmatmul.mubr.bf16.gmra.mrb[0].mxu0 %v1847
        %v1892 = vpop.f32.mrb[0].mxu0
        %v1893 = vadd.f32 0.0, %v1892
        %v1894 = vpop.f32.mrb[0].mxu0
        %v1895 = vpop.f32.mrb[0].mxu0
        %v1896 = vadd.f32 0.0, %v1895
        %v1897 = vpop.f32.mrb[0].mxu0
        %1898 = vmatprep.mubr.bf16.mxu0 0
        %1899 = vmatmul.mubr.bf16.gmra.mrb[0].mxu0 %v1850
        %v1900 = vpop.f32.mrb[0].mxu0
        %v1901 = vadd.f32 0.0, %v1900
        %v1902 = vpop.f32.mrb[0].mxu0
        %v1903 = vpop.f32.mrb[0].mxu0
        %v1904 = vadd.f32 0.0, %v1903
        %v1905 = vpop.f32.mrb[0].mxu0
        %1906 = vmatprep.mubr.bf16.mxu0 0
        %1907 = vmatmul.mubr.bf16.gmra.mrb[0].mxu0 %v1853
        %v1908 = vpop.f32.mrb[0].mxu0
        %v1909 = vadd.f32 0.0, %v1908
        %v1910 = vpop.f32.mrb[0].mxu0
        %v1911 = vpop.f32.mrb[0].mxu0
        %v1912 = vadd.f32 0.0, %v1911
        %v1913 = vpop.f32.mrb[0].mxu0
        %1914 = vmatprep.mubr.bf16.mxu0 0
        %1915 = vmatmul.mubr.bf16.gmra.mrb[0].mxu0 %v1856
        %v1916 = vpop.f32.mrb[0].mxu0
        %v1917 = vadd.f32 0.0, %v1916
        %v1918 = vpop.f32.mrb[0].mxu0
        %v1919 = vpop.f32.mrb[0].mxu0
        %v1920 = vadd.f32 0.0, %v1919
        %v1921 = vpop.f32.mrb[0].mxu0
        %1922 = vdwg.mxu0
        %v1931 = vunpack.c.l.b16 %v1746
        %v1932 = vunpack.c.l.b16 %v1747
        %v1933 = vunpack.c.l.b16 %v1748
        %v1934 = vunpack.c.l.b16 %v1749
        %v1935 = vunpack.c.l.b16 %v1750
        %v1936 = vunpack.c.l.b16 %v1751
        %v1937 = vunpack.c.l.b16 %v1752
        %v1938 = vunpack.c.l.b16 %v1753
        %v1939 = vpack.c.b16 %v1932, %v1931
        %v1940 = vpack.c.b16 %v1934, %v1933
        %v1941 = vpack.c.b16 %v1936, %v1935
        %v1942 = vpack.c.b16 %v1938, %v1937
        %1943 = vrot.lane.b32.xlu0 %v1814, 19
        %v1944 = vpop.permute.xlu0 %1943
        %1945 = vrot.lane.b32.xlu0 %v1815, 19
        %v1946 = vpop.permute.xlu0 %1945
        %1947 = vrot.lane.b32.xlu0 %v1816, 19
        %v1948 = vpop.permute.xlu0 %1947
        %1949 = vrot.lane.b32.xlu0 %v1817, 19
        %v1950 = vpop.permute.xlu0 %1949
        %1951 = vrot.lane.b32.xlu0 %v1818, 19
        %v1952 = vpop.permute.xlu0 %1951
        %1953 = vrot.lane.b32.xlu0 %v1819, 19
        %v1954 = vpop.permute.xlu0 %1953
        %1955 = vrot.lane.b32.xlu0 %v1820, 19
        %v1956 = vpop.permute.xlu0 %1955
        %1957 = vrot.lane.b32.xlu0 %v1821, 19
        %v1958 = vpop.permute.xlu0 %1957
        %v1959 = vsel %vm545, %v1944, %v1946
        %v1960 = vsel %vm545, %v1948, %v1950
        %v1961 = vsel %vm545, %v1952, %v1954
        %v1962 = vsel %vm545, %v1956, %v1958
        %v1968 = vsel %vm431, %v1939, 0
        %v1971 = vsel %vm431, %v1940, 0
        %v1974 = vsel %vm431, %v1941, 0
        %v1977 = vsel %vm431, %v1942, 0
        %1979 = vmatprep.subr.bf16.mxu0 0
        %1980 = vmatpush1.bf16.msra.mxu0 %v1959
        %1981 = vmatprep.subr.bf16.mxu0 0
        %1982 = vmatpush1.bf16.msra.mxu0 %v1960
        %1983 = vmatprep.subr.bf16.mxu0 0
        %1984 = vmatpush1.bf16.msra.mxu0 %v1961
        %1985 = vmatprep.subr.bf16.mxu0 0
        %1986 = vmatpush1.bf16.msra.mxu0 %v1962
        %1987 = vmatprep.subr.bf16.mxu0 0
        %1988 = vmatpush1.bf16.msra.mxu0 0
        %1989 = vmatprep.subr.bf16.mxu0 0
        %1990 = vmatpush1.bf16.msra.mxu0 0
        %1991 = vmatprep.subr.bf16.mxu0 0
        %1992 = vmatpush1.bf16.msra.mxu0 0
        %1993 = vmatprep.subr.bf16.mxu0 0
        %1994 = vmatpush1.bf16.msra.mxu0 0
        %1995 = vmatprep.subr.bf16.mxu0 0
        %1996 = vmatpush1.bf16.msra.mxu0 0
        %1997 = vmatprep.subr.bf16.mxu0 0
        %1998 = vmatpush1.bf16.msra.mxu0 0
        %1999 = vmatprep.subr.bf16.mxu0 0
        %2000 = vmatpush1.bf16.msra.mxu0 0
        %2001 = vmatprep.subr.bf16.mxu0 0
        %2002 = vmatpush1.bf16.msra.mxu0 0
        %2003 = vmatprep.subr.bf16.mxu0 0
        %2004 = vmatpush1.bf16.msra.mxu0 0
        %2005 = vmatprep.subr.bf16.mxu0 0
        %2006 = vmatpush1.bf16.msra.mxu0 0
        %2007 = vmatprep.subr.bf16.mxu0 0
        %2008 = vmatpush1.bf16.msra.mxu0 0
        %2009 = vmatprep.subr.bf16.mxu0 0
        %2010 = vmatpush1.bf16.msra.mxu0 0
        %2011 = vmatprep.mubr.bf16.mxu0 0
        %2012 = vmatmul.mubr.bf16.gmra.mrb[0].mxu0 %v1968
        %v2013 = vpop.f32.mrb[0].mxu0
        %v2014 = vadd.f32 %v1893, %v2013
        %v2015 = vpop.f32.mrb[0].mxu0
        %v2016 = vpop.f32.mrb[0].mxu0
        %v2017 = vadd.f32 %v1896, %v2016
        %v2018 = vpop.f32.mrb[0].mxu0
        %2019 = vmatprep.mubr.bf16.mxu0 0
        %2020 = vmatmul.mubr.bf16.gmra.mrb[0].mxu0 %v1971
        %v2021 = vpop.f32.mrb[0].mxu0
        %v2022 = vadd.f32 %v1901, %v2021
        %v2023 = vpop.f32.mrb[0].mxu0
        %v2024 = vpop.f32.mrb[0].mxu0
        %v2025 = vadd.f32 %v1904, %v2024
        %v2026 = vpop.f32.mrb[0].mxu0
        %2027 = vmatprep.mubr.bf16.mxu0 0
        %2028 = vmatmul.mubr.bf16.gmra.mrb[0].mxu0 %v1974
        %v2029 = vpop.f32.mrb[0].mxu0
        %v2030 = vadd.f32 %v1909, %v2029
        %v2031 = vpop.f32.mrb[0].mxu0
        %v2032 = vpop.f32.mrb[0].mxu0
        %v2033 = vadd.f32 %v1912, %v2032
        %v2034 = vpop.f32.mrb[0].mxu0
        %2035 = vmatprep.mubr.bf16.mxu0 0
        %2036 = vmatmul.mubr.bf16.gmra.mrb[0].mxu0 %v1977
        %v2037 = vpop.f32.mrb[0].mxu0
        %v2038 = vadd.f32 %v1917, %v2037
        %v2039 = vpop.f32.mrb[0].mxu0
        %v2040 = vpop.f32.mrb[0].mxu0
        %v2041 = vadd.f32 %v1920, %v2040
        %v2042 = vpop.f32.mrb[0].mxu0
        %2043 = vdwg.mxu0
        %v2044 = vld [vmem:[%s631] sm:$0xf]
        %v2045 = vld [vmem:[%s631 + $0x4] sm:$0xf]
        %v2046 = vld [vmem:[%s631 + $0x8] sm:$0xf]
        %v2047 = vld [vmem:[%s631 + $0xc] sm:$0xf]
        %v2048 = vld [vmem:[%s631 + $0x10] sm:$0xf]
        %v2049 = vld [vmem:[%s631 + $0x14] sm:$0xf]
        %v2050 = vld [vmem:[%s631 + $0x18] sm:$0xf]
        %v2051 = vld [vmem:[%s631 + $0x1c] sm:$0xf]
        %v2060 = vunpack.c.l.b16 %v2044
        %v2061 = vunpack.c.l.b16 %v2045
        %v2062 = vunpack.c.l.b16 %v2046
        %v2063 = vunpack.c.l.b16 %v2047
        %v2064 = vunpack.c.l.b16 %v2048
        %v2065 = vunpack.c.l.b16 %v2049
        %v2066 = vunpack.c.l.b16 %v2050
        %v2067 = vunpack.c.l.b16 %v2051
        %v2068 = vpack.c.b16 %v2061, %v2060
        %v2069 = vpack.c.b16 %v2063, %v2062
        %v2070 = vpack.c.b16 %v2065, %v2064
        %v2071 = vpack.c.b16 %v2067, %v2066
        %2072 = vrot.lane.b32.xlu0 %v1814, 17
        %v2073 = vpop.permute.xlu0 %2072
        %2074 = vrot.lane.b32.xlu0 %v1815, 17
        %v2075 = vpop.permute.xlu0 %2074
        %2076 = vrot.lane.b32.xlu0 %v1816, 17
        %v2077 = vpop.permute.xlu0 %2076
        %2078 = vrot.lane.b32.xlu0 %v1817, 17
        %v2079 = vpop.permute.xlu0 %2078
        %2080 = vrot.lane.b32.xlu0 %v1818, 17
        %v2081 = vpop.permute.xlu0 %2080
        %2082 = vrot.lane.b32.xlu0 %v1819, 17
        %v2083 = vpop.permute.xlu0 %2082
        %2084 = vrot.lane.b32.xlu0 %v1820, 17
        %v2085 = vpop.permute.xlu0 %2084
        %2086 = vrot.lane.b32.xlu0 %v1821, 17
        %v2087 = vpop.permute.xlu0 %2086
        %v2088 = vsel %vm676, %v2073, %v2075
        %v2089 = vsel %vm676, %v2077, %v2079
        %v2090 = vsel %vm676, %v2081, %v2083
        %v2091 = vsel %vm676, %v2085, %v2087
        %v2097 = vsel %vm431, %v2068, 0
        %v2100 = vsel %vm431, %v2069, 0
        %v2103 = vsel %vm431, %v2070, 0
        %v2106 = vsel %vm431, %v2071, 0
        %2108 = vmatprep.subr.bf16.mxu0 0
        %2109 = vmatpush1.bf16.msra.mxu0 %v2088
        %2110 = vmatprep.subr.bf16.mxu0 0
        %2111 = vmatpush1.bf16.msra.mxu0 %v2089
        %2112 = vmatprep.subr.bf16.mxu0 0
        %2113 = vmatpush1.bf16.msra.mxu0 %v2090
        %2114 = vmatprep.subr.bf16.mxu0 0
        %2115 = vmatpush1.bf16.msra.mxu0 %v2091
        %2116 = vmatprep.subr.bf16.mxu0 0
        %2117 = vmatpush1.bf16.msra.mxu0 0
        %2118 = vmatprep.subr.bf16.mxu0 0
        %2119 = vmatpush1.bf16.msra.mxu0 0
        %2120 = vmatprep.subr.bf16.mxu0 0
        %2121 = vmatpush1.bf16.msra.mxu0 0
        %2122 = vmatprep.subr.bf16.mxu0 0
        %2123 = vmatpush1.bf16.msra.mxu0 0
        %2124 = vmatprep.subr.bf16.mxu0 0
        %2125 = vmatpush1.bf16.msra.mxu0 0
        %2126 = vmatprep.subr.bf16.mxu0 0
        %2127 = vmatpush1.bf16.msra.mxu0 0
        %2128 = vmatprep.subr.bf16.mxu0 0
        %2129 = vmatpush1.bf16.msra.mxu0 0
        %2130 = vmatprep.subr.bf16.mxu0 0
        %2131 = vmatpush1.bf16.msra.mxu0 0
        %2132 = vmatprep.subr.bf16.mxu0 0
        %2133 = vmatpush1.bf16.msra.mxu0 0
        %2134 = vmatprep.subr.bf16.mxu0 0
        %2135 = vmatpush1.bf16.msra.mxu0 0
        %2136 = vmatprep.subr.bf16.mxu0 0
        %2137 = vmatpush1.bf16.msra.mxu0 0
        %2138 = vmatprep.subr.bf16.mxu0 0
        %2139 = vmatpush1.bf16.msra.mxu0 0
        %2140 = vmatprep.mubr.bf16.mxu0 0
        %2141 = vmatmul.mubr.bf16.gmra.mrb[0].mxu0 %v2097
        %v2142 = vpop.f32.mrb[0].mxu0
        %v2143 = vadd.f32 0.0, %v2142
        %v2144 = vpop.f32.mrb[0].mxu0
        %v2145 = vpop.f32.mrb[0].mxu0
        %v2146 = vadd.f32 0.0, %v2145
        %v2147 = vpop.f32.mrb[0].mxu0
        %2148 = vmatprep.mubr.bf16.mxu0 0
        %2149 = vmatmul.mubr.bf16.gmra.mrb[0].mxu0 %v2100
        %v2150 = vpop.f32.mrb[0].mxu0
        %v2151 = vadd.f32 0.0, %v2150
        %v2152 = vpop.f32.mrb[0].mxu0
        %v2153 = vpop.f32.mrb[0].mxu0
        %v2154 = vadd.f32 0.0, %v2153
        %v2155 = vpop.f32.mrb[0].mxu0
        %2156 = vmatprep.mubr.bf16.mxu0 0
        %2157 = vmatmul.mubr.bf16.gmra.mrb[0].mxu0 %v2103
        %v2158 = vpop.f32.mrb[0].mxu0
        %v2159 = vadd.f32 0.0, %v2158
        %v2160 = vpop.f32.mrb[0].mxu0
        %v2161 = vpop.f32.mrb[0].mxu0
        %v2162 = vadd.f32 0.0, %v2161
        %v2163 = vpop.f32.mrb[0].mxu0
        %2164 = vmatprep.mubr.bf16.mxu0 0
        %2165 = vmatmul.mubr.bf16.gmra.mrb[0].mxu0 %v2106
        %v2166 = vpop.f32.mrb[0].mxu0
        %v2167 = vadd.f32 0.0, %v2166
        %v2168 = vpop.f32.mrb[0].mxu0
        %v2169 = vpop.f32.mrb[0].mxu0
        %v2170 = vadd.f32 0.0, %v2169
        %v2171 = vpop.f32.mrb[0].mxu0
        %2172 = vdwg.mxu0
        %v2173 = vadd.f32 %v2014, %v2143
        %v2174 = vadd.f32 %v2017, %v2146
        %v2175 = vadd.f32 %v2022, %v2151
        %v2176 = vadd.f32 %v2025, %v2154
        %v2177 = vadd.f32 %v2030, %v2159
        %v2178 = vadd.f32 %v2033, %v2162
        %v2179 = vadd.f32 %v2038, %v2167
        %v2180 = vadd.f32 %v2041, %v2170
        %v2181 = vld [vmem:[%s770] sm:$0xf]
        %v2182 = vld [vmem:[%s770 + $0x4] sm:$0xf]
        %v2183 = vld [vmem:[%s770 + $0x8] sm:$0xf]
        %v2184 = vld [vmem:[%s770 + $0xc] sm:$0xf]
        %v2185 = vld [vmem:[%s770 + $0x10] sm:$0xf]
        %v2186 = vld [vmem:[%s770 + $0x14] sm:$0xf]
        %v2187 = vld [vmem:[%s770 + $0x18] sm:$0xf]
        %v2188 = vld [vmem:[%s770 + $0x1c] sm:$0xf]
        %v2197 = vunpack.c.l.b16 %v2181
        %v2198 = vunpack.c.l.b16 %v2182
        %v2199 = vunpack.c.l.b16 %v2183
        %v2200 = vunpack.c.l.b16 %v2184
        %v2201 = vunpack.c.l.b16 %v2185
        %v2202 = vunpack.c.l.b16 %v2186
        %v2203 = vunpack.c.l.b16 %v2187
        %v2204 = vunpack.c.l.b16 %v2188
        %v2205 = vpack.c.b16 %v2198, %v2197
        %v2206 = vpack.c.b16 %v2200, %v2199
        %v2207 = vpack.c.b16 %v2202, %v2201
        %v2208 = vpack.c.b16 %v2204, %v2203
        %2209 = vrot.lane.b32.xlu0 %v1814, 1
        %v2210 = vpop.permute.xlu0 %2209
        %2211 = vrot.lane.b32.xlu0 %v1815, 1
        %v2212 = vpop.permute.xlu0 %2211
        %2213 = vrot.lane.b32.xlu0 %v1816, 1
        %v2214 = vpop.permute.xlu0 %2213
        %2215 = vrot.lane.b32.xlu0 %v1817, 1
        %v2216 = vpop.permute.xlu0 %2215
        %2217 = vrot.lane.b32.xlu0 %v1818, 1
        %v2218 = vpop.permute.xlu0 %2217
        %2219 = vrot.lane.b32.xlu0 %v1819, 1
        %v2220 = vpop.permute.xlu0 %2219
        %2221 = vrot.lane.b32.xlu0 %v1820, 1
        %v2222 = vpop.permute.xlu0 %2221
        %2223 = vrot.lane.b32.xlu0 %v1821, 1
        %v2224 = vpop.permute.xlu0 %2223
        %v2225 = vsel %vm815, %v2210, %v2212
        %v2226 = vsel %vm815, %v2214, %v2216
        %v2227 = vsel %vm815, %v2218, %v2220
        %v2228 = vsel %vm815, %v2222, %v2224
        %v2234 = vsel %vm431, %v2205, 0
        %v2237 = vsel %vm431, %v2206, 0
        %v2240 = vsel %vm431, %v2207, 0
        %v2243 = vsel %vm431, %v2208, 0
        %2245 = vmatprep.subr.bf16.mxu0 0
        %2246 = vmatpush1.bf16.msra.mxu0 %v2225
        %2247 = vmatprep.subr.bf16.mxu0 0
        %2248 = vmatpush1.bf16.msra.mxu0 %v2226
        %2249 = vmatprep.subr.bf16.mxu0 0
        %2250 = vmatpush1.bf16.msra.mxu0 %v2227
        %2251 = vmatprep.subr.bf16.mxu0 0
        %2252 = vmatpush1.bf16.msra.mxu0 %v2228
        %2253 = vmatprep.subr.bf16.mxu0 0
        %2254 = vmatpush1.bf16.msra.mxu0 0
        %2255 = vmatprep.subr.bf16.mxu0 0
        %2256 = vmatpush1.bf16.msra.mxu0 0
        %2257 = vmatprep.subr.bf16.mxu0 0
        %2258 = vmatpush1.bf16.msra.mxu0 0
        %2259 = vmatprep.subr.bf16.mxu0 0
        %2260 = vmatpush1.bf16.msra.mxu0 0
        %2261 = vmatprep.subr.bf16.mxu0 0
        %2262 = vmatpush1.bf16.msra.mxu0 0
        %2263 = vmatprep.subr.bf16.mxu0 0
        %2264 = vmatpush1.bf16.msra.mxu0 0
        %2265 = vmatprep.subr.bf16.mxu0 0
        %2266 = vmatpush1.bf16.msra.mxu0 0
        %2267 = vmatprep.subr.bf16.mxu0 0
        %2268 = vmatpush1.bf16.msra.mxu0 0
        %2269 = vmatprep.subr.bf16.mxu0 0
        %2270 = vmatpush1.bf16.msra.mxu0 0
        %2271 = vmatprep.subr.bf16.mxu0 0
        %2272 = vmatpush1.bf16.msra.mxu0 0
        %2273 = vmatprep.subr.bf16.mxu0 0
        %2274 = vmatpush1.bf16.msra.mxu0 0
        %2275 = vmatprep.subr.bf16.mxu0 0
        %2276 = vmatpush1.bf16.msra.mxu0 0
        %2277 = vmatprep.mubr.bf16.mxu0 0
        %2278 = vmatmul.mubr.bf16.gmra.mrb[0].mxu0 %v2234
        %v2279 = vpop.f32.mrb[0].mxu0
        %v2280 = vadd.f32 0.0, %v2279
        %v2281 = vpop.f32.mrb[0].mxu0
        %v2282 = vpop.f32.mrb[0].mxu0
        %v2283 = vadd.f32 0.0, %v2282
        %v2284 = vpop.f32.mrb[0].mxu0
        %2285 = vmatprep.mubr.bf16.mxu0 0
        %2286 = vmatmul.mubr.bf16.gmra.mrb[0].mxu0 %v2237
        %v2287 = vpop.f32.mrb[0].mxu0
        %v2288 = vadd.f32 0.0, %v2287
        %v2289 = vpop.f32.mrb[0].mxu0
        %v2290 = vpop.f32.mrb[0].mxu0
        %v2291 = vadd.f32 0.0, %v2290
        %v2292 = vpop.f32.mrb[0].mxu0
        %2293 = vmatprep.mubr.bf16.mxu0 0
        %2294 = vmatmul.mubr.bf16.gmra.mrb[0].mxu0 %v2240
        %v2295 = vpop.f32.mrb[0].mxu0
        %v2296 = vadd.f32 0.0, %v2295
        %v2297 = vpop.f32.mrb[0].mxu0
        %v2298 = vpop.f32.mrb[0].mxu0
        %v2299 = vadd.f32 0.0, %v2298
        %v2300 = vpop.f32.mrb[0].mxu0
        %2301 = vmatprep.mubr.bf16.mxu0 0
        %2302 = vmatmul.mubr.bf16.gmra.mrb[0].mxu0 %v2243
        %v2303 = vpop.f32.mrb[0].mxu0
        %v2304 = vadd.f32 0.0, %v2303
        %v2305 = vpop.f32.mrb[0].mxu0
        %v2306 = vpop.f32.mrb[0].mxu0
        %v2307 = vadd.f32 0.0, %v2306
        %v2308 = vpop.f32.mrb[0].mxu0
        %2309 = vdwg.mxu0
        %v2310 = vadd.f32 %v2173, %v2280
        %v2311 = vadd.f32 %v2174, %v2283
        %v2312 = vadd.f32 %v2175, %v2288
        %v2313 = vadd.f32 %v2176, %v2291
        %v2314 = vadd.f32 %v2177, %v2296
        %v2315 = vadd.f32 %v2178, %v2299
        %v2316 = vadd.f32 %v2179, %v2304
        %v2317 = vadd.f32 %v2180, %v2307
        %v2318 = vld [vmem:[%s909] sm:$0xf]
        %v2319 = vld [vmem:[%s909 + $0x4] sm:$0xf]
        %v2320 = vld [vmem:[%s909 + $0x8] sm:$0xf]
        %v2321 = vld [vmem:[%s909 + $0xc] sm:$0xf]
        %v2322 = vld [vmem:[%s909 + $0x10] sm:$0xf]
        %v2323 = vld [vmem:[%s909 + $0x14] sm:$0xf]
        %v2324 = vld [vmem:[%s909 + $0x18] sm:$0xf]
        %v2325 = vld [vmem:[%s909 + $0x1c] sm:$0xf]
        %v2326 = vld [vmem:[%s289 + $0x8] sm:$0xf]
        %v2327 = vld [vmem:[%s289 + $0x1c] sm:$0xf]
        %v2328 = vld [vmem:[%s289 + $0x30] sm:$0xf]
        %v2329 = vld [vmem:[%s289 + $0x44] sm:$0xf]
        %v2330 = vld [vmem:[%s289 + $0x58] sm:$0xf]
        %v2331 = vld [vmem:[%s289 + $0x6c] sm:$0xf]
        %v2332 = vld [vmem:[%s289 + $0x80] sm:$0xf]
        %v2333 = vld [vmem:[%s289 + $0x94] sm:$0xf]
        %v2342 = vunpack.c.l.b16 %v2318
        %v2343 = vunpack.c.l.b16 %v2319
        %v2344 = vunpack.c.l.b16 %v2320
        %v2345 = vunpack.c.l.b16 %v2321
        %v2346 = vunpack.c.l.b16 %v2322
        %v2347 = vunpack.c.l.b16 %v2323
        %v2348 = vunpack.c.l.b16 %v2324
        %v2349 = vunpack.c.l.b16 %v2325
        %v2350 = vpack.c.b16 %v2343, %v2342
        %v2351 = vpack.c.b16 %v2345, %v2344
        %v2352 = vpack.c.b16 %v2347, %v2346
        %v2353 = vpack.c.b16 %v2349, %v2348
        %v2362 = vunpack.c.l.b16 %v2326
        %v2363 = vunpack.c.l.b16 %v2327
        %v2364 = vunpack.c.l.b16 %v2328
        %v2365 = vunpack.c.l.b16 %v2329
        %v2366 = vunpack.c.l.b16 %v2330
        %v2367 = vunpack.c.l.b16 %v2331
        %v2368 = vunpack.c.l.b16 %v2332
        %v2369 = vunpack.c.l.b16 %v2333
        %v2370 = vpack.c.b16 %v2363, %v2362
        %v2371 = vpack.c.b16 %v2365, %v2364
        %v2372 = vpack.c.b16 %v2367, %v2366
        %v2373 = vpack.c.b16 %v2369, %v2368
        %v2379 = vsel %vm431, %v2350, 0
        %v2382 = vsel %vm431, %v2351, 0
        %v2385 = vsel %vm431, %v2352, 0
        %v2388 = vsel %vm431, %v2353, 0
        %2390 = vmatprep.subr.bf16.mxu0 0
        %2391 = vmatpush1.bf16.msra.mxu0 %v2370
        %2392 = vmatprep.subr.bf16.mxu0 0
        %2393 = vmatpush1.bf16.msra.mxu0 %v2371
        %2394 = vmatprep.subr.bf16.mxu0 0
        %2395 = vmatpush1.bf16.msra.mxu0 %v2372
        %2396 = vmatprep.subr.bf16.mxu0 0
        %2397 = vmatpush1.bf16.msra.mxu0 %v2373
        %2398 = vmatprep.subr.bf16.mxu0 0
        %2399 = vmatpush1.bf16.msra.mxu0 0
        %2400 = vmatprep.subr.bf16.mxu0 0
        %2401 = vmatpush1.bf16.msra.mxu0 0
        %2402 = vmatprep.subr.bf16.mxu0 0
        %2403 = vmatpush1.bf16.msra.mxu0 0
        %2404 = vmatprep.subr.bf16.mxu0 0
        %2405 = vmatpush1.bf16.msra.mxu0 0
        %2406 = vmatprep.subr.bf16.mxu0 0
        %2407 = vmatpush1.bf16.msra.mxu0 0
        %2408 = vmatprep.subr.bf16.mxu0 0
        %2409 = vmatpush1.bf16.msra.mxu0 0
        %2410 = vmatprep.subr.bf16.mxu0 0
        %2411 = vmatpush1.bf16.msra.mxu0 0
        %2412 = vmatprep.subr.bf16.mxu0 0
        %2413 = vmatpush1.bf16.msra.mxu0 0
        %2414 = vmatprep.subr.bf16.mxu0 0
        %2415 = vmatpush1.bf16.msra.mxu0 0
        %2416 = vmatprep.subr.bf16.mxu0 0
        %2417 = vmatpush1.bf16.msra.mxu0 0
        %2418 = vmatprep.subr.bf16.mxu0 0
        %2419 = vmatpush1.bf16.msra.mxu0 0
        %2420 = vmatprep.subr.bf16.mxu0 0
        %2421 = vmatpush1.bf16.msra.mxu0 0
        %2422 = vmatprep.mubr.bf16.mxu0 0
        %2423 = vmatmul.mubr.bf16.gmra.mrb[0].mxu0 %v2379
        %v2424 = vpop.f32.mrb[0].mxu0
        %v2425 = vadd.f32 0.0, %v2424
        %v2426 = vpop.f32.mrb[0].mxu0
        %v2427 = vpop.f32.mrb[0].mxu0
        %v2428 = vadd.f32 0.0, %v2427
        %v2429 = vpop.f32.mrb[0].mxu0
        %2430 = vmatprep.mubr.bf16.mxu0 0
        %2431 = vmatmul.mubr.bf16.gmra.mrb[0].mxu0 %v2382
        %v2432 = vpop.f32.mrb[0].mxu0
        %v2433 = vadd.f32 0.0, %v2432
        %v2434 = vpop.f32.mrb[0].mxu0
        %v2435 = vpop.f32.mrb[0].mxu0
        %v2436 = vadd.f32 0.0, %v2435
        %v2437 = vpop.f32.mrb[0].mxu0
        %2438 = vmatprep.mubr.bf16.mxu0 0
        %2439 = vmatmul.mubr.bf16.gmra.mrb[0].mxu0 %v2385
        %v2440 = vpop.f32.mrb[0].mxu0
        %v2441 = vadd.f32 0.0, %v2440
        %v2442 = vpop.f32.mrb[0].mxu0
        %v2443 = vpop.f32.mrb[0].mxu0
        %v2444 = vadd.f32 0.0, %v2443
        %v2445 = vpop.f32.mrb[0].mxu0
        %2446 = vmatprep.mubr.bf16.mxu0 0
        %2447 = vmatmul.mubr.bf16.gmra.mrb[0].mxu0 %v2388
        %v2448 = vpop.f32.mrb[0].mxu0
        %v2449 = vadd.f32 0.0, %v2448
        %v2450 = vpop.f32.mrb[0].mxu0
        %v2451 = vpop.f32.mrb[0].mxu0
        %v2452 = vadd.f32 0.0, %v2451
        %v2453 = vpop.f32.mrb[0].mxu0
        %2454 = vdwg.mxu0
        %v2455 = vadd.f32 %v2310, %v2425
        %v2456 = vadd.f32 %v2311, %v2428
        %v2457 = vadd.f32 %v2312, %v2433
        %v2458 = vadd.f32 %v2313, %v2436
        %v2459 = vadd.f32 %v2314, %v2441
        %v2460 = vadd.f32 %v2315, %v2444
        %v2461 = vadd.f32 %v2316, %v2449
        %v2462 = vadd.f32 %v2317, %v2452
        %v2463 = vld [vmem:[%s1055] sm:$0xf]
        %v2464 = vld [vmem:[%s1055 + $0x4] sm:$0xf]
        %v2465 = vld [vmem:[%s1055 + $0x8] sm:$0xf]
        %v2466 = vld [vmem:[%s1055 + $0xc] sm:$0xf]
        %v2467 = vld [vmem:[%s1055 + $0x10] sm:$0xf]
        %v2468 = vld [vmem:[%s1055 + $0x14] sm:$0xf]
        %v2469 = vld [vmem:[%s1055 + $0x18] sm:$0xf]
        %v2470 = vld [vmem:[%s1055 + $0x1c] sm:$0xf]
        %v2471 = vld [vmem:[%s289 + $0x8] sm:$0xff]
        %v2472 = vld [vmem:[%s289 + $0x1c] sm:$0xff]
        %v2473 = vld [vmem:[%s289 + $0x30] sm:$0xff]
        %v2474 = vld [vmem:[%s289 + $0x44] sm:$0xff]
        %v2475 = vld [vmem:[%s289 + $0x58] sm:$0xff]
        %v2476 = vld [vmem:[%s289 + $0x6c] sm:$0xff]
        %v2477 = vld [vmem:[%s289 + $0x80] sm:$0xff]
        %v2478 = vld [vmem:[%s289 + $0x94] sm:$0xff]
        %v2487 = vunpack.c.l.b16 %v2463
        %v2488 = vunpack.c.l.b16 %v2464
        %v2489 = vunpack.c.l.b16 %v2465
        %v2490 = vunpack.c.l.b16 %v2466
        %v2491 = vunpack.c.l.b16 %v2467
        %v2492 = vunpack.c.l.b16 %v2468
        %v2493 = vunpack.c.l.b16 %v2469
        %v2494 = vunpack.c.l.b16 %v2470
        %v2495 = vpack.c.b16 %v2488, %v2487
        %v2496 = vpack.c.b16 %v2490, %v2489
        %v2497 = vpack.c.b16 %v2492, %v2491
        %v2498 = vpack.c.b16 %v2494, %v2493
        %v2507 = vunpack.c.l.b16 %v2471
        %v2508 = vunpack.c.h.b16 %v2471
        %v2509 = vunpack.c.l.b16 %v2472
        %v2510 = vunpack.c.h.b16 %v2472
        %v2511 = vunpack.c.l.b16 %v2473
        %v2512 = vunpack.c.h.b16 %v2473
        %v2513 = vunpack.c.l.b16 %v2474
        %v2514 = vunpack.c.h.b16 %v2474
        %v2515 = vunpack.c.l.b16 %v2475
        %v2516 = vunpack.c.h.b16 %v2475
        %v2517 = vunpack.c.l.b16 %v2476
        %v2518 = vunpack.c.h.b16 %v2476
        %v2519 = vunpack.c.l.b16 %v2477
        %v2520 = vunpack.c.h.b16 %v2477
        %v2521 = vunpack.c.l.b16 %v2478
        %v2522 = vunpack.c.h.b16 %v2478
        %v2523 = vpack.c.b16 %v2509, %v2507
        %v2524 = vpack.c.b16 %v2510, %v2508
        %v2525 = vpack.c.b16 %v2513, %v2511
        %v2526 = vpack.c.b16 %v2514, %v2512
        %v2527 = vpack.c.b16 %v2517, %v2515
        %v2528 = vpack.c.b16 %v2518, %v2516
        %v2529 = vpack.c.b16 %v2521, %v2519
        %v2530 = vpack.c.b16 %v2522, %v2520
        %2531 = vrot.lane.b32.xlu0 %v2523, 127
        %v2532 = vpop.permute.xlu0 %2531
        %2533 = vrot.lane.b32.xlu0 %v2524, 127
        %v2534 = vpop.permute.xlu0 %2533
        %2535 = vrot.lane.b32.xlu0 %v2525, 127
        %v2536 = vpop.permute.xlu0 %2535
        %2537 = vrot.lane.b32.xlu0 %v2526, 127
        %v2538 = vpop.permute.xlu0 %2537
        %2539 = vrot.lane.b32.xlu0 %v2527, 127
        %v2540 = vpop.permute.xlu0 %2539
        %2541 = vrot.lane.b32.xlu0 %v2528, 127
        %v2542 = vpop.permute.xlu0 %2541
        %2543 = vrot.lane.b32.xlu0 %v2529, 127
        %v2544 = vpop.permute.xlu0 %2543
        %2545 = vrot.lane.b32.xlu0 %v2530, 127
        %v2546 = vpop.permute.xlu0 %2545
        %v2547 = vsel %vm1140, %v2532, %v2534
        %v2548 = vsel %vm1140, %v2536, %v2538
        %v2549 = vsel %vm1140, %v2540, %v2542
        %v2550 = vsel %vm1140, %v2544, %v2546
        %v2556 = vsel %vm431, %v2495, 0
        %v2559 = vsel %vm431, %v2496, 0
        %v2562 = vsel %vm431, %v2497, 0
        %v2565 = vsel %vm431, %v2498, 0
        %2567 = vmatprep.subr.bf16.mxu0 0
        %2568 = vmatpush1.bf16.msra.mxu0 %v2547
        %2569 = vmatprep.subr.bf16.mxu0 0
        %2570 = vmatpush1.bf16.msra.mxu0 %v2548
        %2571 = vmatprep.subr.bf16.mxu0 0
        %2572 = vmatpush1.bf16.msra.mxu0 %v2549
        %2573 = vmatprep.subr.bf16.mxu0 0
        %2574 = vmatpush1.bf16.msra.mxu0 %v2550
        %2575 = vmatprep.subr.bf16.mxu0 0
        %2576 = vmatpush1.bf16.msra.mxu0 0
        %2577 = vmatprep.subr.bf16.mxu0 0
        %2578 = vmatpush1.bf16.msra.mxu0 0
        %2579 = vmatprep.subr.bf16.mxu0 0
        %2580 = vmatpush1.bf16.msra.mxu0 0
        %2581 = vmatprep.subr.bf16.mxu0 0
        %2582 = vmatpush1.bf16.msra.mxu0 0
        %2583 = vmatprep.subr.bf16.mxu0 0
        %2584 = vmatpush1.bf16.msra.mxu0 0
        %2585 = vmatprep.subr.bf16.mxu0 0
        %2586 = vmatpush1.bf16.msra.mxu0 0
        %2587 = vmatprep.subr.bf16.mxu0 0
        %2588 = vmatpush1.bf16.msra.mxu0 0
        %2589 = vmatprep.subr.bf16.mxu0 0
        %2590 = vmatpush1.bf16.msra.mxu0 0
        %2591 = vmatprep.subr.bf16.mxu0 0
        %2592 = vmatpush1.bf16.msra.mxu0 0
        %2593 = vmatprep.subr.bf16.mxu0 0
        %2594 = vmatpush1.bf16.msra.mxu0 0
        %2595 = vmatprep.subr.bf16.mxu0 0
        %2596 = vmatpush1.bf16.msra.mxu0 0
        %2597 = vmatprep.subr.bf16.mxu0 0
        %2598 = vmatpush1.bf16.msra.mxu0 0
        %2599 = vmatprep.mubr.bf16.mxu0 0
        %2600 = vmatmul.mubr.bf16.gmra.mrb[0].mxu0 %v2556
        %v2601 = vpop.f32.mrb[0].mxu0
        %v2602 = vadd.f32 0.0, %v2601
        %v2603 = vpop.f32.mrb[0].mxu0
        %v2604 = vpop.f32.mrb[0].mxu0
        %v2605 = vadd.f32 0.0, %v2604
        %v2606 = vpop.f32.mrb[0].mxu0
        %2607 = vmatprep.mubr.bf16.mxu0 0
        %2608 = vmatmul.mubr.bf16.gmra.mrb[0].mxu0 %v2559
        %v2609 = vpop.f32.mrb[0].mxu0
        %v2610 = vadd.f32 0.0, %v2609
        %v2611 = vpop.f32.mrb[0].mxu0
        %v2612 = vpop.f32.mrb[0].mxu0
        %v2613 = vadd.f32 0.0, %v2612
        %v2614 = vpop.f32.mrb[0].mxu0
        %2615 = vmatprep.mubr.bf16.mxu0 0
        %2616 = vmatmul.mubr.bf16.gmra.mrb[0].mxu0 %v2562
        %v2617 = vpop.f32.mrb[0].mxu0
        %v2618 = vadd.f32 0.0, %v2617
        %v2619 = vpop.f32.mrb[0].mxu0
        %v2620 = vpop.f32.mrb[0].mxu0
        %v2621 = vadd.f32 0.0, %v2620
        %v2622 = vpop.f32.mrb[0].mxu0
        %2623 = vmatprep.mubr.bf16.mxu0 0
        %2624 = vmatmul.mubr.bf16.gmra.mrb[0].mxu0 %v2565
        %v2625 = vpop.f32.mrb[0].mxu0
        %v2626 = vadd.f32 0.0, %v2625
        %v2627 = vpop.f32.mrb[0].mxu0
        %v2628 = vpop.f32.mrb[0].mxu0
        %v2629 = vadd.f32 0.0, %v2628
        %v2630 = vpop.f32.mrb[0].mxu0
        %2631 = vdwg.mxu0
        %v2632 = vadd.f32 %v2455, %v2602
        %v2633 = vadd.f32 %v2456, %v2605
        %v2634 = vadd.f32 %v2457, %v2610
        %v2635 = vadd.f32 %v2458, %v2613
        %v2636 = vadd.f32 %v2459, %v2618
        %v2637 = vadd.f32 %v2460, %v2621
        %v2638 = vadd.f32 %v2461, %v2626
        %v2639 = vadd.f32 %v2462, %v2629
        %v2640 = vld [vmem:[%s1234] sm:$0xf]
        %v2641 = vld [vmem:[%s1234 + $0x4] sm:$0xf]
        %v2642 = vld [vmem:[%s1234 + $0x8] sm:$0xf]
        %v2643 = vld [vmem:[%s1234 + $0xc] sm:$0xf]
        %v2644 = vld [vmem:[%s1234 + $0x10] sm:$0xf]
        %v2645 = vld [vmem:[%s1234 + $0x14] sm:$0xf]
        %v2646 = vld [vmem:[%s1234 + $0x18] sm:$0xf]
        %v2647 = vld [vmem:[%s1234 + $0x1c] sm:$0xf]
        %v2656 = vunpack.c.l.b16 %v2640
        %v2657 = vunpack.c.l.b16 %v2641
        %v2658 = vunpack.c.l.b16 %v2642
        %v2659 = vunpack.c.l.b16 %v2643
        %v2660 = vunpack.c.l.b16 %v2644
        %v2661 = vunpack.c.l.b16 %v2645
        %v2662 = vunpack.c.l.b16 %v2646
        %v2663 = vunpack.c.l.b16 %v2647
        %v2664 = vpack.c.b16 %v2657, %v2656
        %v2665 = vpack.c.b16 %v2659, %v2658
        %v2666 = vpack.c.b16 %v2661, %v2660
        %v2667 = vpack.c.b16 %v2663, %v2662
        %2668 = vrot.lane.b32.xlu0 %v2523, 111
        %v2669 = vpop.permute.xlu0 %2668
        %2670 = vrot.lane.b32.xlu0 %v2524, 111
        %v2671 = vpop.permute.xlu0 %2670
        %2672 = vrot.lane.b32.xlu0 %v2525, 111
        %v2673 = vpop.permute.xlu0 %2672
        %2674 = vrot.lane.b32.xlu0 %v2526, 111
        %v2675 = vpop.permute.xlu0 %2674
        %2676 = vrot.lane.b32.xlu0 %v2527, 111
        %v2677 = vpop.permute.xlu0 %2676
        %2678 = vrot.lane.b32.xlu0 %v2528, 111
        %v2679 = vpop.permute.xlu0 %2678
        %2680 = vrot.lane.b32.xlu0 %v2529, 111
        %v2681 = vpop.permute.xlu0 %2680
        %2682 = vrot.lane.b32.xlu0 %v2530, 111
        %v2683 = vpop.permute.xlu0 %2682
        %v2684 = vsel %vm1279, %v2669, %v2671
        %v2685 = vsel %vm1279, %v2673, %v2675
        %v2686 = vsel %vm1279, %v2677, %v2679
        %v2687 = vsel %vm1279, %v2681, %v2683
        %v2693 = vsel %vm431, %v2664, 0
        %v2696 = vsel %vm431, %v2665, 0
        %v2699 = vsel %vm431, %v2666, 0
        %v2702 = vsel %vm431, %v2667, 0
        %2704 = vmatprep.subr.bf16.mxu0 0
        %2705 = vmatpush1.bf16.msra.mxu0 %v2684
        %2706 = vmatprep.subr.bf16.mxu0 0
        %2707 = vmatpush1.bf16.msra.mxu0 %v2685
        %2708 = vmatprep.subr.bf16.mxu0 0
        %2709 = vmatpush1.bf16.msra.mxu0 %v2686
        %2710 = vmatprep.subr.bf16.mxu0 0
        %2711 = vmatpush1.bf16.msra.mxu0 %v2687
        %2712 = vmatprep.subr.bf16.mxu0 0
        %2713 = vmatpush1.bf16.msra.mxu0 0
        %2714 = vmatprep.subr.bf16.mxu0 0
        %2715 = vmatpush1.bf16.msra.mxu0 0
        %2716 = vmatprep.subr.bf16.mxu0 0
        %2717 = vmatpush1.bf16.msra.mxu0 0
        %2718 = vmatprep.subr.bf16.mxu0 0
        %2719 = vmatpush1.bf16.msra.mxu0 0
        %2720 = vmatprep.subr.bf16.mxu0 0
        %2721 = vmatpush1.bf16.msra.mxu0 0
        %2722 = vmatprep.subr.bf16.mxu0 0
        %2723 = vmatpush1.bf16.msra.mxu0 0
        %2724 = vmatprep.subr.bf16.mxu0 0
        %2725 = vmatpush1.bf16.msra.mxu0 0
        %2726 = vmatprep.subr.bf16.mxu0 0
        %2727 = vmatpush1.bf16.msra.mxu0 0
        %2728 = vmatprep.subr.bf16.mxu0 0
        %2729 = vmatpush1.bf16.msra.mxu0 0
        %2730 = vmatprep.subr.bf16.mxu0 0
        %2731 = vmatpush1.bf16.msra.mxu0 0
        %2732 = vmatprep.subr.bf16.mxu0 0
        %2733 = vmatpush1.bf16.msra.mxu0 0
        %2734 = vmatprep.subr.bf16.mxu0 0
        %2735 = vmatpush1.bf16.msra.mxu0 0
        %2736 = vmatprep.mubr.bf16.mxu0 0
        %2737 = vmatmul.mubr.bf16.gmra.mrb[0].mxu0 %v2693
        %v2738 = vpop.f32.mrb[0].mxu0
        %v2739 = vadd.f32 0.0, %v2738
        %v2740 = vpop.f32.mrb[0].mxu0
        %v2741 = vpop.f32.mrb[0].mxu0
        %v2742 = vadd.f32 0.0, %v2741
        %v2743 = vpop.f32.mrb[0].mxu0
        %2744 = vmatprep.mubr.bf16.mxu0 0
        %2745 = vmatmul.mubr.bf16.gmra.mrb[0].mxu0 %v2696
        %v2746 = vpop.f32.mrb[0].mxu0
        %v2747 = vadd.f32 0.0, %v2746
        %v2748 = vpop.f32.mrb[0].mxu0
        %v2749 = vpop.f32.mrb[0].mxu0
        %v2750 = vadd.f32 0.0, %v2749
        %v2751 = vpop.f32.mrb[0].mxu0
        %2752 = vmatprep.mubr.bf16.mxu0 0
        %2753 = vmatmul.mubr.bf16.gmra.mrb[0].mxu0 %v2699
        %v2754 = vpop.f32.mrb[0].mxu0
        %v2755 = vadd.f32 0.0, %v2754
        %v2756 = vpop.f32.mrb[0].mxu0
        %v2757 = vpop.f32.mrb[0].mxu0
        %v2758 = vadd.f32 0.0, %v2757
        %v2759 = vpop.f32.mrb[0].mxu0
        %2760 = vmatprep.mubr.bf16.mxu0 0
        %2761 = vmatmul.mubr.bf16.gmra.mrb[0].mxu0 %v2702
        %v2762 = vpop.f32.mrb[0].mxu0
        %v2763 = vadd.f32 0.0, %v2762
        %v2764 = vpop.f32.mrb[0].mxu0
        %v2765 = vpop.f32.mrb[0].mxu0
        %v2766 = vadd.f32 0.0, %v2765
        %v2767 = vpop.f32.mrb[0].mxu0
        %2768 = vdwg.mxu0
        %v2769 = vadd.f32 %v2632, %v2739
        %v2770 = vadd.f32 %v2633, %v2742
        %v2771 = vadd.f32 %v2634, %v2747
        %v2772 = vadd.f32 %v2635, %v2750
        %v2773 = vadd.f32 %v2636, %v2755
        %v2774 = vadd.f32 %v2637, %v2758
        %v2775 = vadd.f32 %v2638, %v2763
        %v2776 = vadd.f32 %v2639, %v2766
        %v2777 = vld [vmem:[%s1373] sm:$0xf]
        %v2778 = vld [vmem:[%s1373 + $0x4] sm:$0xf]
        %v2779 = vld [vmem:[%s1373 + $0x8] sm:$0xf]
        %v2780 = vld [vmem:[%s1373 + $0xc] sm:$0xf]
        %v2781 = vld [vmem:[%s1373 + $0x10] sm:$0xf]
        %v2782 = vld [vmem:[%s1373 + $0x14] sm:$0xf]
        %v2783 = vld [vmem:[%s1373 + $0x18] sm:$0xf]
        %v2784 = vld [vmem:[%s1373 + $0x1c] sm:$0xf]
        %v2793 = vunpack.c.l.b16 %v2777
        %v2794 = vunpack.c.l.b16 %v2778
        %v2795 = vunpack.c.l.b16 %v2779
        %v2796 = vunpack.c.l.b16 %v2780
        %v2797 = vunpack.c.l.b16 %v2781
        %v2798 = vunpack.c.l.b16 %v2782
        %v2799 = vunpack.c.l.b16 %v2783
        %v2800 = vunpack.c.l.b16 %v2784
        %v2801 = vpack.c.b16 %v2794, %v2793
        %v2802 = vpack.c.b16 %v2796, %v2795
        %v2803 = vpack.c.b16 %v2798, %v2797
        %v2804 = vpack.c.b16 %v2800, %v2799
        %2805 = vrot.lane.b32.xlu0 %v2523, 110
        %v2806 = vpop.permute.xlu0 %2805
        %2807 = vrot.lane.b32.xlu0 %v2524, 110
        %v2808 = vpop.permute.xlu0 %2807
        %2809 = vrot.lane.b32.xlu0 %v2525, 110
        %v2810 = vpop.permute.xlu0 %2809
        %2811 = vrot.lane.b32.xlu0 %v2526, 110
        %v2812 = vpop.permute.xlu0 %2811
        %2813 = vrot.lane.b32.xlu0 %v2527, 110
        %v2814 = vpop.permute.xlu0 %2813
        %2815 = vrot.lane.b32.xlu0 %v2528, 110
        %v2816 = vpop.permute.xlu0 %2815
        %2817 = vrot.lane.b32.xlu0 %v2529, 110
        %v2818 = vpop.permute.xlu0 %2817
        %2819 = vrot.lane.b32.xlu0 %v2530, 110
        %v2820 = vpop.permute.xlu0 %2819
        %v2821 = vsel %vm1418, %v2806, %v2808
        %v2822 = vsel %vm1418, %v2810, %v2812
        %v2823 = vsel %vm1418, %v2814, %v2816
        %v2824 = vsel %vm1418, %v2818, %v2820
        %v2830 = vsel %vm431, %v2801, 0
        %v2833 = vsel %vm431, %v2802, 0
        %v2836 = vsel %vm431, %v2803, 0
        %v2839 = vsel %vm431, %v2804, 0
        %2841 = vmatprep.subr.bf16.mxu0 0
        %2842 = vmatpush1.bf16.msra.mxu0 %v2821
        %2843 = vmatprep.subr.bf16.mxu0 0
        %2844 = vmatpush1.bf16.msra.mxu0 %v2822
        %2845 = vmatprep.subr.bf16.mxu0 0
        %2846 = vmatpush1.bf16.msra.mxu0 %v2823
        %2847 = vmatprep.subr.bf16.mxu0 0
        %2848 = vmatpush1.bf16.msra.mxu0 %v2824
        %2849 = vmatprep.subr.bf16.mxu0 0
        %2850 = vmatpush1.bf16.msra.mxu0 0
        %2851 = vmatprep.subr.bf16.mxu0 0
        %2852 = vmatpush1.bf16.msra.mxu0 0
        %2853 = vmatprep.subr.bf16.mxu0 0
        %2854 = vmatpush1.bf16.msra.mxu0 0
        %2855 = vmatprep.subr.bf16.mxu0 0
        %2856 = vmatpush1.bf16.msra.mxu0 0
        %2857 = vmatprep.subr.bf16.mxu0 0
        %2858 = vmatpush1.bf16.msra.mxu0 0
        %2859 = vmatprep.subr.bf16.mxu0 0
        %2860 = vmatpush1.bf16.msra.mxu0 0
        %2861 = vmatprep.subr.bf16.mxu0 0
        %2862 = vmatpush1.bf16.msra.mxu0 0
        %2863 = vmatprep.subr.bf16.mxu0 0
        %2864 = vmatpush1.bf16.msra.mxu0 0
        %2865 = vmatprep.subr.bf16.mxu0 0
        %2866 = vmatpush1.bf16.msra.mxu0 0
        %2867 = vmatprep.subr.bf16.mxu0 0
        %2868 = vmatpush1.bf16.msra.mxu0 0
        %2869 = vmatprep.subr.bf16.mxu0 0
        %2870 = vmatpush1.bf16.msra.mxu0 0
        %2871 = vmatprep.subr.bf16.mxu0 0
        %2872 = vmatpush1.bf16.msra.mxu0 0
        %2873 = vmatprep.mubr.bf16.mxu0 0
        %2874 = vmatmul.mubr.bf16.gmra.mrb[0].mxu0 %v2830
        %v2875 = vpop.f32.mrb[0].mxu0
        %v2876 = vadd.f32 0.0, %v2875
        %v2877 = vpop.f32.mrb[0].mxu0
        %v2878 = vpop.f32.mrb[0].mxu0
        %v2879 = vadd.f32 0.0, %v2878
        %v2880 = vpop.f32.mrb[0].mxu0
        %2881 = vmatprep.mubr.bf16.mxu0 0
        %2882 = vmatmul.mubr.bf16.gmra.mrb[0].mxu0 %v2833
        %v2883 = vpop.f32.mrb[0].mxu0
        %v2884 = vadd.f32 0.0, %v2883
        %v2885 = vpop.f32.mrb[0].mxu0
        %v2886 = vpop.f32.mrb[0].mxu0
        %v2887 = vadd.f32 0.0, %v2886
        %v2888 = vpop.f32.mrb[0].mxu0
        %2889 = vmatprep.mubr.bf16.mxu0 0
        %2890 = vmatmul.mubr.bf16.gmra.mrb[0].mxu0 %v2836
        %v2891 = vpop.f32.mrb[0].mxu0
        %v2892 = vadd.f32 0.0, %v2891
        %v2893 = vpop.f32.mrb[0].mxu0
        %v2894 = vpop.f32.mrb[0].mxu0
        %v2895 = vadd.f32 0.0, %v2894
        %v2896 = vpop.f32.mrb[0].mxu0
        %2897 = vmatprep.mubr.bf16.mxu0 0
        %2898 = vmatmul.mubr.bf16.gmra.mrb[0].mxu0 %v2839
        %v2899 = vpop.f32.mrb[0].mxu0
        %v2900 = vadd.f32 0.0, %v2899
        %v2901 = vpop.f32.mrb[0].mxu0
        %v2902 = vpop.f32.mrb[0].mxu0
        %v2903 = vadd.f32 0.0, %v2902
        %v2904 = vpop.f32.mrb[0].mxu0
        %2905 = vdwg.mxu0
        %v2906 = vadd.f32 %v2769, %v2876
        %v2907 = vadd.f32 %v2770, %v2879
        %v2908 = vadd.f32 %v2771, %v2884
        %v2909 = vadd.f32 %v2772, %v2887
        %v2910 = vadd.f32 %v2773, %v2892
        %v2911 = vadd.f32 %v2774, %v2895
        %v2912 = vadd.f32 %v2775, %v2900
        %v2913 = vadd.f32 %v2776, %v2903
        %v2914 = vld [vmem:[%s1512] sm:$0xf]
        %v2915 = vld [vmem:[%s1512 + $0x4] sm:$0xf]
        %v2916 = vld [vmem:[%s1512 + $0x8] sm:$0xf]
        %v2917 = vld [vmem:[%s1512 + $0xc] sm:$0xf]
        %v2918 = vld [vmem:[%s1512 + $0x10] sm:$0xf]
        %v2919 = vld [vmem:[%s1512 + $0x14] sm:$0xf]
        %v2920 = vld [vmem:[%s1512 + $0x18] sm:$0xf]
        %v2921 = vld [vmem:[%s1512 + $0x1c] sm:$0xf]
        %v2930 = vunpack.c.l.b16 %v2914
        %v2931 = vunpack.c.l.b16 %v2915
        %v2932 = vunpack.c.l.b16 %v2916
        %v2933 = vunpack.c.l.b16 %v2917
        %v2934 = vunpack.c.l.b16 %v2918
        %v2935 = vunpack.c.l.b16 %v2919
        %v2936 = vunpack.c.l.b16 %v2920
        %v2937 = vunpack.c.l.b16 %v2921
        %v2938 = vpack.c.b16 %v2931, %v2930
        %v2939 = vpack.c.b16 %v2933, %v2932
        %v2940 = vpack.c.b16 %v2935, %v2934
        %v2941 = vpack.c.b16 %v2937, %v2936
        %2942 = vrot.lane.b32.xlu0 %v2523, 109
        %v2943 = vpop.permute.xlu0 %2942
        %2944 = vrot.lane.b32.xlu0 %v2524, 109
        %v2945 = vpop.permute.xlu0 %2944
        %2946 = vrot.lane.b32.xlu0 %v2525, 109
        %v2947 = vpop.permute.xlu0 %2946
        %2948 = vrot.lane.b32.xlu0 %v2526, 109
        %v2949 = vpop.permute.xlu0 %2948
        %2950 = vrot.lane.b32.xlu0 %v2527, 109
        %v2951 = vpop.permute.xlu0 %2950
        %2952 = vrot.lane.b32.xlu0 %v2528, 109
        %v2953 = vpop.permute.xlu0 %2952
        %2954 = vrot.lane.b32.xlu0 %v2529, 109
        %v2955 = vpop.permute.xlu0 %2954
        %2956 = vrot.lane.b32.xlu0 %v2530, 109
        %v2957 = vpop.permute.xlu0 %2956
        %v2958 = vsel %vm1557, %v2943, %v2945
        %v2959 = vsel %vm1557, %v2947, %v2949
        %v2960 = vsel %vm1557, %v2951, %v2953
        %v2961 = vsel %vm1557, %v2955, %v2957
        %v2967 = vsel %vm431, %v2938, 0
        %v2970 = vsel %vm431, %v2939, 0
        %v2973 = vsel %vm431, %v2940, 0
        %v2976 = vsel %vm431, %v2941, 0
        %2978 = vmatprep.subr.bf16.mxu0 0
        %2979 = vmatpush1.bf16.msra.mxu0 %v2958
        %2980 = vmatprep.subr.bf16.mxu0 0
        %2981 = vmatpush1.bf16.msra.mxu0 %v2959
        %2982 = vmatprep.subr.bf16.mxu0 0
        %2983 = vmatpush1.bf16.msra.mxu0 %v2960
        %2984 = vmatprep.subr.bf16.mxu0 0
        %2985 = vmatpush1.bf16.msra.mxu0 %v2961
        %2986 = vmatprep.subr.bf16.mxu0 0
        %2987 = vmatpush1.bf16.msra.mxu0 0
        %2988 = vmatprep.subr.bf16.mxu0 0
        %2989 = vmatpush1.bf16.msra.mxu0 0
        %2990 = vmatprep.subr.bf16.mxu0 0
        %2991 = vmatpush1.bf16.msra.mxu0 0
        %2992 = vmatprep.subr.bf16.mxu0 0
        %2993 = vmatpush1.bf16.msra.mxu0 0
        %2994 = vmatprep.subr.bf16.mxu0 0
        %2995 = vmatpush1.bf16.msra.mxu0 0
        %2996 = vmatprep.subr.bf16.mxu0 0
        %2997 = vmatpush1.bf16.msra.mxu0 0
        %2998 = vmatprep.subr.bf16.mxu0 0
        %2999 = vmatpush1.bf16.msra.mxu0 0
        %3000 = vmatprep.subr.bf16.mxu0 0
        %3001 = vmatpush1.bf16.msra.mxu0 0
        %3002 = vmatprep.subr.bf16.mxu0 0
        %3003 = vmatpush1.bf16.msra.mxu0 0
        %3004 = vmatprep.subr.bf16.mxu0 0
        %3005 = vmatpush1.bf16.msra.mxu0 0
        %3006 = vmatprep.subr.bf16.mxu0 0
        %3007 = vmatpush1.bf16.msra.mxu0 0
        %3008 = vmatprep.subr.bf16.mxu0 0
        %3009 = vmatpush1.bf16.msra.mxu0 0
        %3010 = vmatprep.mubr.bf16.mxu0 0
        %3011 = vmatmul.mubr.bf16.gmra.mrb[0].mxu0 %v2967
        %v3012 = vpop.f32.mrb[0].mxu0
        %v3013 = vadd.f32 0.0, %v3012
        %v3014 = vpop.f32.mrb[0].mxu0
        %v3015 = vpop.f32.mrb[0].mxu0
        %v3016 = vadd.f32 0.0, %v3015
        %v3017 = vpop.f32.mrb[0].mxu0
        %3018 = vmatprep.mubr.bf16.mxu0 0
        %3019 = vmatmul.mubr.bf16.gmra.mrb[0].mxu0 %v2970
        %v3020 = vpop.f32.mrb[0].mxu0
        %v3021 = vadd.f32 0.0, %v3020
        %v3022 = vpop.f32.mrb[0].mxu0
        %v3023 = vpop.f32.mrb[0].mxu0
        %v3024 = vadd.f32 0.0, %v3023
        %v3025 = vpop.f32.mrb[0].mxu0
        %3026 = vmatprep.mubr.bf16.mxu0 0
        %3027 = vmatmul.mubr.bf16.gmra.mrb[0].mxu0 %v2973
        %v3028 = vpop.f32.mrb[0].mxu0
        %v3029 = vadd.f32 0.0, %v3028
        %v3030 = vpop.f32.mrb[0].mxu0
        %v3031 = vpop.f32.mrb[0].mxu0
        %v3032 = vadd.f32 0.0, %v3031
        %v3033 = vpop.f32.mrb[0].mxu0
        %3034 = vmatprep.mubr.bf16.mxu0 0
        %3035 = vmatmul.mubr.bf16.gmra.mrb[0].mxu0 %v2976
        %v3036 = vpop.f32.mrb[0].mxu0
        %v3037 = vadd.f32 0.0, %v3036
        %v3038 = vpop.f32.mrb[0].mxu0
        %v3039 = vpop.f32.mrb[0].mxu0
        %v3040 = vadd.f32 0.0, %v3039
        %v3041 = vpop.f32.mrb[0].mxu0
        %3042 = vdwg.mxu0
        %v3043 = vadd.f32 %v2906, %v3013
        %v3044 = vadd.f32 %v2907, %v3016
        %v3045 = vadd.f32 %v2908, %v3021
        %v3046 = vadd.f32 %v2909, %v3024
        %v3047 = vadd.f32 %v2910, %v3029
        %v3048 = vadd.f32 %v2911, %v3032
        %v3049 = vadd.f32 %v2912, %v3037
        %v3050 = vadd.f32 %v2913, %v3040
        %v3051 = vld [vmem:[%s2] sm:$0xff]
        %v3052 = vld [vmem:[%s2 + $0x8] sm:$0xff]
        %v3053 = vld [vmem:[%s2 + $0x10] sm:$0xff]
        %v3054 = vld [vmem:[%s2 + $0x18] sm:$0xff]
        %v3055 = vld [vmem:[%s2 + $0x20] sm:$0xff]
        %v3056 = vld [vmem:[%s2 + $0x28] sm:$0xff]
        %v3057 = vld [vmem:[%s2 + $0x30] sm:$0xff]
        %v3058 = vld [vmem:[%s2 + $0x38] sm:$0xff]
        %3060 = vset.pattern.permute.xlu0 0
        %3061 = vperm.xlu0 %3060, %v3051
        %v3062 = vpop.permute.xlu0 %3061
        %3065 = vset.pattern.permute.xlu0 0
        %3066 = vperm.xlu0 %3065, %v3052
        %v3067 = vpop.permute.xlu0 %3066
        %3070 = vset.pattern.permute.xlu0 0
        %3071 = vperm.xlu0 %3070, %v3053
        %v3072 = vpop.permute.xlu0 %3071
        %3075 = vset.pattern.permute.xlu0 0
        %3076 = vperm.xlu0 %3075, %v3054
        %v3077 = vpop.permute.xlu0 %3076
        %3080 = vset.pattern.permute.xlu0 0
        %3081 = vperm.xlu0 %3080, %v3055
        %v3082 = vpop.permute.xlu0 %3081
        %3085 = vset.pattern.permute.xlu0 0
        %3086 = vperm.xlu0 %3085, %v3056
        %v3087 = vpop.permute.xlu0 %3086
        %3090 = vset.pattern.permute.xlu0 0
        %3091 = vperm.xlu0 %3090, %v3057
        %v3092 = vpop.permute.xlu0 %3091
        %3095 = vset.pattern.permute.xlu0 0
        %3096 = vperm.xlu0 %3095, %v3058
        %v3097 = vpop.permute.xlu0 %3096
        %v3099 = vadd.f32 %v3043, %v3062
        %v3100 = vadd.f32 %v3044, %v3067
        %v3101 = vadd.f32 %v3045, %v3072
        %v3102 = vadd.f32 %v3046, %v3077
        %v3103 = vadd.f32 %v3047, %v3082
        %v3104 = vadd.f32 %v3048, %v3087
        %v3105 = vadd.f32 %v3049, %v3092
        %v3106 = vadd.f32 %v3050, %v3097
        %v3107 = vmax.f32 %v3099, 0.0
        %v3108 = vmax.f32 %v3100, 0.0
        %v3109 = vmax.f32 %v3101, 0.0
        %v3110 = vmax.f32 %v3102, 0.0
        %v3111 = vmax.f32 %v3103, 0.0
        %v3112 = vmax.f32 %v3104, 0.0
        %v3113 = vmax.f32 %v3105, 0.0
        %v3114 = vmax.f32 %v3106, 0.0
        %v3115 = vadd.s32 %v1716, 128
        %v3116 = vmul.u32 %v3115, 57
        %v3117 = vshra.s32 %v3116, 10
        %v3118 = vmul.u32 %v3117, 18
        %v3119 = vsub.s32 %v3115, %v3118
        %vm3120 = vcmp.ge.s32.totalorder %v3117, 1
        %vm3121 = vcmp.le.s32.totalorder %v3117, 16
        %vm3122 = vmand %vm3120, %vm3121
        %vm3123 = vcmp.ge.s32.totalorder %v3119, 1
        %vm3124 = vmand %vm3122, %vm3123
        %vm3125 = vcmp.le.s32.totalorder %v3119, 16
        %vm3126 = vmand %vm3124, %vm3125
        %v3127 = vsel %vm3126, 1, 0
        %v3128 = vcvt.s32.f32 %v3127
        %v3129 = vmul.f32 %v3107, %v3128
        %v3130 = vmul.f32 %v3108, %v3128
        %v3131 = vmul.f32 %v3109, %v3128
        %v3132 = vmul.f32 %v3110, %v3128
        %v3133 = vmul.f32 %v3111, %v3128
        %v3134 = vmul.f32 %v3112, %v3128
        %v3135 = vmul.f32 %v3113, %v3128
        %v3136 = vmul.f32 %v3114, %v3128
        %v3137 = vpack.c.bf16 %v3130, %v3129
        %v3138 = vpack.c.bf16 %v3132, %v3131
        %v3139 = vpack.c.bf16 %v3134, %v3133
        %v3140 = vpack.c.bf16 %v3136, %v3135
        %3141 = vst [vmem:[#allocation2 + $0x10] sm:$0xff] %v3137
        %3142 = vst [vmem:[#allocation2 + $0x38] sm:$0xff] %v3138
        %3143 = vst [vmem:[#allocation2 + $0x60] sm:$0xff] %v3139
        %3144 = vst [vmem:[#allocation2 + $0x88] sm:$0xff] %v3140
        %v3145 = vld [vmem:[#allocation7] sm:$0xf]
        %v3146 = vld [vmem:[#allocation7 + $0x4] sm:$0xf]
        %v3147 = vld [vmem:[#allocation7 + $0x8] sm:$0xf]
        %v3148 = vld [vmem:[#allocation7 + $0xc] sm:$0xf]
        %v3149 = vld [vmem:[#allocation7 + $0x10] sm:$0xf]
        %v3150 = vld [vmem:[#allocation7 + $0x14] sm:$0xf]
        %v3151 = vld [vmem:[#allocation7 + $0x18] sm:$0xf]
        %v3152 = vld [vmem:[#allocation7 + $0x1c] sm:$0xf]
        %v3153 = vld [vmem:[%s289 + $0x8] sm:$0xff]
        %v3154 = vld [vmem:[%s289 + $0x1c] sm:$0xff]
        %v3155 = vld [vmem:[%s289 + $0x30] sm:$0xff]
        %v3156 = vld [vmem:[%s289 + $0x44] sm:$0xff]
        %v3157 = vld [vmem:[%s289 + $0x58] sm:$0xff]
        %v3158 = vld [vmem:[%s289 + $0x6c] sm:$0xff]
        %v3159 = vld [vmem:[%s289 + $0x80] sm:$0xff]
        %v3160 = vld [vmem:[%s289 + $0x94] sm:$0xff]
        %v3161 = vld [vmem:[%s345] sm:$0xf]
        %v3162 = vld [vmem:[%s345 + $0x4] sm:$0xf]
        %v3163 = vld [vmem:[%s345 + $0x8] sm:$0xf]
        %v3164 = vld [vmem:[%s345 + $0xc] sm:$0xf]
        %v3165 = vld [vmem:[%s345 + $0x10] sm:$0xf]
        %v3166 = vld [vmem:[%s345 + $0x14] sm:$0xf]
        %v3167 = vld [vmem:[%s345 + $0x18] sm:$0xf]
        %v3168 = vld [vmem:[%s345 + $0x1c] sm:$0xf]
        %v3177 = vunpack.c.l.b16 %v3161
        %v3178 = vunpack.c.l.b16 %v3162
        %v3179 = vunpack.c.l.b16 %v3163
        %v3180 = vunpack.c.l.b16 %v3164
        %v3181 = vunpack.c.l.b16 %v3165
        %v3182 = vunpack.c.l.b16 %v3166
        %v3183 = vunpack.c.l.b16 %v3167
        %v3184 = vunpack.c.l.b16 %v3168
        %v3185 = vpack.c.b16 %v3178, %v3177
        %v3186 = vpack.c.b16 %v3180, %v3179
        %v3187 = vpack.c.b16 %v3182, %v3181
        %v3188 = vpack.c.b16 %v3184, %v3183
        %v3197 = vunpack.c.l.b16 %v3153
        %v3198 = vunpack.c.h.b16 %v3153
        %v3199 = vunpack.c.l.b16 %v3154
        %v3200 = vunpack.c.h.b16 %v3154
        %v3201 = vunpack.c.l.b16 %v3155
        %v3202 = vunpack.c.h.b16 %v3155
        %v3203 = vunpack.c.l.b16 %v3156
        %v3204 = vunpack.c.h.b16 %v3156
        %v3205 = vunpack.c.l.b16 %v3157
        %v3206 = vunpack.c.h.b16 %v3157
        %v3207 = vunpack.c.l.b16 %v3158
        %v3208 = vunpack.c.h.b16 %v3158
        %v3209 = vunpack.c.l.b16 %v3159
        %v3210 = vunpack.c.h.b16 %v3159
        %v3211 = vunpack.c.l.b16 %v3160
        %v3212 = vunpack.c.h.b16 %v3160
        %v3213 = vpack.c.b16 %v3199, %v3197
        %v3214 = vpack.c.b16 %v3200, %v3198
        %v3215 = vpack.c.b16 %v3203, %v3201
        %v3216 = vpack.c.b16 %v3204, %v3202
        %v3217 = vpack.c.b16 %v3207, %v3205
        %v3218 = vpack.c.b16 %v3208, %v3206
        %v3219 = vpack.c.b16 %v3211, %v3209
        %v3220 = vpack.c.b16 %v3212, %v3210
        %3221 = vrot.lane.b32.xlu0 %v3213, 18
        %v3222 = vpop.permute.xlu0 %3221
        %3223 = vrot.lane.b32.xlu0 %v3214, 18
        %v3224 = vpop.permute.xlu0 %3223
        %3225 = vrot.lane.b32.xlu0 %v3215, 18
        %v3226 = vpop.permute.xlu0 %3225
        %3227 = vrot.lane.b32.xlu0 %v3216, 18
        %v3228 = vpop.permute.xlu0 %3227
        %3229 = vrot.lane.b32.xlu0 %v3217, 18
        %v3230 = vpop.permute.xlu0 %3229
        %3231 = vrot.lane.b32.xlu0 %v3218, 18
        %v3232 = vpop.permute.xlu0 %3231
        %3233 = vrot.lane.b32.xlu0 %v3219, 18
        %v3234 = vpop.permute.xlu0 %3233
        %3235 = vrot.lane.b32.xlu0 %v3220, 18
        %v3236 = vpop.permute.xlu0 %3235
        %v3237 = vsel %vm422, %v3222, %v3224
        %v3238 = vsel %vm422, %v3226, %v3228
        %v3239 = vsel %vm422, %v3230, %v3232
        %v3240 = vsel %vm422, %v3234, %v3236
        %v3246 = vsel %vm431, %v3185, 0
        %v3249 = vsel %vm431, %v3186, 0
        %v3252 = vsel %vm431, %v3187, 0
        %v3255 = vsel %vm431, %v3188, 0
        %3257 = vmatprep.subr.bf16.mxu0 0
        %3258 = vmatpush1.bf16.msra.mxu0 %v3237
        %3259 = vmatprep.subr.bf16.mxu0 0
        %3260 = vmatpush1.bf16.msra.mxu0 %v3238
        %3261 = vmatprep.subr.bf16.mxu0 0
        %3262 = vmatpush1.bf16.msra.mxu0 %v3239
        %3263 = vmatprep.subr.bf16.mxu0 0
        %3264 = vmatpush1.bf16.msra.mxu0 %v3240
        %3265 = vmatprep.subr.bf16.mxu0 0
        %3266 = vmatpush1.bf16.msra.mxu0 0
        %3267 = vmatprep.subr.bf16.mxu0 0
        %3268 = vmatpush1.bf16.msra.mxu0 0
        %3269 = vmatprep.subr.bf16.mxu0 0
        %3270 = vmatpush1.bf16.msra.mxu0 0
        %3271 = vmatprep.subr.bf16.mxu0 0
        %3272 = vmatpush1.bf16.msra.mxu0 0
        %3273 = vmatprep.subr.bf16.mxu0 0
        %3274 = vmatpush1.bf16.msra.mxu0 0
        %3275 = vmatprep.subr.bf16.mxu0 0
        %3276 = vmatpush1.bf16.msra.mxu0 0
        %3277 = vmatprep.subr.bf16.mxu0 0
        %3278 = vmatpush1.bf16.msra.mxu0 0
        %3279 = vmatprep.subr.bf16.mxu0 0
        %3280 = vmatpush1.bf16.msra.mxu0 0
        %3281 = vmatprep.subr.bf16.mxu0 0
        %3282 = vmatpush1.bf16.msra.mxu0 0
        %3283 = vmatprep.subr.bf16.mxu0 0
        %3284 = vmatpush1.bf16.msra.mxu0 0
        %3285 = vmatprep.subr.bf16.mxu0 0
        %3286 = vmatpush1.bf16.msra.mxu0 0
        %3287 = vmatprep.subr.bf16.mxu0 0
        %3288 = vmatpush1.bf16.msra.mxu0 0
        %3289 = vmatprep.mubr.bf16.mxu0 0
        %3290 = vmatmul.mubr.bf16.gmra.mrb[0].mxu0 %v3246
        %v3291 = vpop.f32.mrb[0].mxu0
        %v3292 = vadd.f32 0.0, %v3291
        %v3293 = vpop.f32.mrb[0].mxu0
        %v3294 = vpop.f32.mrb[0].mxu0
        %v3295 = vadd.f32 0.0, %v3294
        %v3296 = vpop.f32.mrb[0].mxu0
        %3297 = vmatprep.mubr.bf16.mxu0 0
        %3298 = vmatmul.mubr.bf16.gmra.mrb[0].mxu0 %v3249
        %v3299 = vpop.f32.mrb[0].mxu0
        %v3300 = vadd.f32 0.0, %v3299
        %v3301 = vpop.f32.mrb[0].mxu0
        %v3302 = vpop.f32.mrb[0].mxu0
        %v3303 = vadd.f32 0.0, %v3302
        %v3304 = vpop.f32.mrb[0].mxu0
        %3305 = vmatprep.mubr.bf16.mxu0 0
        %3306 = vmatmul.mubr.bf16.gmra.mrb[0].mxu0 %v3252
        %v3307 = vpop.f32.mrb[0].mxu0
        %v3308 = vadd.f32 0.0, %v3307
        %v3309 = vpop.f32.mrb[0].mxu0
        %v3310 = vpop.f32.mrb[0].mxu0
        %v3311 = vadd.f32 0.0, %v3310
        %v3312 = vpop.f32.mrb[0].mxu0
        %3313 = vmatprep.mubr.bf16.mxu0 0
        %3314 = vmatmul.mubr.bf16.gmra.mrb[0].mxu0 %v3255
        %v3315 = vpop.f32.mrb[0].mxu0
        %v3316 = vadd.f32 0.0, %v3315
        %v3317 = vpop.f32.mrb[0].mxu0
        %v3318 = vpop.f32.mrb[0].mxu0
        %v3319 = vadd.f32 0.0, %v3318
        %v3320 = vpop.f32.mrb[0].mxu0
        %3321 = vdwg.mxu0
        %v3330 = vunpack.c.l.b16 %v3145
        %v3331 = vunpack.c.l.b16 %v3146
        %v3332 = vunpack.c.l.b16 %v3147
        %v3333 = vunpack.c.l.b16 %v3148
        %v3334 = vunpack.c.l.b16 %v3149
        %v3335 = vunpack.c.l.b16 %v3150
        %v3336 = vunpack.c.l.b16 %v3151
        %v3337 = vunpack.c.l.b16 %v3152
        %v3338 = vpack.c.b16 %v3331, %v3330
        %v3339 = vpack.c.b16 %v3333, %v3332
        %v3340 = vpack.c.b16 %v3335, %v3334
        %v3341 = vpack.c.b16 %v3337, %v3336
        %3342 = vrot.lane.b32.xlu0 %v3213, 19
        %v3343 = vpop.permute.xlu0 %3342
        %3344 = vrot.lane.b32.xlu0 %v3214, 19
        %v3345 = vpop.permute.xlu0 %3344
        %3346 = vrot.lane.b32.xlu0 %v3215, 19
        %v3347 = vpop.permute.xlu0 %3346
        %3348 = vrot.lane.b32.xlu0 %v3216, 19
        %v3349 = vpop.permute.xlu0 %3348
        %3350 = vrot.lane.b32.xlu0 %v3217, 19
        %v3351 = vpop.permute.xlu0 %3350
        %3352 = vrot.lane.b32.xlu0 %v3218, 19
        %v3353 = vpop.permute.xlu0 %3352
        %3354 = vrot.lane.b32.xlu0 %v3219, 19
        %v3355 = vpop.permute.xlu0 %3354
        %3356 = vrot.lane.b32.xlu0 %v3220, 19
        %v3357 = vpop.permute.xlu0 %3356
        %v3358 = vsel %vm545, %v3343, %v3345
        %v3359 = vsel %vm545, %v3347, %v3349
        %v3360 = vsel %vm545, %v3351, %v3353
        %v3361 = vsel %vm545, %v3355, %v3357
        %v3367 = vsel %vm431, %v3338, 0
        %v3370 = vsel %vm431, %v3339, 0
        %v3373 = vsel %vm431, %v3340, 0
        %v3376 = vsel %vm431, %v3341, 0
        %3378 = vmatprep.subr.bf16.mxu0 0
        %3379 = vmatpush1.bf16.msra.mxu0 %v3358
        %3380 = vmatprep.subr.bf16.mxu0 0
        %3381 = vmatpush1.bf16.msra.mxu0 %v3359
        %3382 = vmatprep.subr.bf16.mxu0 0
        %3383 = vmatpush1.bf16.msra.mxu0 %v3360
        %3384 = vmatprep.subr.bf16.mxu0 0
        %3385 = vmatpush1.bf16.msra.mxu0 %v3361
        %3386 = vmatprep.subr.bf16.mxu0 0
        %3387 = vmatpush1.bf16.msra.mxu0 0
        %3388 = vmatprep.subr.bf16.mxu0 0
        %3389 = vmatpush1.bf16.msra.mxu0 0
        %3390 = vmatprep.subr.bf16.mxu0 0
        %3391 = vmatpush1.bf16.msra.mxu0 0
        %3392 = vmatprep.subr.bf16.mxu0 0
        %3393 = vmatpush1.bf16.msra.mxu0 0
        %3394 = vmatprep.subr.bf16.mxu0 0
        %3395 = vmatpush1.bf16.msra.mxu0 0
        %3396 = vmatprep.subr.bf16.mxu0 0
        %3397 = vmatpush1.bf16.msra.mxu0 0
        %3398 = vmatprep.subr.bf16.mxu0 0
        %3399 = vmatpush1.bf16.msra.mxu0 0
        %3400 = vmatprep.subr.bf16.mxu0 0
        %3401 = vmatpush1.bf16.msra.mxu0 0
        %3402 = vmatprep.subr.bf16.mxu0 0
        %3403 = vmatpush1.bf16.msra.mxu0 0
        %3404 = vmatprep.subr.bf16.mxu0 0
        %3405 = vmatpush1.bf16.msra.mxu0 0
        %3406 = vmatprep.subr.bf16.mxu0 0
        %3407 = vmatpush1.bf16.msra.mxu0 0
        %3408 = vmatprep.subr.bf16.mxu0 0
        %3409 = vmatpush1.bf16.msra.mxu0 0
        %3410 = vmatprep.mubr.bf16.mxu0 0
        %3411 = vmatmul.mubr.bf16.gmra.mrb[0].mxu0 %v3367
        %v3412 = vpop.f32.mrb[0].mxu0
        %v3413 = vadd.f32 %v3292, %v3412
        %v3414 = vpop.f32.mrb[0].mxu0
        %v3415 = vpop.f32.mrb[0].mxu0
        %v3416 = vadd.f32 %v3295, %v3415
        %v3417 = vpop.f32.mrb[0].mxu0
        %3418 = vmatprep.mubr.bf16.mxu0 0
        %3419 = vmatmul.mubr.bf16.gmra.mrb[0].mxu0 %v3370
        %v3420 = vpop.f32.mrb[0].mxu0
        %v3421 = vadd.f32 %v3300, %v3420
        %v3422 = vpop.f32.mrb[0].mxu0
        %v3423 = vpop.f32.mrb[0].mxu0
        %v3424 = vadd.f32 %v3303, %v3423
        %v3425 = vpop.f32.mrb[0].mxu0
        %3426 = vmatprep.mubr.bf16.mxu0 0
        %3427 = vmatmul.mubr.bf16.gmra.mrb[0].mxu0 %v3373
        %v3428 = vpop.f32.mrb[0].mxu0
        %v3429 = vadd.f32 %v3308, %v3428
        %v3430 = vpop.f32.mrb[0].mxu0
        %v3431 = vpop.f32.mrb[0].mxu0
        %v3432 = vadd.f32 %v3311, %v3431
        %v3433 = vpop.f32.mrb[0].mxu0
        %3434 = vmatprep.mubr.bf16.mxu0 0
        %3435 = vmatmul.mubr.bf16.gmra.mrb[0].mxu0 %v3376
        %v3436 = vpop.f32.mrb[0].mxu0
        %v3437 = vadd.f32 %v3316, %v3436
        %v3438 = vpop.f32.mrb[0].mxu0
        %v3439 = vpop.f32.mrb[0].mxu0
        %v3440 = vadd.f32 %v3319, %v3439
        %v3441 = vpop.f32.mrb[0].mxu0
        %3442 = vdwg.mxu0
        %v3443 = vld [vmem:[%s631] sm:$0xf]
        %v3444 = vld [vmem:[%s631 + $0x4] sm:$0xf]
        %v3445 = vld [vmem:[%s631 + $0x8] sm:$0xf]
        %v3446 = vld [vmem:[%s631 + $0xc] sm:$0xf]
        %v3447 = vld [vmem:[%s631 + $0x10] sm:$0xf]
        %v3448 = vld [vmem:[%s631 + $0x14] sm:$0xf]
        %v3449 = vld [vmem:[%s631 + $0x18] sm:$0xf]
        %v3450 = vld [vmem:[%s631 + $0x1c] sm:$0xf]
        %v3459 = vunpack.c.l.b16 %v3443
        %v3460 = vunpack.c.l.b16 %v3444
        %v3461 = vunpack.c.l.b16 %v3445
        %v3462 = vunpack.c.l.b16 %v3446
        %v3463 = vunpack.c.l.b16 %v3447
        %v3464 = vunpack.c.l.b16 %v3448
        %v3465 = vunpack.c.l.b16 %v3449
        %v3466 = vunpack.c.l.b16 %v3450
        %v3467 = vpack.c.b16 %v3460, %v3459
        %v3468 = vpack.c.b16 %v3462, %v3461
        %v3469 = vpack.c.b16 %v3464, %v3463
        %v3470 = vpack.c.b16 %v3466, %v3465
        %3471 = vrot.lane.b32.xlu0 %v3213, 17
        %v3472 = vpop.permute.xlu0 %3471
        %3473 = vrot.lane.b32.xlu0 %v3214, 17
        %v3474 = vpop.permute.xlu0 %3473
        %3475 = vrot.lane.b32.xlu0 %v3215, 17
        %v3476 = vpop.permute.xlu0 %3475
        %3477 = vrot.lane.b32.xlu0 %v3216, 17
        %v3478 = vpop.permute.xlu0 %3477
        %3479 = vrot.lane.b32.xlu0 %v3217, 17
        %v3480 = vpop.permute.xlu0 %3479
        %3481 = vrot.lane.b32.xlu0 %v3218, 17
        %v3482 = vpop.permute.xlu0 %3481
        %3483 = vrot.lane.b32.xlu0 %v3219, 17
        %v3484 = vpop.permute.xlu0 %3483
        %3485 = vrot.lane.b32.xlu0 %v3220, 17
        %v3486 = vpop.permute.xlu0 %3485
        %v3487 = vsel %vm676, %v3472, %v3474
        %v3488 = vsel %vm676, %v3476, %v3478
        %v3489 = vsel %vm676, %v3480, %v3482
        %v3490 = vsel %vm676, %v3484, %v3486
        %v3496 = vsel %vm431, %v3467, 0
        %v3499 = vsel %vm431, %v3468, 0
        %v3502 = vsel %vm431, %v3469, 0
        %v3505 = vsel %vm431, %v3470, 0
        %3507 = vmatprep.subr.bf16.mxu0 0
        %3508 = vmatpush1.bf16.msra.mxu0 %v3487
        %3509 = vmatprep.subr.bf16.mxu0 0
        %3510 = vmatpush1.bf16.msra.mxu0 %v3488
        %3511 = vmatprep.subr.bf16.mxu0 0
        %3512 = vmatpush1.bf16.msra.mxu0 %v3489
        %3513 = vmatprep.subr.bf16.mxu0 0
        %3514 = vmatpush1.bf16.msra.mxu0 %v3490
        %3515 = vmatprep.subr.bf16.mxu0 0
        %3516 = vmatpush1.bf16.msra.mxu0 0
        %3517 = vmatprep.subr.bf16.mxu0 0
        %3518 = vmatpush1.bf16.msra.mxu0 0
        %3519 = vmatprep.subr.bf16.mxu0 0
        %3520 = vmatpush1.bf16.msra.mxu0 0
        %3521 = vmatprep.subr.bf16.mxu0 0
        %3522 = vmatpush1.bf16.msra.mxu0 0
        %3523 = vmatprep.subr.bf16.mxu0 0
        %3524 = vmatpush1.bf16.msra.mxu0 0
        %3525 = vmatprep.subr.bf16.mxu0 0
        %3526 = vmatpush1.bf16.msra.mxu0 0
        %3527 = vmatprep.subr.bf16.mxu0 0
        %3528 = vmatpush1.bf16.msra.mxu0 0
        %3529 = vmatprep.subr.bf16.mxu0 0
        %3530 = vmatpush1.bf16.msra.mxu0 0
        %3531 = vmatprep.subr.bf16.mxu0 0
        %3532 = vmatpush1.bf16.msra.mxu0 0
        %3533 = vmatprep.subr.bf16.mxu0 0
        %3534 = vmatpush1.bf16.msra.mxu0 0
        %3535 = vmatprep.subr.bf16.mxu0 0
        %3536 = vmatpush1.bf16.msra.mxu0 0
        %3537 = vmatprep.subr.bf16.mxu0 0
        %3538 = vmatpush1.bf16.msra.mxu0 0
        %3539 = vmatprep.mubr.bf16.mxu0 0
        %3540 = vmatmul.mubr.bf16.gmra.mrb[0].mxu0 %v3496
        %v3541 = vpop.f32.mrb[0].mxu0
        %v3542 = vadd.f32 0.0, %v3541
        %v3543 = vpop.f32.mrb[0].mxu0
        %v3544 = vpop.f32.mrb[0].mxu0
        %v3545 = vadd.f32 0.0, %v3544
        %v3546 = vpop.f32.mrb[0].mxu0
        %3547 = vmatprep.mubr.bf16.mxu0 0
        %3548 = vmatmul.mubr.bf16.gmra.mrb[0].mxu0 %v3499
        %v3549 = vpop.f32.mrb[0].mxu0
        %v3550 = vadd.f32 0.0, %v3549
        %v3551 = vpop.f32.mrb[0].mxu0
        %v3552 = vpop.f32.mrb[0].mxu0
        %v3553 = vadd.f32 0.0, %v3552
        %v3554 = vpop.f32.mrb[0].mxu0
        %3555 = vmatprep.mubr.bf16.mxu0 0
        %3556 = vmatmul.mubr.bf16.gmra.mrb[0].mxu0 %v3502
        %v3557 = vpop.f32.mrb[0].mxu0
        %v3558 = vadd.f32 0.0, %v3557
        %v3559 = vpop.f32.mrb[0].mxu0
        %v3560 = vpop.f32.mrb[0].mxu0
        %v3561 = vadd.f32 0.0, %v3560
        %v3562 = vpop.f32.mrb[0].mxu0
        %3563 = vmatprep.mubr.bf16.mxu0 0
        %3564 = vmatmul.mubr.bf16.gmra.mrb[0].mxu0 %v3505
        %v3565 = vpop.f32.mrb[0].mxu0
        %v3566 = vadd.f32 0.0, %v3565
        %v3567 = vpop.f32.mrb[0].mxu0
        %v3568 = vpop.f32.mrb[0].mxu0
        %v3569 = vadd.f32 0.0, %v3568
        %v3570 = vpop.f32.mrb[0].mxu0
        %3571 = vdwg.mxu0
        %v3572 = vadd.f32 %v3413, %v3542
        %v3573 = vadd.f32 %v3416, %v3545
        %v3574 = vadd.f32 %v3421, %v3550
        %v3575 = vadd.f32 %v3424, %v3553
        %v3576 = vadd.f32 %v3429, %v3558
        %v3577 = vadd.f32 %v3432, %v3561
        %v3578 = vadd.f32 %v3437, %v3566
        %v3579 = vadd.f32 %v3440, %v3569
        %v3580 = vld [vmem:[%s770] sm:$0xf]
        %v3581 = vld [vmem:[%s770 + $0x4] sm:$0xf]
        %v3582 = vld [vmem:[%s770 + $0x8] sm:$0xf]
        %v3583 = vld [vmem:[%s770 + $0xc] sm:$0xf]
        %v3584 = vld [vmem:[%s770 + $0x10] sm:$0xf]
        %v3585 = vld [vmem:[%s770 + $0x14] sm:$0xf]
        %v3586 = vld [vmem:[%s770 + $0x18] sm:$0xf]
        %v3587 = vld [vmem:[%s770 + $0x1c] sm:$0xf]
        %v3596 = vunpack.c.l.b16 %v3580
        %v3597 = vunpack.c.l.b16 %v3581
        %v3598 = vunpack.c.l.b16 %v3582
        %v3599 = vunpack.c.l.b16 %v3583
        %v3600 = vunpack.c.l.b16 %v3584
        %v3601 = vunpack.c.l.b16 %v3585
        %v3602 = vunpack.c.l.b16 %v3586
        %v3603 = vunpack.c.l.b16 %v3587
        %v3604 = vpack.c.b16 %v3597, %v3596
        %v3605 = vpack.c.b16 %v3599, %v3598
        %v3606 = vpack.c.b16 %v3601, %v3600
        %v3607 = vpack.c.b16 %v3603, %v3602
        %3608 = vrot.lane.b32.xlu0 %v3213, 1
        %v3609 = vpop.permute.xlu0 %3608
        %3610 = vrot.lane.b32.xlu0 %v3214, 1
        %v3611 = vpop.permute.xlu0 %3610
        %3612 = vrot.lane.b32.xlu0 %v3215, 1
        %v3613 = vpop.permute.xlu0 %3612
        %3614 = vrot.lane.b32.xlu0 %v3216, 1
        %v3615 = vpop.permute.xlu0 %3614
        %3616 = vrot.lane.b32.xlu0 %v3217, 1
        %v3617 = vpop.permute.xlu0 %3616
        %3618 = vrot.lane.b32.xlu0 %v3218, 1
        %v3619 = vpop.permute.xlu0 %3618
        %3620 = vrot.lane.b32.xlu0 %v3219, 1
        %v3621 = vpop.permute.xlu0 %3620
        %3622 = vrot.lane.b32.xlu0 %v3220, 1
        %v3623 = vpop.permute.xlu0 %3622
        %v3624 = vsel %vm815, %v3609, %v3611
        %v3625 = vsel %vm815, %v3613, %v3615
        %v3626 = vsel %vm815, %v3617, %v3619
        %v3627 = vsel %vm815, %v3621, %v3623
        %v3633 = vsel %vm431, %v3604, 0
        %v3636 = vsel %vm431, %v3605, 0
        %v3639 = vsel %vm431, %v3606, 0
        %v3642 = vsel %vm431, %v3607, 0
        %3644 = vmatprep.subr.bf16.mxu0 0
        %3645 = vmatpush1.bf16.msra.mxu0 %v3624
        %3646 = vmatprep.subr.bf16.mxu0 0
        %3647 = vmatpush1.bf16.msra.mxu0 %v3625
        %3648 = vmatprep.subr.bf16.mxu0 0
        %3649 = vmatpush1.bf16.msra.mxu0 %v3626
        %3650 = vmatprep.subr.bf16.mxu0 0
        %3651 = vmatpush1.bf16.msra.mxu0 %v3627
        %3652 = vmatprep.subr.bf16.mxu0 0
        %3653 = vmatpush1.bf16.msra.mxu0 0
        %3654 = vmatprep.subr.bf16.mxu0 0
        %3655 = vmatpush1.bf16.msra.mxu0 0
        %3656 = vmatprep.subr.bf16.mxu0 0
        %3657 = vmatpush1.bf16.msra.mxu0 0
        %3658 = vmatprep.subr.bf16.mxu0 0
        %3659 = vmatpush1.bf16.msra.mxu0 0
        %3660 = vmatprep.subr.bf16.mxu0 0
        %3661 = vmatpush1.bf16.msra.mxu0 0
        %3662 = vmatprep.subr.bf16.mxu0 0
        %3663 = vmatpush1.bf16.msra.mxu0 0
        %3664 = vmatprep.subr.bf16.mxu0 0
        %3665 = vmatpush1.bf16.msra.mxu0 0
        %3666 = vmatprep.subr.bf16.mxu0 0
        %3667 = vmatpush1.bf16.msra.mxu0 0
        %3668 = vmatprep.subr.bf16.mxu0 0
        %3669 = vmatpush1.bf16.msra.mxu0 0
        %3670 = vmatprep.subr.bf16.mxu0 0
        %3671 = vmatpush1.bf16.msra.mxu0 0
        %3672 = vmatprep.subr.bf16.mxu0 0
        %3673 = vmatpush1.bf16.msra.mxu0 0
        %3674 = vmatprep.subr.bf16.mxu0 0
        %3675 = vmatpush1.bf16.msra.mxu0 0
        %3676 = vmatprep.mubr.bf16.mxu0 0
        %3677 = vmatmul.mubr.bf16.gmra.mrb[0].mxu0 %v3633
        %v3678 = vpop.f32.mrb[0].mxu0
        %v3679 = vadd.f32 0.0, %v3678
        %v3680 = vpop.f32.mrb[0].mxu0
        %v3681 = vpop.f32.mrb[0].mxu0
        %v3682 = vadd.f32 0.0, %v3681
        %v3683 = vpop.f32.mrb[0].mxu0
        %3684 = vmatprep.mubr.bf16.mxu0 0
        %3685 = vmatmul.mubr.bf16.gmra.mrb[0].mxu0 %v3636
        %v3686 = vpop.f32.mrb[0].mxu0
        %v3687 = vadd.f32 0.0, %v3686
        %v3688 = vpop.f32.mrb[0].mxu0
        %v3689 = vpop.f32.mrb[0].mxu0
        %v3690 = vadd.f32 0.0, %v3689
        %v3691 = vpop.f32.mrb[0].mxu0
        %3692 = vmatprep.mubr.bf16.mxu0 0
        %3693 = vmatmul.mubr.bf16.gmra.mrb[0].mxu0 %v3639
        %v3694 = vpop.f32.mrb[0].mxu0
        %v3695 = vadd.f32 0.0, %v3694
        %v3696 = vpop.f32.mrb[0].mxu0
        %v3697 = vpop.f32.mrb[0].mxu0
        %v3698 = vadd.f32 0.0, %v3697
        %v3699 = vpop.f32.mrb[0].mxu0
        %3700 = vmatprep.mubr.bf16.mxu0 0
        %3701 = vmatmul.mubr.bf16.gmra.mrb[0].mxu0 %v3642
        %v3702 = vpop.f32.mrb[0].mxu0
        %v3703 = vadd.f32 0.0, %v3702
        %v3704 = vpop.f32.mrb[0].mxu0
        %v3705 = vpop.f32.mrb[0].mxu0
        %v3706 = vadd.f32 0.0, %v3705
        %v3707 = vpop.f32.mrb[0].mxu0
        %3708 = vdwg.mxu0
        %v3709 = vadd.f32 %v3572, %v3679
        %v3710 = vadd.f32 %v3573, %v3682
        %v3711 = vadd.f32 %v3574, %v3687
        %v3712 = vadd.f32 %v3575, %v3690
        %v3713 = vadd.f32 %v3576, %v3695
        %v3714 = vadd.f32 %v3577, %v3698
        %v3715 = vadd.f32 %v3578, %v3703
        %v3716 = vadd.f32 %v3579, %v3706
        %v3717 = vld [vmem:[%s909] sm:$0xf]
        %v3718 = vld [vmem:[%s909 + $0x4] sm:$0xf]
        %v3719 = vld [vmem:[%s909 + $0x8] sm:$0xf]
        %v3720 = vld [vmem:[%s909 + $0xc] sm:$0xf]
        %v3721 = vld [vmem:[%s909 + $0x10] sm:$0xf]
        %v3722 = vld [vmem:[%s909 + $0x14] sm:$0xf]
        %v3723 = vld [vmem:[%s909 + $0x18] sm:$0xf]
        %v3724 = vld [vmem:[%s909 + $0x1c] sm:$0xf]
        %v3725 = vld [vmem:[%s289 + $0xc] sm:$0xf]
        %v3726 = vld [vmem:[%s289 + $0x20] sm:$0xf]
        %v3727 = vld [vmem:[%s289 + $0x34] sm:$0xf]
        %v3728 = vld [vmem:[%s289 + $0x48] sm:$0xf]
        %v3729 = vld [vmem:[%s289 + $0x5c] sm:$0xf]
        %v3730 = vld [vmem:[%s289 + $0x70] sm:$0xf]
        %v3731 = vld [vmem:[%s289 + $0x84] sm:$0xf]
        %v3732 = vld [vmem:[%s289 + $0x98] sm:$0xf]
        %v3741 = vunpack.c.l.b16 %v3717
        %v3742 = vunpack.c.l.b16 %v3718
        %v3743 = vunpack.c.l.b16 %v3719
        %v3744 = vunpack.c.l.b16 %v3720
        %v3745 = vunpack.c.l.b16 %v3721
        %v3746 = vunpack.c.l.b16 %v3722
        %v3747 = vunpack.c.l.b16 %v3723
        %v3748 = vunpack.c.l.b16 %v3724
        %v3749 = vpack.c.b16 %v3742, %v3741
        %v3750 = vpack.c.b16 %v3744, %v3743
        %v3751 = vpack.c.b16 %v3746, %v3745
        %v3752 = vpack.c.b16 %v3748, %v3747
        %v3761 = vunpack.c.l.b16 %v3725
        %v3762 = vunpack.c.l.b16 %v3726
        %v3763 = vunpack.c.l.b16 %v3727
        %v3764 = vunpack.c.l.b16 %v3728
        %v3765 = vunpack.c.l.b16 %v3729
        %v3766 = vunpack.c.l.b16 %v3730
        %v3767 = vunpack.c.l.b16 %v3731
        %v3768 = vunpack.c.l.b16 %v3732
        %v3769 = vpack.c.b16 %v3762, %v3761
        %v3770 = vpack.c.b16 %v3764, %v3763
        %v3771 = vpack.c.b16 %v3766, %v3765
        %v3772 = vpack.c.b16 %v3768, %v3767
        %v3778 = vsel %vm431, %v3749, 0
        %v3781 = vsel %vm431, %v3750, 0
        %v3784 = vsel %vm431, %v3751, 0
        %v3787 = vsel %vm431, %v3752, 0
        %3789 = vmatprep.subr.bf16.mxu0 0
        %3790 = vmatpush1.bf16.msra.mxu0 %v3769
        %3791 = vmatprep.subr.bf16.mxu0 0
        %3792 = vmatpush1.bf16.msra.mxu0 %v3770
        %3793 = vmatprep.subr.bf16.mxu0 0
        %3794 = vmatpush1.bf16.msra.mxu0 %v3771
        %3795 = vmatprep.subr.bf16.mxu0 0
        %3796 = vmatpush1.bf16.msra.mxu0 %v3772
        %3797 = vmatprep.subr.bf16.mxu0 0
        %3798 = vmatpush1.bf16.msra.mxu0 0
        %3799 = vmatprep.subr.bf16.mxu0 0
        %3800 = vmatpush1.bf16.msra.mxu0 0
        %3801 = vmatprep.subr.bf16.mxu0 0
        %3802 = vmatpush1.bf16.msra.mxu0 0
        %3803 = vmatprep.subr.bf16.mxu0 0
        %3804 = vmatpush1.bf16.msra.mxu0 0
        %3805 = vmatprep.subr.bf16.mxu0 0
        %3806 = vmatpush1.bf16.msra.mxu0 0
        %3807 = vmatprep.subr.bf16.mxu0 0
        %3808 = vmatpush1.bf16.msra.mxu0 0
        %3809 = vmatprep.subr.bf16.mxu0 0
        %3810 = vmatpush1.bf16.msra.mxu0 0
        %3811 = vmatprep.subr.bf16.mxu0 0
        %3812 = vmatpush1.bf16.msra.mxu0 0
        %3813 = vmatprep.subr.bf16.mxu0 0
        %3814 = vmatpush1.bf16.msra.mxu0 0
        %3815 = vmatprep.subr.bf16.mxu0 0
        %3816 = vmatpush1.bf16.msra.mxu0 0
        %3817 = vmatprep.subr.bf16.mxu0 0
        %3818 = vmatpush1.bf16.msra.mxu0 0
        %3819 = vmatprep.subr.bf16.mxu0 0
        %3820 = vmatpush1.bf16.msra.mxu0 0
        %3821 = vmatprep.mubr.bf16.mxu0 0
        %3822 = vmatmul.mubr.bf16.gmra.mrb[0].mxu0 %v3778
        %v3823 = vpop.f32.mrb[0].mxu0
        %v3824 = vadd.f32 0.0, %v3823
        %v3825 = vpop.f32.mrb[0].mxu0
        %v3826 = vpop.f32.mrb[0].mxu0
        %v3827 = vadd.f32 0.0, %v3826
        %v3828 = vpop.f32.mrb[0].mxu0
        %3829 = vmatprep.mubr.bf16.mxu0 0
        %3830 = vmatmul.mubr.bf16.gmra.mrb[0].mxu0 %v3781
        %v3831 = vpop.f32.mrb[0].mxu0
        %v3832 = vadd.f32 0.0, %v3831
        %v3833 = vpop.f32.mrb[0].mxu0
        %v3834 = vpop.f32.mrb[0].mxu0
        %v3835 = vadd.f32 0.0, %v3834
        %v3836 = vpop.f32.mrb[0].mxu0
        %3837 = vmatprep.mubr.bf16.mxu0 0
        %3838 = vmatmul.mubr.bf16.gmra.mrb[0].mxu0 %v3784
        %v3839 = vpop.f32.mrb[0].mxu0
        %v3840 = vadd.f32 0.0, %v3839
        %v3841 = vpop.f32.mrb[0].mxu0
        %v3842 = vpop.f32.mrb[0].mxu0
        %v3843 = vadd.f32 0.0, %v3842
        %v3844 = vpop.f32.mrb[0].mxu0
        %3845 = vmatprep.mubr.bf16.mxu0 0
        %3846 = vmatmul.mubr.bf16.gmra.mrb[0].mxu0 %v3787
        %v3847 = vpop.f32.mrb[0].mxu0
        %v3848 = vadd.f32 0.0, %v3847
        %v3849 = vpop.f32.mrb[0].mxu0
        %v3850 = vpop.f32.mrb[0].mxu0
        %v3851 = vadd.f32 0.0, %v3850
        %v3852 = vpop.f32.mrb[0].mxu0
        %3853 = vdwg.mxu0
        %v3854 = vadd.f32 %v3709, %v3824
        %v3855 = vadd.f32 %v3710, %v3827
        %v3856 = vadd.f32 %v3711, %v3832
        %v3857 = vadd.f32 %v3712, %v3835
        %v3858 = vadd.f32 %v3713, %v3840
        %v3859 = vadd.f32 %v3714, %v3843
        %v3860 = vadd.f32 %v3715, %v3848
        %v3861 = vadd.f32 %v3716, %v3851
        %v3862 = vld [vmem:[%s1055] sm:$0xf]
        %v3863 = vld [vmem:[%s1055 + $0x4] sm:$0xf]
        %v3864 = vld [vmem:[%s1055 + $0x8] sm:$0xf]
        %v3865 = vld [vmem:[%s1055 + $0xc] sm:$0xf]
        %v3866 = vld [vmem:[%s1055 + $0x10] sm:$0xf]
        %v3867 = vld [vmem:[%s1055 + $0x14] sm:$0xf]
        %v3868 = vld [vmem:[%s1055 + $0x18] sm:$0xf]
        %v3869 = vld [vmem:[%s1055 + $0x1c] sm:$0xf]
        %v3870 = vld [vmem:[%s289 + $0xc] sm:$0xff]
        %v3871 = vld [vmem:[%s289 + $0x20] sm:$0xff]
        %v3872 = vld [vmem:[%s289 + $0x34] sm:$0xff]
        %v3873 = vld [vmem:[%s289 + $0x48] sm:$0xff]
        %v3874 = vld [vmem:[%s289 + $0x5c] sm:$0xff]
        %v3875 = vld [vmem:[%s289 + $0x70] sm:$0xff]
        %v3876 = vld [vmem:[%s289 + $0x84] sm:$0xff]
        %v3877 = vld [vmem:[%s289 + $0x98] sm:$0xff]
        %v3886 = vunpack.c.l.b16 %v3862
        %v3887 = vunpack.c.l.b16 %v3863
        %v3888 = vunpack.c.l.b16 %v3864
        %v3889 = vunpack.c.l.b16 %v3865
        %v3890 = vunpack.c.l.b16 %v3866
        %v3891 = vunpack.c.l.b16 %v3867
        %v3892 = vunpack.c.l.b16 %v3868
        %v3893 = vunpack.c.l.b16 %v3869
        %v3894 = vpack.c.b16 %v3887, %v3886
        %v3895 = vpack.c.b16 %v3889, %v3888
        %v3896 = vpack.c.b16 %v3891, %v3890
        %v3897 = vpack.c.b16 %v3893, %v3892
        %v3906 = vunpack.c.l.b16 %v3870
        %v3907 = vunpack.c.h.b16 %v3870
        %v3908 = vunpack.c.l.b16 %v3871
        %v3909 = vunpack.c.h.b16 %v3871
        %v3910 = vunpack.c.l.b16 %v3872
        %v3911 = vunpack.c.h.b16 %v3872
        %v3912 = vunpack.c.l.b16 %v3873
        %v3913 = vunpack.c.h.b16 %v3873
        %v3914 = vunpack.c.l.b16 %v3874
        %v3915 = vunpack.c.h.b16 %v3874
        %v3916 = vunpack.c.l.b16 %v3875
        %v3917 = vunpack.c.h.b16 %v3875
        %v3918 = vunpack.c.l.b16 %v3876
        %v3919 = vunpack.c.h.b16 %v3876
        %v3920 = vunpack.c.l.b16 %v3877
        %v3921 = vunpack.c.h.b16 %v3877
        %v3922 = vpack.c.b16 %v3908, %v3906
        %v3923 = vpack.c.b16 %v3909, %v3907
        %v3924 = vpack.c.b16 %v3912, %v3910
        %v3925 = vpack.c.b16 %v3913, %v3911
        %v3926 = vpack.c.b16 %v3916, %v3914
        %v3927 = vpack.c.b16 %v3917, %v3915
        %v3928 = vpack.c.b16 %v3920, %v3918
        %v3929 = vpack.c.b16 %v3921, %v3919
        %3930 = vrot.lane.b32.xlu0 %v3922, 127
        %v3931 = vpop.permute.xlu0 %3930
        %3932 = vrot.lane.b32.xlu0 %v3923, 127
        %v3933 = vpop.permute.xlu0 %3932
        %3934 = vrot.lane.b32.xlu0 %v3924, 127
        %v3935 = vpop.permute.xlu0 %3934
        %3936 = vrot.lane.b32.xlu0 %v3925, 127
        %v3937 = vpop.permute.xlu0 %3936
        %3938 = vrot.lane.b32.xlu0 %v3926, 127
        %v3939 = vpop.permute.xlu0 %3938
        %3940 = vrot.lane.b32.xlu0 %v3927, 127
        %v3941 = vpop.permute.xlu0 %3940
        %3942 = vrot.lane.b32.xlu0 %v3928, 127
        %v3943 = vpop.permute.xlu0 %3942
        %3944 = vrot.lane.b32.xlu0 %v3929, 127
        %v3945 = vpop.permute.xlu0 %3944
        %v3946 = vsel %vm1140, %v3931, %v3933
        %v3947 = vsel %vm1140, %v3935, %v3937
        %v3948 = vsel %vm1140, %v3939, %v3941
        %v3949 = vsel %vm1140, %v3943, %v3945
        %v3955 = vsel %vm431, %v3894, 0
        %v3958 = vsel %vm431, %v3895, 0
        %v3961 = vsel %vm431, %v3896, 0
        %v3964 = vsel %vm431, %v3897, 0
        %3966 = vmatprep.subr.bf16.mxu0 0
        %3967 = vmatpush1.bf16.msra.mxu0 %v3946
        %3968 = vmatprep.subr.bf16.mxu0 0
        %3969 = vmatpush1.bf16.msra.mxu0 %v3947
        %3970 = vmatprep.subr.bf16.mxu0 0
        %3971 = vmatpush1.bf16.msra.mxu0 %v3948
        %3972 = vmatprep.subr.bf16.mxu0 0
        %3973 = vmatpush1.bf16.msra.mxu0 %v3949
        %3974 = vmatprep.subr.bf16.mxu0 0
        %3975 = vmatpush1.bf16.msra.mxu0 0
        %3976 = vmatprep.subr.bf16.mxu0 0
        %3977 = vmatpush1.bf16.msra.mxu0 0
        %3978 = vmatprep.subr.bf16.mxu0 0
        %3979 = vmatpush1.bf16.msra.mxu0 0
        %3980 = vmatprep.subr.bf16.mxu0 0
        %3981 = vmatpush1.bf16.msra.mxu0 0
        %3982 = vmatprep.subr.bf16.mxu0 0
        %3983 = vmatpush1.bf16.msra.mxu0 0
        %3984 = vmatprep.subr.bf16.mxu0 0
        %3985 = vmatpush1.bf16.msra.mxu0 0
        %3986 = vmatprep.subr.bf16.mxu0 0
        %3987 = vmatpush1.bf16.msra.mxu0 0
        %3988 = vmatprep.subr.bf16.mxu0 0
        %3989 = vmatpush1.bf16.msra.mxu0 0
        %3990 = vmatprep.subr.bf16.mxu0 0
        %3991 = vmatpush1.bf16.msra.mxu0 0
        %3992 = vmatprep.subr.bf16.mxu0 0
        %3993 = vmatpush1.bf16.msra.mxu0 0
        %3994 = vmatprep.subr.bf16.mxu0 0
        %3995 = vmatpush1.bf16.msra.mxu0 0
        %3996 = vmatprep.subr.bf16.mxu0 0
        %3997 = vmatpush1.bf16.msra.mxu0 0
        %3998 = vmatprep.mubr.bf16.mxu0 0
        %3999 = vmatmul.mubr.bf16.gmra.mrb[0].mxu0 %v3955
        %v4000 = vpop.f32.mrb[0].mxu0
        %v4001 = vadd.f32 0.0, %v4000
        %v4002 = vpop.f32.mrb[0].mxu0
        %v4003 = vpop.f32.mrb[0].mxu0
        %v4004 = vadd.f32 0.0, %v4003
        %v4005 = vpop.f32.mrb[0].mxu0
        %4006 = vmatprep.mubr.bf16.mxu0 0
        %4007 = vmatmul.mubr.bf16.gmra.mrb[0].mxu0 %v3958
        %v4008 = vpop.f32.mrb[0].mxu0
        %v4009 = vadd.f32 0.0, %v4008
        %v4010 = vpop.f32.mrb[0].mxu0
        %v4011 = vpop.f32.mrb[0].mxu0
        %v4012 = vadd.f32 0.0, %v4011
        %v4013 = vpop.f32.mrb[0].mxu0
        %4014 = vmatprep.mubr.bf16.mxu0 0
        %4015 = vmatmul.mubr.bf16.gmra.mrb[0].mxu0 %v3961
        %v4016 = vpop.f32.mrb[0].mxu0
        %v4017 = vadd.f32 0.0, %v4016
        %v4018 = vpop.f32.mrb[0].mxu0
        %v4019 = vpop.f32.mrb[0].mxu0
        %v4020 = vadd.f32 0.0, %v4019
        %v4021 = vpop.f32.mrb[0].mxu0
        %4022 = vmatprep.mubr.bf16.mxu0 0
        %4023 = vmatmul.mubr.bf16.gmra.mrb[0].mxu0 %v3964
        %v4024 = vpop.f32.mrb[0].mxu0
        %v4025 = vadd.f32 0.0, %v4024
        %v4026 = vpop.f32.mrb[0].mxu0
        %v4027 = vpop.f32.mrb[0].mxu0
        %v4028 = vadd.f32 0.0, %v4027
        %v4029 = vpop.f32.mrb[0].mxu0
        %4030 = vdwg.mxu0
        %v4031 = vadd.f32 %v3854, %v4001
        %v4032 = vadd.f32 %v3855, %v4004
        %v4033 = vadd.f32 %v3856, %v4009
        %v4034 = vadd.f32 %v3857, %v4012
        %v4035 = vadd.f32 %v3858, %v4017
        %v4036 = vadd.f32 %v3859, %v4020
        %v4037 = vadd.f32 %v3860, %v4025
        %v4038 = vadd.f32 %v3861, %v4028
        %v4039 = vld [vmem:[%s1234] sm:$0xf]
        %v4040 = vld [vmem:[%s1234 + $0x4] sm:$0xf]
        %v4041 = vld [vmem:[%s1234 + $0x8] sm:$0xf]
        %v4042 = vld [vmem:[%s1234 + $0xc] sm:$0xf]
        %v4043 = vld [vmem:[%s1234 + $0x10] sm:$0xf]
        %v4044 = vld [vmem:[%s1234 + $0x14] sm:$0xf]
        %v4045 = vld [vmem:[%s1234 + $0x18] sm:$0xf]
        %v4046 = vld [vmem:[%s1234 + $0x1c] sm:$0xf]
        %v4055 = vunpack.c.l.b16 %v4039
        %v4056 = vunpack.c.l.b16 %v4040
        %v4057 = vunpack.c.l.b16 %v4041
        %v4058 = vunpack.c.l.b16 %v4042
        %v4059 = vunpack.c.l.b16 %v4043
        %v4060 = vunpack.c.l.b16 %v4044
        %v4061 = vunpack.c.l.b16 %v4045
        %v4062 = vunpack.c.l.b16 %v4046
        %v4063 = vpack.c.b16 %v4056, %v4055
        %v4064 = vpack.c.b16 %v4058, %v4057
        %v4065 = vpack.c.b16 %v4060, %v4059
        %v4066 = vpack.c.b16 %v4062, %v4061
        %4067 = vrot.lane.b32.xlu0 %v3922, 111
        %v4068 = vpop.permute.xlu0 %4067
        %4069 = vrot.lane.b32.xlu0 %v3923, 111
        %v4070 = vpop.permute.xlu0 %4069
        %4071 = vrot.lane.b32.xlu0 %v3924, 111
        %v4072 = vpop.permute.xlu0 %4071
        %4073 = vrot.lane.b32.xlu0 %v3925, 111
        %v4074 = vpop.permute.xlu0 %4073
        %4075 = vrot.lane.b32.xlu0 %v3926, 111
        %v4076 = vpop.permute.xlu0 %4075
        %4077 = vrot.lane.b32.xlu0 %v3927, 111
        %v4078 = vpop.permute.xlu0 %4077
        %4079 = vrot.lane.b32.xlu0 %v3928, 111
        %v4080 = vpop.permute.xlu0 %4079
        %4081 = vrot.lane.b32.xlu0 %v3929, 111
        %v4082 = vpop.permute.xlu0 %4081
        %v4083 = vsel %vm1279, %v4068, %v4070
        %v4084 = vsel %vm1279, %v4072, %v4074
        %v4085 = vsel %vm1279, %v4076, %v4078
        %v4086 = vsel %vm1279, %v4080, %v4082
        %v4092 = vsel %vm431, %v4063, 0
        %v4095 = vsel %vm431, %v4064, 0
        %v4098 = vsel %vm431, %v4065, 0
        %v4101 = vsel %vm431, %v4066, 0
        %4103 = vmatprep.subr.bf16.mxu0 0
        %4104 = vmatpush1.bf16.msra.mxu0 %v4083
        %4105 = vmatprep.subr.bf16.mxu0 0
        %4106 = vmatpush1.bf16.msra.mxu0 %v4084
        %4107 = vmatprep.subr.bf16.mxu0 0
        %4108 = vmatpush1.bf16.msra.mxu0 %v4085
        %4109 = vmatprep.subr.bf16.mxu0 0
        %4110 = vmatpush1.bf16.msra.mxu0 %v4086
        %4111 = vmatprep.subr.bf16.mxu0 0
        %4112 = vmatpush1.bf16.msra.mxu0 0
        %4113 = vmatprep.subr.bf16.mxu0 0
        %4114 = vmatpush1.bf16.msra.mxu0 0
        %4115 = vmatprep.subr.bf16.mxu0 0
        %4116 = vmatpush1.bf16.msra.mxu0 0
        %4117 = vmatprep.subr.bf16.mxu0 0
        %4118 = vmatpush1.bf16.msra.mxu0 0
        %4119 = vmatprep.subr.bf16.mxu0 0
        %4120 = vmatpush1.bf16.msra.mxu0 0
        %4121 = vmatprep.subr.bf16.mxu0 0
        %4122 = vmatpush1.bf16.msra.mxu0 0
        %4123 = vmatprep.subr.bf16.mxu0 0
        %4124 = vmatpush1.bf16.msra.mxu0 0
        %4125 = vmatprep.subr.bf16.mxu0 0
        %4126 = vmatpush1.bf16.msra.mxu0 0
        %4127 = vmatprep.subr.bf16.mxu0 0
        %4128 = vmatpush1.bf16.msra.mxu0 0
        %4129 = vmatprep.subr.bf16.mxu0 0
        %4130 = vmatpush1.bf16.msra.mxu0 0
        %4131 = vmatprep.subr.bf16.mxu0 0
        %4132 = vmatpush1.bf16.msra.mxu0 0
        %4133 = vmatprep.subr.bf16.mxu0 0
        %4134 = vmatpush1.bf16.msra.mxu0 0
        %4135 = vmatprep.mubr.bf16.mxu0 0
        %4136 = vmatmul.mubr.bf16.gmra.mrb[0].mxu0 %v4092
        %v4137 = vpop.f32.mrb[0].mxu0
        %v4138 = vadd.f32 0.0, %v4137
        %v4139 = vpop.f32.mrb[0].mxu0
        %v4140 = vpop.f32.mrb[0].mxu0
        %v4141 = vadd.f32 0.0, %v4140
        %v4142 = vpop.f32.mrb[0].mxu0
        %4143 = vmatprep.mubr.bf16.mxu0 0
        %4144 = vmatmul.mubr.bf16.gmra.mrb[0].mxu0 %v4095
        %v4145 = vpop.f32.mrb[0].mxu0
        %v4146 = vadd.f32 0.0, %v4145
        %v4147 = vpop.f32.mrb[0].mxu0
        %v4148 = vpop.f32.mrb[0].mxu0
        %v4149 = vadd.f32 0.0, %v4148
        %v4150 = vpop.f32.mrb[0].mxu0
        %4151 = vmatprep.mubr.bf16.mxu0 0
        %4152 = vmatmul.mubr.bf16.gmra.mrb[0].mxu0 %v4098
        %v4153 = vpop.f32.mrb[0].mxu0
        %v4154 = vadd.f32 0.0, %v4153
        %v4155 = vpop.f32.mrb[0].mxu0
        %v4156 = vpop.f32.mrb[0].mxu0
        %v4157 = vadd.f32 0.0, %v4156
        %v4158 = vpop.f32.mrb[0].mxu0
        %4159 = vmatprep.mubr.bf16.mxu0 0
        %4160 = vmatmul.mubr.bf16.gmra.mrb[0].mxu0 %v4101
        %v4161 = vpop.f32.mrb[0].mxu0
        %v4162 = vadd.f32 0.0, %v4161
        %v4163 = vpop.f32.mrb[0].mxu0
        %v4164 = vpop.f32.mrb[0].mxu0
        %v4165 = vadd.f32 0.0, %v4164
        %v4166 = vpop.f32.mrb[0].mxu0
        %4167 = vdwg.mxu0
        %v4168 = vadd.f32 %v4031, %v4138
        %v4169 = vadd.f32 %v4032, %v4141
        %v4170 = vadd.f32 %v4033, %v4146
        %v4171 = vadd.f32 %v4034, %v4149
        %v4172 = vadd.f32 %v4035, %v4154
        %v4173 = vadd.f32 %v4036, %v4157
        %v4174 = vadd.f32 %v4037, %v4162
        %v4175 = vadd.f32 %v4038, %v4165
        %v4176 = vld [vmem:[%s1373] sm:$0xf]
        %v4177 = vld [vmem:[%s1373 + $0x4] sm:$0xf]
        %v4178 = vld [vmem:[%s1373 + $0x8] sm:$0xf]
        %v4179 = vld [vmem:[%s1373 + $0xc] sm:$0xf]
        %v4180 = vld [vmem:[%s1373 + $0x10] sm:$0xf]
        %v4181 = vld [vmem:[%s1373 + $0x14] sm:$0xf]
        %v4182 = vld [vmem:[%s1373 + $0x18] sm:$0xf]
        %v4183 = vld [vmem:[%s1373 + $0x1c] sm:$0xf]
        %v4192 = vunpack.c.l.b16 %v4176
        %v4193 = vunpack.c.l.b16 %v4177
        %v4194 = vunpack.c.l.b16 %v4178
        %v4195 = vunpack.c.l.b16 %v4179
        %v4196 = vunpack.c.l.b16 %v4180
        %v4197 = vunpack.c.l.b16 %v4181
        %v4198 = vunpack.c.l.b16 %v4182
        %v4199 = vunpack.c.l.b16 %v4183
        %v4200 = vpack.c.b16 %v4193, %v4192
        %v4201 = vpack.c.b16 %v4195, %v4194
        %v4202 = vpack.c.b16 %v4197, %v4196
        %v4203 = vpack.c.b16 %v4199, %v4198
        %4204 = vrot.lane.b32.xlu0 %v3922, 110
        %v4205 = vpop.permute.xlu0 %4204
        %4206 = vrot.lane.b32.xlu0 %v3923, 110
        %v4207 = vpop.permute.xlu0 %4206
        %4208 = vrot.lane.b32.xlu0 %v3924, 110
        %v4209 = vpop.permute.xlu0 %4208
        %4210 = vrot.lane.b32.xlu0 %v3925, 110
        %v4211 = vpop.permute.xlu0 %4210
        %4212 = vrot.lane.b32.xlu0 %v3926, 110
        %v4213 = vpop.permute.xlu0 %4212
        %4214 = vrot.lane.b32.xlu0 %v3927, 110
        %v4215 = vpop.permute.xlu0 %4214
        %4216 = vrot.lane.b32.xlu0 %v3928, 110
        %v4217 = vpop.permute.xlu0 %4216
        %4218 = vrot.lane.b32.xlu0 %v3929, 110
        %v4219 = vpop.permute.xlu0 %4218
        %v4220 = vsel %vm1418, %v4205, %v4207
        %v4221 = vsel %vm1418, %v4209, %v4211
        %v4222 = vsel %vm1418, %v4213, %v4215
        %v4223 = vsel %vm1418, %v4217, %v4219
        %v4229 = vsel %vm431, %v4200, 0
        %v4232 = vsel %vm431, %v4201, 0
        %v4235 = vsel %vm431, %v4202, 0
        %v4238 = vsel %vm431, %v4203, 0
        %4240 = vmatprep.subr.bf16.mxu0 0
        %4241 = vmatpush1.bf16.msra.mxu0 %v4220
        %4242 = vmatprep.subr.bf16.mxu0 0
        %4243 = vmatpush1.bf16.msra.mxu0 %v4221
        %4244 = vmatprep.subr.bf16.mxu0 0
        %4245 = vmatpush1.bf16.msra.mxu0 %v4222
        %4246 = vmatprep.subr.bf16.mxu0 0
        %4247 = vmatpush1.bf16.msra.mxu0 %v4223
        %4248 = vmatprep.subr.bf16.mxu0 0
        %4249 = vmatpush1.bf16.msra.mxu0 0
        %4250 = vmatprep.subr.bf16.mxu0 0
        %4251 = vmatpush1.bf16.msra.mxu0 0
        %4252 = vmatprep.subr.bf16.mxu0 0
        %4253 = vmatpush1.bf16.msra.mxu0 0
        %4254 = vmatprep.subr.bf16.mxu0 0
        %4255 = vmatpush1.bf16.msra.mxu0 0
        %4256 = vmatprep.subr.bf16.mxu0 0
        %4257 = vmatpush1.bf16.msra.mxu0 0
        %4258 = vmatprep.subr.bf16.mxu0 0
        %4259 = vmatpush1.bf16.msra.mxu0 0
        %4260 = vmatprep.subr.bf16.mxu0 0
        %4261 = vmatpush1.bf16.msra.mxu0 0
        %4262 = vmatprep.subr.bf16.mxu0 0
        %4263 = vmatpush1.bf16.msra.mxu0 0
        %4264 = vmatprep.subr.bf16.mxu0 0
        %4265 = vmatpush1.bf16.msra.mxu0 0
        %4266 = vmatprep.subr.bf16.mxu0 0
        %4267 = vmatpush1.bf16.msra.mxu0 0
        %4268 = vmatprep.subr.bf16.mxu0 0
        %4269 = vmatpush1.bf16.msra.mxu0 0
        %4270 = vmatprep.subr.bf16.mxu0 0
        %4271 = vmatpush1.bf16.msra.mxu0 0
        %4272 = vmatprep.mubr.bf16.mxu0 0
        %4273 = vmatmul.mubr.bf16.gmra.mrb[0].mxu0 %v4229
        %v4274 = vpop.f32.mrb[0].mxu0
        %v4275 = vadd.f32 0.0, %v4274
        %v4276 = vpop.f32.mrb[0].mxu0
        %v4277 = vpop.f32.mrb[0].mxu0
        %v4278 = vadd.f32 0.0, %v4277
        %v4279 = vpop.f32.mrb[0].mxu0
        %4280 = vmatprep.mubr.bf16.mxu0 0
        %4281 = vmatmul.mubr.bf16.gmra.mrb[0].mxu0 %v4232
        %v4282 = vpop.f32.mrb[0].mxu0
        %v4283 = vadd.f32 0.0, %v4282
        %v4284 = vpop.f32.mrb[0].mxu0
        %v4285 = vpop.f32.mrb[0].mxu0
        %v4286 = vadd.f32 0.0, %v4285
        %v4287 = vpop.f32.mrb[0].mxu0
        %4288 = vmatprep.mubr.bf16.mxu0 0
        %4289 = vmatmul.mubr.bf16.gmra.mrb[0].mxu0 %v4235
        %v4290 = vpop.f32.mrb[0].mxu0
        %v4291 = vadd.f32 0.0, %v4290
        %v4292 = vpop.f32.mrb[0].mxu0
        %v4293 = vpop.f32.mrb[0].mxu0
        %v4294 = vadd.f32 0.0, %v4293
        %v4295 = vpop.f32.mrb[0].mxu0
        %4296 = vmatprep.mubr.bf16.mxu0 0
        %4297 = vmatmul.mubr.bf16.gmra.mrb[0].mxu0 %v4238
        %v4298 = vpop.f32.mrb[0].mxu0
        %v4299 = vadd.f32 0.0, %v4298
        %v4300 = vpop.f32.mrb[0].mxu0
        %v4301 = vpop.f32.mrb[0].mxu0
        %v4302 = vadd.f32 0.0, %v4301
        %v4303 = vpop.f32.mrb[0].mxu0
        %4304 = vdwg.mxu0
        %v4305 = vadd.f32 %v4168, %v4275
        %v4306 = vadd.f32 %v4169, %v4278
        %v4307 = vadd.f32 %v4170, %v4283
        %v4308 = vadd.f32 %v4171, %v4286
        %v4309 = vadd.f32 %v4172, %v4291
        %v4310 = vadd.f32 %v4173, %v4294
        %v4311 = vadd.f32 %v4174, %v4299
        %v4312 = vadd.f32 %v4175, %v4302
        %v4313 = vld [vmem:[%s1512] sm:$0xf]
        %v4314 = vld [vmem:[%s1512 + $0x4] sm:$0xf]
        %v4315 = vld [vmem:[%s1512 + $0x8] sm:$0xf]
        %v4316 = vld [vmem:[%s1512 + $0xc] sm:$0xf]
        %v4317 = vld [vmem:[%s1512 + $0x10] sm:$0xf]
        %v4318 = vld [vmem:[%s1512 + $0x14] sm:$0xf]
        %v4319 = vld [vmem:[%s1512 + $0x18] sm:$0xf]
        %v4320 = vld [vmem:[%s1512 + $0x1c] sm:$0xf]
        %v4329 = vunpack.c.l.b16 %v4313
        %v4330 = vunpack.c.l.b16 %v4314
        %v4331 = vunpack.c.l.b16 %v4315
        %v4332 = vunpack.c.l.b16 %v4316
        %v4333 = vunpack.c.l.b16 %v4317
        %v4334 = vunpack.c.l.b16 %v4318
        %v4335 = vunpack.c.l.b16 %v4319
        %v4336 = vunpack.c.l.b16 %v4320
        %v4337 = vpack.c.b16 %v4330, %v4329
        %v4338 = vpack.c.b16 %v4332, %v4331
        %v4339 = vpack.c.b16 %v4334, %v4333
        %v4340 = vpack.c.b16 %v4336, %v4335
        %4341 = vrot.lane.b32.xlu0 %v3922, 109
        %v4342 = vpop.permute.xlu0 %4341
        %4343 = vrot.lane.b32.xlu0 %v3923, 109
        %v4344 = vpop.permute.xlu0 %4343
        %4345 = vrot.lane.b32.xlu0 %v3924, 109
        %v4346 = vpop.permute.xlu0 %4345
        %4347 = vrot.lane.b32.xlu0 %v3925, 109
        %v4348 = vpop.permute.xlu0 %4347
        %4349 = vrot.lane.b32.xlu0 %v3926, 109
        %v4350 = vpop.permute.xlu0 %4349
        %4351 = vrot.lane.b32.xlu0 %v3927, 109
        %v4352 = vpop.permute.xlu0 %4351
        %4353 = vrot.lane.b32.xlu0 %v3928, 109
        %v4354 = vpop.permute.xlu0 %4353
        %4355 = vrot.lane.b32.xlu0 %v3929, 109
        %v4356 = vpop.permute.xlu0 %4355
        %v4357 = vsel %vm1557, %v4342, %v4344
        %v4358 = vsel %vm1557, %v4346, %v4348
        %v4359 = vsel %vm1557, %v4350, %v4352
        %v4360 = vsel %vm1557, %v4354, %v4356
        %v4366 = vsel %vm431, %v4337, 0
        %v4369 = vsel %vm431, %v4338, 0
        %v4372 = vsel %vm431, %v4339, 0
        %v4375 = vsel %vm431, %v4340, 0
        %4377 = vmatprep.subr.bf16.mxu0 0
        %4378 = vmatpush1.bf16.msra.mxu0 %v4357
        %4379 = vmatprep.subr.bf16.mxu0 0
        %4380 = vmatpush1.bf16.msra.mxu0 %v4358
        %4381 = vmatprep.subr.bf16.mxu0 0
        %4382 = vmatpush1.bf16.msra.mxu0 %v4359
        %4383 = vmatprep.subr.bf16.mxu0 0
        %4384 = vmatpush1.bf16.msra.mxu0 %v4360
        %4385 = vmatprep.subr.bf16.mxu0 0
        %4386 = vmatpush1.bf16.msra.mxu0 0
        %4387 = vmatprep.subr.bf16.mxu0 0
        %4388 = vmatpush1.bf16.msra.mxu0 0
        %4389 = vmatprep.subr.bf16.mxu0 0
        %4390 = vmatpush1.bf16.msra.mxu0 0
        %4391 = vmatprep.subr.bf16.mxu0 0
        %4392 = vmatpush1.bf16.msra.mxu0 0
        %4393 = vmatprep.subr.bf16.mxu0 0
        %4394 = vmatpush1.bf16.msra.mxu0 0
        %4395 = vmatprep.subr.bf16.mxu0 0
        %4396 = vmatpush1.bf16.msra.mxu0 0
        %4397 = vmatprep.subr.bf16.mxu0 0
        %4398 = vmatpush1.bf16.msra.mxu0 0
        %4399 = vmatprep.subr.bf16.mxu0 0
        %4400 = vmatpush1.bf16.msra.mxu0 0
        %4401 = vmatprep.subr.bf16.mxu0 0
        %4402 = vmatpush1.bf16.msra.mxu0 0
        %4403 = vmatprep.subr.bf16.mxu0 0
        %4404 = vmatpush1.bf16.msra.mxu0 0
        %4405 = vmatprep.subr.bf16.mxu0 0
        %4406 = vmatpush1.bf16.msra.mxu0 0
        %4407 = vmatprep.subr.bf16.mxu0 0
        %4408 = vmatpush1.bf16.msra.mxu0 0
        %4409 = vmatprep.mubr.bf16.mxu0 0
        %4410 = vmatmul.mubr.bf16.gmra.mrb[0].mxu0 %v4366
        %v4411 = vpop.f32.mrb[0].mxu0
        %v4412 = vadd.f32 0.0, %v4411
        %v4413 = vpop.f32.mrb[0].mxu0
        %v4414 = vpop.f32.mrb[0].mxu0
        %v4415 = vadd.f32 0.0, %v4414
        %v4416 = vpop.f32.mrb[0].mxu0
        %4417 = vmatprep.mubr.bf16.mxu0 0
        %4418 = vmatmul.mubr.bf16.gmra.mrb[0].mxu0 %v4369
        %v4419 = vpop.f32.mrb[0].mxu0
        %v4420 = vadd.f32 0.0, %v4419
        %v4421 = vpop.f32.mrb[0].mxu0
        %v4422 = vpop.f32.mrb[0].mxu0
        %v4423 = vadd.f32 0.0, %v4422
        %v4424 = vpop.f32.mrb[0].mxu0
        %4425 = vmatprep.mubr.bf16.mxu0 0
        %4426 = vmatmul.mubr.bf16.gmra.mrb[0].mxu0 %v4372
        %v4427 = vpop.f32.mrb[0].mxu0
        %v4428 = vadd.f32 0.0, %v4427
        %v4429 = vpop.f32.mrb[0].mxu0
        %v4430 = vpop.f32.mrb[0].mxu0
        %v4431 = vadd.f32 0.0, %v4430
        %v4432 = vpop.f32.mrb[0].mxu0
        %4433 = vmatprep.mubr.bf16.mxu0 0
        %4434 = vmatmul.mubr.bf16.gmra.mrb[0].mxu0 %v4375
        %v4435 = vpop.f32.mrb[0].mxu0
        %v4436 = vadd.f32 0.0, %v4435
        %v4437 = vpop.f32.mrb[0].mxu0
        %v4438 = vpop.f32.mrb[0].mxu0
        %v4439 = vadd.f32 0.0, %v4438
        %v4440 = vpop.f32.mrb[0].mxu0
        %4441 = vdwg.mxu0
        %v4442 = vadd.f32 %v4305, %v4412
        %v4443 = vadd.f32 %v4306, %v4415
        %v4444 = vadd.f32 %v4307, %v4420
        %v4445 = vadd.f32 %v4308, %v4423
        %v4446 = vadd.f32 %v4309, %v4428
        %v4447 = vadd.f32 %v4310, %v4431
        %v4448 = vadd.f32 %v4311, %v4436
        %v4449 = vadd.f32 %v4312, %v4439
        %v4450 = vld [vmem:[%s2] sm:$0xff]
        %v4451 = vld [vmem:[%s2 + $0x8] sm:$0xff]
        %v4452 = vld [vmem:[%s2 + $0x10] sm:$0xff]
        %v4453 = vld [vmem:[%s2 + $0x18] sm:$0xff]
        %v4454 = vld [vmem:[%s2 + $0x20] sm:$0xff]
        %v4455 = vld [vmem:[%s2 + $0x28] sm:$0xff]
        %v4456 = vld [vmem:[%s2 + $0x30] sm:$0xff]
        %v4457 = vld [vmem:[%s2 + $0x38] sm:$0xff]
        %4459 = vset.pattern.permute.xlu0 0
        %4460 = vperm.xlu0 %4459, %v4450
        %v4461 = vpop.permute.xlu0 %4460
        %4464 = vset.pattern.permute.xlu0 0
        %4465 = vperm.xlu0 %4464, %v4451
        %v4466 = vpop.permute.xlu0 %4465
        %4469 = vset.pattern.permute.xlu0 0
        %4470 = vperm.xlu0 %4469, %v4452
        %v4471 = vpop.permute.xlu0 %4470
        %4474 = vset.pattern.permute.xlu0 0
        %4475 = vperm.xlu0 %4474, %v4453
        %v4476 = vpop.permute.xlu0 %4475
        %4479 = vset.pattern.permute.xlu0 0
        %4480 = vperm.xlu0 %4479, %v4454
        %v4481 = vpop.permute.xlu0 %4480
        %4484 = vset.pattern.permute.xlu0 0
        %4485 = vperm.xlu0 %4484, %v4455
        %v4486 = vpop.permute.xlu0 %4485
        %4489 = vset.pattern.permute.xlu0 0
        %4490 = vperm.xlu0 %4489, %v4456
        %v4491 = vpop.permute.xlu0 %4490
        %4494 = vset.pattern.permute.xlu0 0
        %4495 = vperm.xlu0 %4494, %v4457
        %v4496 = vpop.permute.xlu0 %4495
        %v4498 = vadd.f32 %v4442, %v4461
        %v4499 = vadd.f32 %v4443, %v4466
        %v4500 = vadd.f32 %v4444, %v4471
        %v4501 = vadd.f32 %v4445, %v4476
        %v4502 = vadd.f32 %v4446, %v4481
        %v4503 = vadd.f32 %v4447, %v4486
        %v4504 = vadd.f32 %v4448, %v4491
        %v4505 = vadd.f32 %v4449, %v4496
        %v4506 = vmax.f32 %v4498, 0.0
        %v4507 = vmax.f32 %v4499, 0.0
        %v4508 = vmax.f32 %v4500, 0.0
        %v4509 = vmax.f32 %v4501, 0.0
        %v4510 = vmax.f32 %v4502, 0.0
        %v4511 = vmax.f32 %v4503, 0.0
        %v4512 = vmax.f32 %v4504, 0.0
        %v4513 = vmax.f32 %v4505, 0.0
        %v4514 = vadd.s32 %v1716, 256
        %v4515 = vmul.u32 %v4514, 57
        %v4516 = vshra.s32 %v4515, 10
        %v4517 = vmul.u32 %v4516, 18
        %v4518 = vsub.s32 %v4514, %v4517
        %vm4519 = vcmp.ge.s32.totalorder %v4516, 1
        %vm4520 = vcmp.le.s32.totalorder %v4516, 16
        %vm4521 = vmand %vm4519, %vm4520
        %vm4522 = vcmp.ge.s32.totalorder %v4518, 1
        %vm4523 = vmand %vm4521, %vm4522
        %vm4524 = vcmp.le.s32.totalorder %v4518, 16
        %vm4525 = vmand %vm4523, %vm4524
        %v4526 = vsel %vm4525, 1, 0
        %v4527 = vcvt.s32.f32 %v4526
        %v4528 = vmul.f32 %v4506, %v4527
        %v4529 = vmul.f32 %v4507, %v4527
        %v4530 = vmul.f32 %v4508, %v4527
        %v4531 = vmul.f32 %v4509, %v4527
        %v4532 = vmul.f32 %v4510, %v4527
        %v4533 = vmul.f32 %v4511, %v4527
        %v4534 = vmul.f32 %v4512, %v4527
        %v4535 = vmul.f32 %v4513, %v4527
        %v4536 = vpack.c.bf16 %v4529, %v4528
        %v4537 = vpack.c.bf16 %v4531, %v4530
        %v4538 = vpack.c.bf16 %v4533, %v4532
        %v4539 = vpack.c.bf16 %v4535, %v4534
        %4540 = vst [vmem:[#allocation2 + $0x18] sm:$0xff] %v4536
        %4541 = vst [vmem:[#allocation2 + $0x40] sm:$0xff] %v4537
        %4542 = vst [vmem:[#allocation2 + $0x68] sm:$0xff] %v4538
        %4543 = vst [vmem:[#allocation2 + $0x90] sm:$0xff] %v4539
        %v4544 = vld [vmem:[#allocation9] sm:$0xf]
        %v4545 = vld [vmem:[#allocation9 + $0x4] sm:$0xf]
        %v4546 = vld [vmem:[#allocation9 + $0x8] sm:$0xf]
        %v4547 = vld [vmem:[#allocation9 + $0xc] sm:$0xf]
        %v4548 = vld [vmem:[#allocation9 + $0x10] sm:$0xf]
        %v4549 = vld [vmem:[#allocation9 + $0x14] sm:$0xf]
        %v4550 = vld [vmem:[#allocation9 + $0x18] sm:$0xf]
        %v4551 = vld [vmem:[#allocation9 + $0x1c] sm:$0xf]
        %v4552 = vld [vmem:[#allocation2] sm:$0xff]
        %v4553 = vld [vmem:[#allocation2 + $0x8] sm:$0xff]
        %v4554 = vld [vmem:[#allocation2 + $0x28] sm:$0xff]
        %v4555 = vld [vmem:[#allocation2 + $0x30] sm:$0xff]
        %v4556 = vld [vmem:[#allocation2 + $0x50] sm:$0xff]
        %v4557 = vld [vmem:[#allocation2 + $0x58] sm:$0xff]
        %v4558 = vld [vmem:[#allocation2 + $0x78] sm:$0xff]
        %v4559 = vld [vmem:[#allocation2 + $0x80] sm:$0xff]
        %s4560 = scalar_lea.vmem [#allocation9], 32
        %v4561 = vld [vmem:[%s4560] sm:$0xf]
        %v4562 = vld [vmem:[%s4560 + $0x4] sm:$0xf]
        %v4563 = vld [vmem:[%s4560 + $0x8] sm:$0xf]
        %v4564 = vld [vmem:[%s4560 + $0xc] sm:$0xf]
        %v4565 = vld [vmem:[%s4560 + $0x10] sm:$0xf]
        %v4566 = vld [vmem:[%s4560 + $0x14] sm:$0xf]
        %v4567 = vld [vmem:[%s4560 + $0x18] sm:$0xf]
        %v4568 = vld [vmem:[%s4560 + $0x1c] sm:$0xf]
        %v4577 = vunpack.c.l.b16 %v4561
        %v4578 = vunpack.c.l.b16 %v4562
        %v4579 = vunpack.c.l.b16 %v4563
        %v4580 = vunpack.c.l.b16 %v4564
        %v4581 = vunpack.c.l.b16 %v4565
        %v4582 = vunpack.c.l.b16 %v4566
        %v4583 = vunpack.c.l.b16 %v4567
        %v4584 = vunpack.c.l.b16 %v4568
        %v4585 = vpack.c.b16 %v4578, %v4577
        %v4586 = vpack.c.b16 %v4580, %v4579
        %v4587 = vpack.c.b16 %v4582, %v4581
        %v4588 = vpack.c.b16 %v4584, %v4583
        %4597 = vrot.lane.b32.xlu0 %v4552, 18
        %v4598 = vpop.permute.xlu0 %4597
        %4599 = vrot.lane.b32.xlu0 %v4553, 18
        %v4600 = vpop.permute.xlu0 %4599
        %4601 = vrot.lane.b32.xlu0 %v4554, 18
        %v4602 = vpop.permute.xlu0 %4601
        %4603 = vrot.lane.b32.xlu0 %v4555, 18
        %v4604 = vpop.permute.xlu0 %4603
        %4605 = vrot.lane.b32.xlu0 %v4556, 18
        %v4606 = vpop.permute.xlu0 %4605
        %4607 = vrot.lane.b32.xlu0 %v4557, 18
        %v4608 = vpop.permute.xlu0 %4607
        %4609 = vrot.lane.b32.xlu0 %v4558, 18
        %v4610 = vpop.permute.xlu0 %4609
        %4611 = vrot.lane.b32.xlu0 %v4559, 18
        %v4612 = vpop.permute.xlu0 %4611
        %v4613 = vsel %vm422, %v4598, %v4600
        %v4614 = vsel %vm422, %v4602, %v4604
        %v4615 = vsel %vm422, %v4606, %v4608
        %v4616 = vsel %vm422, %v4610, %v4612
        %v4622 = vsel %vm431, %v4585, 0
        %v4625 = vsel %vm431, %v4586, 0
        %v4628 = vsel %vm431, %v4587, 0
        %v4631 = vsel %vm431, %v4588, 0
        %4633 = vmatprep.subr.bf16.mxu0 0
        %4634 = vmatpush1.bf16.msra.mxu0 %v4613
        %4635 = vmatprep.subr.bf16.mxu0 0
        %4636 = vmatpush1.bf16.msra.mxu0 %v4614
        %4637 = vmatprep.subr.bf16.mxu0 0
        %4638 = vmatpush1.bf16.msra.mxu0 %v4615
        %4639 = vmatprep.subr.bf16.mxu0 0
        %4640 = vmatpush1.bf16.msra.mxu0 %v4616
        %4641 = vmatprep.subr.bf16.mxu0 0
        %4642 = vmatpush1.bf16.msra.mxu0 0
        %4643 = vmatprep.subr.bf16.mxu0 0
        %4644 = vmatpush1.bf16.msra.mxu0 0
        %4645 = vmatprep.subr.bf16.mxu0 0
        %4646 = vmatpush1.bf16.msra.mxu0 0
        %4647 = vmatprep.subr.bf16.mxu0 0
        %4648 = vmatpush1.bf16.msra.mxu0 0
        %4649 = vmatprep.subr.bf16.mxu0 0
        %4650 = vmatpush1.bf16.msra.mxu0 0
        %4651 = vmatprep.subr.bf16.mxu0 0
        %4652 = vmatpush1.bf16.msra.mxu0 0
        %4653 = vmatprep.subr.bf16.mxu0 0
        %4654 = vmatpush1.bf16.msra.mxu0 0
        %4655 = vmatprep.subr.bf16.mxu0 0
        %4656 = vmatpush1.bf16.msra.mxu0 0
        %4657 = vmatprep.subr.bf16.mxu0 0
        %4658 = vmatpush1.bf16.msra.mxu0 0
        %4659 = vmatprep.subr.bf16.mxu0 0
        %4660 = vmatpush1.bf16.msra.mxu0 0
        %4661 = vmatprep.subr.bf16.mxu0 0
        %4662 = vmatpush1.bf16.msra.mxu0 0
        %4663 = vmatprep.subr.bf16.mxu0 0
        %4664 = vmatpush1.bf16.msra.mxu0 0
        %4665 = vmatprep.mubr.bf16.mxu0 0
        %4666 = vmatmul.mubr.bf16.gmra.mrb[0].mxu0 %v4622
        %v4667 = vpop.f32.mrb[0].mxu0
        %v4668 = vadd.f32 0.0, %v4667
        %v4669 = vpop.f32.mrb[0].mxu0
        %v4670 = vpop.f32.mrb[0].mxu0
        %v4671 = vadd.f32 0.0, %v4670
        %v4672 = vpop.f32.mrb[0].mxu0
        %4673 = vmatprep.mubr.bf16.mxu0 0
        %4674 = vmatmul.mubr.bf16.gmra.mrb[0].mxu0 %v4625
        %v4675 = vpop.f32.mrb[0].mxu0
        %v4676 = vadd.f32 0.0, %v4675
        %v4677 = vpop.f32.mrb[0].mxu0
        %v4678 = vpop.f32.mrb[0].mxu0
        %v4679 = vadd.f32 0.0, %v4678
        %v4680 = vpop.f32.mrb[0].mxu0
        %4681 = vmatprep.mubr.bf16.mxu0 0
        %4682 = vmatmul.mubr.bf16.gmra.mrb[0].mxu0 %v4628
        %v4683 = vpop.f32.mrb[0].mxu0
        %v4684 = vadd.f32 0.0, %v4683
        %v4685 = vpop.f32.mrb[0].mxu0
        %v4686 = vpop.f32.mrb[0].mxu0
        %v4687 = vadd.f32 0.0, %v4686
        %v4688 = vpop.f32.mrb[0].mxu0
        %4689 = vmatprep.mubr.bf16.mxu0 0
        %4690 = vmatmul.mubr.bf16.gmra.mrb[0].mxu0 %v4631
        %v4691 = vpop.f32.mrb[0].mxu0
        %v4692 = vadd.f32 0.0, %v4691
        %v4693 = vpop.f32.mrb[0].mxu0
        %v4694 = vpop.f32.mrb[0].mxu0
        %v4695 = vadd.f32 0.0, %v4694
        %v4696 = vpop.f32.mrb[0].mxu0
        %4697 = vdwg.mxu0
        %v4706 = vunpack.c.l.b16 %v4544
        %v4707 = vunpack.c.l.b16 %v4545
        %v4708 = vunpack.c.l.b16 %v4546
        %v4709 = vunpack.c.l.b16 %v4547
        %v4710 = vunpack.c.l.b16 %v4548
        %v4711 = vunpack.c.l.b16 %v4549
        %v4712 = vunpack.c.l.b16 %v4550
        %v4713 = vunpack.c.l.b16 %v4551
        %v4714 = vpack.c.b16 %v4707, %v4706
        %v4715 = vpack.c.b16 %v4709, %v4708
        %v4716 = vpack.c.b16 %v4711, %v4710
        %v4717 = vpack.c.b16 %v4713, %v4712
        %4718 = vrot.lane.b32.xlu0 %v4552, 19
        %v4719 = vpop.permute.xlu0 %4718
        %4720 = vrot.lane.b32.xlu0 %v4553, 19
        %v4721 = vpop.permute.xlu0 %4720
        %4722 = vrot.lane.b32.xlu0 %v4554, 19
        %v4723 = vpop.permute.xlu0 %4722
        %4724 = vrot.lane.b32.xlu0 %v4555, 19
        %v4725 = vpop.permute.xlu0 %4724
        %4726 = vrot.lane.b32.xlu0 %v4556, 19
        %v4727 = vpop.permute.xlu0 %4726
        %4728 = vrot.lane.b32.xlu0 %v4557, 19
        %v4729 = vpop.permute.xlu0 %4728
        %4730 = vrot.lane.b32.xlu0 %v4558, 19
        %v4731 = vpop.permute.xlu0 %4730
        %4732 = vrot.lane.b32.xlu0 %v4559, 19
        %v4733 = vpop.permute.xlu0 %4732
        %v4734 = vsel %vm545, %v4719, %v4721
        %v4735 = vsel %vm545, %v4723, %v4725
        %v4736 = vsel %vm545, %v4727, %v4729
        %v4737 = vsel %vm545, %v4731, %v4733
        %v4743 = vsel %vm431, %v4714, 0
        %v4746 = vsel %vm431, %v4715, 0
        %v4749 = vsel %vm431, %v4716, 0
        %v4752 = vsel %vm431, %v4717, 0
        %4754 = vmatprep.subr.bf16.mxu0 0
        %4755 = vmatpush1.bf16.msra.mxu0 %v4734
        %4756 = vmatprep.subr.bf16.mxu0 0
        %4757 = vmatpush1.bf16.msra.mxu0 %v4735
        %4758 = vmatprep.subr.bf16.mxu0 0
        %4759 = vmatpush1.bf16.msra.mxu0 %v4736
        %4760 = vmatprep.subr.bf16.mxu0 0
        %4761 = vmatpush1.bf16.msra.mxu0 %v4737
        %4762 = vmatprep.subr.bf16.mxu0 0
        %4763 = vmatpush1.bf16.msra.mxu0 0
        %4764 = vmatprep.subr.bf16.mxu0 0
        %4765 = vmatpush1.bf16.msra.mxu0 0
        %4766 = vmatprep.subr.bf16.mxu0 0
        %4767 = vmatpush1.bf16.msra.mxu0 0
        %4768 = vmatprep.subr.bf16.mxu0 0
        %4769 = vmatpush1.bf16.msra.mxu0 0
        %4770 = vmatprep.subr.bf16.mxu0 0
        %4771 = vmatpush1.bf16.msra.mxu0 0
        %4772 = vmatprep.subr.bf16.mxu0 0
        %4773 = vmatpush1.bf16.msra.mxu0 0
        %4774 = vmatprep.subr.bf16.mxu0 0
        %4775 = vmatpush1.bf16.msra.mxu0 0
        %4776 = vmatprep.subr.bf16.mxu0 0
        %4777 = vmatpush1.bf16.msra.mxu0 0
        %4778 = vmatprep.subr.bf16.mxu0 0
        %4779 = vmatpush1.bf16.msra.mxu0 0
        %4780 = vmatprep.subr.bf16.mxu0 0
        %4781 = vmatpush1.bf16.msra.mxu0 0
        %4782 = vmatprep.subr.bf16.mxu0 0
        %4783 = vmatpush1.bf16.msra.mxu0 0
        %4784 = vmatprep.subr.bf16.mxu0 0
        %4785 = vmatpush1.bf16.msra.mxu0 0
        %4786 = vmatprep.mubr.bf16.mxu0 0
        %4787 = vmatmul.mubr.bf16.gmra.mrb[0].mxu0 %v4743
        %v4788 = vpop.f32.mrb[0].mxu0
        %v4789 = vadd.f32 %v4668, %v4788
        %v4790 = vpop.f32.mrb[0].mxu0
        %v4791 = vpop.f32.mrb[0].mxu0
        %v4792 = vadd.f32 %v4671, %v4791
        %v4793 = vpop.f32.mrb[0].mxu0
        %4794 = vmatprep.mubr.bf16.mxu0 0
        %4795 = vmatmul.mubr.bf16.gmra.mrb[0].mxu0 %v4746
        %v4796 = vpop.f32.mrb[0].mxu0
        %v4797 = vadd.f32 %v4676, %v4796
        %v4798 = vpop.f32.mrb[0].mxu0
        %v4799 = vpop.f32.mrb[0].mxu0
        %v4800 = vadd.f32 %v4679, %v4799
        %v4801 = vpop.f32.mrb[0].mxu0
        %4802 = vmatprep.mubr.bf16.mxu0 0
        %4803 = vmatmul.mubr.bf16.gmra.mrb[0].mxu0 %v4749
        %v4804 = vpop.f32.mrb[0].mxu0
        %v4805 = vadd.f32 %v4684, %v4804
        %v4806 = vpop.f32.mrb[0].mxu0
        %v4807 = vpop.f32.mrb[0].mxu0
        %v4808 = vadd.f32 %v4687, %v4807
        %v4809 = vpop.f32.mrb[0].mxu0
        %4810 = vmatprep.mubr.bf16.mxu0 0
        %4811 = vmatmul.mubr.bf16.gmra.mrb[0].mxu0 %v4752
        %v4812 = vpop.f32.mrb[0].mxu0
        %v4813 = vadd.f32 %v4692, %v4812
        %v4814 = vpop.f32.mrb[0].mxu0
        %v4815 = vpop.f32.mrb[0].mxu0
        %v4816 = vadd.f32 %v4695, %v4815
        %v4817 = vpop.f32.mrb[0].mxu0
        %4818 = vdwg.mxu0
        %s4819 = scalar_lea.vmem [#allocation9], 64
        %v4820 = vld [vmem:[%s4819] sm:$0xf]
        %v4821 = vld [vmem:[%s4819 + $0x4] sm:$0xf]
        %v4822 = vld [vmem:[%s4819 + $0x8] sm:$0xf]
        %v4823 = vld [vmem:[%s4819 + $0xc] sm:$0xf]
        %v4824 = vld [vmem:[%s4819 + $0x10] sm:$0xf]
        %v4825 = vld [vmem:[%s4819 + $0x14] sm:$0xf]
        %v4826 = vld [vmem:[%s4819 + $0x18] sm:$0xf]
        %v4827 = vld [vmem:[%s4819 + $0x1c] sm:$0xf]
        %v4836 = vunpack.c.l.b16 %v4820
        %v4837 = vunpack.c.l.b16 %v4821
        %v4838 = vunpack.c.l.b16 %v4822
        %v4839 = vunpack.c.l.b16 %v4823
        %v4840 = vunpack.c.l.b16 %v4824
        %v4841 = vunpack.c.l.b16 %v4825
        %v4842 = vunpack.c.l.b16 %v4826
        %v4843 = vunpack.c.l.b16 %v4827
        %v4844 = vpack.c.b16 %v4837, %v4836
        %v4845 = vpack.c.b16 %v4839, %v4838
        %v4846 = vpack.c.b16 %v4841, %v4840
        %v4847 = vpack.c.b16 %v4843, %v4842
        %4848 = vrot.lane.b32.xlu0 %v4552, 17
        %v4849 = vpop.permute.xlu0 %4848
        %4850 = vrot.lane.b32.xlu0 %v4553, 17
        %v4851 = vpop.permute.xlu0 %4850
        %4852 = vrot.lane.b32.xlu0 %v4554, 17
        %v4853 = vpop.permute.xlu0 %4852
        %4854 = vrot.lane.b32.xlu0 %v4555, 17
        %v4855 = vpop.permute.xlu0 %4854
        %4856 = vrot.lane.b32.xlu0 %v4556, 17
        %v4857 = vpop.permute.xlu0 %4856
        %4858 = vrot.lane.b32.xlu0 %v4557, 17
        %v4859 = vpop.permute.xlu0 %4858
        %4860 = vrot.lane.b32.xlu0 %v4558, 17
        %v4861 = vpop.permute.xlu0 %4860
        %4862 = vrot.lane.b32.xlu0 %v4559, 17
        %v4863 = vpop.permute.xlu0 %4862
        %v4864 = vsel %vm676, %v4849, %v4851
        %v4865 = vsel %vm676, %v4853, %v4855
        %v4866 = vsel %vm676, %v4857, %v4859
        %v4867 = vsel %vm676, %v4861, %v4863
        %v4873 = vsel %vm431, %v4844, 0
        %v4876 = vsel %vm431, %v4845, 0
        %v4879 = vsel %vm431, %v4846, 0
        %v4882 = vsel %vm431, %v4847, 0
        %4884 = vmatprep.subr.bf16.mxu0 0
        %4885 = vmatpush1.bf16.msra.mxu0 %v4864
        %4886 = vmatprep.subr.bf16.mxu0 0
        %4887 = vmatpush1.bf16.msra.mxu0 %v4865
        %4888 = vmatprep.subr.bf16.mxu0 0
        %4889 = vmatpush1.bf16.msra.mxu0 %v4866
        %4890 = vmatprep.subr.bf16.mxu0 0
        %4891 = vmatpush1.bf16.msra.mxu0 %v4867
        %4892 = vmatprep.subr.bf16.mxu0 0
        %4893 = vmatpush1.bf16.msra.mxu0 0
        %4894 = vmatprep.subr.bf16.mxu0 0
        %4895 = vmatpush1.bf16.msra.mxu0 0
        %4896 = vmatprep.subr.bf16.mxu0 0
        %4897 = vmatpush1.bf16.msra.mxu0 0
        %4898 = vmatprep.subr.bf16.mxu0 0
        %4899 = vmatpush1.bf16.msra.mxu0 0
        %4900 = vmatprep.subr.bf16.mxu0 0
        %4901 = vmatpush1.bf16.msra.mxu0 0
        %4902 = vmatprep.subr.bf16.mxu0 0
        %4903 = vmatpush1.bf16.msra.mxu0 0
        %4904 = vmatprep.subr.bf16.mxu0 0
        %4905 = vmatpush1.bf16.msra.mxu0 0
        %4906 = vmatprep.subr.bf16.mxu0 0
        %4907 = vmatpush1.bf16.msra.mxu0 0
        %4908 = vmatprep.subr.bf16.mxu0 0
        %4909 = vmatpush1.bf16.msra.mxu0 0
        %4910 = vmatprep.subr.bf16.mxu0 0
        %4911 = vmatpush1.bf16.msra.mxu0 0
        %4912 = vmatprep.subr.bf16.mxu0 0
        %4913 = vmatpush1.bf16.msra.mxu0 0
        %4914 = vmatprep.subr.bf16.mxu0 0
        %4915 = vmatpush1.bf16.msra.mxu0 0
        %4916 = vmatprep.mubr.bf16.mxu0 0
        %4917 = vmatmul.mubr.bf16.gmra.mrb[0].mxu0 %v4873
        %v4918 = vpop.f32.mrb[0].mxu0
        %v4919 = vadd.f32 0.0, %v4918
        %v4920 = vpop.f32.mrb[0].mxu0
        %v4921 = vpop.f32.mrb[0].mxu0
        %v4922 = vadd.f32 0.0, %v4921
        %v4923 = vpop.f32.mrb[0].mxu0
        %4924 = vmatprep.mubr.bf16.mxu0 0
        %4925 = vmatmul.mubr.bf16.gmra.mrb[0].mxu0 %v4876
        %v4926 = vpop.f32.mrb[0].mxu0
        %v4927 = vadd.f32 0.0, %v4926
        %v4928 = vpop.f32.mrb[0].mxu0
        %v4929 = vpop.f32.mrb[0].mxu0
        %v4930 = vadd.f32 0.0, %v4929
        %v4931 = vpop.f32.mrb[0].mxu0
        %4932 = vmatprep.mubr.bf16.mxu0 0
        %4933 = vmatmul.mubr.bf16.gmra.mrb[0].mxu0 %v4879
        %v4934 = vpop.f32.mrb[0].mxu0
        %v4935 = vadd.f32 0.0, %v4934
        %v4936 = vpop.f32.mrb[0].mxu0
        %v4937 = vpop.f32.mrb[0].mxu0
        %v4938 = vadd.f32 0.0, %v4937
        %v4939 = vpop.f32.mrb[0].mxu0
        %4940 = vmatprep.mubr.bf16.mxu0 0
        %4941 = vmatmul.mubr.bf16.gmra.mrb[0].mxu0 %v4882
        %v4942 = vpop.f32.mrb[0].mxu0
        %v4943 = vadd.f32 0.0, %v4942
        %v4944 = vpop.f32.mrb[0].mxu0
        %v4945 = vpop.f32.mrb[0].mxu0
        %v4946 = vadd.f32 0.0, %v4945
        %v4947 = vpop.f32.mrb[0].mxu0
        %4948 = vdwg.mxu0
        %v4949 = vadd.f32 %v4789, %v4919
        %v4950 = vadd.f32 %v4792, %v4922
        %v4951 = vadd.f32 %v4797, %v4927
        %v4952 = vadd.f32 %v4800, %v4930
        %v4953 = vadd.f32 %v4805, %v4935
        %v4954 = vadd.f32 %v4808, %v4938
        %v4955 = vadd.f32 %v4813, %v4943
        %v4956 = vadd.f32 %v4816, %v4946
        %s4957 = scalar_lea.vmem [#allocation9], 96
        %v4958 = vld [vmem:[%s4957] sm:$0xf]
        %v4959 = vld [vmem:[%s4957 + $0x4] sm:$0xf]
        %v4960 = vld [vmem:[%s4957 + $0x8] sm:$0xf]
        %v4961 = vld [vmem:[%s4957 + $0xc] sm:$0xf]
        %v4962 = vld [vmem:[%s4957 + $0x10] sm:$0xf]
        %v4963 = vld [vmem:[%s4957 + $0x14] sm:$0xf]
        %v4964 = vld [vmem:[%s4957 + $0x18] sm:$0xf]
        %v4965 = vld [vmem:[%s4957 + $0x1c] sm:$0xf]
        %v4974 = vunpack.c.l.b16 %v4958
        %v4975 = vunpack.c.l.b16 %v4959
        %v4976 = vunpack.c.l.b16 %v4960
        %v4977 = vunpack.c.l.b16 %v4961
        %v4978 = vunpack.c.l.b16 %v4962
        %v4979 = vunpack.c.l.b16 %v4963
        %v4980 = vunpack.c.l.b16 %v4964
        %v4981 = vunpack.c.l.b16 %v4965
        %v4982 = vpack.c.b16 %v4975, %v4974
        %v4983 = vpack.c.b16 %v4977, %v4976
        %v4984 = vpack.c.b16 %v4979, %v4978
        %v4985 = vpack.c.b16 %v4981, %v4980
        %4986 = vrot.lane.b32.xlu0 %v4552, 1
        %v4987 = vpop.permute.xlu0 %4986
        %4988 = vrot.lane.b32.xlu0 %v4553, 1
        %v4989 = vpop.permute.xlu0 %4988
        %4990 = vrot.lane.b32.xlu0 %v4554, 1
        %v4991 = vpop.permute.xlu0 %4990
        %4992 = vrot.lane.b32.xlu0 %v4555, 1
        %v4993 = vpop.permute.xlu0 %4992
        %4994 = vrot.lane.b32.xlu0 %v4556, 1
        %v4995 = vpop.permute.xlu0 %4994
        %4996 = vrot.lane.b32.xlu0 %v4557, 1
        %v4997 = vpop.permute.xlu0 %4996
        %4998 = vrot.lane.b32.xlu0 %v4558, 1
        %v4999 = vpop.permute.xlu0 %4998
        %5000 = vrot.lane.b32.xlu0 %v4559, 1
        %v5001 = vpop.permute.xlu0 %5000
        %v5002 = vsel %vm815, %v4987, %v4989
        %v5003 = vsel %vm815, %v4991, %v4993
        %v5004 = vsel %vm815, %v4995, %v4997
        %v5005 = vsel %vm815, %v4999, %v5001
        %v5011 = vsel %vm431, %v4982, 0
        %v5014 = vsel %vm431, %v4983, 0
        %v5017 = vsel %vm431, %v4984, 0
        %v5020 = vsel %vm431, %v4985, 0
        %5022 = vmatprep.subr.bf16.mxu0 0
        %5023 = vmatpush1.bf16.msra.mxu0 %v5002
        %5024 = vmatprep.subr.bf16.mxu0 0
        %5025 = vmatpush1.bf16.msra.mxu0 %v5003
        %5026 = vmatprep.subr.bf16.mxu0 0
        %5027 = vmatpush1.bf16.msra.mxu0 %v5004
        %5028 = vmatprep.subr.bf16.mxu0 0
        %5029 = vmatpush1.bf16.msra.mxu0 %v5005
        %5030 = vmatprep.subr.bf16.mxu0 0
        %5031 = vmatpush1.bf16.msra.mxu0 0
        %5032 = vmatprep.subr.bf16.mxu0 0
        %5033 = vmatpush1.bf16.msra.mxu0 0
        %5034 = vmatprep.subr.bf16.mxu0 0
        %5035 = vmatpush1.bf16.msra.mxu0 0
        %5036 = vmatprep.subr.bf16.mxu0 0
        %5037 = vmatpush1.bf16.msra.mxu0 0
        %5038 = vmatprep.subr.bf16.mxu0 0
        %5039 = vmatpush1.bf16.msra.mxu0 0
        %5040 = vmatprep.subr.bf16.mxu0 0
        %5041 = vmatpush1.bf16.msra.mxu0 0
        %5042 = vmatprep.subr.bf16.mxu0 0
        %5043 = vmatpush1.bf16.msra.mxu0 0
        %5044 = vmatprep.subr.bf16.mxu0 0
        %5045 = vmatpush1.bf16.msra.mxu0 0
        %5046 = vmatprep.subr.bf16.mxu0 0
        %5047 = vmatpush1.bf16.msra.mxu0 0
        %5048 = vmatprep.subr.bf16.mxu0 0
        %5049 = vmatpush1.bf16.msra.mxu0 0
        %5050 = vmatprep.subr.bf16.mxu0 0
        %5051 = vmatpush1.bf16.msra.mxu0 0
        %5052 = vmatprep.subr.bf16.mxu0 0
        %5053 = vmatpush1.bf16.msra.mxu0 0
        %5054 = vmatprep.mubr.bf16.mxu0 0
        %5055 = vmatmul.mubr.bf16.gmra.mrb[0].mxu0 %v5011
        %v5056 = vpop.f32.mrb[0].mxu0
        %v5057 = vadd.f32 0.0, %v5056
        %v5058 = vpop.f32.mrb[0].mxu0
        %v5059 = vpop.f32.mrb[0].mxu0
        %v5060 = vadd.f32 0.0, %v5059
        %v5061 = vpop.f32.mrb[0].mxu0
        %5062 = vmatprep.mubr.bf16.mxu0 0
        %5063 = vmatmul.mubr.bf16.gmra.mrb[0].mxu0 %v5014
        %v5064 = vpop.f32.mrb[0].mxu0
        %v5065 = vadd.f32 0.0, %v5064
        %v5066 = vpop.f32.mrb[0].mxu0
        %v5067 = vpop.f32.mrb[0].mxu0
        %v5068 = vadd.f32 0.0, %v5067
        %v5069 = vpop.f32.mrb[0].mxu0
        %5070 = vmatprep.mubr.bf16.mxu0 0
        %5071 = vmatmul.mubr.bf16.gmra.mrb[0].mxu0 %v5017
        %v5072 = vpop.f32.mrb[0].mxu0
        %v5073 = vadd.f32 0.0, %v5072
        %v5074 = vpop.f32.mrb[0].mxu0
        %v5075 = vpop.f32.mrb[0].mxu0
        %v5076 = vadd.f32 0.0, %v5075
        %v5077 = vpop.f32.mrb[0].mxu0
        %5078 = vmatprep.mubr.bf16.mxu0 0
        %5079 = vmatmul.mubr.bf16.gmra.mrb[0].mxu0 %v5020
        %v5080 = vpop.f32.mrb[0].mxu0
        %v5081 = vadd.f32 0.0, %v5080
        %v5082 = vpop.f32.mrb[0].mxu0
        %v5083 = vpop.f32.mrb[0].mxu0
        %v5084 = vadd.f32 0.0, %v5083
        %v5085 = vpop.f32.mrb[0].mxu0
        %5086 = vdwg.mxu0
        %v5087 = vadd.f32 %v4949, %v5057
        %v5088 = vadd.f32 %v4950, %v5060
        %v5089 = vadd.f32 %v4951, %v5065
        %v5090 = vadd.f32 %v4952, %v5068
        %v5091 = vadd.f32 %v4953, %v5073
        %v5092 = vadd.f32 %v4954, %v5076
        %v5093 = vadd.f32 %v4955, %v5081
        %v5094 = vadd.f32 %v4956, %v5084
        %s5095 = scalar_lea.vmem [#allocation9], 128
        %v5096 = vld [vmem:[%s5095] sm:$0xf]
        %v5097 = vld [vmem:[%s5095 + $0x4] sm:$0xf]
        %v5098 = vld [vmem:[%s5095 + $0x8] sm:$0xf]
        %v5099 = vld [vmem:[%s5095 + $0xc] sm:$0xf]
        %v5100 = vld [vmem:[%s5095 + $0x10] sm:$0xf]
        %v5101 = vld [vmem:[%s5095 + $0x14] sm:$0xf]
        %v5102 = vld [vmem:[%s5095 + $0x18] sm:$0xf]
        %v5103 = vld [vmem:[%s5095 + $0x1c] sm:$0xf]
        %v5112 = vunpack.c.l.b16 %v5096
        %v5113 = vunpack.c.l.b16 %v5097
        %v5114 = vunpack.c.l.b16 %v5098
        %v5115 = vunpack.c.l.b16 %v5099
        %v5116 = vunpack.c.l.b16 %v5100
        %v5117 = vunpack.c.l.b16 %v5101
        %v5118 = vunpack.c.l.b16 %v5102
        %v5119 = vunpack.c.l.b16 %v5103
        %v5120 = vpack.c.b16 %v5113, %v5112
        %v5121 = vpack.c.b16 %v5115, %v5114
        %v5122 = vpack.c.b16 %v5117, %v5116
        %v5123 = vpack.c.b16 %v5119, %v5118
        %v5125 = vsel %vm431, %v5120, 0
        %v5128 = vsel %vm431, %v5121, 0
        %v5131 = vsel %vm431, %v5122, 0
        %v5134 = vsel %vm431, %v5123, 0
        %5136 = vmatprep.subr.bf16.mxu0 0
        %5137 = vmatpush1.bf16.msra.mxu0 %v4553
        %5138 = vmatprep.subr.bf16.mxu0 0
        %5139 = vmatpush1.bf16.msra.mxu0 %v4555
        %5140 = vmatprep.subr.bf16.mxu0 0
        %5141 = vmatpush1.bf16.msra.mxu0 %v4557
        %5142 = vmatprep.subr.bf16.mxu0 0
        %5143 = vmatpush1.bf16.msra.mxu0 %v4559
        %5144 = vmatprep.subr.bf16.mxu0 0
        %5145 = vmatpush1.bf16.msra.mxu0 0
        %5146 = vmatprep.subr.bf16.mxu0 0
        %5147 = vmatpush1.bf16.msra.mxu0 0
        %5148 = vmatprep.subr.bf16.mxu0 0
        %5149 = vmatpush1.bf16.msra.mxu0 0
        %5150 = vmatprep.subr.bf16.mxu0 0
        %5151 = vmatpush1.bf16.msra.mxu0 0
        %5152 = vmatprep.subr.bf16.mxu0 0
        %5153 = vmatpush1.bf16.msra.mxu0 0
        %5154 = vmatprep.subr.bf16.mxu0 0
        %5155 = vmatpush1.bf16.msra.mxu0 0
        %5156 = vmatprep.subr.bf16.mxu0 0
        %5157 = vmatpush1.bf16.msra.mxu0 0
        %5158 = vmatprep.subr.bf16.mxu0 0
        %5159 = vmatpush1.bf16.msra.mxu0 0
        %5160 = vmatprep.subr.bf16.mxu0 0
        %5161 = vmatpush1.bf16.msra.mxu0 0
        %5162 = vmatprep.subr.bf16.mxu0 0
        %5163 = vmatpush1.bf16.msra.mxu0 0
        %5164 = vmatprep.subr.bf16.mxu0 0
        %5165 = vmatpush1.bf16.msra.mxu0 0
        %5166 = vmatprep.subr.bf16.mxu0 0
        %5167 = vmatpush1.bf16.msra.mxu0 0
        %5168 = vmatprep.mubr.bf16.mxu0 0
        %5169 = vmatmul.mubr.bf16.gmra.mrb[0].mxu0 %v5125
        %v5170 = vpop.f32.mrb[0].mxu0
        %v5171 = vadd.f32 0.0, %v5170
        %v5172 = vpop.f32.mrb[0].mxu0
        %v5173 = vpop.f32.mrb[0].mxu0
        %v5174 = vadd.f32 0.0, %v5173
        %v5175 = vpop.f32.mrb[0].mxu0
        %5176 = vmatprep.mubr.bf16.mxu0 0
        %5177 = vmatmul.mubr.bf16.gmra.mrb[0].mxu0 %v5128
        %v5178 = vpop.f32.mrb[0].mxu0
        %v5179 = vadd.f32 0.0, %v5178
        %v5180 = vpop.f32.mrb[0].mxu0
        %v5181 = vpop.f32.mrb[0].mxu0
        %v5182 = vadd.f32 0.0, %v5181
        %v5183 = vpop.f32.mrb[0].mxu0
        %5184 = vmatprep.mubr.bf16.mxu0 0
        %5185 = vmatmul.mubr.bf16.gmra.mrb[0].mxu0 %v5131
        %v5186 = vpop.f32.mrb[0].mxu0
        %v5187 = vadd.f32 0.0, %v5186
        %v5188 = vpop.f32.mrb[0].mxu0
        %v5189 = vpop.f32.mrb[0].mxu0
        %v5190 = vadd.f32 0.0, %v5189
        %v5191 = vpop.f32.mrb[0].mxu0
        %5192 = vmatprep.mubr.bf16.mxu0 0
        %5193 = vmatmul.mubr.bf16.gmra.mrb[0].mxu0 %v5134
        %v5194 = vpop.f32.mrb[0].mxu0
        %v5195 = vadd.f32 0.0, %v5194
        %v5196 = vpop.f32.mrb[0].mxu0
        %v5197 = vpop.f32.mrb[0].mxu0
        %v5198 = vadd.f32 0.0, %v5197
        %v5199 = vpop.f32.mrb[0].mxu0
        %5200 = vdwg.mxu0
        %v5201 = vadd.f32 %v5087, %v5171
        %v5202 = vadd.f32 %v5088, %v5174
        %v5203 = vadd.f32 %v5089, %v5179
        %v5204 = vadd.f32 %v5090, %v5182
        %v5205 = vadd.f32 %v5091, %v5187
        %v5206 = vadd.f32 %v5092, %v5190
        %v5207 = vadd.f32 %v5093, %v5195
        %v5208 = vadd.f32 %v5094, %v5198
        %s5209 = scalar_lea.vmem [#allocation9], 160
        %v5210 = vld [vmem:[%s5209] sm:$0xf]
        %v5211 = vld [vmem:[%s5209 + $0x4] sm:$0xf]
        %v5212 = vld [vmem:[%s5209 + $0x8] sm:$0xf]
        %v5213 = vld [vmem:[%s5209 + $0xc] sm:$0xf]
        %v5214 = vld [vmem:[%s5209 + $0x10] sm:$0xf]
        %v5215 = vld [vmem:[%s5209 + $0x14] sm:$0xf]
        %v5216 = vld [vmem:[%s5209 + $0x18] sm:$0xf]
        %v5217 = vld [vmem:[%s5209 + $0x1c] sm:$0xf]
        %v5218 = vld [vmem:[#allocation2 + $0x8] sm:$0xff]
        %v5219 = vld [vmem:[#allocation2 + $0x10] sm:$0xff]
        %v5220 = vld [vmem:[#allocation2 + $0x30] sm:$0xff]
        %v5221 = vld [vmem:[#allocation2 + $0x38] sm:$0xff]
        %v5222 = vld [vmem:[#allocation2 + $0x58] sm:$0xff]
        %v5223 = vld [vmem:[#allocation2 + $0x60] sm:$0xff]
        %v5224 = vld [vmem:[#allocation2 + $0x80] sm:$0xff]
        %v5225 = vld [vmem:[#allocation2 + $0x88] sm:$0xff]
        %v5234 = vunpack.c.l.b16 %v5210
        %v5235 = vunpack.c.l.b16 %v5211
        %v5236 = vunpack.c.l.b16 %v5212
        %v5237 = vunpack.c.l.b16 %v5213
        %v5238 = vunpack.c.l.b16 %v5214
        %v5239 = vunpack.c.l.b16 %v5215
        %v5240 = vunpack.c.l.b16 %v5216
        %v5241 = vunpack.c.l.b16 %v5217
        %v5242 = vpack.c.b16 %v5235, %v5234
        %v5243 = vpack.c.b16 %v5237, %v5236
        %v5244 = vpack.c.b16 %v5239, %v5238
        %v5245 = vpack.c.b16 %v5241, %v5240
        %5254 = vrot.lane.b32.xlu0 %v5218, 127
        %v5255 = vpop.permute.xlu0 %5254
        %5256 = vrot.lane.b32.xlu0 %v5219, 127
        %v5257 = vpop.permute.xlu0 %5256
        %5258 = vrot.lane.b32.xlu0 %v5220, 127
        %v5259 = vpop.permute.xlu0 %5258
        %5260 = vrot.lane.b32.xlu0 %v5221, 127
        %v5261 = vpop.permute.xlu0 %5260
        %5262 = vrot.lane.b32.xlu0 %v5222, 127
        %v5263 = vpop.permute.xlu0 %5262
        %5264 = vrot.lane.b32.xlu0 %v5223, 127
        %v5265 = vpop.permute.xlu0 %5264
        %5266 = vrot.lane.b32.xlu0 %v5224, 127
        %v5267 = vpop.permute.xlu0 %5266
        %5268 = vrot.lane.b32.xlu0 %v5225, 127
        %v5269 = vpop.permute.xlu0 %5268
        %v5270 = vsel %vm1140, %v5255, %v5257
        %v5271 = vsel %vm1140, %v5259, %v5261
        %v5272 = vsel %vm1140, %v5263, %v5265
        %v5273 = vsel %vm1140, %v5267, %v5269
        %v5279 = vsel %vm431, %v5242, 0
        %v5282 = vsel %vm431, %v5243, 0
        %v5285 = vsel %vm431, %v5244, 0
        %v5288 = vsel %vm431, %v5245, 0
        %5290 = vmatprep.subr.bf16.mxu0 0
        %5291 = vmatpush1.bf16.msra.mxu0 %v5270
        %5292 = vmatprep.subr.bf16.mxu0 0
        %5293 = vmatpush1.bf16.msra.mxu0 %v5271
        %5294 = vmatprep.subr.bf16.mxu0 0
        %5295 = vmatpush1.bf16.msra.mxu0 %v5272
        %5296 = vmatprep.subr.bf16.mxu0 0
        %5297 = vmatpush1.bf16.msra.mxu0 %v5273
        %5298 = vmatprep.subr.bf16.mxu0 0
        %5299 = vmatpush1.bf16.msra.mxu0 0
        %5300 = vmatprep.subr.bf16.mxu0 0
        %5301 = vmatpush1.bf16.msra.mxu0 0
        %5302 = vmatprep.subr.bf16.mxu0 0
        %5303 = vmatpush1.bf16.msra.mxu0 0
        %5304 = vmatprep.subr.bf16.mxu0 0
        %5305 = vmatpush1.bf16.msra.mxu0 0
        %5306 = vmatprep.subr.bf16.mxu0 0
        %5307 = vmatpush1.bf16.msra.mxu0 0
        %5308 = vmatprep.subr.bf16.mxu0 0
        %5309 = vmatpush1.bf16.msra.mxu0 0
        %5310 = vmatprep.subr.bf16.mxu0 0
        %5311 = vmatpush1.bf16.msra.mxu0 0
        %5312 = vmatprep.subr.bf16.mxu0 0
        %5313 = vmatpush1.bf16.msra.mxu0 0
        %5314 = vmatprep.subr.bf16.mxu0 0
        %5315 = vmatpush1.bf16.msra.mxu0 0
        %5316 = vmatprep.subr.bf16.mxu0 0
        %5317 = vmatpush1.bf16.msra.mxu0 0
        %5318 = vmatprep.subr.bf16.mxu0 0
        %5319 = vmatpush1.bf16.msra.mxu0 0
        %5320 = vmatprep.subr.bf16.mxu0 0
        %5321 = vmatpush1.bf16.msra.mxu0 0
        %5322 = vmatprep.mubr.bf16.mxu0 0
        %5323 = vmatmul.mubr.bf16.gmra.mrb[0].mxu0 %v5279
        %v5324 = vpop.f32.mrb[0].mxu0
        %v5325 = vadd.f32 0.0, %v5324
        %v5326 = vpop.f32.mrb[0].mxu0
        %v5327 = vpop.f32.mrb[0].mxu0
        %v5328 = vadd.f32 0.0, %v5327
        %v5329 = vpop.f32.mrb[0].mxu0
        %5330 = vmatprep.mubr.bf16.mxu0 0
        %5331 = vmatmul.mubr.bf16.gmra.mrb[0].mxu0 %v5282
        %v5332 = vpop.f32.mrb[0].mxu0
        %v5333 = vadd.f32 0.0, %v5332
        %v5334 = vpop.f32.mrb[0].mxu0
        %v5335 = vpop.f32.mrb[0].mxu0
        %v5336 = vadd.f32 0.0, %v5335
        %v5337 = vpop.f32.mrb[0].mxu0
        %5338 = vmatprep.mubr.bf16.mxu0 0
        %5339 = vmatmul.mubr.bf16.gmra.mrb[0].mxu0 %v5285
        %v5340 = vpop.f32.mrb[0].mxu0
        %v5341 = vadd.f32 0.0, %v5340
        %v5342 = vpop.f32.mrb[0].mxu0
        %v5343 = vpop.f32.mrb[0].mxu0
        %v5344 = vadd.f32 0.0, %v5343
        %v5345 = vpop.f32.mrb[0].mxu0
        %5346 = vmatprep.mubr.bf16.mxu0 0
        %5347 = vmatmul.mubr.bf16.gmra.mrb[0].mxu0 %v5288
        %v5348 = vpop.f32.mrb[0].mxu0
        %v5349 = vadd.f32 0.0, %v5348
        %v5350 = vpop.f32.mrb[0].mxu0
        %v5351 = vpop.f32.mrb[0].mxu0
        %v5352 = vadd.f32 0.0, %v5351
        %v5353 = vpop.f32.mrb[0].mxu0
        %5354 = vdwg.mxu0
        %v5355 = vadd.f32 %v5201, %v5325
        %v5356 = vadd.f32 %v5202, %v5328
        %v5357 = vadd.f32 %v5203, %v5333
        %v5358 = vadd.f32 %v5204, %v5336
        %v5359 = vadd.f32 %v5205, %v5341
        %v5360 = vadd.f32 %v5206, %v5344
        %v5361 = vadd.f32 %v5207, %v5349
        %v5362 = vadd.f32 %v5208, %v5352
        %s5363 = scalar_lea.vmem [#allocation9], 192
        %v5364 = vld [vmem:[%s5363] sm:$0xf]
        %v5365 = vld [vmem:[%s5363 + $0x4] sm:$0xf]
        %v5366 = vld [vmem:[%s5363 + $0x8] sm:$0xf]
        %v5367 = vld [vmem:[%s5363 + $0xc] sm:$0xf]
        %v5368 = vld [vmem:[%s5363 + $0x10] sm:$0xf]
        %v5369 = vld [vmem:[%s5363 + $0x14] sm:$0xf]
        %v5370 = vld [vmem:[%s5363 + $0x18] sm:$0xf]
        %v5371 = vld [vmem:[%s5363 + $0x1c] sm:$0xf]
        %v5380 = vunpack.c.l.b16 %v5364
        %v5381 = vunpack.c.l.b16 %v5365
        %v5382 = vunpack.c.l.b16 %v5366
        %v5383 = vunpack.c.l.b16 %v5367
        %v5384 = vunpack.c.l.b16 %v5368
        %v5385 = vunpack.c.l.b16 %v5369
        %v5386 = vunpack.c.l.b16 %v5370
        %v5387 = vunpack.c.l.b16 %v5371
        %v5388 = vpack.c.b16 %v5381, %v5380
        %v5389 = vpack.c.b16 %v5383, %v5382
        %v5390 = vpack.c.b16 %v5385, %v5384
        %v5391 = vpack.c.b16 %v5387, %v5386
        %5392 = vrot.lane.b32.xlu0 %v5218, 111
        %v5393 = vpop.permute.xlu0 %5392
        %5394 = vrot.lane.b32.xlu0 %v5219, 111
        %v5395 = vpop.permute.xlu0 %5394
        %5396 = vrot.lane.b32.xlu0 %v5220, 111
        %v5397 = vpop.permute.xlu0 %5396
        %5398 = vrot.lane.b32.xlu0 %v5221, 111
        %v5399 = vpop.permute.xlu0 %5398
        %5400 = vrot.lane.b32.xlu0 %v5222, 111
        %v5401 = vpop.permute.xlu0 %5400
        %5402 = vrot.lane.b32.xlu0 %v5223, 111
        %v5403 = vpop.permute.xlu0 %5402
        %5404 = vrot.lane.b32.xlu0 %v5224, 111
        %v5405 = vpop.permute.xlu0 %5404
        %5406 = vrot.lane.b32.xlu0 %v5225, 111
        %v5407 = vpop.permute.xlu0 %5406
        %v5408 = vsel %vm1279, %v5393, %v5395
        %v5409 = vsel %vm1279, %v5397, %v5399
        %v5410 = vsel %vm1279, %v5401, %v5403
        %v5411 = vsel %vm1279, %v5405, %v5407
        %v5417 = vsel %vm431, %v5388, 0
        %v5420 = vsel %vm431, %v5389, 0
        %v5423 = vsel %vm431, %v5390, 0
        %v5426 = vsel %vm431, %v5391, 0
        %5428 = vmatprep.subr.bf16.mxu0 0
        %5429 = vmatpush1.bf16.msra.mxu0 %v5408
        %5430 = vmatprep.subr.bf16.mxu0 0
        %5431 = vmatpush1.bf16.msra.mxu0 %v5409
        %5432 = vmatprep.subr.bf16.mxu0 0
        %5433 = vmatpush1.bf16.msra.mxu0 %v5410
        %5434 = vmatprep.subr.bf16.mxu0 0
        %5435 = vmatpush1.bf16.msra.mxu0 %v5411
        %5436 = vmatprep.subr.bf16.mxu0 0
        %5437 = vmatpush1.bf16.msra.mxu0 0
        %5438 = vmatprep.subr.bf16.mxu0 0
        %5439 = vmatpush1.bf16.msra.mxu0 0
        %5440 = vmatprep.subr.bf16.mxu0 0
        %5441 = vmatpush1.bf16.msra.mxu0 0
        %5442 = vmatprep.subr.bf16.mxu0 0
        %5443 = vmatpush1.bf16.msra.mxu0 0
        %5444 = vmatprep.subr.bf16.mxu0 0
        %5445 = vmatpush1.bf16.msra.mxu0 0
        %5446 = vmatprep.subr.bf16.mxu0 0
        %5447 = vmatpush1.bf16.msra.mxu0 0
        %5448 = vmatprep.subr.bf16.mxu0 0
        %5449 = vmatpush1.bf16.msra.mxu0 0
        %5450 = vmatprep.subr.bf16.mxu0 0
        %5451 = vmatpush1.bf16.msra.mxu0 0
        %5452 = vmatprep.subr.bf16.mxu0 0
        %5453 = vmatpush1.bf16.msra.mxu0 0
        %5454 = vmatprep.subr.bf16.mxu0 0
        %5455 = vmatpush1.bf16.msra.mxu0 0
        %5456 = vmatprep.subr.bf16.mxu0 0
        %5457 = vmatpush1.bf16.msra.mxu0 0
        %5458 = vmatprep.subr.bf16.mxu0 0
        %5459 = vmatpush1.bf16.msra.mxu0 0
        %5460 = vmatprep.mubr.bf16.mxu0 0
        %5461 = vmatmul.mubr.bf16.gmra.mrb[0].mxu0 %v5417
        %v5462 = vpop.f32.mrb[0].mxu0
        %v5463 = vadd.f32 0.0, %v5462
        %v5464 = vpop.f32.mrb[0].mxu0
        %v5465 = vpop.f32.mrb[0].mxu0
        %v5466 = vadd.f32 0.0, %v5465
        %v5467 = vpop.f32.mrb[0].mxu0
        %5468 = vmatprep.mubr.bf16.mxu0 0
        %5469 = vmatmul.mubr.bf16.gmra.mrb[0].mxu0 %v5420
        %v5470 = vpop.f32.mrb[0].mxu0
        %v5471 = vadd.f32 0.0, %v5470
        %v5472 = vpop.f32.mrb[0].mxu0
        %v5473 = vpop.f32.mrb[0].mxu0
        %v5474 = vadd.f32 0.0, %v5473
        %v5475 = vpop.f32.mrb[0].mxu0
        %5476 = vmatprep.mubr.bf16.mxu0 0
        %5477 = vmatmul.mubr.bf16.gmra.mrb[0].mxu0 %v5423
        %v5478 = vpop.f32.mrb[0].mxu0
        %v5479 = vadd.f32 0.0, %v5478
        %v5480 = vpop.f32.mrb[0].mxu0
        %v5481 = vpop.f32.mrb[0].mxu0
        %v5482 = vadd.f32 0.0, %v5481
        %v5483 = vpop.f32.mrb[0].mxu0
        %5484 = vmatprep.mubr.bf16.mxu0 0
        %5485 = vmatmul.mubr.bf16.gmra.mrb[0].mxu0 %v5426
        %v5486 = vpop.f32.mrb[0].mxu0
        %v5487 = vadd.f32 0.0, %v5486
        %v5488 = vpop.f32.mrb[0].mxu0
        %v5489 = vpop.f32.mrb[0].mxu0
        %v5490 = vadd.f32 0.0, %v5489
        %v5491 = vpop.f32.mrb[0].mxu0
        %5492 = vdwg.mxu0
        %v5493 = vadd.f32 %v5355, %v5463
        %v5494 = vadd.f32 %v5356, %v5466
        %v5495 = vadd.f32 %v5357, %v5471
        %v5496 = vadd.f32 %v5358, %v5474
        %v5497 = vadd.f32 %v5359, %v5479
        %v5498 = vadd.f32 %v5360, %v5482
        %v5499 = vadd.f32 %v5361, %v5487
        %v5500 = vadd.f32 %v5362, %v5490
        %s5501 = scalar_lea.vmem [#allocation9], 224
        %v5502 = vld [vmem:[%s5501] sm:$0xf]
        %v5503 = vld [vmem:[%s5501 + $0x4] sm:$0xf]
        %v5504 = vld [vmem:[%s5501 + $0x8] sm:$0xf]
        %v5505 = vld [vmem:[%s5501 + $0xc] sm:$0xf]
        %v5506 = vld [vmem:[%s5501 + $0x10] sm:$0xf]
        %v5507 = vld [vmem:[%s5501 + $0x14] sm:$0xf]
        %v5508 = vld [vmem:[%s5501 + $0x18] sm:$0xf]
        %v5509 = vld [vmem:[%s5501 + $0x1c] sm:$0xf]
        %v5518 = vunpack.c.l.b16 %v5502
        %v5519 = vunpack.c.l.b16 %v5503
        %v5520 = vunpack.c.l.b16 %v5504
        %v5521 = vunpack.c.l.b16 %v5505
        %v5522 = vunpack.c.l.b16 %v5506
        %v5523 = vunpack.c.l.b16 %v5507
        %v5524 = vunpack.c.l.b16 %v5508
        %v5525 = vunpack.c.l.b16 %v5509
        %v5526 = vpack.c.b16 %v5519, %v5518
        %v5527 = vpack.c.b16 %v5521, %v5520
        %v5528 = vpack.c.b16 %v5523, %v5522
        %v5529 = vpack.c.b16 %v5525, %v5524
        %5530 = vrot.lane.b32.xlu0 %v5218, 110
        %v5531 = vpop.permute.xlu0 %5530
        %5532 = vrot.lane.b32.xlu0 %v5219, 110
        %v5533 = vpop.permute.xlu0 %5532
        %5534 = vrot.lane.b32.xlu0 %v5220, 110
        %v5535 = vpop.permute.xlu0 %5534
        %5536 = vrot.lane.b32.xlu0 %v5221, 110
        %v5537 = vpop.permute.xlu0 %5536
        %5538 = vrot.lane.b32.xlu0 %v5222, 110
        %v5539 = vpop.permute.xlu0 %5538
        %5540 = vrot.lane.b32.xlu0 %v5223, 110
        %v5541 = vpop.permute.xlu0 %5540
        %5542 = vrot.lane.b32.xlu0 %v5224, 110
        %v5543 = vpop.permute.xlu0 %5542
        %5544 = vrot.lane.b32.xlu0 %v5225, 110
        %v5545 = vpop.permute.xlu0 %5544
        %v5546 = vsel %vm1418, %v5531, %v5533
        %v5547 = vsel %vm1418, %v5535, %v5537
        %v5548 = vsel %vm1418, %v5539, %v5541
        %v5549 = vsel %vm1418, %v5543, %v5545
        %v5555 = vsel %vm431, %v5526, 0
        %v5558 = vsel %vm431, %v5527, 0
        %v5561 = vsel %vm431, %v5528, 0
        %v5564 = vsel %vm431, %v5529, 0
        %5566 = vmatprep.subr.bf16.mxu0 0
        %5567 = vmatpush1.bf16.msra.mxu0 %v5546
        %5568 = vmatprep.subr.bf16.mxu0 0
        %5569 = vmatpush1.bf16.msra.mxu0 %v5547
        %5570 = vmatprep.subr.bf16.mxu0 0
        %5571 = vmatpush1.bf16.msra.mxu0 %v5548
        %5572 = vmatprep.subr.bf16.mxu0 0
        %5573 = vmatpush1.bf16.msra.mxu0 %v5549
        %5574 = vmatprep.subr.bf16.mxu0 0
        %5575 = vmatpush1.bf16.msra.mxu0 0
        %5576 = vmatprep.subr.bf16.mxu0 0
        %5577 = vmatpush1.bf16.msra.mxu0 0
        %5578 = vmatprep.subr.bf16.mxu0 0
        %5579 = vmatpush1.bf16.msra.mxu0 0
        %5580 = vmatprep.subr.bf16.mxu0 0
        %5581 = vmatpush1.bf16.msra.mxu0 0
        %5582 = vmatprep.subr.bf16.mxu0 0
        %5583 = vmatpush1.bf16.msra.mxu0 0
        %5584 = vmatprep.subr.bf16.mxu0 0
        %5585 = vmatpush1.bf16.msra.mxu0 0
        %5586 = vmatprep.subr.bf16.mxu0 0
        %5587 = vmatpush1.bf16.msra.mxu0 0
        %5588 = vmatprep.subr.bf16.mxu0 0
        %5589 = vmatpush1.bf16.msra.mxu0 0
        %5590 = vmatprep.subr.bf16.mxu0 0
        %5591 = vmatpush1.bf16.msra.mxu0 0
        %5592 = vmatprep.subr.bf16.mxu0 0
        %5593 = vmatpush1.bf16.msra.mxu0 0
        %5594 = vmatprep.subr.bf16.mxu0 0
        %5595 = vmatpush1.bf16.msra.mxu0 0
        %5596 = vmatprep.subr.bf16.mxu0 0
        %5597 = vmatpush1.bf16.msra.mxu0 0
        %5598 = vmatprep.mubr.bf16.mxu0 0
        %5599 = vmatmul.mubr.bf16.gmra.mrb[0].mxu0 %v5555
        %v5600 = vpop.f32.mrb[0].mxu0
        %v5601 = vadd.f32 0.0, %v5600
        %v5602 = vpop.f32.mrb[0].mxu0
        %v5603 = vpop.f32.mrb[0].mxu0
        %v5604 = vadd.f32 0.0, %v5603
        %v5605 = vpop.f32.mrb[0].mxu0
        %5606 = vmatprep.mubr.bf16.mxu0 0
        %5607 = vmatmul.mubr.bf16.gmra.mrb[0].mxu0 %v5558
        %v5608 = vpop.f32.mrb[0].mxu0
        %v5609 = vadd.f32 0.0, %v5608
        %v5610 = vpop.f32.mrb[0].mxu0
        %v5611 = vpop.f32.mrb[0].mxu0
        %v5612 = vadd.f32 0.0, %v5611
        %v5613 = vpop.f32.mrb[0].mxu0
        %5614 = vmatprep.mubr.bf16.mxu0 0
        %5615 = vmatmul.mubr.bf16.gmra.mrb[0].mxu0 %v5561
        %v5616 = vpop.f32.mrb[0].mxu0
        %v5617 = vadd.f32 0.0, %v5616
        %v5618 = vpop.f32.mrb[0].mxu0
        %v5619 = vpop.f32.mrb[0].mxu0
        %v5620 = vadd.f32 0.0, %v5619
        %v5621 = vpop.f32.mrb[0].mxu0
        %5622 = vmatprep.mubr.bf16.mxu0 0
        %5623 = vmatmul.mubr.bf16.gmra.mrb[0].mxu0 %v5564
        %v5624 = vpop.f32.mrb[0].mxu0
        %v5625 = vadd.f32 0.0, %v5624
        %v5626 = vpop.f32.mrb[0].mxu0
        %v5627 = vpop.f32.mrb[0].mxu0
        %v5628 = vadd.f32 0.0, %v5627
        %v5629 = vpop.f32.mrb[0].mxu0
        %5630 = vdwg.mxu0
        %v5631 = vadd.f32 %v5493, %v5601
        %v5632 = vadd.f32 %v5494, %v5604
        %v5633 = vadd.f32 %v5495, %v5609
        %v5634 = vadd.f32 %v5496, %v5612
        %v5635 = vadd.f32 %v5497, %v5617
        %v5636 = vadd.f32 %v5498, %v5620
        %v5637 = vadd.f32 %v5499, %v5625
        %v5638 = vadd.f32 %v5500, %v5628
        %s5639 = scalar_lea.vmem [#allocation9], 256
        %v5640 = vld [vmem:[%s5639] sm:$0xf]
        %v5641 = vld [vmem:[%s5639 + $0x4] sm:$0xf]
        %v5642 = vld [vmem:[%s5639 + $0x8] sm:$0xf]
        %v5643 = vld [vmem:[%s5639 + $0xc] sm:$0xf]
        %v5644 = vld [vmem:[%s5639 + $0x10] sm:$0xf]
        %v5645 = vld [vmem:[%s5639 + $0x14] sm:$0xf]
        %v5646 = vld [vmem:[%s5639 + $0x18] sm:$0xf]
        %v5647 = vld [vmem:[%s5639 + $0x1c] sm:$0xf]
        %v5656 = vunpack.c.l.b16 %v5640
        %v5657 = vunpack.c.l.b16 %v5641
        %v5658 = vunpack.c.l.b16 %v5642
        %v5659 = vunpack.c.l.b16 %v5643
        %v5660 = vunpack.c.l.b16 %v5644
        %v5661 = vunpack.c.l.b16 %v5645
        %v5662 = vunpack.c.l.b16 %v5646
        %v5663 = vunpack.c.l.b16 %v5647
        %v5664 = vpack.c.b16 %v5657, %v5656
        %v5665 = vpack.c.b16 %v5659, %v5658
        %v5666 = vpack.c.b16 %v5661, %v5660
        %v5667 = vpack.c.b16 %v5663, %v5662
        %5668 = vrot.lane.b32.xlu0 %v5218, 109
        %v5669 = vpop.permute.xlu0 %5668
        %5670 = vrot.lane.b32.xlu0 %v5219, 109
        %v5671 = vpop.permute.xlu0 %5670
        %5672 = vrot.lane.b32.xlu0 %v5220, 109
        %v5673 = vpop.permute.xlu0 %5672
        %5674 = vrot.lane.b32.xlu0 %v5221, 109
        %v5675 = vpop.permute.xlu0 %5674
        %5676 = vrot.lane.b32.xlu0 %v5222, 109
        %v5677 = vpop.permute.xlu0 %5676
        %5678 = vrot.lane.b32.xlu0 %v5223, 109
        %v5679 = vpop.permute.xlu0 %5678
        %5680 = vrot.lane.b32.xlu0 %v5224, 109
        %v5681 = vpop.permute.xlu0 %5680
        %5682 = vrot.lane.b32.xlu0 %v5225, 109
        %v5683 = vpop.permute.xlu0 %5682
        %v5684 = vsel %vm1557, %v5669, %v5671
        %v5685 = vsel %vm1557, %v5673, %v5675
        %v5686 = vsel %vm1557, %v5677, %v5679
        %v5687 = vsel %vm1557, %v5681, %v5683
        %v5693 = vsel %vm431, %v5664, 0
        %v5696 = vsel %vm431, %v5665, 0
        %v5699 = vsel %vm431, %v5666, 0
        %v5702 = vsel %vm431, %v5667, 0
        %5704 = vmatprep.subr.bf16.mxu0 0
        %5705 = vmatpush1.bf16.msra.mxu0 %v5684
        %5706 = vmatprep.subr.bf16.mxu0 0
        %5707 = vmatpush1.bf16.msra.mxu0 %v5685
        %5708 = vmatprep.subr.bf16.mxu0 0
        %5709 = vmatpush1.bf16.msra.mxu0 %v5686
        %5710 = vmatprep.subr.bf16.mxu0 0
        %5711 = vmatpush1.bf16.msra.mxu0 %v5687
        %5712 = vmatprep.subr.bf16.mxu0 0
        %5713 = vmatpush1.bf16.msra.mxu0 0
        %5714 = vmatprep.subr.bf16.mxu0 0
        %5715 = vmatpush1.bf16.msra.mxu0 0
        %5716 = vmatprep.subr.bf16.mxu0 0
        %5717 = vmatpush1.bf16.msra.mxu0 0
        %5718 = vmatprep.subr.bf16.mxu0 0
        %5719 = vmatpush1.bf16.msra.mxu0 0
        %5720 = vmatprep.subr.bf16.mxu0 0
        %5721 = vmatpush1.bf16.msra.mxu0 0
        %5722 = vmatprep.subr.bf16.mxu0 0
        %5723 = vmatpush1.bf16.msra.mxu0 0
        %5724 = vmatprep.subr.bf16.mxu0 0
        %5725 = vmatpush1.bf16.msra.mxu0 0
        %5726 = vmatprep.subr.bf16.mxu0 0
        %5727 = vmatpush1.bf16.msra.mxu0 0
        %5728 = vmatprep.subr.bf16.mxu0 0
        %5729 = vmatpush1.bf16.msra.mxu0 0
        %5730 = vmatprep.subr.bf16.mxu0 0
        %5731 = vmatpush1.bf16.msra.mxu0 0
        %5732 = vmatprep.subr.bf16.mxu0 0
        %5733 = vmatpush1.bf16.msra.mxu0 0
        %5734 = vmatprep.subr.bf16.mxu0 0
        %5735 = vmatpush1.bf16.msra.mxu0 0
        %5736 = vmatprep.mubr.bf16.mxu0 0
        %5737 = vmatmul.mubr.bf16.gmra.mrb[0].mxu0 %v5693
        %v5738 = vpop.f32.mrb[0].mxu0
        %v5739 = vadd.f32 0.0, %v5738
        %v5740 = vpop.f32.mrb[0].mxu0
        %v5741 = vpop.f32.mrb[0].mxu0
        %v5742 = vadd.f32 0.0, %v5741
        %v5743 = vpop.f32.mrb[0].mxu0
        %5744 = vmatprep.mubr.bf16.mxu0 0
        %5745 = vmatmul.mubr.bf16.gmra.mrb[0].mxu0 %v5696
        %v5746 = vpop.f32.mrb[0].mxu0
        %v5747 = vadd.f32 0.0, %v5746
        %v5748 = vpop.f32.mrb[0].mxu0
        %v5749 = vpop.f32.mrb[0].mxu0
        %v5750 = vadd.f32 0.0, %v5749
        %v5751 = vpop.f32.mrb[0].mxu0
        %5752 = vmatprep.mubr.bf16.mxu0 0
        %5753 = vmatmul.mubr.bf16.gmra.mrb[0].mxu0 %v5699
        %v5754 = vpop.f32.mrb[0].mxu0
        %v5755 = vadd.f32 0.0, %v5754
        %v5756 = vpop.f32.mrb[0].mxu0
        %v5757 = vpop.f32.mrb[0].mxu0
        %v5758 = vadd.f32 0.0, %v5757
        %v5759 = vpop.f32.mrb[0].mxu0
        %5760 = vmatprep.mubr.bf16.mxu0 0
        %5761 = vmatmul.mubr.bf16.gmra.mrb[0].mxu0 %v5702
        %v5762 = vpop.f32.mrb[0].mxu0
        %v5763 = vadd.f32 0.0, %v5762
        %v5764 = vpop.f32.mrb[0].mxu0
        %v5765 = vpop.f32.mrb[0].mxu0
        %v5766 = vadd.f32 0.0, %v5765
        %v5767 = vpop.f32.mrb[0].mxu0
        %5768 = vdwg.mxu0
        %v5769 = vadd.f32 %v5631, %v5739
        %v5770 = vadd.f32 %v5632, %v5742
        %v5771 = vadd.f32 %v5633, %v5747
        %v5772 = vadd.f32 %v5634, %v5750
        %v5773 = vadd.f32 %v5635, %v5755
        %v5774 = vadd.f32 %v5636, %v5758
        %v5775 = vadd.f32 %v5637, %v5763
        %v5776 = vadd.f32 %v5638, %v5766
        %v5777 = vld [vmem:[%s4] sm:$0xff]
        %v5778 = vld [vmem:[%s4 + $0x8] sm:$0xff]
        %v5779 = vld [vmem:[%s4 + $0x10] sm:$0xff]
        %v5780 = vld [vmem:[%s4 + $0x18] sm:$0xff]
        %v5781 = vld [vmem:[%s4 + $0x20] sm:$0xff]
        %v5782 = vld [vmem:[%s4 + $0x28] sm:$0xff]
        %v5783 = vld [vmem:[%s4 + $0x30] sm:$0xff]
        %v5784 = vld [vmem:[%s4 + $0x38] sm:$0xff]
        %5786 = vset.pattern.permute.xlu0 0
        %5787 = vperm.xlu0 %5786, %v5777
        %v5788 = vpop.permute.xlu0 %5787
        %5791 = vset.pattern.permute.xlu0 0
        %5792 = vperm.xlu0 %5791, %v5778
        %v5793 = vpop.permute.xlu0 %5792
        %5796 = vset.pattern.permute.xlu0 0
        %5797 = vperm.xlu0 %5796, %v5779
        %v5798 = vpop.permute.xlu0 %5797
        %5801 = vset.pattern.permute.xlu0 0
        %5802 = vperm.xlu0 %5801, %v5780
        %v5803 = vpop.permute.xlu0 %5802
        %5806 = vset.pattern.permute.xlu0 0
        %5807 = vperm.xlu0 %5806, %v5781
        %v5808 = vpop.permute.xlu0 %5807
        %5811 = vset.pattern.permute.xlu0 0
        %5812 = vperm.xlu0 %5811, %v5782
        %v5813 = vpop.permute.xlu0 %5812
        %5816 = vset.pattern.permute.xlu0 0
        %5817 = vperm.xlu0 %5816, %v5783
        %v5818 = vpop.permute.xlu0 %5817
        %5821 = vset.pattern.permute.xlu0 0
        %5822 = vperm.xlu0 %5821, %v5784
        %v5823 = vpop.permute.xlu0 %5822
        %v5825 = vadd.f32 %v5769, %v5788
        %v5826 = vadd.f32 %v5770, %v5793
        %v5827 = vadd.f32 %v5771, %v5798
        %v5828 = vadd.f32 %v5772, %v5803
        %v5829 = vadd.f32 %v5773, %v5808
        %v5830 = vadd.f32 %v5774, %v5813
        %v5831 = vadd.f32 %v5775, %v5818
        %v5832 = vadd.f32 %v5776, %v5823
        %v5833 = vmax.f32 %v5825, 0.0
        %v5834 = vmax.f32 %v5826, 0.0
        %v5835 = vmax.f32 %v5827, 0.0
        %v5836 = vmax.f32 %v5828, 0.0
        %v5837 = vmax.f32 %v5829, 0.0
        %v5838 = vmax.f32 %v5830, 0.0
        %v5839 = vmax.f32 %v5831, 0.0
        %v5840 = vmax.f32 %v5832, 0.0
        %v5841 = vld [vmem:[%s5] sm:$0x1]
        %v5842 = vpack.c.bf16 %v5834, %v5833
        %v5843 = vpack.c.bf16 %v5836, %v5835
        %v5844 = vpack.c.bf16 %v5838, %v5837
        %v5845 = vpack.c.bf16 %v5840, %v5839
        %v5846 = vld [vmem:[#allocation3] sm:$0x1]
        %5848 = vset.pattern.permute.xlu0 0
        %5849 = vperm.xlu0 %5848, %v5846
        %v5850 = vpop.permute.xlu0 %5849
        %v5852 = vlaneseq
        %v5853 = vshrl.u32 %v5852, 7
        %v5854 = vsub.s32 0, %v5853
        %v5855 = vrot.slane %v5850, %v5854
        %v5857 = vsel %vm431, %v5841, 0
        %5859 = vmatprep.subr.bf16.mxu0 0
        %5860 = vmatpush1.bf16.msra.mxu0 %v5842
        %5861 = vmatprep.subr.bf16.mxu0 0
        %5862 = vmatpush1.bf16.msra.mxu0 %v5843
        %5863 = vmatprep.subr.bf16.mxu0 0
        %5864 = vmatpush1.bf16.msra.mxu0 %v5844
        %5865 = vmatprep.subr.bf16.mxu0 0
        %5866 = vmatpush1.bf16.msra.mxu0 %v5845
        %5867 = vmatprep.subr.bf16.mxu0 0
        %5868 = vmatpush1.bf16.msra.mxu0 0
        %5869 = vmatprep.subr.bf16.mxu0 0
        %5870 = vmatpush1.bf16.msra.mxu0 0
        %5871 = vmatprep.subr.bf16.mxu0 0
        %5872 = vmatpush1.bf16.msra.mxu0 0
        %5873 = vmatprep.subr.bf16.mxu0 0
        %5874 = vmatpush1.bf16.msra.mxu0 0
        %5875 = vmatprep.subr.bf16.mxu0 0
        %5876 = vmatpush1.bf16.msra.mxu0 0
        %5877 = vmatprep.subr.bf16.mxu0 0
        %5878 = vmatpush1.bf16.msra.mxu0 0
        %5879 = vmatprep.subr.bf16.mxu0 0
        %5880 = vmatpush1.bf16.msra.mxu0 0
        %5881 = vmatprep.subr.bf16.mxu0 0
        %5882 = vmatpush1.bf16.msra.mxu0 0
        %5883 = vmatprep.subr.bf16.mxu0 0
        %5884 = vmatpush1.bf16.msra.mxu0 0
        %5885 = vmatprep.subr.bf16.mxu0 0
        %5886 = vmatpush1.bf16.msra.mxu0 0
        %5887 = vmatprep.subr.bf16.mxu0 0
        %5888 = vmatpush1.bf16.msra.mxu0 0
        %5889 = vmatprep.subr.bf16.mxu0 0
        %5890 = vmatpush1.bf16.msra.mxu0 0
        %5891 = vmatprep.mubr.bf16.mxu0 0
        %5892 = vmatmul.mubr.bf16.gmra.mrb[0].mxu0 %v5857
        %v5893 = vpop.f32.mrb[0].mxu0
        %v5894 = vadd.f32 %v5855, %v5893
        %v5895 = vpop.f32.mrb[0].mxu0
        %v5896 = vpop.f32.mrb[0].mxu0
        %v5897 = vpop.f32.mrb[0].mxu0
        %5898 = vdwg.mxu0
        %v5899 = vlaneseq
        %vm5900 = vcmp.ge.s32.totalorder %v5899, 0
        %vm5901 = vcmp.lt.s32.totalorder %v5899, 128
        %vm5902 = vmand %vm5900, %vm5901
        %5903 = vst.msk [vmem:[%s327] sm:$0x1] %vm5902, %v5894
        %v5904 = vld [vmem:[#allocation9] sm:$0xf]
        %v5905 = vld [vmem:[#allocation9 + $0x4] sm:$0xf]
        %v5906 = vld [vmem:[#allocation9 + $0x8] sm:$0xf]
        %v5907 = vld [vmem:[#allocation9 + $0xc] sm:$0xf]
        %v5908 = vld [vmem:[#allocation9 + $0x10] sm:$0xf]
        %v5909 = vld [vmem:[#allocation9 + $0x14] sm:$0xf]
        %v5910 = vld [vmem:[#allocation9 + $0x18] sm:$0xf]
        %v5911 = vld [vmem:[#allocation9 + $0x1c] sm:$0xf]
        %v5912 = vld [vmem:[#allocation2 + $0x8] sm:$0xff]
        %v5913 = vld [vmem:[#allocation2 + $0x10] sm:$0xff]
        %v5914 = vld [vmem:[#allocation2 + $0x30] sm:$0xff]
        %v5915 = vld [vmem:[#allocation2 + $0x38] sm:$0xff]
        %v5916 = vld [vmem:[#allocation2 + $0x58] sm:$0xff]
        %v5917 = vld [vmem:[#allocation2 + $0x60] sm:$0xff]
        %v5918 = vld [vmem:[#allocation2 + $0x80] sm:$0xff]
        %v5919 = vld [vmem:[#allocation2 + $0x88] sm:$0xff]
        %v5920 = vld [vmem:[%s4560] sm:$0xf]
        %v5921 = vld [vmem:[%s4560 + $0x4] sm:$0xf]
        %v5922 = vld [vmem:[%s4560 + $0x8] sm:$0xf]
        %v5923 = vld [vmem:[%s4560 + $0xc] sm:$0xf]
        %v5924 = vld [vmem:[%s4560 + $0x10] sm:$0xf]
        %v5925 = vld [vmem:[%s4560 + $0x14] sm:$0xf]
        %v5926 = vld [vmem:[%s4560 + $0x18] sm:$0xf]
        %v5927 = vld [vmem:[%s4560 + $0x1c] sm:$0xf]
        %v5936 = vunpack.c.l.b16 %v5920
        %v5937 = vunpack.c.l.b16 %v5921
        %v5938 = vunpack.c.l.b16 %v5922
        %v5939 = vunpack.c.l.b16 %v5923
        %v5940 = vunpack.c.l.b16 %v5924
        %v5941 = vunpack.c.l.b16 %v5925
        %v5942 = vunpack.c.l.b16 %v5926
        %v5943 = vunpack.c.l.b16 %v5927
        %v5944 = vpack.c.b16 %v5937, %v5936
        %v5945 = vpack.c.b16 %v5939, %v5938
        %v5946 = vpack.c.b16 %v5941, %v5940
        %v5947 = vpack.c.b16 %v5943, %v5942
        %5956 = vrot.lane.b32.xlu0 %v5912, 18
        %v5957 = vpop.permute.xlu0 %5956
        %5958 = vrot.lane.b32.xlu0 %v5913, 18
        %v5959 = vpop.permute.xlu0 %5958
        %5960 = vrot.lane.b32.xlu0 %v5914, 18
        %v5961 = vpop.permute.xlu0 %5960
        %5962 = vrot.lane.b32.xlu0 %v5915, 18
        %v5963 = vpop.permute.xlu0 %5962
        %5964 = vrot.lane.b32.xlu0 %v5916, 18
        %v5965 = vpop.permute.xlu0 %5964
        %5966 = vrot.lane.b32.xlu0 %v5917, 18
        %v5967 = vpop.permute.xlu0 %5966
        %5968 = vrot.lane.b32.xlu0 %v5918, 18
        %v5969 = vpop.permute.xlu0 %5968
        %5970 = vrot.lane.b32.xlu0 %v5919, 18
        %v5971 = vpop.permute.xlu0 %5970
        %v5972 = vsel %vm422, %v5957, %v5959
        %v5973 = vsel %vm422, %v5961, %v5963
        %v5974 = vsel %vm422, %v5965, %v5967
        %v5975 = vsel %vm422, %v5969, %v5971
        %v5981 = vsel %vm431, %v5944, 0
        %v5984 = vsel %vm431, %v5945, 0
        %v5987 = vsel %vm431, %v5946, 0
        %v5990 = vsel %vm431, %v5947, 0
        %5992 = vmatprep.subr.bf16.mxu0 0
        %5993 = vmatpush1.bf16.msra.mxu0 %v5972
        %5994 = vmatprep.subr.bf16.mxu0 0
        %5995 = vmatpush1.bf16.msra.mxu0 %v5973
        %5996 = vmatprep.subr.bf16.mxu0 0
        %5997 = vmatpush1.bf16.msra.mxu0 %v5974
        %5998 = vmatprep.subr.bf16.mxu0 0
        %5999 = vmatpush1.bf16.msra.mxu0 %v5975
        %6000 = vmatprep.subr.bf16.mxu0 0
        %6001 = vmatpush1.bf16.msra.mxu0 0
        %6002 = vmatprep.subr.bf16.mxu0 0
        %6003 = vmatpush1.bf16.msra.mxu0 0
        %6004 = vmatprep.subr.bf16.mxu0 0
        %6005 = vmatpush1.bf16.msra.mxu0 0
        %6006 = vmatprep.subr.bf16.mxu0 0
        %6007 = vmatpush1.bf16.msra.mxu0 0
        %6008 = vmatprep.subr.bf16.mxu0 0
        %6009 = vmatpush1.bf16.msra.mxu0 0
        %6010 = vmatprep.subr.bf16.mxu0 0
        %6011 = vmatpush1.bf16.msra.mxu0 0
        %6012 = vmatprep.subr.bf16.mxu0 0
        %6013 = vmatpush1.bf16.msra.mxu0 0
        %6014 = vmatprep.subr.bf16.mxu0 0
        %6015 = vmatpush1.bf16.msra.mxu0 0
        %6016 = vmatprep.subr.bf16.mxu0 0
        %6017 = vmatpush1.bf16.msra.mxu0 0
        %6018 = vmatprep.subr.bf16.mxu0 0
        %6019 = vmatpush1.bf16.msra.mxu0 0
        %6020 = vmatprep.subr.bf16.mxu0 0
        %6021 = vmatpush1.bf16.msra.mxu0 0
        %6022 = vmatprep.subr.bf16.mxu0 0
        %6023 = vmatpush1.bf16.msra.mxu0 0
        %6024 = vmatprep.mubr.bf16.mxu0 0
        %6025 = vmatmul.mubr.bf16.gmra.mrb[0].mxu0 %v5981
        %v6026 = vpop.f32.mrb[0].mxu0
        %v6027 = vadd.f32 0.0, %v6026
        %v6028 = vpop.f32.mrb[0].mxu0
        %v6029 = vpop.f32.mrb[0].mxu0
        %v6030 = vadd.f32 0.0, %v6029
        %v6031 = vpop.f32.mrb[0].mxu0
        %6032 = vmatprep.mubr.bf16.mxu0 0
        %6033 = vmatmul.mubr.bf16.gmra.mrb[0].mxu0 %v5984
        %v6034 = vpop.f32.mrb[0].mxu0
        %v6035 = vadd.f32 0.0, %v6034
        %v6036 = vpop.f32.mrb[0].mxu0
        %v6037 = vpop.f32.mrb[0].mxu0
        %v6038 = vadd.f32 0.0, %v6037
        %v6039 = vpop.f32.mrb[0].mxu0
        %6040 = vmatprep.mubr.bf16.mxu0 0
        %6041 = vmatmul.mubr.bf16.gmra.mrb[0].mxu0 %v5987
        %v6042 = vpop.f32.mrb[0].mxu0
        %v6043 = vadd.f32 0.0, %v6042
        %v6044 = vpop.f32.mrb[0].mxu0
        %v6045 = vpop.f32.mrb[0].mxu0
        %v6046 = vadd.f32 0.0, %v6045
        %v6047 = vpop.f32.mrb[0].mxu0
        %6048 = vmatprep.mubr.bf16.mxu0 0
        %6049 = vmatmul.mubr.bf16.gmra.mrb[0].mxu0 %v5990
        %v6050 = vpop.f32.mrb[0].mxu0
        %v6051 = vadd.f32 0.0, %v6050
        %v6052 = vpop.f32.mrb[0].mxu0
        %v6053 = vpop.f32.mrb[0].mxu0
        %v6054 = vadd.f32 0.0, %v6053
        %v6055 = vpop.f32.mrb[0].mxu0
        %6056 = vdwg.mxu0
        %v6065 = vunpack.c.l.b16 %v5904
        %v6066 = vunpack.c.l.b16 %v5905
        %v6067 = vunpack.c.l.b16 %v5906
        %v6068 = vunpack.c.l.b16 %v5907
        %v6069 = vunpack.c.l.b16 %v5908
        %v6070 = vunpack.c.l.b16 %v5909
        %v6071 = vunpack.c.l.b16 %v5910
        %v6072 = vunpack.c.l.b16 %v5911
        %v6073 = vpack.c.b16 %v6066, %v6065
        %v6074 = vpack.c.b16 %v6068, %v6067
        %v6075 = vpack.c.b16 %v6070, %v6069
        %v6076 = vpack.c.b16 %v6072, %v6071
        %6077 = vrot.lane.b32.xlu0 %v5912, 19
        %v6078 = vpop.permute.xlu0 %6077
        %6079 = vrot.lane.b32.xlu0 %v5913, 19
        %v6080 = vpop.permute.xlu0 %6079
        %6081 = vrot.lane.b32.xlu0 %v5914, 19
        %v6082 = vpop.permute.xlu0 %6081
        %6083 = vrot.lane.b32.xlu0 %v5915, 19
        %v6084 = vpop.permute.xlu0 %6083
        %6085 = vrot.lane.b32.xlu0 %v5916, 19
        %v6086 = vpop.permute.xlu0 %6085
        %6087 = vrot.lane.b32.xlu0 %v5917, 19
        %v6088 = vpop.permute.xlu0 %6087
        %6089 = vrot.lane.b32.xlu0 %v5918, 19
        %v6090 = vpop.permute.xlu0 %6089
        %6091 = vrot.lane.b32.xlu0 %v5919, 19
        %v6092 = vpop.permute.xlu0 %6091
        %v6093 = vsel %vm545, %v6078, %v6080
        %v6094 = vsel %vm545, %v6082, %v6084
        %v6095 = vsel %vm545, %v6086, %v6088
        %v6096 = vsel %vm545, %v6090, %v6092
        %v6102 = vsel %vm431, %v6073, 0
        %v6105 = vsel %vm431, %v6074, 0
        %v6108 = vsel %vm431, %v6075, 0
        %v6111 = vsel %vm431, %v6076, 0
        %6113 = vmatprep.subr.bf16.mxu0 0
        %6114 = vmatpush1.bf16.msra.mxu0 %v6093
        %6115 = vmatprep.subr.bf16.mxu0 0
        %6116 = vmatpush1.bf16.msra.mxu0 %v6094
        %6117 = vmatprep.subr.bf16.mxu0 0
        %6118 = vmatpush1.bf16.msra.mxu0 %v6095
        %6119 = vmatprep.subr.bf16.mxu0 0
        %6120 = vmatpush1.bf16.msra.mxu0 %v6096
        %6121 = vmatprep.subr.bf16.mxu0 0
        %6122 = vmatpush1.bf16.msra.mxu0 0
        %6123 = vmatprep.subr.bf16.mxu0 0
        %6124 = vmatpush1.bf16.msra.mxu0 0
        %6125 = vmatprep.subr.bf16.mxu0 0
        %6126 = vmatpush1.bf16.msra.mxu0 0
        %6127 = vmatprep.subr.bf16.mxu0 0
        %6128 = vmatpush1.bf16.msra.mxu0 0
        %6129 = vmatprep.subr.bf16.mxu0 0
        %6130 = vmatpush1.bf16.msra.mxu0 0
        %6131 = vmatprep.subr.bf16.mxu0 0
        %6132 = vmatpush1.bf16.msra.mxu0 0
        %6133 = vmatprep.subr.bf16.mxu0 0
        %6134 = vmatpush1.bf16.msra.mxu0 0
        %6135 = vmatprep.subr.bf16.mxu0 0
        %6136 = vmatpush1.bf16.msra.mxu0 0
        %6137 = vmatprep.subr.bf16.mxu0 0
        %6138 = vmatpush1.bf16.msra.mxu0 0
        %6139 = vmatprep.subr.bf16.mxu0 0
        %6140 = vmatpush1.bf16.msra.mxu0 0
        %6141 = vmatprep.subr.bf16.mxu0 0
        %6142 = vmatpush1.bf16.msra.mxu0 0
        %6143 = vmatprep.subr.bf16.mxu0 0
        %6144 = vmatpush1.bf16.msra.mxu0 0
        %6145 = vmatprep.mubr.bf16.mxu0 0
        %6146 = vmatmul.mubr.bf16.gmra.mrb[0].mxu0 %v6102
        %v6147 = vpop.f32.mrb[0].mxu0
        %v6148 = vadd.f32 %v6027, %v6147
        %v6149 = vpop.f32.mrb[0].mxu0
        %v6150 = vpop.f32.mrb[0].mxu0
        %v6151 = vadd.f32 %v6030, %v6150
        %v6152 = vpop.f32.mrb[0].mxu0
        %6153 = vmatprep.mubr.bf16.mxu0 0
        %6154 = vmatmul.mubr.bf16.gmra.mrb[0].mxu0 %v6105
        %v6155 = vpop.f32.mrb[0].mxu0
        %v6156 = vadd.f32 %v6035, %v6155
        %v6157 = vpop.f32.mrb[0].mxu0
        %v6158 = vpop.f32.mrb[0].mxu0
        %v6159 = vadd.f32 %v6038, %v6158
        %v6160 = vpop.f32.mrb[0].mxu0
        %6161 = vmatprep.mubr.bf16.mxu0 0
        %6162 = vmatmul.mubr.bf16.gmra.mrb[0].mxu0 %v6108
        %v6163 = vpop.f32.mrb[0].mxu0
        %v6164 = vadd.f32 %v6043, %v6163
        %v6165 = vpop.f32.mrb[0].mxu0
        %v6166 = vpop.f32.mrb[0].mxu0
        %v6167 = vadd.f32 %v6046, %v6166
        %v6168 = vpop.f32.mrb[0].mxu0
        %6169 = vmatprep.mubr.bf16.mxu0 0
        %6170 = vmatmul.mubr.bf16.gmra.mrb[0].mxu0 %v6111
        %v6171 = vpop.f32.mrb[0].mxu0
        %v6172 = vadd.f32 %v6051, %v6171
        %v6173 = vpop.f32.mrb[0].mxu0
        %v6174 = vpop.f32.mrb[0].mxu0
        %v6175 = vadd.f32 %v6054, %v6174
        %v6176 = vpop.f32.mrb[0].mxu0
        %6177 = vdwg.mxu0
        %v6178 = vld [vmem:[%s4819] sm:$0xf]
        %v6179 = vld [vmem:[%s4819 + $0x4] sm:$0xf]
        %v6180 = vld [vmem:[%s4819 + $0x8] sm:$0xf]
        %v6181 = vld [vmem:[%s4819 + $0xc] sm:$0xf]
        %v6182 = vld [vmem:[%s4819 + $0x10] sm:$0xf]
        %v6183 = vld [vmem:[%s4819 + $0x14] sm:$0xf]
        %v6184 = vld [vmem:[%s4819 + $0x18] sm:$0xf]
        %v6185 = vld [vmem:[%s4819 + $0x1c] sm:$0xf]
        %v6194 = vunpack.c.l.b16 %v6178
        %v6195 = vunpack.c.l.b16 %v6179
        %v6196 = vunpack.c.l.b16 %v6180
        %v6197 = vunpack.c.l.b16 %v6181
        %v6198 = vunpack.c.l.b16 %v6182
        %v6199 = vunpack.c.l.b16 %v6183
        %v6200 = vunpack.c.l.b16 %v6184
        %v6201 = vunpack.c.l.b16 %v6185
        %v6202 = vpack.c.b16 %v6195, %v6194
        %v6203 = vpack.c.b16 %v6197, %v6196
        %v6204 = vpack.c.b16 %v6199, %v6198
        %v6205 = vpack.c.b16 %v6201, %v6200
        %6206 = vrot.lane.b32.xlu0 %v5912, 17
        %v6207 = vpop.permute.xlu0 %6206
        %6208 = vrot.lane.b32.xlu0 %v5913, 17
        %v6209 = vpop.permute.xlu0 %6208
        %6210 = vrot.lane.b32.xlu0 %v5914, 17
        %v6211 = vpop.permute.xlu0 %6210
        %6212 = vrot.lane.b32.xlu0 %v5915, 17
        %v6213 = vpop.permute.xlu0 %6212
        %6214 = vrot.lane.b32.xlu0 %v5916, 17
        %v6215 = vpop.permute.xlu0 %6214
        %6216 = vrot.lane.b32.xlu0 %v5917, 17
        %v6217 = vpop.permute.xlu0 %6216
        %6218 = vrot.lane.b32.xlu0 %v5918, 17
        %v6219 = vpop.permute.xlu0 %6218
        %6220 = vrot.lane.b32.xlu0 %v5919, 17
        %v6221 = vpop.permute.xlu0 %6220
        %v6222 = vsel %vm676, %v6207, %v6209
        %v6223 = vsel %vm676, %v6211, %v6213
        %v6224 = vsel %vm676, %v6215, %v6217
        %v6225 = vsel %vm676, %v6219, %v6221
        %v6231 = vsel %vm431, %v6202, 0
        %v6234 = vsel %vm431, %v6203, 0
        %v6237 = vsel %vm431, %v6204, 0
        %v6240 = vsel %vm431, %v6205, 0
        %6242 = vmatprep.subr.bf16.mxu0 0
        %6243 = vmatpush1.bf16.msra.mxu0 %v6222
        %6244 = vmatprep.subr.bf16.mxu0 0
        %6245 = vmatpush1.bf16.msra.mxu0 %v6223
        %6246 = vmatprep.subr.bf16.mxu0 0
        %6247 = vmatpush1.bf16.msra.mxu0 %v6224
        %6248 = vmatprep.subr.bf16.mxu0 0
        %6249 = vmatpush1.bf16.msra.mxu0 %v6225
        %6250 = vmatprep.subr.bf16.mxu0 0
        %6251 = vmatpush1.bf16.msra.mxu0 0
        %6252 = vmatprep.subr.bf16.mxu0 0
        %6253 = vmatpush1.bf16.msra.mxu0 0
        %6254 = vmatprep.subr.bf16.mxu0 0
        %6255 = vmatpush1.bf16.msra.mxu0 0
        %6256 = vmatprep.subr.bf16.mxu0 0
        %6257 = vmatpush1.bf16.msra.mxu0 0
        %6258 = vmatprep.subr.bf16.mxu0 0
        %6259 = vmatpush1.bf16.msra.mxu0 0
        %6260 = vmatprep.subr.bf16.mxu0 0
        %6261 = vmatpush1.bf16.msra.mxu0 0
        %6262 = vmatprep.subr.bf16.mxu0 0
        %6263 = vmatpush1.bf16.msra.mxu0 0
        %6264 = vmatprep.subr.bf16.mxu0 0
        %6265 = vmatpush1.bf16.msra.mxu0 0
        %6266 = vmatprep.subr.bf16.mxu0 0
        %6267 = vmatpush1.bf16.msra.mxu0 0
        %6268 = vmatprep.subr.bf16.mxu0 0
        %6269 = vmatpush1.bf16.msra.mxu0 0
        %6270 = vmatprep.subr.bf16.mxu0 0
        %6271 = vmatpush1.bf16.msra.mxu0 0
        %6272 = vmatprep.subr.bf16.mxu0 0
        %6273 = vmatpush1.bf16.msra.mxu0 0
        %6274 = vmatprep.mubr.bf16.mxu0 0
        %6275 = vmatmul.mubr.bf16.gmra.mrb[0].mxu0 %v6231
        %v6276 = vpop.f32.mrb[0].mxu0
        %v6277 = vadd.f32 0.0, %v6276
        %v6278 = vpop.f32.mrb[0].mxu0
        %v6279 = vpop.f32.mrb[0].mxu0
        %v6280 = vadd.f32 0.0, %v6279
        %v6281 = vpop.f32.mrb[0].mxu0
        %6282 = vmatprep.mubr.bf16.mxu0 0
        %6283 = vmatmul.mubr.bf16.gmra.mrb[0].mxu0 %v6234
        %v6284 = vpop.f32.mrb[0].mxu0
        %v6285 = vadd.f32 0.0, %v6284
        %v6286 = vpop.f32.mrb[0].mxu0
        %v6287 = vpop.f32.mrb[0].mxu0
        %v6288 = vadd.f32 0.0, %v6287
        %v6289 = vpop.f32.mrb[0].mxu0
        %6290 = vmatprep.mubr.bf16.mxu0 0
        %6291 = vmatmul.mubr.bf16.gmra.mrb[0].mxu0 %v6237
        %v6292 = vpop.f32.mrb[0].mxu0
        %v6293 = vadd.f32 0.0, %v6292
        %v6294 = vpop.f32.mrb[0].mxu0
        %v6295 = vpop.f32.mrb[0].mxu0
        %v6296 = vadd.f32 0.0, %v6295
        %v6297 = vpop.f32.mrb[0].mxu0
        %6298 = vmatprep.mubr.bf16.mxu0 0
        %6299 = vmatmul.mubr.bf16.gmra.mrb[0].mxu0 %v6240
        %v6300 = vpop.f32.mrb[0].mxu0
        %v6301 = vadd.f32 0.0, %v6300
        %v6302 = vpop.f32.mrb[0].mxu0
        %v6303 = vpop.f32.mrb[0].mxu0
        %v6304 = vadd.f32 0.0, %v6303
        %v6305 = vpop.f32.mrb[0].mxu0
        %6306 = vdwg.mxu0
        %v6307 = vadd.f32 %v6148, %v6277
        %v6308 = vadd.f32 %v6151, %v6280
        %v6309 = vadd.f32 %v6156, %v6285
        %v6310 = vadd.f32 %v6159, %v6288
        %v6311 = vadd.f32 %v6164, %v6293
        %v6312 = vadd.f32 %v6167, %v6296
        %v6313 = vadd.f32 %v6172, %v6301
        %v6314 = vadd.f32 %v6175, %v6304
        %v6315 = vld [vmem:[%s4957] sm:$0xf]
        %v6316 = vld [vmem:[%s4957 + $0x4] sm:$0xf]
        %v6317 = vld [vmem:[%s4957 + $0x8] sm:$0xf]
        %v6318 = vld [vmem:[%s4957 + $0xc] sm:$0xf]
        %v6319 = vld [vmem:[%s4957 + $0x10] sm:$0xf]
        %v6320 = vld [vmem:[%s4957 + $0x14] sm:$0xf]
        %v6321 = vld [vmem:[%s4957 + $0x18] sm:$0xf]
        %v6322 = vld [vmem:[%s4957 + $0x1c] sm:$0xf]
        %v6331 = vunpack.c.l.b16 %v6315
        %v6332 = vunpack.c.l.b16 %v6316
        %v6333 = vunpack.c.l.b16 %v6317
        %v6334 = vunpack.c.l.b16 %v6318
        %v6335 = vunpack.c.l.b16 %v6319
        %v6336 = vunpack.c.l.b16 %v6320
        %v6337 = vunpack.c.l.b16 %v6321
        %v6338 = vunpack.c.l.b16 %v6322
        %v6339 = vpack.c.b16 %v6332, %v6331
        %v6340 = vpack.c.b16 %v6334, %v6333
        %v6341 = vpack.c.b16 %v6336, %v6335
        %v6342 = vpack.c.b16 %v6338, %v6337
        %6343 = vrot.lane.b32.xlu0 %v5912, 1
        %v6344 = vpop.permute.xlu0 %6343
        %6345 = vrot.lane.b32.xlu0 %v5913, 1
        %v6346 = vpop.permute.xlu0 %6345
        %6347 = vrot.lane.b32.xlu0 %v5914, 1
        %v6348 = vpop.permute.xlu0 %6347
        %6349 = vrot.lane.b32.xlu0 %v5915, 1
        %v6350 = vpop.permute.xlu0 %6349
        %6351 = vrot.lane.b32.xlu0 %v5916, 1
        %v6352 = vpop.permute.xlu0 %6351
        %6353 = vrot.lane.b32.xlu0 %v5917, 1
        %v6354 = vpop.permute.xlu0 %6353
        %6355 = vrot.lane.b32.xlu0 %v5918, 1
        %v6356 = vpop.permute.xlu0 %6355
        %6357 = vrot.lane.b32.xlu0 %v5919, 1
        %v6358 = vpop.permute.xlu0 %6357
        %v6359 = vsel %vm815, %v6344, %v6346
        %v6360 = vsel %vm815, %v6348, %v6350
        %v6361 = vsel %vm815, %v6352, %v6354
        %v6362 = vsel %vm815, %v6356, %v6358
        %v6368 = vsel %vm431, %v6339, 0
        %v6371 = vsel %vm431, %v6340, 0
        %v6374 = vsel %vm431, %v6341, 0
        %v6377 = vsel %vm431, %v6342, 0
        %6379 = vmatprep.subr.bf16.mxu0 0
        %6380 = vmatpush1.bf16.msra.mxu0 %v6359
        %6381 = vmatprep.subr.bf16.mxu0 0
        %6382 = vmatpush1.bf16.msra.mxu0 %v6360
        %6383 = vmatprep.subr.bf16.mxu0 0
        %6384 = vmatpush1.bf16.msra.mxu0 %v6361
        %6385 = vmatprep.subr.bf16.mxu0 0
        %6386 = vmatpush1.bf16.msra.mxu0 %v6362
        %6387 = vmatprep.subr.bf16.mxu0 0
        %6388 = vmatpush1.bf16.msra.mxu0 0
        %6389 = vmatprep.subr.bf16.mxu0 0
        %6390 = vmatpush1.bf16.msra.mxu0 0
        %6391 = vmatprep.subr.bf16.mxu0 0
        %6392 = vmatpush1.bf16.msra.mxu0 0
        %6393 = vmatprep.subr.bf16.mxu0 0
        %6394 = vmatpush1.bf16.msra.mxu0 0
        %6395 = vmatprep.subr.bf16.mxu0 0
        %6396 = vmatpush1.bf16.msra.mxu0 0
        %6397 = vmatprep.subr.bf16.mxu0 0
        %6398 = vmatpush1.bf16.msra.mxu0 0
        %6399 = vmatprep.subr.bf16.mxu0 0
        %6400 = vmatpush1.bf16.msra.mxu0 0
        %6401 = vmatprep.subr.bf16.mxu0 0
        %6402 = vmatpush1.bf16.msra.mxu0 0
        %6403 = vmatprep.subr.bf16.mxu0 0
        %6404 = vmatpush1.bf16.msra.mxu0 0
        %6405 = vmatprep.subr.bf16.mxu0 0
        %6406 = vmatpush1.bf16.msra.mxu0 0
        %6407 = vmatprep.subr.bf16.mxu0 0
        %6408 = vmatpush1.bf16.msra.mxu0 0
        %6409 = vmatprep.subr.bf16.mxu0 0
        %6410 = vmatpush1.bf16.msra.mxu0 0
        %6411 = vmatprep.mubr.bf16.mxu0 0
        %6412 = vmatmul.mubr.bf16.gmra.mrb[0].mxu0 %v6368
        %v6413 = vpop.f32.mrb[0].mxu0
        %v6414 = vadd.f32 0.0, %v6413
        %v6415 = vpop.f32.mrb[0].mxu0
        %v6416 = vpop.f32.mrb[0].mxu0
        %v6417 = vadd.f32 0.0, %v6416
        %v6418 = vpop.f32.mrb[0].mxu0
        %6419 = vmatprep.mubr.bf16.mxu0 0
        %6420 = vmatmul.mubr.bf16.gmra.mrb[0].mxu0 %v6371
        %v6421 = vpop.f32.mrb[0].mxu0
        %v6422 = vadd.f32 0.0, %v6421
        %v6423 = vpop.f32.mrb[0].mxu0
        %v6424 = vpop.f32.mrb[0].mxu0
        %v6425 = vadd.f32 0.0, %v6424
        %v6426 = vpop.f32.mrb[0].mxu0
        %6427 = vmatprep.mubr.bf16.mxu0 0
        %6428 = vmatmul.mubr.bf16.gmra.mrb[0].mxu0 %v6374
        %v6429 = vpop.f32.mrb[0].mxu0
        %v6430 = vadd.f32 0.0, %v6429
        %v6431 = vpop.f32.mrb[0].mxu0
        %v6432 = vpop.f32.mrb[0].mxu0
        %v6433 = vadd.f32 0.0, %v6432
        %v6434 = vpop.f32.mrb[0].mxu0
        %6435 = vmatprep.mubr.bf16.mxu0 0
        %6436 = vmatmul.mubr.bf16.gmra.mrb[0].mxu0 %v6377
        %v6437 = vpop.f32.mrb[0].mxu0
        %v6438 = vadd.f32 0.0, %v6437
        %v6439 = vpop.f32.mrb[0].mxu0
        %v6440 = vpop.f32.mrb[0].mxu0
        %v6441 = vadd.f32 0.0, %v6440
        %v6442 = vpop.f32.mrb[0].mxu0
        %6443 = vdwg.mxu0
        %v6444 = vadd.f32 %v6307, %v6414
        %v6445 = vadd.f32 %v6308, %v6417
        %v6446 = vadd.f32 %v6309, %v6422
        %v6447 = vadd.f32 %v6310, %v6425
        %v6448 = vadd.f32 %v6311, %v6430
        %v6449 = vadd.f32 %v6312, %v6433
        %v6450 = vadd.f32 %v6313, %v6438
        %v6451 = vadd.f32 %v6314, %v6441
        %v6452 = vld [vmem:[%s5095] sm:$0xf]
        %v6453 = vld [vmem:[%s5095 + $0x4] sm:$0xf]
        %v6454 = vld [vmem:[%s5095 + $0x8] sm:$0xf]
        %v6455 = vld [vmem:[%s5095 + $0xc] sm:$0xf]
        %v6456 = vld [vmem:[%s5095 + $0x10] sm:$0xf]
        %v6457 = vld [vmem:[%s5095 + $0x14] sm:$0xf]
        %v6458 = vld [vmem:[%s5095 + $0x18] sm:$0xf]
        %v6459 = vld [vmem:[%s5095 + $0x1c] sm:$0xf]
        %v6468 = vunpack.c.l.b16 %v6452
        %v6469 = vunpack.c.l.b16 %v6453
        %v6470 = vunpack.c.l.b16 %v6454
        %v6471 = vunpack.c.l.b16 %v6455
        %v6472 = vunpack.c.l.b16 %v6456
        %v6473 = vunpack.c.l.b16 %v6457
        %v6474 = vunpack.c.l.b16 %v6458
        %v6475 = vunpack.c.l.b16 %v6459
        %v6476 = vpack.c.b16 %v6469, %v6468
        %v6477 = vpack.c.b16 %v6471, %v6470
        %v6478 = vpack.c.b16 %v6473, %v6472
        %v6479 = vpack.c.b16 %v6475, %v6474
        %v6481 = vsel %vm431, %v6476, 0
        %v6484 = vsel %vm431, %v6477, 0
        %v6487 = vsel %vm431, %v6478, 0
        %v6490 = vsel %vm431, %v6479, 0
        %6492 = vmatprep.subr.bf16.mxu0 0
        %6493 = vmatpush1.bf16.msra.mxu0 %v5913
        %6494 = vmatprep.subr.bf16.mxu0 0
        %6495 = vmatpush1.bf16.msra.mxu0 %v5915
        %6496 = vmatprep.subr.bf16.mxu0 0
        %6497 = vmatpush1.bf16.msra.mxu0 %v5917
        %6498 = vmatprep.subr.bf16.mxu0 0
        %6499 = vmatpush1.bf16.msra.mxu0 %v5919
        %6500 = vmatprep.subr.bf16.mxu0 0
        %6501 = vmatpush1.bf16.msra.mxu0 0
        %6502 = vmatprep.subr.bf16.mxu0 0
        %6503 = vmatpush1.bf16.msra.mxu0 0
        %6504 = vmatprep.subr.bf16.mxu0 0
        %6505 = vmatpush1.bf16.msra.mxu0 0
        %6506 = vmatprep.subr.bf16.mxu0 0
        %6507 = vmatpush1.bf16.msra.mxu0 0
        %6508 = vmatprep.subr.bf16.mxu0 0
        %6509 = vmatpush1.bf16.msra.mxu0 0
        %6510 = vmatprep.subr.bf16.mxu0 0
        %6511 = vmatpush1.bf16.msra.mxu0 0
        %6512 = vmatprep.subr.bf16.mxu0 0
        %6513 = vmatpush1.bf16.msra.mxu0 0
        %6514 = vmatprep.subr.bf16.mxu0 0
        %6515 = vmatpush1.bf16.msra.mxu0 0
        %6516 = vmatprep.subr.bf16.mxu0 0
        %6517 = vmatpush1.bf16.msra.mxu0 0
        %6518 = vmatprep.subr.bf16.mxu0 0
        %6519 = vmatpush1.bf16.msra.mxu0 0
        %6520 = vmatprep.subr.bf16.mxu0 0
        %6521 = vmatpush1.bf16.msra.mxu0 0
        %6522 = vmatprep.subr.bf16.mxu0 0
        %6523 = vmatpush1.bf16.msra.mxu0 0
        %6524 = vmatprep.mubr.bf16.mxu0 0
        %6525 = vmatmul.mubr.bf16.gmra.mrb[0].mxu0 %v6481
        %v6526 = vpop.f32.mrb[0].mxu0
        %v6527 = vadd.f32 0.0, %v6526
        %v6528 = vpop.f32.mrb[0].mxu0
        %v6529 = vpop.f32.mrb[0].mxu0
        %v6530 = vadd.f32 0.0, %v6529
        %v6531 = vpop.f32.mrb[0].mxu0
        %6532 = vmatprep.mubr.bf16.mxu0 0
        %6533 = vmatmul.mubr.bf16.gmra.mrb[0].mxu0 %v6484
        %v6534 = vpop.f32.mrb[0].mxu0
        %v6535 = vadd.f32 0.0, %v6534
        %v6536 = vpop.f32.mrb[0].mxu0
        %v6537 = vpop.f32.mrb[0].mxu0
        %v6538 = vadd.f32 0.0, %v6537
        %v6539 = vpop.f32.mrb[0].mxu0
        %6540 = vmatprep.mubr.bf16.mxu0 0
        %6541 = vmatmul.mubr.bf16.gmra.mrb[0].mxu0 %v6487
        %v6542 = vpop.f32.mrb[0].mxu0
        %v6543 = vadd.f32 0.0, %v6542
        %v6544 = vpop.f32.mrb[0].mxu0
        %v6545 = vpop.f32.mrb[0].mxu0
        %v6546 = vadd.f32 0.0, %v6545
        %v6547 = vpop.f32.mrb[0].mxu0
        %6548 = vmatprep.mubr.bf16.mxu0 0
        %6549 = vmatmul.mubr.bf16.gmra.mrb[0].mxu0 %v6490
        %v6550 = vpop.f32.mrb[0].mxu0
        %v6551 = vadd.f32 0.0, %v6550
        %v6552 = vpop.f32.mrb[0].mxu0
        %v6553 = vpop.f32.mrb[0].mxu0
        %v6554 = vadd.f32 0.0, %v6553
        %v6555 = vpop.f32.mrb[0].mxu0
        %6556 = vdwg.mxu0
        %v6557 = vadd.f32 %v6444, %v6527
        %v6558 = vadd.f32 %v6445, %v6530
        %v6559 = vadd.f32 %v6446, %v6535
        %v6560 = vadd.f32 %v6447, %v6538
        %v6561 = vadd.f32 %v6448, %v6543
        %v6562 = vadd.f32 %v6449, %v6546
        %v6563 = vadd.f32 %v6450, %v6551
        %v6564 = vadd.f32 %v6451, %v6554
        %v6565 = vld [vmem:[%s5209] sm:$0xf]
        %v6566 = vld [vmem:[%s5209 + $0x4] sm:$0xf]
        %v6567 = vld [vmem:[%s5209 + $0x8] sm:$0xf]
        %v6568 = vld [vmem:[%s5209 + $0xc] sm:$0xf]
        %v6569 = vld [vmem:[%s5209 + $0x10] sm:$0xf]
        %v6570 = vld [vmem:[%s5209 + $0x14] sm:$0xf]
        %v6571 = vld [vmem:[%s5209 + $0x18] sm:$0xf]
        %v6572 = vld [vmem:[%s5209 + $0x1c] sm:$0xf]
        %v6573 = vld [vmem:[#allocation2 + $0x10] sm:$0xff]
        %v6574 = vld [vmem:[#allocation2 + $0x18] sm:$0xff]
        %v6575 = vld [vmem:[#allocation2 + $0x38] sm:$0xff]
        %v6576 = vld [vmem:[#allocation2 + $0x40] sm:$0xff]
        %v6577 = vld [vmem:[#allocation2 + $0x60] sm:$0xff]
        %v6578 = vld [vmem:[#allocation2 + $0x68] sm:$0xff]
        %v6579 = vld [vmem:[#allocation2 + $0x88] sm:$0xff]
        %v6580 = vld [vmem:[#allocation2 + $0x90] sm:$0xff]
        %v6589 = vunpack.c.l.b16 %v6565
        %v6590 = vunpack.c.l.b16 %v6566
        %v6591 = vunpack.c.l.b16 %v6567
        %v6592 = vunpack.c.l.b16 %v6568
        %v6593 = vunpack.c.l.b16 %v6569
        %v6594 = vunpack.c.l.b16 %v6570
        %v6595 = vunpack.c.l.b16 %v6571
        %v6596 = vunpack.c.l.b16 %v6572
        %v6597 = vpack.c.b16 %v6590, %v6589
        %v6598 = vpack.c.b16 %v6592, %v6591
        %v6599 = vpack.c.b16 %v6594, %v6593
        %v6600 = vpack.c.b16 %v6596, %v6595
        %6609 = vrot.lane.b32.xlu0 %v6573, 127
        %v6610 = vpop.permute.xlu0 %6609
        %6611 = vrot.lane.b32.xlu0 %v6574, 127
        %v6612 = vpop.permute.xlu0 %6611
        %6613 = vrot.lane.b32.xlu0 %v6575, 127
        %v6614 = vpop.permute.xlu0 %6613
        %6615 = vrot.lane.b32.xlu0 %v6576, 127
        %v6616 = vpop.permute.xlu0 %6615
        %6617 = vrot.lane.b32.xlu0 %v6577, 127
        %v6618 = vpop.permute.xlu0 %6617
        %6619 = vrot.lane.b32.xlu0 %v6578, 127
        %v6620 = vpop.permute.xlu0 %6619
        %6621 = vrot.lane.b32.xlu0 %v6579, 127
        %v6622 = vpop.permute.xlu0 %6621
        %6623 = vrot.lane.b32.xlu0 %v6580, 127
        %v6624 = vpop.permute.xlu0 %6623
        %v6625 = vsel %vm1140, %v6610, %v6612
        %v6626 = vsel %vm1140, %v6614, %v6616
        %v6627 = vsel %vm1140, %v6618, %v6620
        %v6628 = vsel %vm1140, %v6622, %v6624
        %v6634 = vsel %vm431, %v6597, 0
        %v6637 = vsel %vm431, %v6598, 0
        %v6640 = vsel %vm431, %v6599, 0
        %v6643 = vsel %vm431, %v6600, 0
        %6645 = vmatprep.subr.bf16.mxu0 0
        %6646 = vmatpush1.bf16.msra.mxu0 %v6625
        %6647 = vmatprep.subr.bf16.mxu0 0
        %6648 = vmatpush1.bf16.msra.mxu0 %v6626
        %6649 = vmatprep.subr.bf16.mxu0 0
        %6650 = vmatpush1.bf16.msra.mxu0 %v6627
        %6651 = vmatprep.subr.bf16.mxu0 0
        %6652 = vmatpush1.bf16.msra.mxu0 %v6628
        %6653 = vmatprep.subr.bf16.mxu0 0
        %6654 = vmatpush1.bf16.msra.mxu0 0
        %6655 = vmatprep.subr.bf16.mxu0 0
        %6656 = vmatpush1.bf16.msra.mxu0 0
        %6657 = vmatprep.subr.bf16.mxu0 0
        %6658 = vmatpush1.bf16.msra.mxu0 0
        %6659 = vmatprep.subr.bf16.mxu0 0
        %6660 = vmatpush1.bf16.msra.mxu0 0
        %6661 = vmatprep.subr.bf16.mxu0 0
        %6662 = vmatpush1.bf16.msra.mxu0 0
        %6663 = vmatprep.subr.bf16.mxu0 0
        %6664 = vmatpush1.bf16.msra.mxu0 0
        %6665 = vmatprep.subr.bf16.mxu0 0
        %6666 = vmatpush1.bf16.msra.mxu0 0
        %6667 = vmatprep.subr.bf16.mxu0 0
        %6668 = vmatpush1.bf16.msra.mxu0 0
        %6669 = vmatprep.subr.bf16.mxu0 0
        %6670 = vmatpush1.bf16.msra.mxu0 0
        %6671 = vmatprep.subr.bf16.mxu0 0
        %6672 = vmatpush1.bf16.msra.mxu0 0
        %6673 = vmatprep.subr.bf16.mxu0 0
        %6674 = vmatpush1.bf16.msra.mxu0 0
        %6675 = vmatprep.subr.bf16.mxu0 0
        %6676 = vmatpush1.bf16.msra.mxu0 0
        %6677 = vmatprep.mubr.bf16.mxu0 0
        %6678 = vmatmul.mubr.bf16.gmra.mrb[0].mxu0 %v6634
        %v6679 = vpop.f32.mrb[0].mxu0
        %v6680 = vadd.f32 0.0, %v6679
        %v6681 = vpop.f32.mrb[0].mxu0
        %v6682 = vpop.f32.mrb[0].mxu0
        %v6683 = vadd.f32 0.0, %v6682
        %v6684 = vpop.f32.mrb[0].mxu0
        %6685 = vmatprep.mubr.bf16.mxu0 0
        %6686 = vmatmul.mubr.bf16.gmra.mrb[0].mxu0 %v6637
        %v6687 = vpop.f32.mrb[0].mxu0
        %v6688 = vadd.f32 0.0, %v6687
        %v6689 = vpop.f32.mrb[0].mxu0
        %v6690 = vpop.f32.mrb[0].mxu0
        %v6691 = vadd.f32 0.0, %v6690
        %v6692 = vpop.f32.mrb[0].mxu0
        %6693 = vmatprep.mubr.bf16.mxu0 0
        %6694 = vmatmul.mubr.bf16.gmra.mrb[0].mxu0 %v6640
        %v6695 = vpop.f32.mrb[0].mxu0
        %v6696 = vadd.f32 0.0, %v6695
        %v6697 = vpop.f32.mrb[0].mxu0
        %v6698 = vpop.f32.mrb[0].mxu0
        %v6699 = vadd.f32 0.0, %v6698
        %v6700 = vpop.f32.mrb[0].mxu0
        %6701 = vmatprep.mubr.bf16.mxu0 0
        %6702 = vmatmul.mubr.bf16.gmra.mrb[0].mxu0 %v6643
        %v6703 = vpop.f32.mrb[0].mxu0
        %v6704 = vadd.f32 0.0, %v6703
        %v6705 = vpop.f32.mrb[0].mxu0
        %v6706 = vpop.f32.mrb[0].mxu0
        %v6707 = vadd.f32 0.0, %v6706
        %v6708 = vpop.f32.mrb[0].mxu0
        %6709 = vdwg.mxu0
        %v6710 = vadd.f32 %v6557, %v6680
        %v6711 = vadd.f32 %v6558, %v6683
        %v6712 = vadd.f32 %v6559, %v6688
        %v6713 = vadd.f32 %v6560, %v6691
        %v6714 = vadd.f32 %v6561, %v6696
        %v6715 = vadd.f32 %v6562, %v6699
        %v6716 = vadd.f32 %v6563, %v6704
        %v6717 = vadd.f32 %v6564, %v6707
        %v6718 = vld [vmem:[%s5363] sm:$0xf]
        %v6719 = vld [vmem:[%s5363 + $0x4] sm:$0xf]
        %v6720 = vld [vmem:[%s5363 + $0x8] sm:$0xf]
        %v6721 = vld [vmem:[%s5363 + $0xc] sm:$0xf]
        %v6722 = vld [vmem:[%s5363 + $0x10] sm:$0xf]
        %v6723 = vld [vmem:[%s5363 + $0x14] sm:$0xf]
        %v6724 = vld [vmem:[%s5363 + $0x18] sm:$0xf]
        %v6725 = vld [vmem:[%s5363 + $0x1c] sm:$0xf]
        %v6734 = vunpack.c.l.b16 %v6718
        %v6735 = vunpack.c.l.b16 %v6719
        %v6736 = vunpack.c.l.b16 %v6720
        %v6737 = vunpack.c.l.b16 %v6721
        %v6738 = vunpack.c.l.b16 %v6722
        %v6739 = vunpack.c.l.b16 %v6723
        %v6740 = vunpack.c.l.b16 %v6724
        %v6741 = vunpack.c.l.b16 %v6725
        %v6742 = vpack.c.b16 %v6735, %v6734
        %v6743 = vpack.c.b16 %v6737, %v6736
        %v6744 = vpack.c.b16 %v6739, %v6738
        %v6745 = vpack.c.b16 %v6741, %v6740
        %6746 = vrot.lane.b32.xlu0 %v6573, 111
        %v6747 = vpop.permute.xlu0 %6746
        %6748 = vrot.lane.b32.xlu0 %v6574, 111
        %v6749 = vpop.permute.xlu0 %6748
        %6750 = vrot.lane.b32.xlu0 %v6575, 111
        %v6751 = vpop.permute.xlu0 %6750
        %6752 = vrot.lane.b32.xlu0 %v6576, 111
        %v6753 = vpop.permute.xlu0 %6752
        %6754 = vrot.lane.b32.xlu0 %v6577, 111
        %v6755 = vpop.permute.xlu0 %6754
        %6756 = vrot.lane.b32.xlu0 %v6578, 111
        %v6757 = vpop.permute.xlu0 %6756
        %6758 = vrot.lane.b32.xlu0 %v6579, 111
        %v6759 = vpop.permute.xlu0 %6758
        %6760 = vrot.lane.b32.xlu0 %v6580, 111
        %v6761 = vpop.permute.xlu0 %6760
        %v6762 = vsel %vm1279, %v6747, %v6749
        %v6763 = vsel %vm1279, %v6751, %v6753
        %v6764 = vsel %vm1279, %v6755, %v6757
        %v6765 = vsel %vm1279, %v6759, %v6761
        %v6771 = vsel %vm431, %v6742, 0
        %v6774 = vsel %vm431, %v6743, 0
        %v6777 = vsel %vm431, %v6744, 0
        %v6780 = vsel %vm431, %v6745, 0
        %6782 = vmatprep.subr.bf16.mxu0 0
        %6783 = vmatpush1.bf16.msra.mxu0 %v6762
        %6784 = vmatprep.subr.bf16.mxu0 0
        %6785 = vmatpush1.bf16.msra.mxu0 %v6763
        %6786 = vmatprep.subr.bf16.mxu0 0
        %6787 = vmatpush1.bf16.msra.mxu0 %v6764
        %6788 = vmatprep.subr.bf16.mxu0 0
        %6789 = vmatpush1.bf16.msra.mxu0 %v6765
        %6790 = vmatprep.subr.bf16.mxu0 0
        %6791 = vmatpush1.bf16.msra.mxu0 0
        %6792 = vmatprep.subr.bf16.mxu0 0
        %6793 = vmatpush1.bf16.msra.mxu0 0
        %6794 = vmatprep.subr.bf16.mxu0 0
        %6795 = vmatpush1.bf16.msra.mxu0 0
        %6796 = vmatprep.subr.bf16.mxu0 0
        %6797 = vmatpush1.bf16.msra.mxu0 0
        %6798 = vmatprep.subr.bf16.mxu0 0
        %6799 = vmatpush1.bf16.msra.mxu0 0
        %6800 = vmatprep.subr.bf16.mxu0 0
        %6801 = vmatpush1.bf16.msra.mxu0 0
        %6802 = vmatprep.subr.bf16.mxu0 0
        %6803 = vmatpush1.bf16.msra.mxu0 0
        %6804 = vmatprep.subr.bf16.mxu0 0
        %6805 = vmatpush1.bf16.msra.mxu0 0
        %6806 = vmatprep.subr.bf16.mxu0 0
        %6807 = vmatpush1.bf16.msra.mxu0 0
        %6808 = vmatprep.subr.bf16.mxu0 0
        %6809 = vmatpush1.bf16.msra.mxu0 0
        %6810 = vmatprep.subr.bf16.mxu0 0
        %6811 = vmatpush1.bf16.msra.mxu0 0
        %6812 = vmatprep.subr.bf16.mxu0 0
        %6813 = vmatpush1.bf16.msra.mxu0 0
        %6814 = vmatprep.mubr.bf16.mxu0 0
        %6815 = vmatmul.mubr.bf16.gmra.mrb[0].mxu0 %v6771
        %v6816 = vpop.f32.mrb[0].mxu0
        %v6817 = vadd.f32 0.0, %v6816
        %v6818 = vpop.f32.mrb[0].mxu0
        %v6819 = vpop.f32.mrb[0].mxu0
        %v6820 = vadd.f32 0.0, %v6819
        %v6821 = vpop.f32.mrb[0].mxu0
        %6822 = vmatprep.mubr.bf16.mxu0 0
        %6823 = vmatmul.mubr.bf16.gmra.mrb[0].mxu0 %v6774
        %v6824 = vpop.f32.mrb[0].mxu0
        %v6825 = vadd.f32 0.0, %v6824
        %v6826 = vpop.f32.mrb[0].mxu0
        %v6827 = vpop.f32.mrb[0].mxu0
        %v6828 = vadd.f32 0.0, %v6827
        %v6829 = vpop.f32.mrb[0].mxu0
        %6830 = vmatprep.mubr.bf16.mxu0 0
        %6831 = vmatmul.mubr.bf16.gmra.mrb[0].mxu0 %v6777
        %v6832 = vpop.f32.mrb[0].mxu0
        %v6833 = vadd.f32 0.0, %v6832
        %v6834 = vpop.f32.mrb[0].mxu0
        %v6835 = vpop.f32.mrb[0].mxu0
        %v6836 = vadd.f32 0.0, %v6835
        %v6837 = vpop.f32.mrb[0].mxu0
        %6838 = vmatprep.mubr.bf16.mxu0 0
        %6839 = vmatmul.mubr.bf16.gmra.mrb[0].mxu0 %v6780
        %v6840 = vpop.f32.mrb[0].mxu0
        %v6841 = vadd.f32 0.0, %v6840
        %v6842 = vpop.f32.mrb[0].mxu0
        %v6843 = vpop.f32.mrb[0].mxu0
        %v6844 = vadd.f32 0.0, %v6843
        %v6845 = vpop.f32.mrb[0].mxu0
        %6846 = vdwg.mxu0
        %v6847 = vadd.f32 %v6710, %v6817
        %v6848 = vadd.f32 %v6711, %v6820
        %v6849 = vadd.f32 %v6712, %v6825
        %v6850 = vadd.f32 %v6713, %v6828
        %v6851 = vadd.f32 %v6714, %v6833
        %v6852 = vadd.f32 %v6715, %v6836
        %v6853 = vadd.f32 %v6716, %v6841
        %v6854 = vadd.f32 %v6717, %v6844
        %v6855 = vld [vmem:[%s5501] sm:$0xf]
        %v6856 = vld [vmem:[%s5501 + $0x4] sm:$0xf]
        %v6857 = vld [vmem:[%s5501 + $0x8] sm:$0xf]
        %v6858 = vld [vmem:[%s5501 + $0xc] sm:$0xf]
        %v6859 = vld [vmem:[%s5501 + $0x10] sm:$0xf]
        %v6860 = vld [vmem:[%s5501 + $0x14] sm:$0xf]
        %v6861 = vld [vmem:[%s5501 + $0x18] sm:$0xf]
        %v6862 = vld [vmem:[%s5501 + $0x1c] sm:$0xf]
        %v6871 = vunpack.c.l.b16 %v6855
        %v6872 = vunpack.c.l.b16 %v6856
        %v6873 = vunpack.c.l.b16 %v6857
        %v6874 = vunpack.c.l.b16 %v6858
        %v6875 = vunpack.c.l.b16 %v6859
        %v6876 = vunpack.c.l.b16 %v6860
        %v6877 = vunpack.c.l.b16 %v6861
        %v6878 = vunpack.c.l.b16 %v6862
        %v6879 = vpack.c.b16 %v6872, %v6871
        %v6880 = vpack.c.b16 %v6874, %v6873
        %v6881 = vpack.c.b16 %v6876, %v6875
        %v6882 = vpack.c.b16 %v6878, %v6877
        %6883 = vrot.lane.b32.xlu0 %v6573, 110
        %v6884 = vpop.permute.xlu0 %6883
        %6885 = vrot.lane.b32.xlu0 %v6574, 110
        %v6886 = vpop.permute.xlu0 %6885
        %6887 = vrot.lane.b32.xlu0 %v6575, 110
        %v6888 = vpop.permute.xlu0 %6887
        %6889 = vrot.lane.b32.xlu0 %v6576, 110
        %v6890 = vpop.permute.xlu0 %6889
        %6891 = vrot.lane.b32.xlu0 %v6577, 110
        %v6892 = vpop.permute.xlu0 %6891
        %6893 = vrot.lane.b32.xlu0 %v6578, 110
        %v6894 = vpop.permute.xlu0 %6893
        %6895 = vrot.lane.b32.xlu0 %v6579, 110
        %v6896 = vpop.permute.xlu0 %6895
        %6897 = vrot.lane.b32.xlu0 %v6580, 110
        %v6898 = vpop.permute.xlu0 %6897
        %v6899 = vsel %vm1418, %v6884, %v6886
        %v6900 = vsel %vm1418, %v6888, %v6890
        %v6901 = vsel %vm1418, %v6892, %v6894
        %v6902 = vsel %vm1418, %v6896, %v6898
        %v6908 = vsel %vm431, %v6879, 0
        %v6911 = vsel %vm431, %v6880, 0
        %v6914 = vsel %vm431, %v6881, 0
        %v6917 = vsel %vm431, %v6882, 0
        %6919 = vmatprep.subr.bf16.mxu0 0
        %6920 = vmatpush1.bf16.msra.mxu0 %v6899
        %6921 = vmatprep.subr.bf16.mxu0 0
        %6922 = vmatpush1.bf16.msra.mxu0 %v6900
        %6923 = vmatprep.subr.bf16.mxu0 0
        %6924 = vmatpush1.bf16.msra.mxu0 %v6901
        %6925 = vmatprep.subr.bf16.mxu0 0
        %6926 = vmatpush1.bf16.msra.mxu0 %v6902
        %6927 = vmatprep.subr.bf16.mxu0 0
        %6928 = vmatpush1.bf16.msra.mxu0 0
        %6929 = vmatprep.subr.bf16.mxu0 0
        %6930 = vmatpush1.bf16.msra.mxu0 0
        %6931 = vmatprep.subr.bf16.mxu0 0
        %6932 = vmatpush1.bf16.msra.mxu0 0
        %6933 = vmatprep.subr.bf16.mxu0 0
        %6934 = vmatpush1.bf16.msra.mxu0 0
        %6935 = vmatprep.subr.bf16.mxu0 0
        %6936 = vmatpush1.bf16.msra.mxu0 0
        %6937 = vmatprep.subr.bf16.mxu0 0
        %6938 = vmatpush1.bf16.msra.mxu0 0
        %6939 = vmatprep.subr.bf16.mxu0 0
        %6940 = vmatpush1.bf16.msra.mxu0 0
        %6941 = vmatprep.subr.bf16.mxu0 0
        %6942 = vmatpush1.bf16.msra.mxu0 0
        %6943 = vmatprep.subr.bf16.mxu0 0
        %6944 = vmatpush1.bf16.msra.mxu0 0
        %6945 = vmatprep.subr.bf16.mxu0 0
        %6946 = vmatpush1.bf16.msra.mxu0 0
        %6947 = vmatprep.subr.bf16.mxu0 0
        %6948 = vmatpush1.bf16.msra.mxu0 0
        %6949 = vmatprep.subr.bf16.mxu0 0
        %6950 = vmatpush1.bf16.msra.mxu0 0
        %6951 = vmatprep.mubr.bf16.mxu0 0
        %6952 = vmatmul.mubr.bf16.gmra.mrb[0].mxu0 %v6908
        %v6953 = vpop.f32.mrb[0].mxu0
        %v6954 = vadd.f32 0.0, %v6953
        %v6955 = vpop.f32.mrb[0].mxu0
        %v6956 = vpop.f32.mrb[0].mxu0
        %v6957 = vadd.f32 0.0, %v6956
        %v6958 = vpop.f32.mrb[0].mxu0
        %6959 = vmatprep.mubr.bf16.mxu0 0
        %6960 = vmatmul.mubr.bf16.gmra.mrb[0].mxu0 %v6911
        %v6961 = vpop.f32.mrb[0].mxu0
        %v6962 = vadd.f32 0.0, %v6961
        %v6963 = vpop.f32.mrb[0].mxu0
        %v6964 = vpop.f32.mrb[0].mxu0
        %v6965 = vadd.f32 0.0, %v6964
        %v6966 = vpop.f32.mrb[0].mxu0
        %6967 = vmatprep.mubr.bf16.mxu0 0
        %6968 = vmatmul.mubr.bf16.gmra.mrb[0].mxu0 %v6914
        %v6969 = vpop.f32.mrb[0].mxu0
        %v6970 = vadd.f32 0.0, %v6969
        %v6971 = vpop.f32.mrb[0].mxu0
        %v6972 = vpop.f32.mrb[0].mxu0
        %v6973 = vadd.f32 0.0, %v6972
        %v6974 = vpop.f32.mrb[0].mxu0
        %6975 = vmatprep.mubr.bf16.mxu0 0
        %6976 = vmatmul.mubr.bf16.gmra.mrb[0].mxu0 %v6917
        %v6977 = vpop.f32.mrb[0].mxu0
        %v6978 = vadd.f32 0.0, %v6977
        %v6979 = vpop.f32.mrb[0].mxu0
        %v6980 = vpop.f32.mrb[0].mxu0
        %v6981 = vadd.f32 0.0, %v6980
        %v6982 = vpop.f32.mrb[0].mxu0
        %6983 = vdwg.mxu0
        %v6984 = vadd.f32 %v6847, %v6954
        %v6985 = vadd.f32 %v6848, %v6957
        %v6986 = vadd.f32 %v6849, %v6962
        %v6987 = vadd.f32 %v6850, %v6965
        %v6988 = vadd.f32 %v6851, %v6970
        %v6989 = vadd.f32 %v6852, %v6973
        %v6990 = vadd.f32 %v6853, %v6978
        %v6991 = vadd.f32 %v6854, %v6981
        %v6992 = vld [vmem:[%s5639] sm:$0xf]
        %v6993 = vld [vmem:[%s5639 + $0x4] sm:$0xf]
        %v6994 = vld [vmem:[%s5639 + $0x8] sm:$0xf]
        %v6995 = vld [vmem:[%s5639 + $0xc] sm:$0xf]
        %v6996 = vld [vmem:[%s5639 + $0x10] sm:$0xf]
        %v6997 = vld [vmem:[%s5639 + $0x14] sm:$0xf]
        %v6998 = vld [vmem:[%s5639 + $0x18] sm:$0xf]
        %v6999 = vld [vmem:[%s5639 + $0x1c] sm:$0xf]
        %v7008 = vunpack.c.l.b16 %v6992
        %v7009 = vunpack.c.l.b16 %v6993
        %v7010 = vunpack.c.l.b16 %v6994
        %v7011 = vunpack.c.l.b16 %v6995
        %v7012 = vunpack.c.l.b16 %v6996
        %v7013 = vunpack.c.l.b16 %v6997
        %v7014 = vunpack.c.l.b16 %v6998
        %v7015 = vunpack.c.l.b16 %v6999
        %v7016 = vpack.c.b16 %v7009, %v7008
        %v7017 = vpack.c.b16 %v7011, %v7010
        %v7018 = vpack.c.b16 %v7013, %v7012
        %v7019 = vpack.c.b16 %v7015, %v7014
        %7020 = vrot.lane.b32.xlu0 %v6573, 109
        %v7021 = vpop.permute.xlu0 %7020
        %7022 = vrot.lane.b32.xlu0 %v6574, 109
        %v7023 = vpop.permute.xlu0 %7022
        %7024 = vrot.lane.b32.xlu0 %v6575, 109
        %v7025 = vpop.permute.xlu0 %7024
        %7026 = vrot.lane.b32.xlu0 %v6576, 109
        %v7027 = vpop.permute.xlu0 %7026
        %7028 = vrot.lane.b32.xlu0 %v6577, 109
        %v7029 = vpop.permute.xlu0 %7028
        %7030 = vrot.lane.b32.xlu0 %v6578, 109
        %v7031 = vpop.permute.xlu0 %7030
        %7032 = vrot.lane.b32.xlu0 %v6579, 109
        %v7033 = vpop.permute.xlu0 %7032
        %7034 = vrot.lane.b32.xlu0 %v6580, 109
        %v7035 = vpop.permute.xlu0 %7034
        %v7036 = vsel %vm1557, %v7021, %v7023
        %v7037 = vsel %vm1557, %v7025, %v7027
        %v7038 = vsel %vm1557, %v7029, %v7031
        %v7039 = vsel %vm1557, %v7033, %v7035
        %v7045 = vsel %vm431, %v7016, 0
        %v7048 = vsel %vm431, %v7017, 0
        %v7051 = vsel %vm431, %v7018, 0
        %v7054 = vsel %vm431, %v7019, 0
        %7056 = vmatprep.subr.bf16.mxu0 0
        %7057 = vmatpush1.bf16.msra.mxu0 %v7036
        %7058 = vmatprep.subr.bf16.mxu0 0
        %7059 = vmatpush1.bf16.msra.mxu0 %v7037
        %7060 = vmatprep.subr.bf16.mxu0 0
        %7061 = vmatpush1.bf16.msra.mxu0 %v7038
        %7062 = vmatprep.subr.bf16.mxu0 0
        %7063 = vmatpush1.bf16.msra.mxu0 %v7039
        %7064 = vmatprep.subr.bf16.mxu0 0
        %7065 = vmatpush1.bf16.msra.mxu0 0
        %7066 = vmatprep.subr.bf16.mxu0 0
        %7067 = vmatpush1.bf16.msra.mxu0 0
        %7068 = vmatprep.subr.bf16.mxu0 0
        %7069 = vmatpush1.bf16.msra.mxu0 0
        %7070 = vmatprep.subr.bf16.mxu0 0
        %7071 = vmatpush1.bf16.msra.mxu0 0
        %7072 = vmatprep.subr.bf16.mxu0 0
        %7073 = vmatpush1.bf16.msra.mxu0 0
        %7074 = vmatprep.subr.bf16.mxu0 0
        %7075 = vmatpush1.bf16.msra.mxu0 0
        %7076 = vmatprep.subr.bf16.mxu0 0
        %7077 = vmatpush1.bf16.msra.mxu0 0
        %7078 = vmatprep.subr.bf16.mxu0 0
        %7079 = vmatpush1.bf16.msra.mxu0 0
        %7080 = vmatprep.subr.bf16.mxu0 0
        %7081 = vmatpush1.bf16.msra.mxu0 0
        %7082 = vmatprep.subr.bf16.mxu0 0
        %7083 = vmatpush1.bf16.msra.mxu0 0
        %7084 = vmatprep.subr.bf16.mxu0 0
        %7085 = vmatpush1.bf16.msra.mxu0 0
        %7086 = vmatprep.subr.bf16.mxu0 0
        %7087 = vmatpush1.bf16.msra.mxu0 0
        %7088 = vmatprep.mubr.bf16.mxu0 0
        %7089 = vmatmul.mubr.bf16.gmra.mrb[0].mxu0 %v7045
        %v7090 = vpop.f32.mrb[0].mxu0
        %v7091 = vadd.f32 0.0, %v7090
        %v7092 = vpop.f32.mrb[0].mxu0
        %v7093 = vpop.f32.mrb[0].mxu0
        %v7094 = vadd.f32 0.0, %v7093
        %v7095 = vpop.f32.mrb[0].mxu0
        %7096 = vmatprep.mubr.bf16.mxu0 0
        %7097 = vmatmul.mubr.bf16.gmra.mrb[0].mxu0 %v7048
        %v7098 = vpop.f32.mrb[0].mxu0
        %v7099 = vadd.f32 0.0, %v7098
        %v7100 = vpop.f32.mrb[0].mxu0
        %v7101 = vpop.f32.mrb[0].mxu0
        %v7102 = vadd.f32 0.0, %v7101
        %v7103 = vpop.f32.mrb[0].mxu0
        %7104 = vmatprep.mubr.bf16.mxu0 0
        %7105 = vmatmul.mubr.bf16.gmra.mrb[0].mxu0 %v7051
        %v7106 = vpop.f32.mrb[0].mxu0
        %v7107 = vadd.f32 0.0, %v7106
        %v7108 = vpop.f32.mrb[0].mxu0
        %v7109 = vpop.f32.mrb[0].mxu0
        %v7110 = vadd.f32 0.0, %v7109
        %v7111 = vpop.f32.mrb[0].mxu0
        %7112 = vmatprep.mubr.bf16.mxu0 0
        %7113 = vmatmul.mubr.bf16.gmra.mrb[0].mxu0 %v7054
        %v7114 = vpop.f32.mrb[0].mxu0
        %v7115 = vadd.f32 0.0, %v7114
        %v7116 = vpop.f32.mrb[0].mxu0
        %v7117 = vpop.f32.mrb[0].mxu0
        %v7118 = vadd.f32 0.0, %v7117
        %v7119 = vpop.f32.mrb[0].mxu0
        %7120 = vdwg.mxu0
        %v7121 = vadd.f32 %v6984, %v7091
        %v7122 = vadd.f32 %v6985, %v7094
        %v7123 = vadd.f32 %v6986, %v7099
        %v7124 = vadd.f32 %v6987, %v7102
        %v7125 = vadd.f32 %v6988, %v7107
        %v7126 = vadd.f32 %v6989, %v7110
        %v7127 = vadd.f32 %v6990, %v7115
        %v7128 = vadd.f32 %v6991, %v7118
        %v7129 = vld [vmem:[%s4] sm:$0xff]
        %v7130 = vld [vmem:[%s4 + $0x8] sm:$0xff]
        %v7131 = vld [vmem:[%s4 + $0x10] sm:$0xff]
        %v7132 = vld [vmem:[%s4 + $0x18] sm:$0xff]
        %v7133 = vld [vmem:[%s4 + $0x20] sm:$0xff]
        %v7134 = vld [vmem:[%s4 + $0x28] sm:$0xff]
        %v7135 = vld [vmem:[%s4 + $0x30] sm:$0xff]
        %v7136 = vld [vmem:[%s4 + $0x38] sm:$0xff]
        %7138 = vset.pattern.permute.xlu0 0
        %7139 = vperm.xlu0 %7138, %v7129
        %v7140 = vpop.permute.xlu0 %7139
        %7143 = vset.pattern.permute.xlu0 0
        %7144 = vperm.xlu0 %7143, %v7130
        %v7145 = vpop.permute.xlu0 %7144
        %7148 = vset.pattern.permute.xlu0 0
        %7149 = vperm.xlu0 %7148, %v7131
        %v7150 = vpop.permute.xlu0 %7149
        %7153 = vset.pattern.permute.xlu0 0
        %7154 = vperm.xlu0 %7153, %v7132
        %v7155 = vpop.permute.xlu0 %7154
        %7158 = vset.pattern.permute.xlu0 0
        %7159 = vperm.xlu0 %7158, %v7133
        %v7160 = vpop.permute.xlu0 %7159
        %7163 = vset.pattern.permute.xlu0 0
        %7164 = vperm.xlu0 %7163, %v7134
        %v7165 = vpop.permute.xlu0 %7164
        %7168 = vset.pattern.permute.xlu0 0
        %7169 = vperm.xlu0 %7168, %v7135
        %v7170 = vpop.permute.xlu0 %7169
        %7173 = vset.pattern.permute.xlu0 0
        %7174 = vperm.xlu0 %7173, %v7136
        %v7175 = vpop.permute.xlu0 %7174
        %v7177 = vadd.f32 %v7121, %v7140
        %v7178 = vadd.f32 %v7122, %v7145
        %v7179 = vadd.f32 %v7123, %v7150
        %v7180 = vadd.f32 %v7124, %v7155
        %v7181 = vadd.f32 %v7125, %v7160
        %v7182 = vadd.f32 %v7126, %v7165
        %v7183 = vadd.f32 %v7127, %v7170
        %v7184 = vadd.f32 %v7128, %v7175
        %v7185 = vmax.f32 %v7177, 0.0
        %v7186 = vmax.f32 %v7178, 0.0
        %v7187 = vmax.f32 %v7179, 0.0
        %v7188 = vmax.f32 %v7180, 0.0
        %v7189 = vmax.f32 %v7181, 0.0
        %v7190 = vmax.f32 %v7182, 0.0
        %v7191 = vmax.f32 %v7183, 0.0
        %v7192 = vmax.f32 %v7184, 0.0
        %v7193 = vld [vmem:[%s5] sm:$0x1]
        %v7194 = vpack.c.bf16 %v7186, %v7185
        %v7195 = vpack.c.bf16 %v7188, %v7187
        %v7196 = vpack.c.bf16 %v7190, %v7189
        %v7197 = vpack.c.bf16 %v7192, %v7191
        %v7198 = vld [vmem:[#allocation3] sm:$0x1]
        %7200 = vset.pattern.permute.xlu0 0
        %7201 = vperm.xlu0 %7200, %v7198
        %v7202 = vpop.permute.xlu0 %7201
        %v7204 = vlaneseq
        %v7205 = vshrl.u32 %v7204, 7
        %v7206 = vsub.s32 0, %v7205
        %v7207 = vrot.slane %v7202, %v7206
        %v7209 = vsel %vm431, %v7193, 0
        %7211 = vmatprep.subr.bf16.mxu0 0
        %7212 = vmatpush1.bf16.msra.mxu0 %v7194
        %7213 = vmatprep.subr.bf16.mxu0 0
        %7214 = vmatpush1.bf16.msra.mxu0 %v7195
        %7215 = vmatprep.subr.bf16.mxu0 0
        %7216 = vmatpush1.bf16.msra.mxu0 %v7196
        %7217 = vmatprep.subr.bf16.mxu0 0
        %7218 = vmatpush1.bf16.msra.mxu0 %v7197
        %7219 = vmatprep.subr.bf16.mxu0 0
        %7220 = vmatpush1.bf16.msra.mxu0 0
        %7221 = vmatprep.subr.bf16.mxu0 0
        %7222 = vmatpush1.bf16.msra.mxu0 0
        %7223 = vmatprep.subr.bf16.mxu0 0
        %7224 = vmatpush1.bf16.msra.mxu0 0
        %7225 = vmatprep.subr.bf16.mxu0 0
        %7226 = vmatpush1.bf16.msra.mxu0 0
        %7227 = vmatprep.subr.bf16.mxu0 0
        %7228 = vmatpush1.bf16.msra.mxu0 0
        %7229 = vmatprep.subr.bf16.mxu0 0
        %7230 = vmatpush1.bf16.msra.mxu0 0
        %7231 = vmatprep.subr.bf16.mxu0 0
        %7232 = vmatpush1.bf16.msra.mxu0 0
        %7233 = vmatprep.subr.bf16.mxu0 0
        %7234 = vmatpush1.bf16.msra.mxu0 0
        %7235 = vmatprep.subr.bf16.mxu0 0
        %7236 = vmatpush1.bf16.msra.mxu0 0
        %7237 = vmatprep.subr.bf16.mxu0 0
        %7238 = vmatpush1.bf16.msra.mxu0 0
        %7239 = vmatprep.subr.bf16.mxu0 0
        %7240 = vmatpush1.bf16.msra.mxu0 0
        %7241 = vmatprep.subr.bf16.mxu0 0
        %7242 = vmatpush1.bf16.msra.mxu0 0
        %7243 = vmatprep.mubr.bf16.mxu0 0
        %7244 = vmatmul.mubr.bf16.gmra.mrb[0].mxu0 %v7209
        %v7245 = vpop.f32.mrb[0].mxu0
        %v7246 = vadd.f32 %v7207, %v7245
        %v7247 = vpop.f32.mrb[0].mxu0
        %v7248 = vpop.f32.mrb[0].mxu0
        %v7249 = vpop.f32.mrb[0].mxu0
        %7250 = vdwg.mxu0
        %7251 = vst.msk [vmem:[%s327 + $0x1] sm:$0x1] %vm5902, %v7246
        %v7252 = vld [vmem:[#allocation9] sm:$0xf]
        %v7253 = vld [vmem:[#allocation9 + $0x4] sm:$0xf]
        %v7254 = vld [vmem:[#allocation9 + $0x8] sm:$0xf]
        %v7255 = vld [vmem:[#allocation9 + $0xc] sm:$0xf]
        %v7256 = vld [vmem:[#allocation9 + $0x10] sm:$0xf]
        %v7257 = vld [vmem:[#allocation9 + $0x14] sm:$0xf]
        %v7258 = vld [vmem:[#allocation9 + $0x18] sm:$0xf]
        %v7259 = vld [vmem:[#allocation9 + $0x1c] sm:$0xf]
        %v7260 = vld [vmem:[#allocation2 + $0x10] sm:$0xff]
        %v7261 = vld [vmem:[#allocation2 + $0x18] sm:$0xff]
        %v7262 = vld [vmem:[#allocation2 + $0x38] sm:$0xff]
        %v7263 = vld [vmem:[#allocation2 + $0x40] sm:$0xff]
        %v7264 = vld [vmem:[#allocation2 + $0x60] sm:$0xff]
        %v7265 = vld [vmem:[#allocation2 + $0x68] sm:$0xff]
        %v7266 = vld [vmem:[#allocation2 + $0x88] sm:$0xff]
        %v7267 = vld [vmem:[#allocation2 + $0x90] sm:$0xff]
        %v7268 = vld [vmem:[%s4560] sm:$0xf]
        %v7269 = vld [vmem:[%s4560 + $0x4] sm:$0xf]
        %v7270 = vld [vmem:[%s4560 + $0x8] sm:$0xf]
        %v7271 = vld [vmem:[%s4560 + $0xc] sm:$0xf]
        %v7272 = vld [vmem:[%s4560 + $0x10] sm:$0xf]
        %v7273 = vld [vmem:[%s4560 + $0x14] sm:$0xf]
        %v7274 = vld [vmem:[%s4560 + $0x18] sm:$0xf]
        %v7275 = vld [vmem:[%s4560 + $0x1c] sm:$0xf]
        %v7284 = vunpack.c.l.b16 %v7268
        %v7285 = vunpack.c.l.b16 %v7269
        %v7286 = vunpack.c.l.b16 %v7270
        %v7287 = vunpack.c.l.b16 %v7271
        %v7288 = vunpack.c.l.b16 %v7272
        %v7289 = vunpack.c.l.b16 %v7273
        %v7290 = vunpack.c.l.b16 %v7274
        %v7291 = vunpack.c.l.b16 %v7275
        %v7292 = vpack.c.b16 %v7285, %v7284
        %v7293 = vpack.c.b16 %v7287, %v7286
        %v7294 = vpack.c.b16 %v7289, %v7288
        %v7295 = vpack.c.b16 %v7291, %v7290
        %7304 = vrot.lane.b32.xlu0 %v7260, 18
        %v7305 = vpop.permute.xlu0 %7304
        %7306 = vrot.lane.b32.xlu0 %v7261, 18
        %v7307 = vpop.permute.xlu0 %7306
        %7308 = vrot.lane.b32.xlu0 %v7262, 18
        %v7309 = vpop.permute.xlu0 %7308
        %7310 = vrot.lane.b32.xlu0 %v7263, 18
        %v7311 = vpop.permute.xlu0 %7310
        %7312 = vrot.lane.b32.xlu0 %v7264, 18
        %v7313 = vpop.permute.xlu0 %7312
        %7314 = vrot.lane.b32.xlu0 %v7265, 18
        %v7315 = vpop.permute.xlu0 %7314
        %7316 = vrot.lane.b32.xlu0 %v7266, 18
        %v7317 = vpop.permute.xlu0 %7316
        %7318 = vrot.lane.b32.xlu0 %v7267, 18
        %v7319 = vpop.permute.xlu0 %7318
        %v7320 = vsel %vm422, %v7305, %v7307
        %v7321 = vsel %vm422, %v7309, %v7311
        %v7322 = vsel %vm422, %v7313, %v7315
        %v7323 = vsel %vm422, %v7317, %v7319
        %v7329 = vsel %vm431, %v7292, 0
        %v7332 = vsel %vm431, %v7293, 0
        %v7335 = vsel %vm431, %v7294, 0
        %v7338 = vsel %vm431, %v7295, 0
        %7340 = vmatprep.subr.bf16.mxu0 0
        %7341 = vmatpush1.bf16.msra.mxu0 %v7320
        %7342 = vmatprep.subr.bf16.mxu0 0
        %7343 = vmatpush1.bf16.msra.mxu0 %v7321
        %7344 = vmatprep.subr.bf16.mxu0 0
        %7345 = vmatpush1.bf16.msra.mxu0 %v7322
        %7346 = vmatprep.subr.bf16.mxu0 0
        %7347 = vmatpush1.bf16.msra.mxu0 %v7323
        %7348 = vmatprep.subr.bf16.mxu0 0
        %7349 = vmatpush1.bf16.msra.mxu0 0
        %7350 = vmatprep.subr.bf16.mxu0 0
        %7351 = vmatpush1.bf16.msra.mxu0 0
        %7352 = vmatprep.subr.bf16.mxu0 0
        %7353 = vmatpush1.bf16.msra.mxu0 0
        %7354 = vmatprep.subr.bf16.mxu0 0
        %7355 = vmatpush1.bf16.msra.mxu0 0
        %7356 = vmatprep.subr.bf16.mxu0 0
        %7357 = vmatpush1.bf16.msra.mxu0 0
        %7358 = vmatprep.subr.bf16.mxu0 0
        %7359 = vmatpush1.bf16.msra.mxu0 0
        %7360 = vmatprep.subr.bf16.mxu0 0
        %7361 = vmatpush1.bf16.msra.mxu0 0
        %7362 = vmatprep.subr.bf16.mxu0 0
        %7363 = vmatpush1.bf16.msra.mxu0 0
        %7364 = vmatprep.subr.bf16.mxu0 0
        %7365 = vmatpush1.bf16.msra.mxu0 0
        %7366 = vmatprep.subr.bf16.mxu0 0
        %7367 = vmatpush1.bf16.msra.mxu0 0
        %7368 = vmatprep.subr.bf16.mxu0 0
        %7369 = vmatpush1.bf16.msra.mxu0 0
        %7370 = vmatprep.subr.bf16.mxu0 0
        %7371 = vmatpush1.bf16.msra.mxu0 0
        %7372 = vmatprep.mubr.bf16.mxu0 0
        %7373 = vmatmul.mubr.bf16.gmra.mrb[0].mxu0 %v7329
        %v7374 = vpop.f32.mrb[0].mxu0
        %v7375 = vadd.f32 0.0, %v7374
        %v7376 = vpop.f32.mrb[0].mxu0
        %v7377 = vpop.f32.mrb[0].mxu0
        %v7378 = vadd.f32 0.0, %v7377
        %v7379 = vpop.f32.mrb[0].mxu0
        %7380 = vmatprep.mubr.bf16.mxu0 0
        %7381 = vmatmul.mubr.bf16.gmra.mrb[0].mxu0 %v7332
        %v7382 = vpop.f32.mrb[0].mxu0
        %v7383 = vadd.f32 0.0, %v7382
        %v7384 = vpop.f32.mrb[0].mxu0
        %v7385 = vpop.f32.mrb[0].mxu0
        %v7386 = vadd.f32 0.0, %v7385
        %v7387 = vpop.f32.mrb[0].mxu0
        %7388 = vmatprep.mubr.bf16.mxu0 0
        %7389 = vmatmul.mubr.bf16.gmra.mrb[0].mxu0 %v7335
        %v7390 = vpop.f32.mrb[0].mxu0
        %v7391 = vadd.f32 0.0, %v7390
        %v7392 = vpop.f32.mrb[0].mxu0
        %v7393 = vpop.f32.mrb[0].mxu0
        %v7394 = vadd.f32 0.0, %v7393
        %v7395 = vpop.f32.mrb[0].mxu0
        %7396 = vmatprep.mubr.bf16.mxu0 0
        %7397 = vmatmul.mubr.bf16.gmra.mrb[0].mxu0 %v7338
        %v7398 = vpop.f32.mrb[0].mxu0
        %v7399 = vadd.f32 0.0, %v7398
        %v7400 = vpop.f32.mrb[0].mxu0
        %v7401 = vpop.f32.mrb[0].mxu0
        %v7402 = vadd.f32 0.0, %v7401
        %v7403 = vpop.f32.mrb[0].mxu0
        %7404 = vdwg.mxu0
        %v7413 = vunpack.c.l.b16 %v7252
        %v7414 = vunpack.c.l.b16 %v7253
        %v7415 = vunpack.c.l.b16 %v7254
        %v7416 = vunpack.c.l.b16 %v7255
        %v7417 = vunpack.c.l.b16 %v7256
        %v7418 = vunpack.c.l.b16 %v7257
        %v7419 = vunpack.c.l.b16 %v7258
        %v7420 = vunpack.c.l.b16 %v7259
        %v7421 = vpack.c.b16 %v7414, %v7413
        %v7422 = vpack.c.b16 %v7416, %v7415
        %v7423 = vpack.c.b16 %v7418, %v7417
        %v7424 = vpack.c.b16 %v7420, %v7419
        %7425 = vrot.lane.b32.xlu0 %v7260, 19
        %v7426 = vpop.permute.xlu0 %7425
        %7427 = vrot.lane.b32.xlu0 %v7261, 19
        %v7428 = vpop.permute.xlu0 %7427
        %7429 = vrot.lane.b32.xlu0 %v7262, 19
        %v7430 = vpop.permute.xlu0 %7429
        %7431 = vrot.lane.b32.xlu0 %v7263, 19
        %v7432 = vpop.permute.xlu0 %7431
        %7433 = vrot.lane.b32.xlu0 %v7264, 19
        %v7434 = vpop.permute.xlu0 %7433
        %7435 = vrot.lane.b32.xlu0 %v7265, 19
        %v7436 = vpop.permute.xlu0 %7435
        %7437 = vrot.lane.b32.xlu0 %v7266, 19
        %v7438 = vpop.permute.xlu0 %7437
        %7439 = vrot.lane.b32.xlu0 %v7267, 19
        %v7440 = vpop.permute.xlu0 %7439
        %v7441 = vsel %vm545, %v7426, %v7428
        %v7442 = vsel %vm545, %v7430, %v7432
        %v7443 = vsel %vm545, %v7434, %v7436
        %v7444 = vsel %vm545, %v7438, %v7440
        %v7450 = vsel %vm431, %v7421, 0
        %v7453 = vsel %vm431, %v7422, 0
        %v7456 = vsel %vm431, %v7423, 0
        %v7459 = vsel %vm431, %v7424, 0
        %7461 = vmatprep.subr.bf16.mxu0 0
        %7462 = vmatpush1.bf16.msra.mxu0 %v7441
        %7463 = vmatprep.subr.bf16.mxu0 0
        %7464 = vmatpush1.bf16.msra.mxu0 %v7442
        %7465 = vmatprep.subr.bf16.mxu0 0
        %7466 = vmatpush1.bf16.msra.mxu0 %v7443
        %7467 = vmatprep.subr.bf16.mxu0 0
        %7468 = vmatpush1.bf16.msra.mxu0 %v7444
        %7469 = vmatprep.subr.bf16.mxu0 0
        %7470 = vmatpush1.bf16.msra.mxu0 0
        %7471 = vmatprep.subr.bf16.mxu0 0
        %7472 = vmatpush1.bf16.msra.mxu0 0
        %7473 = vmatprep.subr.bf16.mxu0 0
        %7474 = vmatpush1.bf16.msra.mxu0 0
        %7475 = vmatprep.subr.bf16.mxu0 0
        %7476 = vmatpush1.bf16.msra.mxu0 0
        %7477 = vmatprep.subr.bf16.mxu0 0
        %7478 = vmatpush1.bf16.msra.mxu0 0
        %7479 = vmatprep.subr.bf16.mxu0 0
        %7480 = vmatpush1.bf16.msra.mxu0 0
        %7481 = vmatprep.subr.bf16.mxu0 0
        %7482 = vmatpush1.bf16.msra.mxu0 0
        %7483 = vmatprep.subr.bf16.mxu0 0
        %7484 = vmatpush1.bf16.msra.mxu0 0
        %7485 = vmatprep.subr.bf16.mxu0 0
        %7486 = vmatpush1.bf16.msra.mxu0 0
        %7487 = vmatprep.subr.bf16.mxu0 0
        %7488 = vmatpush1.bf16.msra.mxu0 0
        %7489 = vmatprep.subr.bf16.mxu0 0
        %7490 = vmatpush1.bf16.msra.mxu0 0
        %7491 = vmatprep.subr.bf16.mxu0 0
        %7492 = vmatpush1.bf16.msra.mxu0 0
        %7493 = vmatprep.mubr.bf16.mxu0 0
        %7494 = vmatmul.mubr.bf16.gmra.mrb[0].mxu0 %v7450
        %v7495 = vpop.f32.mrb[0].mxu0
        %v7496 = vadd.f32 %v7375, %v7495
        %v7497 = vpop.f32.mrb[0].mxu0
        %v7498 = vpop.f32.mrb[0].mxu0
        %v7499 = vadd.f32 %v7378, %v7498
        %v7500 = vpop.f32.mrb[0].mxu0
        %7501 = vmatprep.mubr.bf16.mxu0 0
        %7502 = vmatmul.mubr.bf16.gmra.mrb[0].mxu0 %v7453
        %v7503 = vpop.f32.mrb[0].mxu0
        %v7504 = vadd.f32 %v7383, %v7503
        %v7505 = vpop.f32.mrb[0].mxu0
        %v7506 = vpop.f32.mrb[0].mxu0
        %v7507 = vadd.f32 %v7386, %v7506
        %v7508 = vpop.f32.mrb[0].mxu0
        %7509 = vmatprep.mubr.bf16.mxu0 0
        %7510 = vmatmul.mubr.bf16.gmra.mrb[0].mxu0 %v7456
        %v7511 = vpop.f32.mrb[0].mxu0
        %v7512 = vadd.f32 %v7391, %v7511
        %v7513 = vpop.f32.mrb[0].mxu0
        %v7514 = vpop.f32.mrb[0].mxu0
        %v7515 = vadd.f32 %v7394, %v7514
        %v7516 = vpop.f32.mrb[0].mxu0
        %7517 = vmatprep.mubr.bf16.mxu0 0
        %7518 = vmatmul.mubr.bf16.gmra.mrb[0].mxu0 %v7459
        %v7519 = vpop.f32.mrb[0].mxu0
        %v7520 = vadd.f32 %v7399, %v7519
        %v7521 = vpop.f32.mrb[0].mxu0
        %v7522 = vpop.f32.mrb[0].mxu0
        %v7523 = vadd.f32 %v7402, %v7522
        %v7524 = vpop.f32.mrb[0].mxu0
        %7525 = vdwg.mxu0
        %v7526 = vld [vmem:[%s4819] sm:$0xf]
        %v7527 = vld [vmem:[%s4819 + $0x4] sm:$0xf]
        %v7528 = vld [vmem:[%s4819 + $0x8] sm:$0xf]
        %v7529 = vld [vmem:[%s4819 + $0xc] sm:$0xf]
        %v7530 = vld [vmem:[%s4819 + $0x10] sm:$0xf]
        %v7531 = vld [vmem:[%s4819 + $0x14] sm:$0xf]
        %v7532 = vld [vmem:[%s4819 + $0x18] sm:$0xf]
        %v7533 = vld [vmem:[%s4819 + $0x1c] sm:$0xf]
        %v7542 = vunpack.c.l.b16 %v7526
        %v7543 = vunpack.c.l.b16 %v7527
        %v7544 = vunpack.c.l.b16 %v7528
        %v7545 = vunpack.c.l.b16 %v7529
        %v7546 = vunpack.c.l.b16 %v7530
        %v7547 = vunpack.c.l.b16 %v7531
        %v7548 = vunpack.c.l.b16 %v7532
        %v7549 = vunpack.c.l.b16 %v7533
        %v7550 = vpack.c.b16 %v7543, %v7542
        %v7551 = vpack.c.b16 %v7545, %v7544
        %v7552 = vpack.c.b16 %v7547, %v7546
        %v7553 = vpack.c.b16 %v7549, %v7548
        %7554 = vrot.lane.b32.xlu0 %v7260, 17
        %v7555 = vpop.permute.xlu0 %7554
        %7556 = vrot.lane.b32.xlu0 %v7261, 17
        %v7557 = vpop.permute.xlu0 %7556
        %7558 = vrot.lane.b32.xlu0 %v7262, 17
        %v7559 = vpop.permute.xlu0 %7558
        %7560 = vrot.lane.b32.xlu0 %v7263, 17
        %v7561 = vpop.permute.xlu0 %7560
        %7562 = vrot.lane.b32.xlu0 %v7264, 17
        %v7563 = vpop.permute.xlu0 %7562
        %7564 = vrot.lane.b32.xlu0 %v7265, 17
        %v7565 = vpop.permute.xlu0 %7564
        %7566 = vrot.lane.b32.xlu0 %v7266, 17
        %v7567 = vpop.permute.xlu0 %7566
        %7568 = vrot.lane.b32.xlu0 %v7267, 17
        %v7569 = vpop.permute.xlu0 %7568
        %v7570 = vsel %vm676, %v7555, %v7557
        %v7571 = vsel %vm676, %v7559, %v7561
        %v7572 = vsel %vm676, %v7563, %v7565
        %v7573 = vsel %vm676, %v7567, %v7569
        %v7579 = vsel %vm431, %v7550, 0
        %v7582 = vsel %vm431, %v7551, 0
        %v7585 = vsel %vm431, %v7552, 0
        %v7588 = vsel %vm431, %v7553, 0
        %7590 = vmatprep.subr.bf16.mxu0 0
        %7591 = vmatpush1.bf16.msra.mxu0 %v7570
        %7592 = vmatprep.subr.bf16.mxu0 0
        %7593 = vmatpush1.bf16.msra.mxu0 %v7571
        %7594 = vmatprep.subr.bf16.mxu0 0
        %7595 = vmatpush1.bf16.msra.mxu0 %v7572
        %7596 = vmatprep.subr.bf16.mxu0 0
        %7597 = vmatpush1.bf16.msra.mxu0 %v7573
        %7598 = vmatprep.subr.bf16.mxu0 0
        %7599 = vmatpush1.bf16.msra.mxu0 0
        %7600 = vmatprep.subr.bf16.mxu0 0
        %7601 = vmatpush1.bf16.msra.mxu0 0
        %7602 = vmatprep.subr.bf16.mxu0 0
        %7603 = vmatpush1.bf16.msra.mxu0 0
        %7604 = vmatprep.subr.bf16.mxu0 0
        %7605 = vmatpush1.bf16.msra.mxu0 0
        %7606 = vmatprep.subr.bf16.mxu0 0
        %7607 = vmatpush1.bf16.msra.mxu0 0
        %7608 = vmatprep.subr.bf16.mxu0 0
        %7609 = vmatpush1.bf16.msra.mxu0 0
        %7610 = vmatprep.subr.bf16.mxu0 0
        %7611 = vmatpush1.bf16.msra.mxu0 0
        %7612 = vmatprep.subr.bf16.mxu0 0
        %7613 = vmatpush1.bf16.msra.mxu0 0
        %7614 = vmatprep.subr.bf16.mxu0 0
        %7615 = vmatpush1.bf16.msra.mxu0 0
        %7616 = vmatprep.subr.bf16.mxu0 0
        %7617 = vmatpush1.bf16.msra.mxu0 0
        %7618 = vmatprep.subr.bf16.mxu0 0
        %7619 = vmatpush1.bf16.msra.mxu0 0
        %7620 = vmatprep.subr.bf16.mxu0 0
        %7621 = vmatpush1.bf16.msra.mxu0 0
        %7622 = vmatprep.mubr.bf16.mxu0 0
        %7623 = vmatmul.mubr.bf16.gmra.mrb[0].mxu0 %v7579
        %v7624 = vpop.f32.mrb[0].mxu0
        %v7625 = vadd.f32 0.0, %v7624
        %v7626 = vpop.f32.mrb[0].mxu0
        %v7627 = vpop.f32.mrb[0].mxu0
        %v7628 = vadd.f32 0.0, %v7627
        %v7629 = vpop.f32.mrb[0].mxu0
        %7630 = vmatprep.mubr.bf16.mxu0 0
        %7631 = vmatmul.mubr.bf16.gmra.mrb[0].mxu0 %v7582
        %v7632 = vpop.f32.mrb[0].mxu0
        %v7633 = vadd.f32 0.0, %v7632
        %v7634 = vpop.f32.mrb[0].mxu0
        %v7635 = vpop.f32.mrb[0].mxu0
        %v7636 = vadd.f32 0.0, %v7635
        %v7637 = vpop.f32.mrb[0].mxu0
        %7638 = vmatprep.mubr.bf16.mxu0 0
        %7639 = vmatmul.mubr.bf16.gmra.mrb[0].mxu0 %v7585
        %v7640 = vpop.f32.mrb[0].mxu0
        %v7641 = vadd.f32 0.0, %v7640
        %v7642 = vpop.f32.mrb[0].mxu0
        %v7643 = vpop.f32.mrb[0].mxu0
        %v7644 = vadd.f32 0.0, %v7643
        %v7645 = vpop.f32.mrb[0].mxu0
        %7646 = vmatprep.mubr.bf16.mxu0 0
        %7647 = vmatmul.mubr.bf16.gmra.mrb[0].mxu0 %v7588
        %v7648 = vpop.f32.mrb[0].mxu0
        %v7649 = vadd.f32 0.0, %v7648
        %v7650 = vpop.f32.mrb[0].mxu0
        %v7651 = vpop.f32.mrb[0].mxu0
        %v7652 = vadd.f32 0.0, %v7651
        %v7653 = vpop.f32.mrb[0].mxu0
        %7654 = vdwg.mxu0
        %v7655 = vadd.f32 %v7496, %v7625
        %v7656 = vadd.f32 %v7499, %v7628
        %v7657 = vadd.f32 %v7504, %v7633
        %v7658 = vadd.f32 %v7507, %v7636
        %v7659 = vadd.f32 %v7512, %v7641
        %v7660 = vadd.f32 %v7515, %v7644
        %v7661 = vadd.f32 %v7520, %v7649
        %v7662 = vadd.f32 %v7523, %v7652
        %v7663 = vld [vmem:[%s4957] sm:$0xf]
        %v7664 = vld [vmem:[%s4957 + $0x4] sm:$0xf]
        %v7665 = vld [vmem:[%s4957 + $0x8] sm:$0xf]
        %v7666 = vld [vmem:[%s4957 + $0xc] sm:$0xf]
        %v7667 = vld [vmem:[%s4957 + $0x10] sm:$0xf]
        %v7668 = vld [vmem:[%s4957 + $0x14] sm:$0xf]
        %v7669 = vld [vmem:[%s4957 + $0x18] sm:$0xf]
        %v7670 = vld [vmem:[%s4957 + $0x1c] sm:$0xf]
        %v7679 = vunpack.c.l.b16 %v7663
        %v7680 = vunpack.c.l.b16 %v7664
        %v7681 = vunpack.c.l.b16 %v7665
        %v7682 = vunpack.c.l.b16 %v7666
        %v7683 = vunpack.c.l.b16 %v7667
        %v7684 = vunpack.c.l.b16 %v7668
        %v7685 = vunpack.c.l.b16 %v7669
        %v7686 = vunpack.c.l.b16 %v7670
        %v7687 = vpack.c.b16 %v7680, %v7679
        %v7688 = vpack.c.b16 %v7682, %v7681
        %v7689 = vpack.c.b16 %v7684, %v7683
        %v7690 = vpack.c.b16 %v7686, %v7685
        %7691 = vrot.lane.b32.xlu0 %v7260, 1
        %v7692 = vpop.permute.xlu0 %7691
        %7693 = vrot.lane.b32.xlu0 %v7261, 1
        %v7694 = vpop.permute.xlu0 %7693
        %7695 = vrot.lane.b32.xlu0 %v7262, 1
        %v7696 = vpop.permute.xlu0 %7695
        %7697 = vrot.lane.b32.xlu0 %v7263, 1
        %v7698 = vpop.permute.xlu0 %7697
        %7699 = vrot.lane.b32.xlu0 %v7264, 1
        %v7700 = vpop.permute.xlu0 %7699
        %7701 = vrot.lane.b32.xlu0 %v7265, 1
        %v7702 = vpop.permute.xlu0 %7701
        %7703 = vrot.lane.b32.xlu0 %v7266, 1
        %v7704 = vpop.permute.xlu0 %7703
        %7705 = vrot.lane.b32.xlu0 %v7267, 1
        %v7706 = vpop.permute.xlu0 %7705
        %v7707 = vsel %vm815, %v7692, %v7694
        %v7708 = vsel %vm815, %v7696, %v7698
        %v7709 = vsel %vm815, %v7700, %v7702
        %v7710 = vsel %vm815, %v7704, %v7706
        %v7716 = vsel %vm431, %v7687, 0
        %v7719 = vsel %vm431, %v7688, 0
        %v7722 = vsel %vm431, %v7689, 0
        %v7725 = vsel %vm431, %v7690, 0
        %7727 = vmatprep.subr.bf16.mxu0 0
        %7728 = vmatpush1.bf16.msra.mxu0 %v7707
        %7729 = vmatprep.subr.bf16.mxu0 0
        %7730 = vmatpush1.bf16.msra.mxu0 %v7708
        %7731 = vmatprep.subr.bf16.mxu0 0
        %7732 = vmatpush1.bf16.msra.mxu0 %v7709
        %7733 = vmatprep.subr.bf16.mxu0 0
        %7734 = vmatpush1.bf16.msra.mxu0 %v7710
        %7735 = vmatprep.subr.bf16.mxu0 0
        %7736 = vmatpush1.bf16.msra.mxu0 0
        %7737 = vmatprep.subr.bf16.mxu0 0
        %7738 = vmatpush1.bf16.msra.mxu0 0
        %7739 = vmatprep.subr.bf16.mxu0 0
        %7740 = vmatpush1.bf16.msra.mxu0 0
        %7741 = vmatprep.subr.bf16.mxu0 0
        %7742 = vmatpush1.bf16.msra.mxu0 0
        %7743 = vmatprep.subr.bf16.mxu0 0
        %7744 = vmatpush1.bf16.msra.mxu0 0
        %7745 = vmatprep.subr.bf16.mxu0 0
        %7746 = vmatpush1.bf16.msra.mxu0 0
        %7747 = vmatprep.subr.bf16.mxu0 0
        %7748 = vmatpush1.bf16.msra.mxu0 0
        %7749 = vmatprep.subr.bf16.mxu0 0
        %7750 = vmatpush1.bf16.msra.mxu0 0
        %7751 = vmatprep.subr.bf16.mxu0 0
        %7752 = vmatpush1.bf16.msra.mxu0 0
        %7753 = vmatprep.subr.bf16.mxu0 0
        %7754 = vmatpush1.bf16.msra.mxu0 0
        %7755 = vmatprep.subr.bf16.mxu0 0
        %7756 = vmatpush1.bf16.msra.mxu0 0
        %7757 = vmatprep.subr.bf16.mxu0 0
        %7758 = vmatpush1.bf16.msra.mxu0 0
        %7759 = vmatprep.mubr.bf16.mxu0 0
        %7760 = vmatmul.mubr.bf16.gmra.mrb[0].mxu0 %v7716
        %v7761 = vpop.f32.mrb[0].mxu0
        %v7762 = vadd.f32 0.0, %v7761
        %v7763 = vpop.f32.mrb[0].mxu0
        %v7764 = vpop.f32.mrb[0].mxu0
        %v7765 = vadd.f32 0.0, %v7764
        %v7766 = vpop.f32.mrb[0].mxu0
        %7767 = vmatprep.mubr.bf16.mxu0 0
        %7768 = vmatmul.mubr.bf16.gmra.mrb[0].mxu0 %v7719
        %v7769 = vpop.f32.mrb[0].mxu0
        %v7770 = vadd.f32 0.0, %v7769
        %v7771 = vpop.f32.mrb[0].mxu0
        %v7772 = vpop.f32.mrb[0].mxu0
        %v7773 = vadd.f32 0.0, %v7772
        %v7774 = vpop.f32.mrb[0].mxu0
        %7775 = vmatprep.mubr.bf16.mxu0 0
        %7776 = vmatmul.mubr.bf16.gmra.mrb[0].mxu0 %v7722
        %v7777 = vpop.f32.mrb[0].mxu0
        %v7778 = vadd.f32 0.0, %v7777
        %v7779 = vpop.f32.mrb[0].mxu0
        %v7780 = vpop.f32.mrb[0].mxu0
        %v7781 = vadd.f32 0.0, %v7780
        %v7782 = vpop.f32.mrb[0].mxu0
        %7783 = vmatprep.mubr.bf16.mxu0 0
        %7784 = vmatmul.mubr.bf16.gmra.mrb[0].mxu0 %v7725
        %v7785 = vpop.f32.mrb[0].mxu0
        %v7786 = vadd.f32 0.0, %v7785
        %v7787 = vpop.f32.mrb[0].mxu0
        %v7788 = vpop.f32.mrb[0].mxu0
        %v7789 = vadd.f32 0.0, %v7788
        %v7790 = vpop.f32.mrb[0].mxu0
        %7791 = vdwg.mxu0
        %v7792 = vadd.f32 %v7655, %v7762
        %v7793 = vadd.f32 %v7656, %v7765
        %v7794 = vadd.f32 %v7657, %v7770
        %v7795 = vadd.f32 %v7658, %v7773
        %v7796 = vadd.f32 %v7659, %v7778
        %v7797 = vadd.f32 %v7660, %v7781
        %v7798 = vadd.f32 %v7661, %v7786
        %v7799 = vadd.f32 %v7662, %v7789
        %v7800 = vld [vmem:[%s5095] sm:$0xf]
        %v7801 = vld [vmem:[%s5095 + $0x4] sm:$0xf]
        %v7802 = vld [vmem:[%s5095 + $0x8] sm:$0xf]
        %v7803 = vld [vmem:[%s5095 + $0xc] sm:$0xf]
        %v7804 = vld [vmem:[%s5095 + $0x10] sm:$0xf]
        %v7805 = vld [vmem:[%s5095 + $0x14] sm:$0xf]
        %v7806 = vld [vmem:[%s5095 + $0x18] sm:$0xf]
        %v7807 = vld [vmem:[%s5095 + $0x1c] sm:$0xf]
        %v7816 = vunpack.c.l.b16 %v7800
        %v7817 = vunpack.c.l.b16 %v7801
        %v7818 = vunpack.c.l.b16 %v7802
        %v7819 = vunpack.c.l.b16 %v7803
        %v7820 = vunpack.c.l.b16 %v7804
        %v7821 = vunpack.c.l.b16 %v7805
        %v7822 = vunpack.c.l.b16 %v7806
        %v7823 = vunpack.c.l.b16 %v7807
        %v7824 = vpack.c.b16 %v7817, %v7816
        %v7825 = vpack.c.b16 %v7819, %v7818
        %v7826 = vpack.c.b16 %v7821, %v7820
        %v7827 = vpack.c.b16 %v7823, %v7822
        %v7829 = vsel %vm431, %v7824, 0
        %v7832 = vsel %vm431, %v7825, 0
        %v7835 = vsel %vm431, %v7826, 0
        %v7838 = vsel %vm431, %v7827, 0
        %7840 = vmatprep.subr.bf16.mxu0 0
        %7841 = vmatpush1.bf16.msra.mxu0 %v7261
        %7842 = vmatprep.subr.bf16.mxu0 0
        %7843 = vmatpush1.bf16.msra.mxu0 %v7263
        %7844 = vmatprep.subr.bf16.mxu0 0
        %7845 = vmatpush1.bf16.msra.mxu0 %v7265
        %7846 = vmatprep.subr.bf16.mxu0 0
        %7847 = vmatpush1.bf16.msra.mxu0 %v7267
        %7848 = vmatprep.subr.bf16.mxu0 0
        %7849 = vmatpush1.bf16.msra.mxu0 0
        %7850 = vmatprep.subr.bf16.mxu0 0
        %7851 = vmatpush1.bf16.msra.mxu0 0
        %7852 = vmatprep.subr.bf16.mxu0 0
        %7853 = vmatpush1.bf16.msra.mxu0 0
        %7854 = vmatprep.subr.bf16.mxu0 0
        %7855 = vmatpush1.bf16.msra.mxu0 0
        %7856 = vmatprep.subr.bf16.mxu0 0
        %7857 = vmatpush1.bf16.msra.mxu0 0
        %7858 = vmatprep.subr.bf16.mxu0 0
        %7859 = vmatpush1.bf16.msra.mxu0 0
        %7860 = vmatprep.subr.bf16.mxu0 0
        %7861 = vmatpush1.bf16.msra.mxu0 0
        %7862 = vmatprep.subr.bf16.mxu0 0
        %7863 = vmatpush1.bf16.msra.mxu0 0
        %7864 = vmatprep.subr.bf16.mxu0 0
        %7865 = vmatpush1.bf16.msra.mxu0 0
        %7866 = vmatprep.subr.bf16.mxu0 0
        %7867 = vmatpush1.bf16.msra.mxu0 0
        %7868 = vmatprep.subr.bf16.mxu0 0
        %7869 = vmatpush1.bf16.msra.mxu0 0
        %7870 = vmatprep.subr.bf16.mxu0 0
        %7871 = vmatpush1.bf16.msra.mxu0 0
        %7872 = vmatprep.mubr.bf16.mxu0 0
        %7873 = vmatmul.mubr.bf16.gmra.mrb[0].mxu0 %v7829
        %v7874 = vpop.f32.mrb[0].mxu0
        %v7875 = vadd.f32 0.0, %v7874
        %v7876 = vpop.f32.mrb[0].mxu0
        %v7877 = vpop.f32.mrb[0].mxu0
        %v7878 = vadd.f32 0.0, %v7877
        %v7879 = vpop.f32.mrb[0].mxu0
        %7880 = vmatprep.mubr.bf16.mxu0 0
        %7881 = vmatmul.mubr.bf16.gmra.mrb[0].mxu0 %v7832
        %v7882 = vpop.f32.mrb[0].mxu0
        %v7883 = vadd.f32 0.0, %v7882
        %v7884 = vpop.f32.mrb[0].mxu0
        %v7885 = vpop.f32.mrb[0].mxu0
        %v7886 = vadd.f32 0.0, %v7885
        %v7887 = vpop.f32.mrb[0].mxu0
        %7888 = vmatprep.mubr.bf16.mxu0 0
        %7889 = vmatmul.mubr.bf16.gmra.mrb[0].mxu0 %v7835
        %v7890 = vpop.f32.mrb[0].mxu0
        %v7891 = vadd.f32 0.0, %v7890
        %v7892 = vpop.f32.mrb[0].mxu0
        %v7893 = vpop.f32.mrb[0].mxu0
        %v7894 = vadd.f32 0.0, %v7893
        %v7895 = vpop.f32.mrb[0].mxu0
        %7896 = vmatprep.mubr.bf16.mxu0 0
        %7897 = vmatmul.mubr.bf16.gmra.mrb[0].mxu0 %v7838
        %v7898 = vpop.f32.mrb[0].mxu0
        %v7899 = vadd.f32 0.0, %v7898
        %v7900 = vpop.f32.mrb[0].mxu0
        %v7901 = vpop.f32.mrb[0].mxu0
        %v7902 = vadd.f32 0.0, %v7901
        %v7903 = vpop.f32.mrb[0].mxu0
        %7904 = vdwg.mxu0
        %v7905 = vadd.f32 %v7792, %v7875
        %v7906 = vadd.f32 %v7793, %v7878
        %v7907 = vadd.f32 %v7794, %v7883
        %v7908 = vadd.f32 %v7795, %v7886
        %v7909 = vadd.f32 %v7796, %v7891
        %v7910 = vadd.f32 %v7797, %v7894
        %v7911 = vadd.f32 %v7798, %v7899
        %v7912 = vadd.f32 %v7799, %v7902
        %v7913 = vld [vmem:[%s5209] sm:$0xf]
        %v7914 = vld [vmem:[%s5209 + $0x4] sm:$0xf]
        %v7915 = vld [vmem:[%s5209 + $0x8] sm:$0xf]
        %v7916 = vld [vmem:[%s5209 + $0xc] sm:$0xf]
        %v7917 = vld [vmem:[%s5209 + $0x10] sm:$0xf]
        %v7918 = vld [vmem:[%s5209 + $0x14] sm:$0xf]
        %v7919 = vld [vmem:[%s5209 + $0x18] sm:$0xf]
        %v7920 = vld [vmem:[%s5209 + $0x1c] sm:$0xf]
        %v7921 = vld [vmem:[#allocation2 + $0x18] sm:$0xff]
        %v7922 = vld [vmem:[#allocation2 + $0x20] sm:$0xff]
        %v7923 = vld [vmem:[#allocation2 + $0x40] sm:$0xff]
        %v7924 = vld [vmem:[#allocation2 + $0x48] sm:$0xff]
        %v7925 = vld [vmem:[#allocation2 + $0x68] sm:$0xff]
        %v7926 = vld [vmem:[#allocation2 + $0x70] sm:$0xff]
        %v7927 = vld [vmem:[#allocation2 + $0x90] sm:$0xff]
        %v7928 = vld [vmem:[#allocation2 + $0x98] sm:$0xff]
        %v7937 = vunpack.c.l.b16 %v7913
        %v7938 = vunpack.c.l.b16 %v7914
        %v7939 = vunpack.c.l.b16 %v7915
        %v7940 = vunpack.c.l.b16 %v7916
        %v7941 = vunpack.c.l.b16 %v7917
        %v7942 = vunpack.c.l.b16 %v7918
        %v7943 = vunpack.c.l.b16 %v7919
        %v7944 = vunpack.c.l.b16 %v7920
        %v7945 = vpack.c.b16 %v7938, %v7937
        %v7946 = vpack.c.b16 %v7940, %v7939
        %v7947 = vpack.c.b16 %v7942, %v7941
        %v7948 = vpack.c.b16 %v7944, %v7943
        %7957 = vrot.lane.b32.xlu0 %v7921, 127
        %v7958 = vpop.permute.xlu0 %7957
        %7959 = vrot.lane.b32.xlu0 %v7922, 127
        %v7960 = vpop.permute.xlu0 %7959
        %7961 = vrot.lane.b32.xlu0 %v7923, 127
        %v7962 = vpop.permute.xlu0 %7961
        %7963 = vrot.lane.b32.xlu0 %v7924, 127
        %v7964 = vpop.permute.xlu0 %7963
        %7965 = vrot.lane.b32.xlu0 %v7925, 127
        %v7966 = vpop.permute.xlu0 %7965
        %7967 = vrot.lane.b32.xlu0 %v7926, 127
        %v7968 = vpop.permute.xlu0 %7967
        %7969 = vrot.lane.b32.xlu0 %v7927, 127
        %v7970 = vpop.permute.xlu0 %7969
        %7971 = vrot.lane.b32.xlu0 %v7928, 127
        %v7972 = vpop.permute.xlu0 %7971
        %v7973 = vsel %vm1140, %v7958, %v7960
        %v7974 = vsel %vm1140, %v7962, %v7964
        %v7975 = vsel %vm1140, %v7966, %v7968
        %v7976 = vsel %vm1140, %v7970, %v7972
        %v7982 = vsel %vm431, %v7945, 0
        %v7985 = vsel %vm431, %v7946, 0
        %v7988 = vsel %vm431, %v7947, 0
        %v7991 = vsel %vm431, %v7948, 0
        %7993 = vmatprep.subr.bf16.mxu0 0
        %7994 = vmatpush1.bf16.msra.mxu0 %v7973
        %7995 = vmatprep.subr.bf16.mxu0 0
        %7996 = vmatpush1.bf16.msra.mxu0 %v7974
        %7997 = vmatprep.subr.bf16.mxu0 0
        %7998 = vmatpush1.bf16.msra.mxu0 %v7975
        %7999 = vmatprep.subr.bf16.mxu0 0
        %8000 = vmatpush1.bf16.msra.mxu0 %v7976
        %8001 = vmatprep.subr.bf16.mxu0 0
        %8002 = vmatpush1.bf16.msra.mxu0 0
        %8003 = vmatprep.subr.bf16.mxu0 0
        %8004 = vmatpush1.bf16.msra.mxu0 0
        %8005 = vmatprep.subr.bf16.mxu0 0
        %8006 = vmatpush1.bf16.msra.mxu0 0
        %8007 = vmatprep.subr.bf16.mxu0 0
        %8008 = vmatpush1.bf16.msra.mxu0 0
        %8009 = vmatprep.subr.bf16.mxu0 0
        %8010 = vmatpush1.bf16.msra.mxu0 0
        %8011 = vmatprep.subr.bf16.mxu0 0
        %8012 = vmatpush1.bf16.msra.mxu0 0
        %8013 = vmatprep.subr.bf16.mxu0 0
        %8014 = vmatpush1.bf16.msra.mxu0 0
        %8015 = vmatprep.subr.bf16.mxu0 0
        %8016 = vmatpush1.bf16.msra.mxu0 0
        %8017 = vmatprep.subr.bf16.mxu0 0
        %8018 = vmatpush1.bf16.msra.mxu0 0
        %8019 = vmatprep.subr.bf16.mxu0 0
        %8020 = vmatpush1.bf16.msra.mxu0 0
        %8021 = vmatprep.subr.bf16.mxu0 0
        %8022 = vmatpush1.bf16.msra.mxu0 0
        %8023 = vmatprep.subr.bf16.mxu0 0
        %8024 = vmatpush1.bf16.msra.mxu0 0
        %8025 = vmatprep.mubr.bf16.mxu0 0
        %8026 = vmatmul.mubr.bf16.gmra.mrb[0].mxu0 %v7982
        %v8027 = vpop.f32.mrb[0].mxu0
        %v8028 = vadd.f32 0.0, %v8027
        %v8029 = vpop.f32.mrb[0].mxu0
        %v8030 = vpop.f32.mrb[0].mxu0
        %v8031 = vadd.f32 0.0, %v8030
        %v8032 = vpop.f32.mrb[0].mxu0
        %8033 = vmatprep.mubr.bf16.mxu0 0
        %8034 = vmatmul.mubr.bf16.gmra.mrb[0].mxu0 %v7985
        %v8035 = vpop.f32.mrb[0].mxu0
        %v8036 = vadd.f32 0.0, %v8035
        %v8037 = vpop.f32.mrb[0].mxu0
        %v8038 = vpop.f32.mrb[0].mxu0
        %v8039 = vadd.f32 0.0, %v8038
        %v8040 = vpop.f32.mrb[0].mxu0
        %8041 = vmatprep.mubr.bf16.mxu0 0
        %8042 = vmatmul.mubr.bf16.gmra.mrb[0].mxu0 %v7988
        %v8043 = vpop.f32.mrb[0].mxu0
        %v8044 = vadd.f32 0.0, %v8043
        %v8045 = vpop.f32.mrb[0].mxu0
        %v8046 = vpop.f32.mrb[0].mxu0
        %v8047 = vadd.f32 0.0, %v8046
        %v8048 = vpop.f32.mrb[0].mxu0
        %8049 = vmatprep.mubr.bf16.mxu0 0
        %8050 = vmatmul.mubr.bf16.gmra.mrb[0].mxu0 %v7991
        %v8051 = vpop.f32.mrb[0].mxu0
        %v8052 = vadd.f32 0.0, %v8051
        %v8053 = vpop.f32.mrb[0].mxu0
        %v8054 = vpop.f32.mrb[0].mxu0
        %v8055 = vadd.f32 0.0, %v8054
        %v8056 = vpop.f32.mrb[0].mxu0
        %8057 = vdwg.mxu0
        %v8058 = vadd.f32 %v7905, %v8028
        %v8059 = vadd.f32 %v7906, %v8031
        %v8060 = vadd.f32 %v7907, %v8036
        %v8061 = vadd.f32 %v7908, %v8039
        %v8062 = vadd.f32 %v7909, %v8044
        %v8063 = vadd.f32 %v7910, %v8047
        %v8064 = vadd.f32 %v7911, %v8052
        %v8065 = vadd.f32 %v7912, %v8055
        %v8066 = vld [vmem:[%s5363] sm:$0xf]
        %v8067 = vld [vmem:[%s5363 + $0x4] sm:$0xf]
        %v8068 = vld [vmem:[%s5363 + $0x8] sm:$0xf]
        %v8069 = vld [vmem:[%s5363 + $0xc] sm:$0xf]
        %v8070 = vld [vmem:[%s5363 + $0x10] sm:$0xf]
        %v8071 = vld [vmem:[%s5363 + $0x14] sm:$0xf]
        %v8072 = vld [vmem:[%s5363 + $0x18] sm:$0xf]
        %v8073 = vld [vmem:[%s5363 + $0x1c] sm:$0xf]
        %v8082 = vunpack.c.l.b16 %v8066
        %v8083 = vunpack.c.l.b16 %v8067
        %v8084 = vunpack.c.l.b16 %v8068
        %v8085 = vunpack.c.l.b16 %v8069
        %v8086 = vunpack.c.l.b16 %v8070
        %v8087 = vunpack.c.l.b16 %v8071
        %v8088 = vunpack.c.l.b16 %v8072
        %v8089 = vunpack.c.l.b16 %v8073
        %v8090 = vpack.c.b16 %v8083, %v8082
        %v8091 = vpack.c.b16 %v8085, %v8084
        %v8092 = vpack.c.b16 %v8087, %v8086
        %v8093 = vpack.c.b16 %v8089, %v8088
        %8094 = vrot.lane.b32.xlu0 %v7921, 111
        %v8095 = vpop.permute.xlu0 %8094
        %8096 = vrot.lane.b32.xlu0 %v7922, 111
        %v8097 = vpop.permute.xlu0 %8096
        %8098 = vrot.lane.b32.xlu0 %v7923, 111
        %v8099 = vpop.permute.xlu0 %8098
        %8100 = vrot.lane.b32.xlu0 %v7924, 111
        %v8101 = vpop.permute.xlu0 %8100
        %8102 = vrot.lane.b32.xlu0 %v7925, 111
        %v8103 = vpop.permute.xlu0 %8102
        %8104 = vrot.lane.b32.xlu0 %v7926, 111
        %v8105 = vpop.permute.xlu0 %8104
        %8106 = vrot.lane.b32.xlu0 %v7927, 111
        %v8107 = vpop.permute.xlu0 %8106
        %8108 = vrot.lane.b32.xlu0 %v7928, 111
        %v8109 = vpop.permute.xlu0 %8108
        %v8110 = vsel %vm1279, %v8095, %v8097
        %v8111 = vsel %vm1279, %v8099, %v8101
        %v8112 = vsel %vm1279, %v8103, %v8105
        %v8113 = vsel %vm1279, %v8107, %v8109
        %v8119 = vsel %vm431, %v8090, 0
        %v8122 = vsel %vm431, %v8091, 0
        %v8125 = vsel %vm431, %v8092, 0
        %v8128 = vsel %vm431, %v8093, 0
        %8130 = vmatprep.subr.bf16.mxu0 0
        %8131 = vmatpush1.bf16.msra.mxu0 %v8110
        %8132 = vmatprep.subr.bf16.mxu0 0
        %8133 = vmatpush1.bf16.msra.mxu0 %v8111
        %8134 = vmatprep.subr.bf16.mxu0 0
        %8135 = vmatpush1.bf16.msra.mxu0 %v8112
        %8136 = vmatprep.subr.bf16.mxu0 0
        %8137 = vmatpush1.bf16.msra.mxu0 %v8113
        %8138 = vmatprep.subr.bf16.mxu0 0
        %8139 = vmatpush1.bf16.msra.mxu0 0
        %8140 = vmatprep.subr.bf16.mxu0 0
        %8141 = vmatpush1.bf16.msra.mxu0 0
        %8142 = vmatprep.subr.bf16.mxu0 0
        %8143 = vmatpush1.bf16.msra.mxu0 0
        %8144 = vmatprep.subr.bf16.mxu0 0
        %8145 = vmatpush1.bf16.msra.mxu0 0
        %8146 = vmatprep.subr.bf16.mxu0 0
        %8147 = vmatpush1.bf16.msra.mxu0 0
        %8148 = vmatprep.subr.bf16.mxu0 0
        %8149 = vmatpush1.bf16.msra.mxu0 0
        %8150 = vmatprep.subr.bf16.mxu0 0
        %8151 = vmatpush1.bf16.msra.mxu0 0
        %8152 = vmatprep.subr.bf16.mxu0 0
        %8153 = vmatpush1.bf16.msra.mxu0 0
        %8154 = vmatprep.subr.bf16.mxu0 0
        %8155 = vmatpush1.bf16.msra.mxu0 0
        %8156 = vmatprep.subr.bf16.mxu0 0
        %8157 = vmatpush1.bf16.msra.mxu0 0
        %8158 = vmatprep.subr.bf16.mxu0 0
        %8159 = vmatpush1.bf16.msra.mxu0 0
        %8160 = vmatprep.subr.bf16.mxu0 0
        %8161 = vmatpush1.bf16.msra.mxu0 0
        %8162 = vmatprep.mubr.bf16.mxu0 0
        %8163 = vmatmul.mubr.bf16.gmra.mrb[0].mxu0 %v8119
        %v8164 = vpop.f32.mrb[0].mxu0
        %v8165 = vadd.f32 0.0, %v8164
        %v8166 = vpop.f32.mrb[0].mxu0
        %v8167 = vpop.f32.mrb[0].mxu0
        %v8168 = vadd.f32 0.0, %v8167
        %v8169 = vpop.f32.mrb[0].mxu0
        %8170 = vmatprep.mubr.bf16.mxu0 0
        %8171 = vmatmul.mubr.bf16.gmra.mrb[0].mxu0 %v8122
        %v8172 = vpop.f32.mrb[0].mxu0
        %v8173 = vadd.f32 0.0, %v8172
        %v8174 = vpop.f32.mrb[0].mxu0
        %v8175 = vpop.f32.mrb[0].mxu0
        %v8176 = vadd.f32 0.0, %v8175
        %v8177 = vpop.f32.mrb[0].mxu0
        %8178 = vmatprep.mubr.bf16.mxu0 0
        %8179 = vmatmul.mubr.bf16.gmra.mrb[0].mxu0 %v8125
        %v8180 = vpop.f32.mrb[0].mxu0
        %v8181 = vadd.f32 0.0, %v8180
        %v8182 = vpop.f32.mrb[0].mxu0
        %v8183 = vpop.f32.mrb[0].mxu0
        %v8184 = vadd.f32 0.0, %v8183
        %v8185 = vpop.f32.mrb[0].mxu0
        %8186 = vmatprep.mubr.bf16.mxu0 0
        %8187 = vmatmul.mubr.bf16.gmra.mrb[0].mxu0 %v8128
        %v8188 = vpop.f32.mrb[0].mxu0
        %v8189 = vadd.f32 0.0, %v8188
        %v8190 = vpop.f32.mrb[0].mxu0
        %v8191 = vpop.f32.mrb[0].mxu0
        %v8192 = vadd.f32 0.0, %v8191
        %v8193 = vpop.f32.mrb[0].mxu0
        %8194 = vdwg.mxu0
        %v8195 = vadd.f32 %v8058, %v8165
        %v8196 = vadd.f32 %v8059, %v8168
        %v8197 = vadd.f32 %v8060, %v8173
        %v8198 = vadd.f32 %v8061, %v8176
        %v8199 = vadd.f32 %v8062, %v8181
        %v8200 = vadd.f32 %v8063, %v8184
        %v8201 = vadd.f32 %v8064, %v8189
        %v8202 = vadd.f32 %v8065, %v8192
        %v8203 = vld [vmem:[%s5501] sm:$0xf]
        %v8204 = vld [vmem:[%s5501 + $0x4] sm:$0xf]
        %v8205 = vld [vmem:[%s5501 + $0x8] sm:$0xf]
        %v8206 = vld [vmem:[%s5501 + $0xc] sm:$0xf]
        %v8207 = vld [vmem:[%s5501 + $0x10] sm:$0xf]
        %v8208 = vld [vmem:[%s5501 + $0x14] sm:$0xf]
        %v8209 = vld [vmem:[%s5501 + $0x18] sm:$0xf]
        %v8210 = vld [vmem:[%s5501 + $0x1c] sm:$0xf]
        %v8219 = vunpack.c.l.b16 %v8203
        %v8220 = vunpack.c.l.b16 %v8204
        %v8221 = vunpack.c.l.b16 %v8205
        %v8222 = vunpack.c.l.b16 %v8206
        %v8223 = vunpack.c.l.b16 %v8207
        %v8224 = vunpack.c.l.b16 %v8208
        %v8225 = vunpack.c.l.b16 %v8209
        %v8226 = vunpack.c.l.b16 %v8210
        %v8227 = vpack.c.b16 %v8220, %v8219
        %v8228 = vpack.c.b16 %v8222, %v8221
        %v8229 = vpack.c.b16 %v8224, %v8223
        %v8230 = vpack.c.b16 %v8226, %v8225
        %8231 = vrot.lane.b32.xlu0 %v7921, 110
        %v8232 = vpop.permute.xlu0 %8231
        %8233 = vrot.lane.b32.xlu0 %v7922, 110
        %v8234 = vpop.permute.xlu0 %8233
        %8235 = vrot.lane.b32.xlu0 %v7923, 110
        %v8236 = vpop.permute.xlu0 %8235
        %8237 = vrot.lane.b32.xlu0 %v7924, 110
        %v8238 = vpop.permute.xlu0 %8237
        %8239 = vrot.lane.b32.xlu0 %v7925, 110
        %v8240 = vpop.permute.xlu0 %8239
        %8241 = vrot.lane.b32.xlu0 %v7926, 110
        %v8242 = vpop.permute.xlu0 %8241
        %8243 = vrot.lane.b32.xlu0 %v7927, 110
        %v8244 = vpop.permute.xlu0 %8243
        %8245 = vrot.lane.b32.xlu0 %v7928, 110
        %v8246 = vpop.permute.xlu0 %8245
        %v8247 = vsel %vm1418, %v8232, %v8234
        %v8248 = vsel %vm1418, %v8236, %v8238
        %v8249 = vsel %vm1418, %v8240, %v8242
        %v8250 = vsel %vm1418, %v8244, %v8246
        %v8256 = vsel %vm431, %v8227, 0
        %v8259 = vsel %vm431, %v8228, 0
        %v8262 = vsel %vm431, %v8229, 0
        %v8265 = vsel %vm431, %v8230, 0
        %8267 = vmatprep.subr.bf16.mxu0 0
        %8268 = vmatpush1.bf16.msra.mxu0 %v8247
        %8269 = vmatprep.subr.bf16.mxu0 0
        %8270 = vmatpush1.bf16.msra.mxu0 %v8248
        %8271 = vmatprep.subr.bf16.mxu0 0
        %8272 = vmatpush1.bf16.msra.mxu0 %v8249
        %8273 = vmatprep.subr.bf16.mxu0 0
        %8274 = vmatpush1.bf16.msra.mxu0 %v8250
        %8275 = vmatprep.subr.bf16.mxu0 0
        %8276 = vmatpush1.bf16.msra.mxu0 0
        %8277 = vmatprep.subr.bf16.mxu0 0
        %8278 = vmatpush1.bf16.msra.mxu0 0
        %8279 = vmatprep.subr.bf16.mxu0 0
        %8280 = vmatpush1.bf16.msra.mxu0 0
        %8281 = vmatprep.subr.bf16.mxu0 0
        %8282 = vmatpush1.bf16.msra.mxu0 0
        %8283 = vmatprep.subr.bf16.mxu0 0
        %8284 = vmatpush1.bf16.msra.mxu0 0
        %8285 = vmatprep.subr.bf16.mxu0 0
        %8286 = vmatpush1.bf16.msra.mxu0 0
        %8287 = vmatprep.subr.bf16.mxu0 0
        %8288 = vmatpush1.bf16.msra.mxu0 0
        %8289 = vmatprep.subr.bf16.mxu0 0
        %8290 = vmatpush1.bf16.msra.mxu0 0
        %8291 = vmatprep.subr.bf16.mxu0 0
        %8292 = vmatpush1.bf16.msra.mxu0 0
        %8293 = vmatprep.subr.bf16.mxu0 0
        %8294 = vmatpush1.bf16.msra.mxu0 0
        %8295 = vmatprep.subr.bf16.mxu0 0
        %8296 = vmatpush1.bf16.msra.mxu0 0
        %8297 = vmatprep.subr.bf16.mxu0 0
        %8298 = vmatpush1.bf16.msra.mxu0 0
        %8299 = vmatprep.mubr.bf16.mxu0 0
        %8300 = vmatmul.mubr.bf16.gmra.mrb[0].mxu0 %v8256
        %v8301 = vpop.f32.mrb[0].mxu0
        %v8302 = vadd.f32 0.0, %v8301
        %v8303 = vpop.f32.mrb[0].mxu0
        %v8304 = vpop.f32.mrb[0].mxu0
        %v8305 = vadd.f32 0.0, %v8304
        %v8306 = vpop.f32.mrb[0].mxu0
        %8307 = vmatprep.mubr.bf16.mxu0 0
        %8308 = vmatmul.mubr.bf16.gmra.mrb[0].mxu0 %v8259
        %v8309 = vpop.f32.mrb[0].mxu0
        %v8310 = vadd.f32 0.0, %v8309
        %v8311 = vpop.f32.mrb[0].mxu0
        %v8312 = vpop.f32.mrb[0].mxu0
        %v8313 = vadd.f32 0.0, %v8312
        %v8314 = vpop.f32.mrb[0].mxu0
        %8315 = vmatprep.mubr.bf16.mxu0 0
        %8316 = vmatmul.mubr.bf16.gmra.mrb[0].mxu0 %v8262
        %v8317 = vpop.f32.mrb[0].mxu0
        %v8318 = vadd.f32 0.0, %v8317
        %v8319 = vpop.f32.mrb[0].mxu0
        %v8320 = vpop.f32.mrb[0].mxu0
        %v8321 = vadd.f32 0.0, %v8320
        %v8322 = vpop.f32.mrb[0].mxu0
        %8323 = vmatprep.mubr.bf16.mxu0 0
        %8324 = vmatmul.mubr.bf16.gmra.mrb[0].mxu0 %v8265
        %v8325 = vpop.f32.mrb[0].mxu0
        %v8326 = vadd.f32 0.0, %v8325
        %v8327 = vpop.f32.mrb[0].mxu0
        %v8328 = vpop.f32.mrb[0].mxu0
        %v8329 = vadd.f32 0.0, %v8328
        %v8330 = vpop.f32.mrb[0].mxu0
        %8331 = vdwg.mxu0
        %v8332 = vadd.f32 %v8195, %v8302
        %v8333 = vadd.f32 %v8196, %v8305
        %v8334 = vadd.f32 %v8197, %v8310
        %v8335 = vadd.f32 %v8198, %v8313
        %v8336 = vadd.f32 %v8199, %v8318
        %v8337 = vadd.f32 %v8200, %v8321
        %v8338 = vadd.f32 %v8201, %v8326
        %v8339 = vadd.f32 %v8202, %v8329
        %v8340 = vld [vmem:[%s5639] sm:$0xf]
        %v8341 = vld [vmem:[%s5639 + $0x4] sm:$0xf]
        %v8342 = vld [vmem:[%s5639 + $0x8] sm:$0xf]
        %v8343 = vld [vmem:[%s5639 + $0xc] sm:$0xf]
        %v8344 = vld [vmem:[%s5639 + $0x10] sm:$0xf]
        %v8345 = vld [vmem:[%s5639 + $0x14] sm:$0xf]
        %v8346 = vld [vmem:[%s5639 + $0x18] sm:$0xf]
        %v8347 = vld [vmem:[%s5639 + $0x1c] sm:$0xf]
        %v8356 = vunpack.c.l.b16 %v8340
        %v8357 = vunpack.c.l.b16 %v8341
        %v8358 = vunpack.c.l.b16 %v8342
        %v8359 = vunpack.c.l.b16 %v8343
        %v8360 = vunpack.c.l.b16 %v8344
        %v8361 = vunpack.c.l.b16 %v8345
        %v8362 = vunpack.c.l.b16 %v8346
        %v8363 = vunpack.c.l.b16 %v8347
        %v8364 = vpack.c.b16 %v8357, %v8356
        %v8365 = vpack.c.b16 %v8359, %v8358
        %v8366 = vpack.c.b16 %v8361, %v8360
        %v8367 = vpack.c.b16 %v8363, %v8362
        %8368 = vrot.lane.b32.xlu0 %v7921, 109
        %v8369 = vpop.permute.xlu0 %8368
        %8370 = vrot.lane.b32.xlu0 %v7922, 109
        %v8371 = vpop.permute.xlu0 %8370
        %8372 = vrot.lane.b32.xlu0 %v7923, 109
        %v8373 = vpop.permute.xlu0 %8372
        %8374 = vrot.lane.b32.xlu0 %v7924, 109
        %v8375 = vpop.permute.xlu0 %8374
        %8376 = vrot.lane.b32.xlu0 %v7925, 109
        %v8377 = vpop.permute.xlu0 %8376
        %8378 = vrot.lane.b32.xlu0 %v7926, 109
        %v8379 = vpop.permute.xlu0 %8378
        %8380 = vrot.lane.b32.xlu0 %v7927, 109
        %v8381 = vpop.permute.xlu0 %8380
        %8382 = vrot.lane.b32.xlu0 %v7928, 109
        %v8383 = vpop.permute.xlu0 %8382
        %v8384 = vsel %vm1557, %v8369, %v8371
        %v8385 = vsel %vm1557, %v8373, %v8375
        %v8386 = vsel %vm1557, %v8377, %v8379
        %v8387 = vsel %vm1557, %v8381, %v8383
        %v8393 = vsel %vm431, %v8364, 0
        %v8396 = vsel %vm431, %v8365, 0
        %v8399 = vsel %vm431, %v8366, 0
        %v8402 = vsel %vm431, %v8367, 0
        %8404 = vmatprep.subr.bf16.mxu0 0
        %8405 = vmatpush1.bf16.msra.mxu0 %v8384
        %8406 = vmatprep.subr.bf16.mxu0 0
        %8407 = vmatpush1.bf16.msra.mxu0 %v8385
        %8408 = vmatprep.subr.bf16.mxu0 0
        %8409 = vmatpush1.bf16.msra.mxu0 %v8386
        %8410 = vmatprep.subr.bf16.mxu0 0
        %8411 = vmatpush1.bf16.msra.mxu0 %v8387
        %8412 = vmatprep.subr.bf16.mxu0 0
        %8413 = vmatpush1.bf16.msra.mxu0 0
        %8414 = vmatprep.subr.bf16.mxu0 0
        %8415 = vmatpush1.bf16.msra.mxu0 0
        %8416 = vmatprep.subr.bf16.mxu0 0
        %8417 = vmatpush1.bf16.msra.mxu0 0
        %8418 = vmatprep.subr.bf16.mxu0 0
        %8419 = vmatpush1.bf16.msra.mxu0 0
        %8420 = vmatprep.subr.bf16.mxu0 0
        %8421 = vmatpush1.bf16.msra.mxu0 0
        %8422 = vmatprep.subr.bf16.mxu0 0
        %8423 = vmatpush1.bf16.msra.mxu0 0
        %8424 = vmatprep.subr.bf16.mxu0 0
        %8425 = vmatpush1.bf16.msra.mxu0 0
        %8426 = vmatprep.subr.bf16.mxu0 0
        %8427 = vmatpush1.bf16.msra.mxu0 0
        %8428 = vmatprep.subr.bf16.mxu0 0
        %8429 = vmatpush1.bf16.msra.mxu0 0
        %8430 = vmatprep.subr.bf16.mxu0 0
        %8431 = vmatpush1.bf16.msra.mxu0 0
        %8432 = vmatprep.subr.bf16.mxu0 0
        %8433 = vmatpush1.bf16.msra.mxu0 0
        %8434 = vmatprep.subr.bf16.mxu0 0
        %8435 = vmatpush1.bf16.msra.mxu0 0
        %8436 = vmatprep.mubr.bf16.mxu0 0
        %8437 = vmatmul.mubr.bf16.gmra.mrb[0].mxu0 %v8393
        %v8438 = vpop.f32.mrb[0].mxu0
        %v8439 = vadd.f32 0.0, %v8438
        %v8440 = vpop.f32.mrb[0].mxu0
        %v8441 = vpop.f32.mrb[0].mxu0
        %v8442 = vadd.f32 0.0, %v8441
        %v8443 = vpop.f32.mrb[0].mxu0
        %8444 = vmatprep.mubr.bf16.mxu0 0
        %8445 = vmatmul.mubr.bf16.gmra.mrb[0].mxu0 %v8396
        %v8446 = vpop.f32.mrb[0].mxu0
        %v8447 = vadd.f32 0.0, %v8446
        %v8448 = vpop.f32.mrb[0].mxu0
        %v8449 = vpop.f32.mrb[0].mxu0
        %v8450 = vadd.f32 0.0, %v8449
        %v8451 = vpop.f32.mrb[0].mxu0
        %8452 = vmatprep.mubr.bf16.mxu0 0
        %8453 = vmatmul.mubr.bf16.gmra.mrb[0].mxu0 %v8399
        %v8454 = vpop.f32.mrb[0].mxu0
        %v8455 = vadd.f32 0.0, %v8454
        %v8456 = vpop.f32.mrb[0].mxu0
        %v8457 = vpop.f32.mrb[0].mxu0
        %v8458 = vadd.f32 0.0, %v8457
        %v8459 = vpop.f32.mrb[0].mxu0
        %8460 = vmatprep.mubr.bf16.mxu0 0
        %8461 = vmatmul.mubr.bf16.gmra.mrb[0].mxu0 %v8402
        %v8462 = vpop.f32.mrb[0].mxu0
        %v8463 = vadd.f32 0.0, %v8462
        %v8464 = vpop.f32.mrb[0].mxu0
        %v8465 = vpop.f32.mrb[0].mxu0
        %v8466 = vadd.f32 0.0, %v8465
        %v8467 = vpop.f32.mrb[0].mxu0
        %8468 = vdwg.mxu0
        %v8469 = vadd.f32 %v8332, %v8439
        %v8470 = vadd.f32 %v8333, %v8442
        %v8471 = vadd.f32 %v8334, %v8447
        %v8472 = vadd.f32 %v8335, %v8450
        %v8473 = vadd.f32 %v8336, %v8455
        %v8474 = vadd.f32 %v8337, %v8458
        %v8475 = vadd.f32 %v8338, %v8463
        %v8476 = vadd.f32 %v8339, %v8466
        %v8477 = vld [vmem:[%s4] sm:$0xff]
        %v8478 = vld [vmem:[%s4 + $0x8] sm:$0xff]
        %v8479 = vld [vmem:[%s4 + $0x10] sm:$0xff]
        %v8480 = vld [vmem:[%s4 + $0x18] sm:$0xff]
        %v8481 = vld [vmem:[%s4 + $0x20] sm:$0xff]
        %v8482 = vld [vmem:[%s4 + $0x28] sm:$0xff]
        %v8483 = vld [vmem:[%s4 + $0x30] sm:$0xff]
        %v8484 = vld [vmem:[%s4 + $0x38] sm:$0xff]
        %8486 = vset.pattern.permute.xlu0 0
        %8487 = vperm.xlu0 %8486, %v8477
        %v8488 = vpop.permute.xlu0 %8487
        %8491 = vset.pattern.permute.xlu0 0
        %8492 = vperm.xlu0 %8491, %v8478
        %v8493 = vpop.permute.xlu0 %8492
        %8496 = vset.pattern.permute.xlu0 0
        %8497 = vperm.xlu0 %8496, %v8479
        %v8498 = vpop.permute.xlu0 %8497
        %8501 = vset.pattern.permute.xlu0 0
        %8502 = vperm.xlu0 %8501, %v8480
        %v8503 = vpop.permute.xlu0 %8502
        %8506 = vset.pattern.permute.xlu0 0
        %8507 = vperm.xlu0 %8506, %v8481
        %v8508 = vpop.permute.xlu0 %8507
        %8511 = vset.pattern.permute.xlu0 0
        %8512 = vperm.xlu0 %8511, %v8482
        %v8513 = vpop.permute.xlu0 %8512
        %8516 = vset.pattern.permute.xlu0 0
        %8517 = vperm.xlu0 %8516, %v8483
        %v8518 = vpop.permute.xlu0 %8517
        %8521 = vset.pattern.permute.xlu0 0
        %8522 = vperm.xlu0 %8521, %v8484
        %v8523 = vpop.permute.xlu0 %8522
        %v8525 = vadd.f32 %v8469, %v8488
        %v8526 = vadd.f32 %v8470, %v8493
        %v8527 = vadd.f32 %v8471, %v8498
        %v8528 = vadd.f32 %v8472, %v8503
        %v8529 = vadd.f32 %v8473, %v8508
        %v8530 = vadd.f32 %v8474, %v8513
        %v8531 = vadd.f32 %v8475, %v8518
        %v8532 = vadd.f32 %v8476, %v8523
        %v8533 = vmax.f32 %v8525, 0.0
        %v8534 = vmax.f32 %v8526, 0.0
        %v8535 = vmax.f32 %v8527, 0.0
        %v8536 = vmax.f32 %v8528, 0.0
        %v8537 = vmax.f32 %v8529, 0.0
        %v8538 = vmax.f32 %v8530, 0.0
        %v8539 = vmax.f32 %v8531, 0.0
        %v8540 = vmax.f32 %v8532, 0.0
        %v8541 = vld [vmem:[%s5] sm:$0x1]
        %v8542 = vpack.c.bf16 %v8534, %v8533
        %v8543 = vpack.c.bf16 %v8536, %v8535
        %v8544 = vpack.c.bf16 %v8538, %v8537
        %v8545 = vpack.c.bf16 %v8540, %v8539
        %v8546 = vld [vmem:[#allocation3] sm:$0x1]
        %8548 = vset.pattern.permute.xlu0 0
        %8549 = vperm.xlu0 %8548, %v8546
        %v8550 = vpop.permute.xlu0 %8549
        %v8552 = vlaneseq
        %v8553 = vshrl.u32 %v8552, 7
        %v8554 = vsub.s32 0, %v8553
        %v8555 = vrot.slane %v8550, %v8554
        %v8557 = vsel %vm431, %v8541, 0
        %8559 = vmatprep.subr.bf16.mxu0 0
        %8560 = vmatpush1.bf16.msra.mxu0 %v8542
        %8561 = vmatprep.subr.bf16.mxu0 0
        %8562 = vmatpush1.bf16.msra.mxu0 %v8543
        %8563 = vmatprep.subr.bf16.mxu0 0
        %8564 = vmatpush1.bf16.msra.mxu0 %v8544
        %8565 = vmatprep.subr.bf16.mxu0 0
        %8566 = vmatpush1.bf16.msra.mxu0 %v8545
        %8567 = vmatprep.subr.bf16.mxu0 0
        %8568 = vmatpush1.bf16.msra.mxu0 0
        %8569 = vmatprep.subr.bf16.mxu0 0
        %8570 = vmatpush1.bf16.msra.mxu0 0
        %8571 = vmatprep.subr.bf16.mxu0 0
        %8572 = vmatpush1.bf16.msra.mxu0 0
        %8573 = vmatprep.subr.bf16.mxu0 0
        %8574 = vmatpush1.bf16.msra.mxu0 0
        %8575 = vmatprep.subr.bf16.mxu0 0
        %8576 = vmatpush1.bf16.msra.mxu0 0
        %8577 = vmatprep.subr.bf16.mxu0 0
        %8578 = vmatpush1.bf16.msra.mxu0 0
        %8579 = vmatprep.subr.bf16.mxu0 0
        %8580 = vmatpush1.bf16.msra.mxu0 0
        %8581 = vmatprep.subr.bf16.mxu0 0
        %8582 = vmatpush1.bf16.msra.mxu0 0
        %8583 = vmatprep.subr.bf16.mxu0 0
        %8584 = vmatpush1.bf16.msra.mxu0 0
        %8585 = vmatprep.subr.bf16.mxu0 0
        %8586 = vmatpush1.bf16.msra.mxu0 0
        %8587 = vmatprep.subr.bf16.mxu0 0
        %8588 = vmatpush1.bf16.msra.mxu0 0
        %8589 = vmatprep.subr.bf16.mxu0 0
        %8590 = vmatpush1.bf16.msra.mxu0 0
        %8591 = vmatprep.mubr.bf16.mxu0 0
        %8592 = vmatmul.mubr.bf16.gmra.mrb[0].mxu0 %v8557
        %v8593 = vpop.f32.mrb[0].mxu0
        %v8594 = vadd.f32 %v8555, %v8593
        %v8595 = vpop.f32.mrb[0].mxu0
        %v8596 = vpop.f32.mrb[0].mxu0
        %v8597 = vpop.f32.mrb[0].mxu0
        %8598 = vdwg.mxu0
        %8599 = vst.msk [vmem:[%s327 + $0x2] sm:$0x1] %vm5902, %v8594
        %s8600 = sand.u32 %s187, 1
        %s8601 = scalar_lea.sflag [#allocation6], %s8600
        %s8602 = sand.u32 %s187, 1
        %s8603 = smul.addr %s8602, 3
        %s8604 = scalar_lea.vmem [#allocation10], %s8603
        // Predicated region
        $region61: #{tpu_custom_call.1} parent=47 // pred_check
          %p8605 = pneg %p197
        $region62: #{tpu_custom_call.1} parent=47 // pred_check_branch
          %8607 = sbr.rel (%p8605) target = $region64
        $region63: #{tpu_custom_call.1} parent=47 // pred_region
          %s8609 = ssub.s32 48, 48
          %8610 = vsyncadd %s8601, %s8609
          %s8611 = smul.addr %s27, 3
          %s8612 = smul.addr %s8611, 16
          %s8613 = scalar_lea.hbm %s7, %s8612
          %s8615 = sshll.u32 %s8604, 4
          %s8616 = int_to_ptr.vmem [resolvable:$true] %s8615
          %8618 = dma.vmem_to_hbm [thread:$0]  %s8616, 48, %s8613, %s8601
        $region64: #{tpu_custom_call.1} parent=47 // pred_fallthru
          _
      $region48: #{tpu_custom_call.1} parent=5 // pred_fallthru
        _
      %p8619 = scmp.le.s32.totalorder 2, %s22
      // Predicated region
      $region65: #{tpu_custom_call.1} parent=5 // pred_check
        %p8620 = pneg %p8619
      $region66: #{tpu_custom_call.1} parent=5 // pred_check_branch
        %8622 = sbr.rel (%p8620) target = $region68
      $region67: #{tpu_custom_call.1} parent=5 // pred_region
        %s8623 = ssub.s32 %s22, 2
        // Predicated region
        $region69: #{tpu_custom_call.1} parent=67 // pred_check
          %p8624 = pneg %p203
        $region70: #{tpu_custom_call.1} parent=67 // pred_check_branch
          %8626 = sbr.rel (%p8624) target = $region72
        $region71: #{tpu_custom_call.1} parent=67 // pred_region
          %s8627 = sand.u32 %s188, 1
          %s8628 = scalar_lea.sflag [#allocation6], %s8627
          %s8629 = sand.u32 %s188, 1
          %s8630 = smul.addr %s8629, 3
          %s8631 = scalar_lea.vmem [#allocation10], %s8630
          %8632 = dma.done %s8628, 48
        $region72: #{tpu_custom_call.1} parent=67 // pred_fallthru
          _
      $region68: #{tpu_custom_call.1} parent=5 // pred_fallthru
        _
    $region6: #{tpu_custom_call.1} parent=1 // loop_footer
      %s26 = sadd.s32 1, %s22
    $region7: #{tpu_custom_call.1} parent=1 // loop_footer_branch
      %21 = sbr.rel target = $region3
    $region8: #{tpu_custom_call.1} parent=1 // loop_exit
      _
    %8633 = vsyncpa [#allocation5], 1
    %s8634 = scalar_lea.sflag [#allocation5], 1
    %8635 = vsyncpa %s8634, 1
    %8636 = vsyncpa [#allocation8], 1
    %8637 = vsyncpa [#allocation6], 1
    %s8638 = scalar_lea.sflag [#allocation6], 1
    %8639 = vsyncpa %s8638, 1

</llo_original>
